<compile_context>
chip_gen: v5e
topology: v5e:2x2
jax: 0.10.0
libtpu: 0.0.40
codegen_flags: <defaults>
</compile_context>

<pallas_src>
import functools
import math

import jax
import jax.numpy as jnp
import numpy as np
from jax import lax
from jax.experimental import pallas as pl
from jax.experimental.pallas import tpu as pltpu


def _round_up(x, m):
    return (x + m - 1) // m * m


def _srcnn_kernel(x_ref, w1_ref, b1_ref, w2_ref, b2_ref, w3_ref, b3_ref,
                  o_ref, p1_ref,
                  *, H, W, C, C1, C2, K1, K3, Nb, lead1, lead3):
    """All three conv+ReLU layers for Nb images, fully fused.

    x_ref : (Nb, C, L1)  H-padded, flattened input in compute dtype
    w1_ref: (C1, R1)     flattened 9x9 weights, cols (kh,kw,ci), zero-padded
    w2_ref: (C2, C1)     1x1 weights
    w3_ref: (C, K3*K3*C2) flattened 5x5 weights, cols (kh,kw,ci)
    b*_ref: (Cout, 1) f32 biases
    o_ref : (Nb, C, H*W) f32 output (NCHW once unflattened)
    p1_ref: (R1, Nb*H*W) layer-1 im2col scratch in compute dtype
    """
    HW = H * W
    NHW = Nb * HW
    pad1 = (K1 - 1) // 2
    pad3 = (K3 - 1) // 2
    cdt = w1_ref.dtype                                   # MXU compute dtype
    L1 = x_ref.shape[2]
    L3 = (H + 2 * lead3) * W
    s3 = lead3 * W

    # column index of every flattened (per-row-padded) source lane — hoisted.
    col1 = lax.broadcasted_iota(jnp.int32, (1, L1), 1) % W
    col3 = lax.broadcasted_iota(jnp.int32, (1, L3), 1) % W

    def cat_lanes(parts):
        return parts[0] if len(parts) == 1 else jnp.concatenate(parts, axis=1)

    def mask_cols(vals, shift, colv):
        """Zero the source columns that are only fetched by out-of-range
        (W-wrapped) output columns for a horizontal tap offset `shift`."""
        if shift == 0:
            return vals
        keep = (colv - shift >= 0) & (colv - shift < W)
        return [jnp.where(keep, v, jnp.zeros_like(v)) for v in vals]

    # ---- layer 1: 9x9 conv = im2col (compute-dtype scratch) + one matmul ----
    xs = [x_ref[b] for b in range(Nb)]                   # each (C, L1), cdt
    for kw in range(K1):                                 # kw-outer: one mask/kw
        shift = kw - pad1
        srcs = mask_cols(xs, shift, col1)
        for kh in range(K1):
            off = (lead1 + kh - pad1) * W + shift
            r = (kh * K1 + kw) * C                       # rows ordered (kh,kw,ci)
            p1_ref[r:r + C, :] = cat_lanes([v[:, off:off + HW] for v in srcs])
    n1 = K1 * K1 * C
    if p1_ref.shape[0] > n1:
        # pad rows must be zero every step (0 * uninitialized-NaN == NaN);
        # tiny (<1 sublane granule), and keeps megacore "parallel" split safe.
        p1_ref[n1:p1_ref.shape[0], :] = jnp.zeros(
            (p1_ref.shape[0] - n1, NHW), cdt)

    a1 = jnp.dot(w1_ref[...], p1_ref[...], preferred_element_type=jnp.float32)
    a1 = jnp.maximum(a1 + b1_ref[...], 0.0).astype(cdt)  # (C1, NHW)

    # ---- layer 2: 1x1 conv == plain matmul, fused epilogue ------------------
    a2 = jnp.dot(w2_ref[...], a1, preferred_element_type=jnp.float32)
    a2 = jnp.maximum(a2 + b2_ref[...], 0.0).astype(cdt)  # (C2, NHW)

    # ---- layer 3: 5x5 conv = 25 direct tap matmuls, no patch scratch --------
    # H-pad the layer-2 activation as a VALUE: all pieces are multiples of 128
    # lanes, so the concat is pure vreg placement (no stores, no memsets).
    zlead = jnp.zeros((C2, s3), cdt)
    ztrail = jnp.zeros((C2, L3 - s3 - HW), cdt)
    a2p = [jnp.concatenate([zlead, a2[:, b * HW:(b + 1) * HW], ztrail], axis=1)
           for b in range(Nb)]                           # each (C2, L3)

    acc = jnp.zeros((C, NHW), jnp.float32)
    for kw in range(K3):
        shift = kw - pad3
        srcs = mask_cols(a2p, shift, col3)
        for kh in range(K3):
            off = (lead3 + kh - pad3) * W + shift
            t = kh * K3 + kw
            tap = cat_lanes([v[:, off:off + HW] for v in srcs])   # (C2, NHW)
            acc = acc + jnp.dot(w3_ref[:, t * C2:(t + 1) * C2], tap,
                                preferred_element_type=jnp.float32)
    out = jnp.maximum(acc + b3_ref[...], 0.0)             # (C, NHW) f32

    for b in range(Nb):                                   # lane-dense, NCHW-flat
        o_ref[b] = out[:, b * HW:(b + 1) * HW].astype(o_ref.dtype)


def srcnn_forward(x, params, *, compute_dtype=jnp.bfloat16, images_per_step=2):
    """Fused SRCNN forward.  x: (N, C, H, W) f32 NCHW (PyTorch layout)."""
    (w1, b1), (w2, b2), (w3, b3) = params
    N, C, H, W = x.shape
    C1, K1 = w1.shape[0], w1.shape[2]          # 64, 9
    C2 = w2.shape[0]                           # 32
    K3 = w3.shape[2]                           # 5
    pad1, pad3 = (K1 - 1) // 2, (K3 - 1) // 2
    HW = H * W

    # guard rows: >= pad+1 (every flat tap slice stays in bounds) and, when
    # cheap, a multiple that makes lead*W a multiple of 128 (aligned slices).
    q = 128 // math.gcd(W, 128)
    if q > 8:
        q = 1
    lead1 = _round_up(pad1 + 1, q)
    lead3 = _round_up(pad3 + 1, q)
    L1 = (H + 2 * lead1) * W

    Nb = max(1, min(images_per_step, N))       # images per grid step
    G = pl.cdiv(N, Nb)
    Npad = G * Nb

    R1 = _round_up(K1 * K1 * C, 16)            # layer-1 patch rows, bf16-granule

    # glue: cast once to the compute dtype, H-only zero pad, flatten spatial.
    xh = x.astype(compute_dtype)
    xh = jnp.pad(xh, ((0, Npad - N), (0, 0), (lead1, lead1), (0, 0)))
    xh = xh.reshape(Npad, C, L1)

    def flat_w(w):                             # (Co,Ci,Kh,Kw) -> (Co, Kh*Kw*Ci)
        co, ci, kh, kw = w.shape
        return jnp.transpose(w, (0, 2, 3, 1)).reshape(co, kh * kw * ci)

    w1f = jnp.pad(flat_w(w1), ((0, 0), (0, R1 - K1 * K1 * C))).astype(compute_dtype)
    w2f = w2.reshape(C2, C1).astype(compute_dtype)
    w3f = flat_w(w3).astype(compute_dtype)     # (C, K3*K3*C2)
    b1c = b1.reshape(C1, 1).astype(jnp.float32)
    b2c = b2.reshape(C2, 1).astype(jnp.float32)
    b3c = b3.reshape(C, 1).astype(jnp.float32)

    kernel = functools.partial(_srcnn_kernel, H=H, W=W, C=C, C1=C1, C2=C2,
                               K1=K1, K3=K3, Nb=Nb, lead1=lead1, lead3=lead3)

    out = pl.pallas_call(
        kernel,
        out_shape=jax.ShapeDtypeStruct((Npad, C, HW), jnp.float32),
        grid_spec=pltpu.PrefetchScalarGridSpec(
            num_scalar_prefetch=0,
            grid=(G,),
            in_specs=[
                pl.BlockSpec((Nb, C, L1), lambda n: (n, 0, 0)),
                # weights/biases: constant block index -> resident in VMEM
                pl.BlockSpec((C1, R1), lambda n: (0, 0)),
                pl.BlockSpec((C1, 1), lambda n: (0, 0)),
                pl.BlockSpec((C2, C1), lambda n: (0, 0)),
                pl.BlockSpec((C2, 1), lambda n: (0, 0)),
                pl.BlockSpec((C, K3 * K3 * C2), lambda n: (0, 0)),
                pl.BlockSpec((C, 1), lambda n: (0, 0)),
            ],
            out_specs=pl.BlockSpec((Nb, C, HW), lambda n: (n, 0, 0)),
            scratch_shapes=[
                pltpu.VMEM((R1, Nb * HW), compute_dtype),   # layer-1 im2col
            ],
        ),
        compiler_params=pltpu.CompilerParams(
            dimension_semantics=("parallel",)),
    )(xh, w1f, b1c, w2f, b2c, w3f, b3c)

    # (N, C, H*W) is already channel-first: just unflatten the spatial dims.
    return out[:N].reshape(N, C, H, W)


def srcnn_reference(x, params):
    """Pure-JAX f32 reference (NCHW lax conv) for validation."""
    out = x
    for (w, b), pad in zip(params, (4, 0, 2)):
        out = lax.conv_general_dilated(
            out, w, window_strides=(1, 1), padding=[(pad, pad), (pad, pad)],
            dimension_numbers=("NCHW", "OIHW", "NCHW"))
        out = jnp.maximum(out + b[None, :, None, None], 0.0)
    return out


def init_params(key, nb_channel=3, base_kernel=64, std=0.02):
    k0, k1 = base_kernel, base_kernel // 2
    shapes = [
        ((k0, nb_channel, 9, 9), (k0,)),
        ((k1, k0, 1, 1), (k1,)),
        ((nb_channel, k1, 5, 5), (nb_channel,)),
    ]
    params = []
    for ws, bs in shapes:
        key, sub = jax.random.split(key)
        w = std * jax.random.normal(sub, ws, dtype=jnp.float32)  # normal_init(mean=0)
        b = jnp.zeros(bs, dtype=jnp.float32)                     # bias zeroed
        params.append((w, b))
    return params


if __name__ == "__main__":
    key = jax.random.PRNGKey(0)
    kx, kp = jax.random.split(key)

    N, C, H, W = 2, 3, 16, 16
    x = jax.random.normal(kx, (N, C, H, W), dtype=jnp.float32)
    params = init_params(kp, nb_channel=C, base_kernel=64)

    y_ref = jax.block_until_ready(srcnn_reference(x, params))

    # f32 compute path: checks fused im2col / shift / mask / tap-matmul math.
    fwd_f32 = jax.jit(functools.partial(srcnn_forward, compute_dtype=jnp.float32))
    y_f32 = jax.block_until_ready(fwd_f32(x, params))
    np.testing.assert_allclose(np.asarray(y_f32), np.asarray(y_ref),
                               rtol=1e-2, atol=1e-3)

    # bf16 compute path (default; MXU-native, f32 accumulation).
    y_bf16 = jax.block_until_ready(jax.jit(srcnn_forward)(x, params))
    np.testing.assert_allclose(np.asarray(y_bf16), np.asarray(y_ref),
                               rtol=6e-2, atol=5e-3)

    assert y_bf16.shape == (N, C, H, W)
    print("KERNEL_OK")
</pallas_src>

<mosaic_0001>
module attributes {stable_mosaic.version = 11 : i64} {
  func.func @_srcnn_kernel(%arg0: i32, %arg1: memref<2x3x512xf32, #tpu.memory_space<vmem>>, %arg2: memref<64x256xf32, #tpu.memory_space<vmem>>, %arg3: memref<64x1xf32, #tpu.memory_space<vmem>>, %arg4: memref<32x64xf32, #tpu.memory_space<vmem>>, %arg5: memref<32x1xf32, #tpu.memory_space<vmem>>, %arg6: memref<3x800xf32, #tpu.memory_space<vmem>>, %arg7: memref<3x1xf32, #tpu.memory_space<vmem>>, %arg8: memref<2x3x256xf32, #tpu.memory_space<vmem>>, %arg9: memref<256x512xf32, #tpu.memory_space<vmem>>) attributes {dimension_semantics = [#tpu.dimension_semantics<parallel>], iteration_bounds = array<i64: 1>, scalar_prefetch = 0 : i64, scratch_operands = 1 : i64, tpu.core_type = #tpu.core_type<tc>, window_params = [{transform_indices = @transform_0, window_bounds = array<i64: 2, 3, 512>}, {pipeline_mode = #tpu.pipeline_mode<synchronous>, transform_indices = @transform_1, window_bounds = array<i64: 64, 256>}, {pipeline_mode = #tpu.pipeline_mode<synchronous>, transform_indices = @transform_2, window_bounds = array<i64: 64, 1>}, {pipeline_mode = #tpu.pipeline_mode<synchronous>, transform_indices = @transform_3, window_bounds = array<i64: 32, 64>}, {pipeline_mode = #tpu.pipeline_mode<synchronous>, transform_indices = @transform_4, window_bounds = array<i64: 32, 1>}, {pipeline_mode = #tpu.pipeline_mode<synchronous>, transform_indices = @transform_5, window_bounds = array<i64: 3, 800>}, {pipeline_mode = #tpu.pipeline_mode<synchronous>, transform_indices = @transform_6, window_bounds = array<i64: 3, 1>}, {transform_indices = @transform_7, window_bounds = array<i64: 2, 3, 256>}]} {
    %0 = tpu.iota {dimensions = array<i32: 1>} : vector<1x512xi32>
    %c16_i32 = arith.constant 16 : i32
    %c0_i32 = arith.constant 0 : i32
    %1 = arith.cmpi eq, %c16_i32, %c0_i32 : i32
    %c1_i32 = arith.constant 1 : i32
    %2 = arith.select %1, %c1_i32, %c16_i32 : i32
    %3 = vector.broadcast %2 : i32 to vector<1x512xi32>
    %4 = arith.remsi %0, %3 : vector<1x512xi32>
    %c0_i32_0 = arith.constant 0 : i32
    %5 = vector.broadcast %c0_i32_0 : i32 to vector<1x512xi32>
    %6 = arith.cmpi ne, %4, %5 : vector<1x512xi32>
    %c0_i32_1 = arith.constant 0 : i32
    %7 = vector.broadcast %c0_i32_1 : i32 to vector<1x512xi32>
    %8 = arith.cmpi slt, %4, %7 : vector<1x512xi32>
    %c0_i32_2 = arith.constant 0 : i32
    %9 = arith.cmpi slt, %2, %c0_i32_2 : i32
    %10 = vector.broadcast %9 : i1 to vector<1x512xi1>
    %11 = vector.broadcast %10 : vector<1x512xi1> to vector<1x512xi1>
    %12 = arith.xori %8, %11 : vector<1x512xi1>
    %13 = arith.andi %12, %6 : vector<1x512xi1>
    %14 = vector.broadcast %2 : i32 to vector<1x512xi32>
    %15 = arith.addi %4, %14 : vector<1x512xi32>
    %16 = arith.select %13, %15, %4 : vector<1x512xi1>, vector<1x512xi32>
    %17 = tpu.iota {dimensions = array<i32: 1>} : vector<1x512xi32>
    %c16_i32_3 = arith.constant 16 : i32
    %c0_i32_4 = arith.constant 0 : i32
    %18 = arith.cmpi eq, %c16_i32_3, %c0_i32_4 : i32
    %c1_i32_5 = arith.constant 1 : i32
    %19 = arith.select %18, %c1_i32_5, %c16_i32_3 : i32
    %20 = vector.broadcast %19 : i32 to vector<1x512xi32>
    %21 = arith.remsi %17, %20 : vector<1x512xi32>
    %c0_i32_6 = arith.constant 0 : i32
    %22 = vector.broadcast %c0_i32_6 : i32 to vector<1x512xi32>
    %23 = arith.cmpi ne, %21, %22 : vector<1x512xi32>
    %c0_i32_7 = arith.constant 0 : i32
    %24 = vector.broadcast %c0_i32_7 : i32 to vector<1x512xi32>
    %25 = arith.cmpi slt, %21, %24 : vector<1x512xi32>
    %c0_i32_8 = arith.constant 0 : i32
    %26 = arith.cmpi slt, %19, %c0_i32_8 : i32
    %27 = vector.broadcast %26 : i1 to vector<1x512xi1>
    %28 = vector.broadcast %27 : vector<1x512xi1> to vector<1x512xi1>
    %29 = arith.xori %25, %28 : vector<1x512xi1>
    %30 = arith.andi %29, %23 : vector<1x512xi1>
    %31 = vector.broadcast %19 : i32 to vector<1x512xi32>
    %32 = arith.addi %21, %31 : vector<1x512xi32>
    %33 = arith.select %30, %32, %21 : vector<1x512xi1>, vector<1x512xi32>
    %c0 = arith.constant 0 : index
    %c0_9 = arith.constant 0 : index
    %c0_10 = arith.constant 0 : index
    %34 = vector.load %arg1[%c0, %c0_9, %c0_10] : memref<2x3x512xf32, #tpu.memory_space<vmem>>, vector<1x3x512xf32>
    %35 = vector.shape_cast %34 : vector<1x3x512xf32> to vector<3x512xf32>
    %c1 = arith.constant 1 : index
    %c0_11 = arith.constant 0 : index
    %c0_12 = arith.constant 0 : index
    %36 = vector.load %arg1[%c1, %c0_11, %c0_12] : memref<2x3x512xf32, #tpu.memory_space<vmem>>, vector<1x3x512xf32>
    %37 = vector.shape_cast %36 : vector<1x3x512xf32> to vector<3x512xf32>
    %c-4_i32 = arith.constant -4 : i32
    %38 = vector.broadcast %c-4_i32 : i32 to vector<1x512xi32>
    %39 = arith.subi %16, %38 : vector<1x512xi32>
    %c0_i32_13 = arith.constant 0 : i32
    %40 = vector.broadcast %c0_i32_13 : i32 to vector<1x512xi32>
    %41 = arith.cmpi sge, %39, %40 : vector<1x512xi32>
    %c-4_i32_14 = arith.constant -4 : i32
    %42 = vector.broadcast %c-4_i32_14 : i32 to vector<1x512xi32>
    %43 = arith.subi %16, %42 : vector<1x512xi32>
    %c16_i32_15 = arith.constant 16 : i32
    %44 = vector.broadcast %c16_i32_15 : i32 to vector<1x512xi32>
    %45 = arith.cmpi slt, %43, %44 : vector<1x512xi32>
    %46 = arith.andi %41, %45 : vector<1x512xi1>
    %cst = arith.constant 0.000000e+00 : f32
    %47 = vector.broadcast %cst : f32 to vector<3x512xf32>
    %48 = vector.shape_cast %46 : vector<1x512xi1> to vector<1x512xi1>
    %49 = vector.broadcast %48 : vector<1x512xi1> to vector<3x512xi1>
    %50 = arith.select %49, %35, %47 : vector<3x512xi1>, vector<3x512xf32>
    %cst_16 = arith.constant 0.000000e+00 : f32
    %51 = vector.broadcast %cst_16 : f32 to vector<3x512xf32>
    %52 = vector.shape_cast %46 : vector<1x512xi1> to vector<1x512xi1>
    %53 = vector.broadcast %52 : vector<1x512xi1> to vector<3x512xi1>
    %54 = arith.select %53, %37, %51 : vector<3x512xi1>, vector<3x512xf32>
    %55 = vector.extract_strided_slice %50 {offsets = [0, 60], sizes = [3, 256], strides = [1, 1]} : vector<3x512xf32> to vector<3x256xf32>
    %56 = vector.extract_strided_slice %54 {offsets = [0, 60], sizes = [3, 256], strides = [1, 1]} : vector<3x512xf32> to vector<3x256xf32>
    %57 = tpu.concatenate %55, %56 in 1 : vector<3x256xf32>, vector<3x256xf32> -> vector<3x512xf32>
    %c0_17 = arith.constant 0 : index
    %c0_18 = arith.constant 0 : index
    %58 = vector.load %arg9[%c0_17, %c0_18] : memref<256x512xf32, #tpu.memory_space<vmem>>, vector<3x512xf32>
    tpu.vector_store %arg9[%c0_17, %c0_18], %57 {strides = array<i32>} : memref<256x512xf32, #tpu.memory_space<vmem>>, vector<3x512xf32>,
    %59 = vector.extract_strided_slice %50 {offsets = [0, 76], sizes = [3, 256], strides = [1, 1]} : vector<3x512xf32> to vector<3x256xf32>
    %60 = vector.extract_strided_slice %54 {offsets = [0, 76], sizes = [3, 256], strides = [1, 1]} : vector<3x512xf32> to vector<3x256xf32>
    %61 = tpu.concatenate %59, %60 in 1 : vector<3x256xf32>, vector<3x256xf32> -> vector<3x512xf32>
    %c27 = arith.constant 27 : index
    %c0_19 = arith.constant 0 : index
    %62 = vector.load %arg9[%c27, %c0_19] : memref<256x512xf32, #tpu.memory_space<vmem>>, vector<3x512xf32>
    tpu.vector_store %arg9[%c27, %c0_19], %61 {strides = array<i32>} : memref<256x512xf32, #tpu.memory_space<vmem>>, vector<3x512xf32>,
    %63 = vector.extract_strided_slice %50 {offsets = [0, 92], sizes = [3, 256], strides = [1, 1]} : vector<3x512xf32> to vector<3x256xf32>
    %64 = vector.extract_strided_slice %54 {offsets = [0, 92], sizes = [3, 256], strides = [1, 1]} : vector<3x512xf32> to vector<3x256xf32>
    %65 = tpu.concatenate %63, %64 in 1 : vector<3x256xf32>, vector<3x256xf32> -> vector<3x512xf32>
    %c54 = arith.constant 54 : index
    %c0_20 = arith.constant 0 : index
    %66 = vector.load %arg9[%c54, %c0_20] : memref<256x512xf32, #tpu.memory_space<vmem>>, vector<3x512xf32>
    tpu.vector_store %arg9[%c54, %c0_20], %65 {strides = array<i32>} : memref<256x512xf32, #tpu.memory_space<vmem>>, vector<3x512xf32>,
    %67 = vector.extract_strided_slice %50 {offsets = [0, 108], sizes = [3, 256], strides = [1, 1]} : vector<3x512xf32> to vector<3x256xf32>
    %68 = vector.extract_strided_slice %54 {offsets = [0, 108], sizes = [3, 256], strides = [1, 1]} : vector<3x512xf32> to vector<3x256xf32>
    %69 = tpu.concatenate %67, %68 in 1 : vector<3x256xf32>, vector<3x256xf32> -> vector<3x512xf32>
    %c81 = arith.constant 81 : index
    %c0_21 = arith.constant 0 : index
    %70 = vector.load %arg9[%c81, %c0_21] : memref<256x512xf32, #tpu.memory_space<vmem>>, vector<3x512xf32>
    tpu.vector_store %arg9[%c81, %c0_21], %69 {strides = array<i32>} : memref<256x512xf32, #tpu.memory_space<vmem>>, vector<3x512xf32>,
    %71 = vector.extract_strided_slice %50 {offsets = [0, 124], sizes = [3, 256], strides = [1, 1]} : vector<3x512xf32> to vector<3x256xf32>
    %72 = vector.extract_strided_slice %54 {offsets = [0, 124], sizes = [3, 256], strides = [1, 1]} : vector<3x512xf32> to vector<3x256xf32>
    %73 = tpu.concatenate %71, %72 in 1 : vector<3x256xf32>, vector<3x256xf32> -> vector<3x512xf32>
    %c108 = arith.constant 108 : index
    %c0_22 = arith.constant 0 : index
    %74 = vector.load %arg9[%c108, %c0_22] : memref<256x512xf32, #tpu.memory_space<vmem>>, vector<3x512xf32>
    tpu.vector_store %arg9[%c108, %c0_22], %73 {strides = array<i32>} : memref<256x512xf32, #tpu.memory_space<vmem>>, vector<3x512xf32>,
    %75 = vector.extract_strided_slice %50 {offsets = [0, 140], sizes = [3, 256], strides = [1, 1]} : vector<3x512xf32> to vector<3x256xf32>
    %76 = vector.extract_strided_slice %54 {offsets = [0, 140], sizes = [3, 256], strides = [1, 1]} : vector<3x512xf32> to vector<3x256xf32>
    %77 = tpu.concatenate %75, %76 in 1 : vector<3x256xf32>, vector<3x256xf32> -> vector<3x512xf32>
    %c135 = arith.constant 135 : index
    %c0_23 = arith.constant 0 : index
    %78 = vector.load %arg9[%c135, %c0_23] : memref<256x512xf32, #tpu.memory_space<vmem>>, vector<3x512xf32>
    tpu.vector_store %arg9[%c135, %c0_23], %77 {strides = array<i32>} : memref<256x512xf32, #tpu.memory_space<vmem>>, vector<3x512xf32>,
    %79 = vector.extract_strided_slice %50 {offsets = [0, 156], sizes = [3, 256], strides = [1, 1]} : vector<3x512xf32> to vector<3x256xf32>
    %80 = vector.extract_strided_slice %54 {offsets = [0, 156], sizes = [3, 256], strides = [1, 1]} : vector<3x512xf32> to vector<3x256xf32>
    %81 = tpu.concatenate %79, %80 in 1 : vector<3x256xf32>, vector<3x256xf32> -> vector<3x512xf32>
    %c162 = arith.constant 162 : index
    %c0_24 = arith.constant 0 : index
    %82 = vector.load %arg9[%c162, %c0_24] : memref<256x512xf32, #tpu.memory_space<vmem>>, vector<3x512xf32>
    tpu.vector_store %arg9[%c162, %c0_24], %81 {strides = array<i32>} : memref<256x512xf32, #tpu.memory_space<vmem>>, vector<3x512xf32>,
    %83 = vector.extract_strided_slice %50 {offsets = [0, 172], sizes = [3, 256], strides = [1, 1]} : vector<3x512xf32> to vector<3x256xf32>
    %84 = vector.extract_strided_slice %54 {offsets = [0, 172], sizes = [3, 256], strides = [1, 1]} : vector<3x512xf32> to vector<3x256xf32>
    %85 = tpu.concatenate %83, %84 in 1 : vector<3x256xf32>, vector<3x256xf32> -> vector<3x512xf32>
    %c189 = arith.constant 189 : index
    %c0_25 = arith.constant 0 : index
    %86 = vector.load %arg9[%c189, %c0_25] : memref<256x512xf32, #tpu.memory_space<vmem>>, vector<3x512xf32>
    tpu.vector_store %arg9[%c189, %c0_25], %85 {strides = array<i32>} : memref<256x512xf32, #tpu.memory_space<vmem>>, vector<3x512xf32>,
    %87 = vector.extract_strided_slice %50 {offsets = [0, 188], sizes = [3, 256], strides = [1, 1]} : vector<3x512xf32> to vector<3x256xf32>
    %88 = vector.extract_strided_slice %54 {offsets = [0, 188], sizes = [3, 256], strides = [1, 1]} : vector<3x512xf32> to vector<3x256xf32>
    %89 = tpu.concatenate %87, %88 in 1 : vector<3x256xf32>, vector<3x256xf32> -> vector<3x512xf32>
    %c216 = arith.constant 216 : index
    %c0_26 = arith.constant 0 : index
    %90 = vector.load %arg9[%c216, %c0_26] : memref<256x512xf32, #tpu.memory_space<vmem>>, vector<3x512xf32>
    tpu.vector_store %arg9[%c216, %c0_26], %89 {strides = array<i32>} : memref<256x512xf32, #tpu.memory_space<vmem>>, vector<3x512xf32>,
    %c-3_i32 = arith.constant -3 : i32
    %91 = vector.broadcast %c-3_i32 : i32 to vector<1x512xi32>
    %92 = arith.subi %16, %91 : vector<1x512xi32>
    %c0_i32_27 = arith.constant 0 : i32
    %93 = vector.broadcast %c0_i32_27 : i32 to vector<1x512xi32>
    %94 = arith.cmpi sge, %92, %93 : vector<1x512xi32>
    %c-3_i32_28 = arith.constant -3 : i32
    %95 = vector.broadcast %c-3_i32_28 : i32 to vector<1x512xi32>
    %96 = arith.subi %16, %95 : vector<1x512xi32>
    %c16_i32_29 = arith.constant 16 : i32
    %97 = vector.broadcast %c16_i32_29 : i32 to vector<1x512xi32>
    %98 = arith.cmpi slt, %96, %97 : vector<1x512xi32>
    %99 = arith.andi %94, %98 : vector<1x512xi1>
    %cst_30 = arith.constant 0.000000e+00 : f32
    %100 = vector.broadcast %cst_30 : f32 to vector<3x512xf32>
    %101 = vector.shape_cast %99 : vector<1x512xi1> to vector<1x512xi1>
    %102 = vector.broadcast %101 : vector<1x512xi1> to vector<3x512xi1>
    %103 = arith.select %102, %35, %100 : vector<3x512xi1>, vector<3x512xf32>
    %cst_31 = arith.constant 0.000000e+00 : f32
    %104 = vector.broadcast %cst_31 : f32 to vector<3x512xf32>
    %105 = vector.shape_cast %99 : vector<1x512xi1> to vector<1x512xi1>
    %106 = vector.broadcast %105 : vector<1x512xi1> to vector<3x512xi1>
    %107 = arith.select %106, %37, %104 : vector<3x512xi1>, vector<3x512xf32>
    %108 = vector.extract_strided_slice %103 {offsets = [0, 61], sizes = [3, 256], strides = [1, 1]} : vector<3x512xf32> to vector<3x256xf32>
    %109 = vector.extract_strided_slice %107 {offsets = [0, 61], sizes = [3, 256], strides = [1, 1]} : vector<3x512xf32> to vector<3x256xf32>
    %110 = tpu.concatenate %108, %109 in 1 : vector<3x256xf32>, vector<3x256xf32> -> vector<3x512xf32>
    %c3 = arith.constant 3 : index
    %c0_32 = arith.constant 0 : index
    %111 = vector.load %arg9[%c3, %c0_32] : memref<256x512xf32, #tpu.memory_space<vmem>>, vector<3x512xf32>
    tpu.vector_store %arg9[%c3, %c0_32], %110 {strides = array<i32>} : memref<256x512xf32, #tpu.memory_space<vmem>>, vector<3x512xf32>,
    %112 = vector.extract_strided_slice %103 {offsets = [0, 77], sizes = [3, 256], strides = [1, 1]} : vector<3x512xf32> to vector<3x256xf32>
    %113 = vector.extract_strided_slice %107 {offsets = [0, 77], sizes = [3, 256], strides = [1, 1]} : vector<3x512xf32> to vector<3x256xf32>
    %114 = tpu.concatenate %112, %113 in 1 : vector<3x256xf32>, vector<3x256xf32> -> vector<3x512xf32>
    %c30 = arith.constant 30 : index
    %c0_33 = arith.constant 0 : index
    %115 = vector.load %arg9[%c30, %c0_33] : memref<256x512xf32, #tpu.memory_space<vmem>>, vector<3x512xf32>
    tpu.vector_store %arg9[%c30, %c0_33], %114 {strides = array<i32>} : memref<256x512xf32, #tpu.memory_space<vmem>>, vector<3x512xf32>,
    %116 = vector.extract_strided_slice %103 {offsets = [0, 93], sizes = [3, 256], strides = [1, 1]} : vector<3x512xf32> to vector<3x256xf32>
    %117 = vector.extract_strided_slice %107 {offsets = [0, 93], sizes = [3, 256], strides = [1, 1]} : vector<3x512xf32> to vector<3x256xf32>
    %118 = tpu.concatenate %116, %117 in 1 : vector<3x256xf32>, vector<3x256xf32> -> vector<3x512xf32>
    %c57 = arith.constant 57 : index
    %c0_34 = arith.constant 0 : index
    %119 = vector.load %arg9[%c57, %c0_34] : memref<256x512xf32, #tpu.memory_space<vmem>>, vector<3x512xf32>
    tpu.vector_store %arg9[%c57, %c0_34], %118 {strides = array<i32>} : memref<256x512xf32, #tpu.memory_space<vmem>>, vector<3x512xf32>,
    %120 = vector.extract_strided_slice %103 {offsets = [0, 109], sizes = [3, 256], strides = [1, 1]} : vector<3x512xf32> to vector<3x256xf32>
    %121 = vector.extract_strided_slice %107 {offsets = [0, 109], sizes = [3, 256], strides = [1, 1]} : vector<3x512xf32> to vector<3x256xf32>
    %122 = tpu.concatenate %120, %121 in 1 : vector<3x256xf32>, vector<3x256xf32> -> vector<3x512xf32>
    %c84 = arith.constant 84 : index
    %c0_35 = arith.constant 0 : index
    %123 = vector.load %arg9[%c84, %c0_35] : memref<256x512xf32, #tpu.memory_space<vmem>>, vector<3x512xf32>
    tpu.vector_store %arg9[%c84, %c0_35], %122 {strides = array<i32>} : memref<256x512xf32, #tpu.memory_space<vmem>>, vector<3x512xf32>,
    %124 = vector.extract_strided_slice %103 {offsets = [0, 125], sizes = [3, 256], strides = [1, 1]} : vector<3x512xf32> to vector<3x256xf32>
    %125 = vector.extract_strided_slice %107 {offsets = [0, 125], sizes = [3, 256], strides = [1, 1]} : vector<3x512xf32> to vector<3x256xf32>
    %126 = tpu.concatenate %124, %125 in 1 : vector<3x256xf32>, vector<3x256xf32> -> vector<3x512xf32>
    %c111 = arith.constant 111 : index
    %c0_36 = arith.constant 0 : index
    %127 = vector.load %arg9[%c111, %c0_36] : memref<256x512xf32, #tpu.memory_space<vmem>>, vector<3x512xf32>
    tpu.vector_store %arg9[%c111, %c0_36], %126 {strides = array<i32>} : memref<256x512xf32, #tpu.memory_space<vmem>>, vector<3x512xf32>,
    %128 = vector.extract_strided_slice %103 {offsets = [0, 141], sizes = [3, 256], strides = [1, 1]} : vector<3x512xf32> to vector<3x256xf32>
    %129 = vector.extract_strided_slice %107 {offsets = [0, 141], sizes = [3, 256], strides = [1, 1]} : vector<3x512xf32> to vector<3x256xf32>
    %130 = tpu.concatenate %128, %129 in 1 : vector<3x256xf32>, vector<3x256xf32> -> vector<3x512xf32>
    %c138 = arith.constant 138 : index
    %c0_37 = arith.constant 0 : index
    %131 = vector.load %arg9[%c138, %c0_37] : memref<256x512xf32, #tpu.memory_space<vmem>>, vector<3x512xf32>
    tpu.vector_store %arg9[%c138, %c0_37], %130 {strides = array<i32>} : memref<256x512xf32, #tpu.memory_space<vmem>>, vector<3x512xf32>,
    %132 = vector.extract_strided_slice %103 {offsets = [0, 157], sizes = [3, 256], strides = [1, 1]} : vector<3x512xf32> to vector<3x256xf32>
    %133 = vector.extract_strided_slice %107 {offsets = [0, 157], sizes = [3, 256], strides = [1, 1]} : vector<3x512xf32> to vector<3x256xf32>
    %134 = tpu.concatenate %132, %133 in 1 : vector<3x256xf32>, vector<3x256xf32> -> vector<3x512xf32>
    %c165 = arith.constant 165 : index
    %c0_38 = arith.constant 0 : index
    %135 = vector.load %arg9[%c165, %c0_38] : memref<256x512xf32, #tpu.memory_space<vmem>>, vector<3x512xf32>
    tpu.vector_store %arg9[%c165, %c0_38], %134 {strides = array<i32>} : memref<256x512xf32, #tpu.memory_space<vmem>>, vector<3x512xf32>,
    %136 = vector.extract_strided_slice %103 {offsets = [0, 173], sizes = [3, 256], strides = [1, 1]} : vector<3x512xf32> to vector<3x256xf32>
    %137 = vector.extract_strided_slice %107 {offsets = [0, 173], sizes = [3, 256], strides = [1, 1]} : vector<3x512xf32> to vector<3x256xf32>
    %138 = tpu.concatenate %136, %137 in 1 : vector<3x256xf32>, vector<3x256xf32> -> vector<3x512xf32>
    %c192 = arith.constant 192 : index
    %c0_39 = arith.constant 0 : index
    %139 = vector.load %arg9[%c192, %c0_39] : memref<256x512xf32, #tpu.memory_space<vmem>>, vector<3x512xf32>
    tpu.vector_store %arg9[%c192, %c0_39], %138 {strides = array<i32>} : memref<256x512xf32, #tpu.memory_space<vmem>>, vector<3x512xf32>,
    %140 = vector.extract_strided_slice %103 {offsets = [0, 189], sizes = [3, 256], strides = [1, 1]} : vector<3x512xf32> to vector<3x256xf32>
    %141 = vector.extract_strided_slice %107 {offsets = [0, 189], sizes = [3, 256], strides = [1, 1]} : vector<3x512xf32> to vector<3x256xf32>
    %142 = tpu.concatenate %140, %141 in 1 : vector<3x256xf32>, vector<3x256xf32> -> vector<3x512xf32>
    %c219 = arith.constant 219 : index
    %c0_40 = arith.constant 0 : index
    %143 = vector.load %arg9[%c219, %c0_40] : memref<256x512xf32, #tpu.memory_space<vmem>>, vector<3x512xf32>
    tpu.vector_store %arg9[%c219, %c0_40], %142 {strides = array<i32>} : memref<256x512xf32, #tpu.memory_space<vmem>>, vector<3x512xf32>,
    %c-2_i32 = arith.constant -2 : i32
    %144 = vector.broadcast %c-2_i32 : i32 to vector<1x512xi32>
    %145 = arith.subi %16, %144 : vector<1x512xi32>
    %c0_i32_41 = arith.constant 0 : i32
    %146 = vector.broadcast %c0_i32_41 : i32 to vector<1x512xi32>
    %147 = arith.cmpi sge, %145, %146 : vector<1x512xi32>
    %c-2_i32_42 = arith.constant -2 : i32
    %148 = vector.broadcast %c-2_i32_42 : i32 to vector<1x512xi32>
    %149 = arith.subi %16, %148 : vector<1x512xi32>
    %c16_i32_43 = arith.constant 16 : i32
    %150 = vector.broadcast %c16_i32_43 : i32 to vector<1x512xi32>
    %151 = arith.cmpi slt, %149, %150 : vector<1x512xi32>
    %152 = arith.andi %147, %151 : vector<1x512xi1>
    %cst_44 = arith.constant 0.000000e+00 : f32
    %153 = vector.broadcast %cst_44 : f32 to vector<3x512xf32>
    %154 = vector.shape_cast %152 : vector<1x512xi1> to vector<1x512xi1>
    %155 = vector.broadcast %154 : vector<1x512xi1> to vector<3x512xi1>
    %156 = arith.select %155, %35, %153 : vector<3x512xi1>, vector<3x512xf32>
    %cst_45 = arith.constant 0.000000e+00 : f32
    %157 = vector.broadcast %cst_45 : f32 to vector<3x512xf32>
    %158 = vector.shape_cast %152 : vector<1x512xi1> to vector<1x512xi1>
    %159 = vector.broadcast %158 : vector<1x512xi1> to vector<3x512xi1>
    %160 = arith.select %159, %37, %157 : vector<3x512xi1>, vector<3x512xf32>
    %161 = vector.extract_strided_slice %156 {offsets = [0, 62], sizes = [3, 256], strides = [1, 1]} : vector<3x512xf32> to vector<3x256xf32>
    %162 = vector.extract_strided_slice %160 {offsets = [0, 62], sizes = [3, 256], strides = [1, 1]} : vector<3x512xf32> to vector<3x256xf32>
    %163 = tpu.concatenate %161, %162 in 1 : vector<3x256xf32>, vector<3x256xf32> -> vector<3x512xf32>
    %c6 = arith.constant 6 : index
    %c0_46 = arith.constant 0 : index
    %164 = vector.load %arg9[%c6, %c0_46] : memref<256x512xf32, #tpu.memory_space<vmem>>, vector<3x512xf32>
    tpu.vector_store %arg9[%c6, %c0_46], %163 {strides = array<i32>} : memref<256x512xf32, #tpu.memory_space<vmem>>, vector<3x512xf32>,
    %165 = vector.extract_strided_slice %156 {offsets = [0, 78], sizes = [3, 256], strides = [1, 1]} : vector<3x512xf32> to vector<3x256xf32>
    %166 = vector.extract_strided_slice %160 {offsets = [0, 78], sizes = [3, 256], strides = [1, 1]} : vector<3x512xf32> to vector<3x256xf32>
    %167 = tpu.concatenate %165, %166 in 1 : vector<3x256xf32>, vector<3x256xf32> -> vector<3x512xf32>
    %c33 = arith.constant 33 : index
    %c0_47 = arith.constant 0 : index
    %168 = vector.load %arg9[%c33, %c0_47] : memref<256x512xf32, #tpu.memory_space<vmem>>, vector<3x512xf32>
    tpu.vector_store %arg9[%c33, %c0_47], %167 {strides = array<i32>} : memref<256x512xf32, #tpu.memory_space<vmem>>, vector<3x512xf32>,
    %169 = vector.extract_strided_slice %156 {offsets = [0, 94], sizes = [3, 256], strides = [1, 1]} : vector<3x512xf32> to vector<3x256xf32>
    %170 = vector.extract_strided_slice %160 {offsets = [0, 94], sizes = [3, 256], strides = [1, 1]} : vector<3x512xf32> to vector<3x256xf32>
    %171 = tpu.concatenate %169, %170 in 1 : vector<3x256xf32>, vector<3x256xf32> -> vector<3x512xf32>
    %c60 = arith.constant 60 : index
    %c0_48 = arith.constant 0 : index
    %172 = vector.load %arg9[%c60, %c0_48] : memref<256x512xf32, #tpu.memory_space<vmem>>, vector<3x512xf32>
    tpu.vector_store %arg9[%c60, %c0_48], %171 {strides = array<i32>} : memref<256x512xf32, #tpu.memory_space<vmem>>, vector<3x512xf32>,
    %173 = vector.extract_strided_slice %156 {offsets = [0, 110], sizes = [3, 256], strides = [1, 1]} : vector<3x512xf32> to vector<3x256xf32>
    %174 = vector.extract_strided_slice %160 {offsets = [0, 110], sizes = [3, 256], strides = [1, 1]} : vector<3x512xf32> to vector<3x256xf32>
    %175 = tpu.concatenate %173, %174 in 1 : vector<3x256xf32>, vector<3x256xf32> -> vector<3x512xf32>
    %c87 = arith.constant 87 : index
    %c0_49 = arith.constant 0 : index
    %176 = vector.load %arg9[%c87, %c0_49] : memref<256x512xf32, #tpu.memory_space<vmem>>, vector<3x512xf32>
    tpu.vector_store %arg9[%c87, %c0_49], %175 {strides = array<i32>} : memref<256x512xf32, #tpu.memory_space<vmem>>, vector<3x512xf32>,
    %177 = vector.extract_strided_slice %156 {offsets = [0, 126], sizes = [3, 256], strides = [1, 1]} : vector<3x512xf32> to vector<3x256xf32>
    %178 = vector.extract_strided_slice %160 {offsets = [0, 126], sizes = [3, 256], strides = [1, 1]} : vector<3x512xf32> to vector<3x256xf32>
    %179 = tpu.concatenate %177, %178 in 1 : vector<3x256xf32>, vector<3x256xf32> -> vector<3x512xf32>
    %c114 = arith.constant 114 : index
    %c0_50 = arith.constant 0 : index
    %180 = vector.load %arg9[%c114, %c0_50] : memref<256x512xf32, #tpu.memory_space<vmem>>, vector<3x512xf32>
    tpu.vector_store %arg9[%c114, %c0_50], %179 {strides = array<i32>} : memref<256x512xf32, #tpu.memory_space<vmem>>, vector<3x512xf32>,
    %181 = vector.extract_strided_slice %156 {offsets = [0, 142], sizes = [3, 256], strides = [1, 1]} : vector<3x512xf32> to vector<3x256xf32>
    %182 = vector.extract_strided_slice %160 {offsets = [0, 142], sizes = [3, 256], strides = [1, 1]} : vector<3x512xf32> to vector<3x256xf32>
    %183 = tpu.concatenate %181, %182 in 1 : vector<3x256xf32>, vector<3x256xf32> -> vector<3x512xf32>
    %c141 = arith.constant 141 : index
    %c0_51 = arith.constant 0 : index
    %184 = vector.load %arg9[%c141, %c0_51] : memref<256x512xf32, #tpu.memory_space<vmem>>, vector<3x512xf32>
    tpu.vector_store %arg9[%c141, %c0_51], %183 {strides = array<i32>} : memref<256x512xf32, #tpu.memory_space<vmem>>, vector<3x512xf32>,
    %185 = vector.extract_strided_slice %156 {offsets = [0, 158], sizes = [3, 256], strides = [1, 1]} : vector<3x512xf32> to vector<3x256xf32>
    %186 = vector.extract_strided_slice %160 {offsets = [0, 158], sizes = [3, 256], strides = [1, 1]} : vector<3x512xf32> to vector<3x256xf32>
    %187 = tpu.concatenate %185, %186 in 1 : vector<3x256xf32>, vector<3x256xf32> -> vector<3x512xf32>
    %c168 = arith.constant 168 : index
    %c0_52 = arith.constant 0 : index
    %188 = vector.load %arg9[%c168, %c0_52] : memref<256x512xf32, #tpu.memory_space<vmem>>, vector<3x512xf32>
    tpu.vector_store %arg9[%c168, %c0_52], %187 {strides = array<i32>} : memref<256x512xf32, #tpu.memory_space<vmem>>, vector<3x512xf32>,
    %189 = vector.extract_strided_slice %156 {offsets = [0, 174], sizes = [3, 256], strides = [1, 1]} : vector<3x512xf32> to vector<3x256xf32>
    %190 = vector.extract_strided_slice %160 {offsets = [0, 174], sizes = [3, 256], strides = [1, 1]} : vector<3x512xf32> to vector<3x256xf32>
    %191 = tpu.concatenate %189, %190 in 1 : vector<3x256xf32>, vector<3x256xf32> -> vector<3x512xf32>
    %c195 = arith.constant 195 : index
    %c0_53 = arith.constant 0 : index
    %192 = vector.load %arg9[%c195, %c0_53] : memref<256x512xf32, #tpu.memory_space<vmem>>, vector<3x512xf32>
    tpu.vector_store %arg9[%c195, %c0_53], %191 {strides = array<i32>} : memref<256x512xf32, #tpu.memory_space<vmem>>, vector<3x512xf32>,
    %193 = vector.extract_strided_slice %156 {offsets = [0, 190], sizes = [3, 256], strides = [1, 1]} : vector<3x512xf32> to vector<3x256xf32>
    %194 = vector.extract_strided_slice %160 {offsets = [0, 190], sizes = [3, 256], strides = [1, 1]} : vector<3x512xf32> to vector<3x256xf32>
    %195 = tpu.concatenate %193, %194 in 1 : vector<3x256xf32>, vector<3x256xf32> -> vector<3x512xf32>
    %c222 = arith.constant 222 : index
    %c0_54 = arith.constant 0 : index
    %196 = vector.load %arg9[%c222, %c0_54] : memref<256x512xf32, #tpu.memory_space<vmem>>, vector<3x512xf32>
    tpu.vector_store %arg9[%c222, %c0_54], %195 {strides = array<i32>} : memref<256x512xf32, #tpu.memory_space<vmem>>, vector<3x512xf32>,
    %c-1_i32 = arith.constant -1 : i32
    %197 = vector.broadcast %c-1_i32 : i32 to vector<1x512xi32>
    %198 = arith.subi %16, %197 : vector<1x512xi32>
    %c0_i32_55 = arith.constant 0 : i32
    %199 = vector.broadcast %c0_i32_55 : i32 to vector<1x512xi32>
    %200 = arith.cmpi sge, %198, %199 : vector<1x512xi32>
    %c-1_i32_56 = arith.constant -1 : i32
    %201 = vector.broadcast %c-1_i32_56 : i32 to vector<1x512xi32>
    %202 = arith.subi %16, %201 : vector<1x512xi32>
    %c16_i32_57 = arith.constant 16 : i32
    %203 = vector.broadcast %c16_i32_57 : i32 to vector<1x512xi32>
    %204 = arith.cmpi slt, %202, %203 : vector<1x512xi32>
    %205 = arith.andi %200, %204 : vector<1x512xi1>
    %cst_58 = arith.constant 0.000000e+00 : f32
    %206 = vector.broadcast %cst_58 : f32 to vector<3x512xf32>
    %207 = vector.shape_cast %205 : vector<1x512xi1> to vector<1x512xi1>
    %208 = vector.broadcast %207 : vector<1x512xi1> to vector<3x512xi1>
    %209 = arith.select %208, %35, %206 : vector<3x512xi1>, vector<3x512xf32>
    %cst_59 = arith.constant 0.000000e+00 : f32
    %210 = vector.broadcast %cst_59 : f32 to vector<3x512xf32>
    %211 = vector.shape_cast %205 : vector<1x512xi1> to vector<1x512xi1>
    %212 = vector.broadcast %211 : vector<1x512xi1> to vector<3x512xi1>
    %213 = arith.select %212, %37, %210 : vector<3x512xi1>, vector<3x512xf32>
    %214 = vector.extract_strided_slice %209 {offsets = [0, 63], sizes = [3, 256], strides = [1, 1]} : vector<3x512xf32> to vector<3x256xf32>
    %215 = vector.extract_strided_slice %213 {offsets = [0, 63], sizes = [3, 256], strides = [1, 1]} : vector<3x512xf32> to vector<3x256xf32>
    %216 = tpu.concatenate %214, %215 in 1 : vector<3x256xf32>, vector<3x256xf32> -> vector<3x512xf32>
    %c9 = arith.constant 9 : index
    %c0_60 = arith.constant 0 : index
    %217 = vector.load %arg9[%c9, %c0_60] : memref<256x512xf32, #tpu.memory_space<vmem>>, vector<3x512xf32>
    tpu.vector_store %arg9[%c9, %c0_60], %216 {strides = array<i32>} : memref<256x512xf32, #tpu.memory_space<vmem>>, vector<3x512xf32>,
    %218 = vector.extract_strided_slice %209 {offsets = [0, 79], sizes = [3, 256], strides = [1, 1]} : vector<3x512xf32> to vector<3x256xf32>
    %219 = vector.extract_strided_slice %213 {offsets = [0, 79], sizes = [3, 256], strides = [1, 1]} : vector<3x512xf32> to vector<3x256xf32>
    %220 = tpu.concatenate %218, %219 in 1 : vector<3x256xf32>, vector<3x256xf32> -> vector<3x512xf32>
    %c36 = arith.constant 36 : index
    %c0_61 = arith.constant 0 : index
    %221 = vector.load %arg9[%c36, %c0_61] : memref<256x512xf32, #tpu.memory_space<vmem>>, vector<3x512xf32>
    tpu.vector_store %arg9[%c36, %c0_61], %220 {strides = array<i32>} : memref<256x512xf32, #tpu.memory_space<vmem>>, vector<3x512xf32>,
    %222 = vector.extract_strided_slice %209 {offsets = [0, 95], sizes = [3, 256], strides = [1, 1]} : vector<3x512xf32> to vector<3x256xf32>
    %223 = vector.extract_strided_slice %213 {offsets = [0, 95], sizes = [3, 256], strides = [1, 1]} : vector<3x512xf32> to vector<3x256xf32>
    %224 = tpu.concatenate %222, %223 in 1 : vector<3x256xf32>, vector<3x256xf32> -> vector<3x512xf32>
    %c63 = arith.constant 63 : index
    %c0_62 = arith.constant 0 : index
    %225 = vector.load %arg9[%c63, %c0_62] : memref<256x512xf32, #tpu.memory_space<vmem>>, vector<3x512xf32>
    tpu.vector_store %arg9[%c63, %c0_62], %224 {strides = array<i32>} : memref<256x512xf32, #tpu.memory_space<vmem>>, vector<3x512xf32>,
    %226 = vector.extract_strided_slice %209 {offsets = [0, 111], sizes = [3, 256], strides = [1, 1]} : vector<3x512xf32> to vector<3x256xf32>
    %227 = vector.extract_strided_slice %213 {offsets = [0, 111], sizes = [3, 256], strides = [1, 1]} : vector<3x512xf32> to vector<3x256xf32>
    %228 = tpu.concatenate %226, %227 in 1 : vector<3x256xf32>, vector<3x256xf32> -> vector<3x512xf32>
    %c90 = arith.constant 90 : index
    %c0_63 = arith.constant 0 : index
    %229 = vector.load %arg9[%c90, %c0_63] : memref<256x512xf32, #tpu.memory_space<vmem>>, vector<3x512xf32>
    tpu.vector_store %arg9[%c90, %c0_63], %228 {strides = array<i32>} : memref<256x512xf32, #tpu.memory_space<vmem>>, vector<3x512xf32>,
    %230 = vector.extract_strided_slice %209 {offsets = [0, 127], sizes = [3, 256], strides = [1, 1]} : vector<3x512xf32> to vector<3x256xf32>
    %231 = vector.extract_strided_slice %213 {offsets = [0, 127], sizes = [3, 256], strides = [1, 1]} : vector<3x512xf32> to vector<3x256xf32>
    %232 = tpu.concatenate %230, %231 in 1 : vector<3x256xf32>, vector<3x256xf32> -> vector<3x512xf32>
    %c117 = arith.constant 117 : index
    %c0_64 = arith.constant 0 : index
    %233 = vector.load %arg9[%c117, %c0_64] : memref<256x512xf32, #tpu.memory_space<vmem>>, vector<3x512xf32>
    tpu.vector_store %arg9[%c117, %c0_64], %232 {strides = array<i32>} : memref<256x512xf32, #tpu.memory_space<vmem>>, vector<3x512xf32>,
    %234 = vector.extract_strided_slice %209 {offsets = [0, 143], sizes = [3, 256], strides = [1, 1]} : vector<3x512xf32> to vector<3x256xf32>
    %235 = vector.extract_strided_slice %213 {offsets = [0, 143], sizes = [3, 256], strides = [1, 1]} : vector<3x512xf32> to vector<3x256xf32>
    %236 = tpu.concatenate %234, %235 in 1 : vector<3x256xf32>, vector<3x256xf32> -> vector<3x512xf32>
    %c144 = arith.constant 144 : index
    %c0_65 = arith.constant 0 : index
    %237 = vector.load %arg9[%c144, %c0_65] : memref<256x512xf32, #tpu.memory_space<vmem>>, vector<3x512xf32>
    tpu.vector_store %arg9[%c144, %c0_65], %236 {strides = array<i32>} : memref<256x512xf32, #tpu.memory_space<vmem>>, vector<3x512xf32>,
    %238 = vector.extract_strided_slice %209 {offsets = [0, 159], sizes = [3, 256], strides = [1, 1]} : vector<3x512xf32> to vector<3x256xf32>
    %239 = vector.extract_strided_slice %213 {offsets = [0, 159], sizes = [3, 256], strides = [1, 1]} : vector<3x512xf32> to vector<3x256xf32>
    %240 = tpu.concatenate %238, %239 in 1 : vector<3x256xf32>, vector<3x256xf32> -> vector<3x512xf32>
    %c171 = arith.constant 171 : index
    %c0_66 = arith.constant 0 : index
    %241 = vector.load %arg9[%c171, %c0_66] : memref<256x512xf32, #tpu.memory_space<vmem>>, vector<3x512xf32>
    tpu.vector_store %arg9[%c171, %c0_66], %240 {strides = array<i32>} : memref<256x512xf32, #tpu.memory_space<vmem>>, vector<3x512xf32>,
    %242 = vector.extract_strided_slice %209 {offsets = [0, 175], sizes = [3, 256], strides = [1, 1]} : vector<3x512xf32> to vector<3x256xf32>
    %243 = vector.extract_strided_slice %213 {offsets = [0, 175], sizes = [3, 256], strides = [1, 1]} : vector<3x512xf32> to vector<3x256xf32>
    %244 = tpu.concatenate %242, %243 in 1 : vector<3x256xf32>, vector<3x256xf32> -> vector<3x512xf32>
    %c198 = arith.constant 198 : index
    %c0_67 = arith.constant 0 : index
    %245 = vector.load %arg9[%c198, %c0_67] : memref<256x512xf32, #tpu.memory_space<vmem>>, vector<3x512xf32>
    tpu.vector_store %arg9[%c198, %c0_67], %244 {strides = array<i32>} : memref<256x512xf32, #tpu.memory_space<vmem>>, vector<3x512xf32>,
    %246 = vector.extract_strided_slice %209 {offsets = [0, 191], sizes = [3, 256], strides = [1, 1]} : vector<3x512xf32> to vector<3x256xf32>
    %247 = vector.extract_strided_slice %213 {offsets = [0, 191], sizes = [3, 256], strides = [1, 1]} : vector<3x512xf32> to vector<3x256xf32>
    %248 = tpu.concatenate %246, %247 in 1 : vector<3x256xf32>, vector<3x256xf32> -> vector<3x512xf32>
    %c225 = arith.constant 225 : index
    %c0_68 = arith.constant 0 : index
    %249 = vector.load %arg9[%c225, %c0_68] : memref<256x512xf32, #tpu.memory_space<vmem>>, vector<3x512xf32>
    tpu.vector_store %arg9[%c225, %c0_68], %248 {strides = array<i32>} : memref<256x512xf32, #tpu.memory_space<vmem>>, vector<3x512xf32>,
    %250 = vector.extract_strided_slice %35 {offsets = [0, 64], sizes = [3, 256], strides = [1, 1]} : vector<3x512xf32> to vector<3x256xf32>
    %251 = vector.extract_strided_slice %37 {offsets = [0, 64], sizes = [3, 256], strides = [1, 1]} : vector<3x512xf32> to vector<3x256xf32>
    %252 = tpu.concatenate %250, %251 in 1 : vector<3x256xf32>, vector<3x256xf32> -> vector<3x512xf32>
    %c12 = arith.constant 12 : index
    %c0_69 = arith.constant 0 : index
    %253 = vector.load %arg9[%c12, %c0_69] : memref<256x512xf32, #tpu.memory_space<vmem>>, vector<3x512xf32>
    tpu.vector_store %arg9[%c12, %c0_69], %252 {strides = array<i32>} : memref<256x512xf32, #tpu.memory_space<vmem>>, vector<3x512xf32>,
    %254 = vector.extract_strided_slice %35 {offsets = [0, 80], sizes = [3, 256], strides = [1, 1]} : vector<3x512xf32> to vector<3x256xf32>
    %255 = vector.extract_strided_slice %37 {offsets = [0, 80], sizes = [3, 256], strides = [1, 1]} : vector<3x512xf32> to vector<3x256xf32>
    %256 = tpu.concatenate %254, %255 in 1 : vector<3x256xf32>, vector<3x256xf32> -> vector<3x512xf32>
    %c39 = arith.constant 39 : index
    %c0_70 = arith.constant 0 : index
    %257 = vector.load %arg9[%c39, %c0_70] : memref<256x512xf32, #tpu.memory_space<vmem>>, vector<3x512xf32>
    tpu.vector_store %arg9[%c39, %c0_70], %256 {strides = array<i32>} : memref<256x512xf32, #tpu.memory_space<vmem>>, vector<3x512xf32>,
    %258 = vector.extract_strided_slice %35 {offsets = [0, 96], sizes = [3, 256], strides = [1, 1]} : vector<3x512xf32> to vector<3x256xf32>
    %259 = vector.extract_strided_slice %37 {offsets = [0, 96], sizes = [3, 256], strides = [1, 1]} : vector<3x512xf32> to vector<3x256xf32>
    %260 = tpu.concatenate %258, %259 in 1 : vector<3x256xf32>, vector<3x256xf32> -> vector<3x512xf32>
    %c66 = arith.constant 66 : index
    %c0_71 = arith.constant 0 : index
    %261 = vector.load %arg9[%c66, %c0_71] : memref<256x512xf32, #tpu.memory_space<vmem>>, vector<3x512xf32>
    tpu.vector_store %arg9[%c66, %c0_71], %260 {strides = array<i32>} : memref<256x512xf32, #tpu.memory_space<vmem>>, vector<3x512xf32>,
    %262 = vector.extract_strided_slice %35 {offsets = [0, 112], sizes = [3, 256], strides = [1, 1]} : vector<3x512xf32> to vector<3x256xf32>
    %263 = vector.extract_strided_slice %37 {offsets = [0, 112], sizes = [3, 256], strides = [1, 1]} : vector<3x512xf32> to vector<3x256xf32>
    %264 = tpu.concatenate %262, %263 in 1 : vector<3x256xf32>, vector<3x256xf32> -> vector<3x512xf32>
    %c93 = arith.constant 93 : index
    %c0_72 = arith.constant 0 : index
    %265 = vector.load %arg9[%c93, %c0_72] : memref<256x512xf32, #tpu.memory_space<vmem>>, vector<3x512xf32>
    tpu.vector_store %arg9[%c93, %c0_72], %264 {strides = array<i32>} : memref<256x512xf32, #tpu.memory_space<vmem>>, vector<3x512xf32>,
    %266 = vector.extract_strided_slice %35 {offsets = [0, 128], sizes = [3, 256], strides = [1, 1]} : vector<3x512xf32> to vector<3x256xf32>
    %267 = vector.extract_strided_slice %37 {offsets = [0, 128], sizes = [3, 256], strides = [1, 1]} : vector<3x512xf32> to vector<3x256xf32>
    %268 = tpu.concatenate %266, %267 in 1 : vector<3x256xf32>, vector<3x256xf32> -> vector<3x512xf32>
    %c120 = arith.constant 120 : index
    %c0_73 = arith.constant 0 : index
    %269 = vector.load %arg9[%c120, %c0_73] : memref<256x512xf32, #tpu.memory_space<vmem>>, vector<3x512xf32>
    tpu.vector_store %arg9[%c120, %c0_73], %268 {strides = array<i32>} : memref<256x512xf32, #tpu.memory_space<vmem>>, vector<3x512xf32>,
    %270 = vector.extract_strided_slice %35 {offsets = [0, 144], sizes = [3, 256], strides = [1, 1]} : vector<3x512xf32> to vector<3x256xf32>
    %271 = vector.extract_strided_slice %37 {offsets = [0, 144], sizes = [3, 256], strides = [1, 1]} : vector<3x512xf32> to vector<3x256xf32>
    %272 = tpu.concatenate %270, %271 in 1 : vector<3x256xf32>, vector<3x256xf32> -> vector<3x512xf32>
    %c147 = arith.constant 147 : index
    %c0_74 = arith.constant 0 : index
    %273 = vector.load %arg9[%c147, %c0_74] : memref<256x512xf32, #tpu.memory_space<vmem>>, vector<3x512xf32>
    tpu.vector_store %arg9[%c147, %c0_74], %272 {strides = array<i32>} : memref<256x512xf32, #tpu.memory_space<vmem>>, vector<3x512xf32>,
    %274 = vector.extract_strided_slice %35 {offsets = [0, 160], sizes = [3, 256], strides = [1, 1]} : vector<3x512xf32> to vector<3x256xf32>
    %275 = vector.extract_strided_slice %37 {offsets = [0, 160], sizes = [3, 256], strides = [1, 1]} : vector<3x512xf32> to vector<3x256xf32>
    %276 = tpu.concatenate %274, %275 in 1 : vector<3x256xf32>, vector<3x256xf32> -> vector<3x512xf32>
    %c174 = arith.constant 174 : index
    %c0_75 = arith.constant 0 : index
    %277 = vector.load %arg9[%c174, %c0_75] : memref<256x512xf32, #tpu.memory_space<vmem>>, vector<3x512xf32>
    tpu.vector_store %arg9[%c174, %c0_75], %276 {strides = array<i32>} : memref<256x512xf32, #tpu.memory_space<vmem>>, vector<3x512xf32>,
    %278 = vector.extract_strided_slice %35 {offsets = [0, 176], sizes = [3, 256], strides = [1, 1]} : vector<3x512xf32> to vector<3x256xf32>
    %279 = vector.extract_strided_slice %37 {offsets = [0, 176], sizes = [3, 256], strides = [1, 1]} : vector<3x512xf32> to vector<3x256xf32>
    %280 = tpu.concatenate %278, %279 in 1 : vector<3x256xf32>, vector<3x256xf32> -> vector<3x512xf32>
    %c201 = arith.constant 201 : index
    %c0_76 = arith.constant 0 : index
    %281 = vector.load %arg9[%c201, %c0_76] : memref<256x512xf32, #tpu.memory_space<vmem>>, vector<3x512xf32>
    tpu.vector_store %arg9[%c201, %c0_76], %280 {strides = array<i32>} : memref<256x512xf32, #tpu.memory_space<vmem>>, vector<3x512xf32>,
    %282 = vector.extract_strided_slice %35 {offsets = [0, 192], sizes = [3, 256], strides = [1, 1]} : vector<3x512xf32> to vector<3x256xf32>
    %283 = vector.extract_strided_slice %37 {offsets = [0, 192], sizes = [3, 256], strides = [1, 1]} : vector<3x512xf32> to vector<3x256xf32>
    %284 = tpu.concatenate %282, %283 in 1 : vector<3x256xf32>, vector<3x256xf32> -> vector<3x512xf32>
    %c228 = arith.constant 228 : index
    %c0_77 = arith.constant 0 : index
    %285 = vector.load %arg9[%c228, %c0_77] : memref<256x512xf32, #tpu.memory_space<vmem>>, vector<3x512xf32>
    tpu.vector_store %arg9[%c228, %c0_77], %284 {strides = array<i32>} : memref<256x512xf32, #tpu.memory_space<vmem>>, vector<3x512xf32>,
    %c1_i32_78 = arith.constant 1 : i32
    %286 = vector.broadcast %c1_i32_78 : i32 to vector<1x512xi32>
    %287 = arith.subi %16, %286 : vector<1x512xi32>
    %c0_i32_79 = arith.constant 0 : i32
    %288 = vector.broadcast %c0_i32_79 : i32 to vector<1x512xi32>
    %289 = arith.cmpi sge, %287, %288 : vector<1x512xi32>
    %c1_i32_80 = arith.constant 1 : i32
    %290 = vector.broadcast %c1_i32_80 : i32 to vector<1x512xi32>
    %291 = arith.subi %16, %290 : vector<1x512xi32>
    %c16_i32_81 = arith.constant 16 : i32
    %292 = vector.broadcast %c16_i32_81 : i32 to vector<1x512xi32>
    %293 = arith.cmpi slt, %291, %292 : vector<1x512xi32>
    %294 = arith.andi %289, %293 : vector<1x512xi1>
    %cst_82 = arith.constant 0.000000e+00 : f32
    %295 = vector.broadcast %cst_82 : f32 to vector<3x512xf32>
    %296 = vector.shape_cast %294 : vector<1x512xi1> to vector<1x512xi1>
    %297 = vector.broadcast %296 : vector<1x512xi1> to vector<3x512xi1>
    %298 = arith.select %297, %35, %295 : vector<3x512xi1>, vector<3x512xf32>
    %cst_83 = arith.constant 0.000000e+00 : f32
    %299 = vector.broadcast %cst_83 : f32 to vector<3x512xf32>
    %300 = vector.shape_cast %294 : vector<1x512xi1> to vector<1x512xi1>
    %301 = vector.broadcast %300 : vector<1x512xi1> to vector<3x512xi1>
    %302 = arith.select %301, %37, %299 : vector<3x512xi1>, vector<3x512xf32>
    %303 = vector.extract_strided_slice %298 {offsets = [0, 65], sizes = [3, 256], strides = [1, 1]} : vector<3x512xf32> to vector<3x256xf32>
    %304 = vector.extract_strided_slice %302 {offsets = [0, 65], sizes = [3, 256], strides = [1, 1]} : vector<3x512xf32> to vector<3x256xf32>
    %305 = tpu.concatenate %303, %304 in 1 : vector<3x256xf32>, vector<3x256xf32> -> vector<3x512xf32>
    %c15 = arith.constant 15 : index
    %c0_84 = arith.constant 0 : index
    %306 = vector.load %arg9[%c15, %c0_84] : memref<256x512xf32, #tpu.memory_space<vmem>>, vector<3x512xf32>
    tpu.vector_store %arg9[%c15, %c0_84], %305 {strides = array<i32>} : memref<256x512xf32, #tpu.memory_space<vmem>>, vector<3x512xf32>,
    %307 = vector.extract_strided_slice %298 {offsets = [0, 81], sizes = [3, 256], strides = [1, 1]} : vector<3x512xf32> to vector<3x256xf32>
    %308 = vector.extract_strided_slice %302 {offsets = [0, 81], sizes = [3, 256], strides = [1, 1]} : vector<3x512xf32> to vector<3x256xf32>
    %309 = tpu.concatenate %307, %308 in 1 : vector<3x256xf32>, vector<3x256xf32> -> vector<3x512xf32>
    %c42 = arith.constant 42 : index
    %c0_85 = arith.constant 0 : index
    %310 = vector.load %arg9[%c42, %c0_85] : memref<256x512xf32, #tpu.memory_space<vmem>>, vector<3x512xf32>
    tpu.vector_store %arg9[%c42, %c0_85], %309 {strides = array<i32>} : memref<256x512xf32, #tpu.memory_space<vmem>>, vector<3x512xf32>,
    %311 = vector.extract_strided_slice %298 {offsets = [0, 97], sizes = [3, 256], strides = [1, 1]} : vector<3x512xf32> to vector<3x256xf32>
    %312 = vector.extract_strided_slice %302 {offsets = [0, 97], sizes = [3, 256], strides = [1, 1]} : vector<3x512xf32> to vector<3x256xf32>
    %313 = tpu.concatenate %311, %312 in 1 : vector<3x256xf32>, vector<3x256xf32> -> vector<3x512xf32>
    %c69 = arith.constant 69 : index
    %c0_86 = arith.constant 0 : index
    %314 = vector.load %arg9[%c69, %c0_86] : memref<256x512xf32, #tpu.memory_space<vmem>>, vector<3x512xf32>
    tpu.vector_store %arg9[%c69, %c0_86], %313 {strides = array<i32>} : memref<256x512xf32, #tpu.memory_space<vmem>>, vector<3x512xf32>,
    %315 = vector.extract_strided_slice %298 {offsets = [0, 113], sizes = [3, 256], strides = [1, 1]} : vector<3x512xf32> to vector<3x256xf32>
    %316 = vector.extract_strided_slice %302 {offsets = [0, 113], sizes = [3, 256], strides = [1, 1]} : vector<3x512xf32> to vector<3x256xf32>
    %317 = tpu.concatenate %315, %316 in 1 : vector<3x256xf32>, vector<3x256xf32> -> vector<3x512xf32>
    %c96 = arith.constant 96 : index
    %c0_87 = arith.constant 0 : index
    %318 = vector.load %arg9[%c96, %c0_87] : memref<256x512xf32, #tpu.memory_space<vmem>>, vector<3x512xf32>
    tpu.vector_store %arg9[%c96, %c0_87], %317 {strides = array<i32>} : memref<256x512xf32, #tpu.memory_space<vmem>>, vector<3x512xf32>,
    %319 = vector.extract_strided_slice %298 {offsets = [0, 129], sizes = [3, 256], strides = [1, 1]} : vector<3x512xf32> to vector<3x256xf32>
    %320 = vector.extract_strided_slice %302 {offsets = [0, 129], sizes = [3, 256], strides = [1, 1]} : vector<3x512xf32> to vector<3x256xf32>
    %321 = tpu.concatenate %319, %320 in 1 : vector<3x256xf32>, vector<3x256xf32> -> vector<3x512xf32>
    %c123 = arith.constant 123 : index
    %c0_88 = arith.constant 0 : index
    %322 = vector.load %arg9[%c123, %c0_88] : memref<256x512xf32, #tpu.memory_space<vmem>>, vector<3x512xf32>
    tpu.vector_store %arg9[%c123, %c0_88], %321 {strides = array<i32>} : memref<256x512xf32, #tpu.memory_space<vmem>>, vector<3x512xf32>,
    %323 = vector.extract_strided_slice %298 {offsets = [0, 145], sizes = [3, 256], strides = [1, 1]} : vector<3x512xf32> to vector<3x256xf32>
    %324 = vector.extract_strided_slice %302 {offsets = [0, 145], sizes = [3, 256], strides = [1, 1]} : vector<3x512xf32> to vector<3x256xf32>
    %325 = tpu.concatenate %323, %324 in 1 : vector<3x256xf32>, vector<3x256xf32> -> vector<3x512xf32>
    %c150 = arith.constant 150 : index
    %c0_89 = arith.constant 0 : index
    %326 = vector.load %arg9[%c150, %c0_89] : memref<256x512xf32, #tpu.memory_space<vmem>>, vector<3x512xf32>
    tpu.vector_store %arg9[%c150, %c0_89], %325 {strides = array<i32>} : memref<256x512xf32, #tpu.memory_space<vmem>>, vector<3x512xf32>,
    %327 = vector.extract_strided_slice %298 {offsets = [0, 161], sizes = [3, 256], strides = [1, 1]} : vector<3x512xf32> to vector<3x256xf32>
    %328 = vector.extract_strided_slice %302 {offsets = [0, 161], sizes = [3, 256], strides = [1, 1]} : vector<3x512xf32> to vector<3x256xf32>
    %329 = tpu.concatenate %327, %328 in 1 : vector<3x256xf32>, vector<3x256xf32> -> vector<3x512xf32>
    %c177 = arith.constant 177 : index
    %c0_90 = arith.constant 0 : index
    %330 = vector.load %arg9[%c177, %c0_90] : memref<256x512xf32, #tpu.memory_space<vmem>>, vector<3x512xf32>
    tpu.vector_store %arg9[%c177, %c0_90], %329 {strides = array<i32>} : memref<256x512xf32, #tpu.memory_space<vmem>>, vector<3x512xf32>,
    %331 = vector.extract_strided_slice %298 {offsets = [0, 177], sizes = [3, 256], strides = [1, 1]} : vector<3x512xf32> to vector<3x256xf32>
    %332 = vector.extract_strided_slice %302 {offsets = [0, 177], sizes = [3, 256], strides = [1, 1]} : vector<3x512xf32> to vector<3x256xf32>
    %333 = tpu.concatenate %331, %332 in 1 : vector<3x256xf32>, vector<3x256xf32> -> vector<3x512xf32>
    %c204 = arith.constant 204 : index
    %c0_91 = arith.constant 0 : index
    %334 = vector.load %arg9[%c204, %c0_91] : memref<256x512xf32, #tpu.memory_space<vmem>>, vector<3x512xf32>
    tpu.vector_store %arg9[%c204, %c0_91], %333 {strides = array<i32>} : memref<256x512xf32, #tpu.memory_space<vmem>>, vector<3x512xf32>,
    %335 = vector.extract_strided_slice %298 {offsets = [0, 193], sizes = [3, 256], strides = [1, 1]} : vector<3x512xf32> to vector<3x256xf32>
    %336 = vector.extract_strided_slice %302 {offsets = [0, 193], sizes = [3, 256], strides = [1, 1]} : vector<3x512xf32> to vector<3x256xf32>
    %337 = tpu.concatenate %335, %336 in 1 : vector<3x256xf32>, vector<3x256xf32> -> vector<3x512xf32>
    %c231 = arith.constant 231 : index
    %c0_92 = arith.constant 0 : index
    %338 = vector.load %arg9[%c231, %c0_92] : memref<256x512xf32, #tpu.memory_space<vmem>>, vector<3x512xf32>
    tpu.vector_store %arg9[%c231, %c0_92], %337 {strides = array<i32>} : memref<256x512xf32, #tpu.memory_space<vmem>>, vector<3x512xf32>,
    %c2_i32 = arith.constant 2 : i32
    %339 = vector.broadcast %c2_i32 : i32 to vector<1x512xi32>
    %340 = arith.subi %16, %339 : vector<1x512xi32>
    %c0_i32_93 = arith.constant 0 : i32
    %341 = vector.broadcast %c0_i32_93 : i32 to vector<1x512xi32>
    %342 = arith.cmpi sge, %340, %341 : vector<1x512xi32>
    %c2_i32_94 = arith.constant 2 : i32
    %343 = vector.broadcast %c2_i32_94 : i32 to vector<1x512xi32>
    %344 = arith.subi %16, %343 : vector<1x512xi32>
    %c16_i32_95 = arith.constant 16 : i32
    %345 = vector.broadcast %c16_i32_95 : i32 to vector<1x512xi32>
    %346 = arith.cmpi slt, %344, %345 : vector<1x512xi32>
    %347 = arith.andi %342, %346 : vector<1x512xi1>
    %cst_96 = arith.constant 0.000000e+00 : f32
    %348 = vector.broadcast %cst_96 : f32 to vector<3x512xf32>
    %349 = vector.shape_cast %347 : vector<1x512xi1> to vector<1x512xi1>
    %350 = vector.broadcast %349 : vector<1x512xi1> to vector<3x512xi1>
    %351 = arith.select %350, %35, %348 : vector<3x512xi1>, vector<3x512xf32>
    %cst_97 = arith.constant 0.000000e+00 : f32
    %352 = vector.broadcast %cst_97 : f32 to vector<3x512xf32>
    %353 = vector.shape_cast %347 : vector<1x512xi1> to vector<1x512xi1>
    %354 = vector.broadcast %353 : vector<1x512xi1> to vector<3x512xi1>
    %355 = arith.select %354, %37, %352 : vector<3x512xi1>, vector<3x512xf32>
    %356 = vector.extract_strided_slice %351 {offsets = [0, 66], sizes = [3, 256], strides = [1, 1]} : vector<3x512xf32> to vector<3x256xf32>
    %357 = vector.extract_strided_slice %355 {offsets = [0, 66], sizes = [3, 256], strides = [1, 1]} : vector<3x512xf32> to vector<3x256xf32>
    %358 = tpu.concatenate %356, %357 in 1 : vector<3x256xf32>, vector<3x256xf32> -> vector<3x512xf32>
    %c18 = arith.constant 18 : index
    %c0_98 = arith.constant 0 : index
    %359 = vector.load %arg9[%c18, %c0_98] : memref<256x512xf32, #tpu.memory_space<vmem>>, vector<3x512xf32>
    tpu.vector_store %arg9[%c18, %c0_98], %358 {strides = array<i32>} : memref<256x512xf32, #tpu.memory_space<vmem>>, vector<3x512xf32>,
    %360 = vector.extract_strided_slice %351 {offsets = [0, 82], sizes = [3, 256], strides = [1, 1]} : vector<3x512xf32> to vector<3x256xf32>
    %361 = vector.extract_strided_slice %355 {offsets = [0, 82], sizes = [3, 256], strides = [1, 1]} : vector<3x512xf32> to vector<3x256xf32>
    %362 = tpu.concatenate %360, %361 in 1 : vector<3x256xf32>, vector<3x256xf32> -> vector<3x512xf32>
    %c45 = arith.constant 45 : index
    %c0_99 = arith.constant 0 : index
    %363 = vector.load %arg9[%c45, %c0_99] : memref<256x512xf32, #tpu.memory_space<vmem>>, vector<3x512xf32>
    tpu.vector_store %arg9[%c45, %c0_99], %362 {strides = array<i32>} : memref<256x512xf32, #tpu.memory_space<vmem>>, vector<3x512xf32>,
    %364 = vector.extract_strided_slice %351 {offsets = [0, 98], sizes = [3, 256], strides = [1, 1]} : vector<3x512xf32> to vector<3x256xf32>
    %365 = vector.extract_strided_slice %355 {offsets = [0, 98], sizes = [3, 256], strides = [1, 1]} : vector<3x512xf32> to vector<3x256xf32>
    %366 = tpu.concatenate %364, %365 in 1 : vector<3x256xf32>, vector<3x256xf32> -> vector<3x512xf32>
    %c72 = arith.constant 72 : index
    %c0_100 = arith.constant 0 : index
    %367 = vector.load %arg9[%c72, %c0_100] : memref<256x512xf32, #tpu.memory_space<vmem>>, vector<3x512xf32>
    tpu.vector_store %arg9[%c72, %c0_100], %366 {strides = array<i32>} : memref<256x512xf32, #tpu.memory_space<vmem>>, vector<3x512xf32>,
    %368 = vector.extract_strided_slice %351 {offsets = [0, 114], sizes = [3, 256], strides = [1, 1]} : vector<3x512xf32> to vector<3x256xf32>
    %369 = vector.extract_strided_slice %355 {offsets = [0, 114], sizes = [3, 256], strides = [1, 1]} : vector<3x512xf32> to vector<3x256xf32>
    %370 = tpu.concatenate %368, %369 in 1 : vector<3x256xf32>, vector<3x256xf32> -> vector<3x512xf32>
    %c99 = arith.constant 99 : index
    %c0_101 = arith.constant 0 : index
    %371 = vector.load %arg9[%c99, %c0_101] : memref<256x512xf32, #tpu.memory_space<vmem>>, vector<3x512xf32>
    tpu.vector_store %arg9[%c99, %c0_101], %370 {strides = array<i32>} : memref<256x512xf32, #tpu.memory_space<vmem>>, vector<3x512xf32>,
    %372 = vector.extract_strided_slice %351 {offsets = [0, 130], sizes = [3, 256], strides = [1, 1]} : vector<3x512xf32> to vector<3x256xf32>
    %373 = vector.extract_strided_slice %355 {offsets = [0, 130], sizes = [3, 256], strides = [1, 1]} : vector<3x512xf32> to vector<3x256xf32>
    %374 = tpu.concatenate %372, %373 in 1 : vector<3x256xf32>, vector<3x256xf32> -> vector<3x512xf32>
    %c126 = arith.constant 126 : index
    %c0_102 = arith.constant 0 : index
    %375 = vector.load %arg9[%c126, %c0_102] : memref<256x512xf32, #tpu.memory_space<vmem>>, vector<3x512xf32>
    tpu.vector_store %arg9[%c126, %c0_102], %374 {strides = array<i32>} : memref<256x512xf32, #tpu.memory_space<vmem>>, vector<3x512xf32>,
    %376 = vector.extract_strided_slice %351 {offsets = [0, 146], sizes = [3, 256], strides = [1, 1]} : vector<3x512xf32> to vector<3x256xf32>
    %377 = vector.extract_strided_slice %355 {offsets = [0, 146], sizes = [3, 256], strides = [1, 1]} : vector<3x512xf32> to vector<3x256xf32>
    %378 = tpu.concatenate %376, %377 in 1 : vector<3x256xf32>, vector<3x256xf32> -> vector<3x512xf32>
    %c153 = arith.constant 153 : index
    %c0_103 = arith.constant 0 : index
    %379 = vector.load %arg9[%c153, %c0_103] : memref<256x512xf32, #tpu.memory_space<vmem>>, vector<3x512xf32>
    tpu.vector_store %arg9[%c153, %c0_103], %378 {strides = array<i32>} : memref<256x512xf32, #tpu.memory_space<vmem>>, vector<3x512xf32>,
    %380 = vector.extract_strided_slice %351 {offsets = [0, 162], sizes = [3, 256], strides = [1, 1]} : vector<3x512xf32> to vector<3x256xf32>
    %381 = vector.extract_strided_slice %355 {offsets = [0, 162], sizes = [3, 256], strides = [1, 1]} : vector<3x512xf32> to vector<3x256xf32>
    %382 = tpu.concatenate %380, %381 in 1 : vector<3x256xf32>, vector<3x256xf32> -> vector<3x512xf32>
    %c180 = arith.constant 180 : index
    %c0_104 = arith.constant 0 : index
    %383 = vector.load %arg9[%c180, %c0_104] : memref<256x512xf32, #tpu.memory_space<vmem>>, vector<3x512xf32>
    tpu.vector_store %arg9[%c180, %c0_104], %382 {strides = array<i32>} : memref<256x512xf32, #tpu.memory_space<vmem>>, vector<3x512xf32>,
    %384 = vector.extract_strided_slice %351 {offsets = [0, 178], sizes = [3, 256], strides = [1, 1]} : vector<3x512xf32> to vector<3x256xf32>
    %385 = vector.extract_strided_slice %355 {offsets = [0, 178], sizes = [3, 256], strides = [1, 1]} : vector<3x512xf32> to vector<3x256xf32>
    %386 = tpu.concatenate %384, %385 in 1 : vector<3x256xf32>, vector<3x256xf32> -> vector<3x512xf32>
    %c207 = arith.constant 207 : index
    %c0_105 = arith.constant 0 : index
    %387 = vector.load %arg9[%c207, %c0_105] : memref<256x512xf32, #tpu.memory_space<vmem>>, vector<3x512xf32>
    tpu.vector_store %arg9[%c207, %c0_105], %386 {strides = array<i32>} : memref<256x512xf32, #tpu.memory_space<vmem>>, vector<3x512xf32>,
    %388 = vector.extract_strided_slice %351 {offsets = [0, 194], sizes = [3, 256], strides = [1, 1]} : vector<3x512xf32> to vector<3x256xf32>
    %389 = vector.extract_strided_slice %355 {offsets = [0, 194], sizes = [3, 256], strides = [1, 1]} : vector<3x512xf32> to vector<3x256xf32>
    %390 = tpu.concatenate %388, %389 in 1 : vector<3x256xf32>, vector<3x256xf32> -> vector<3x512xf32>
    %c234 = arith.constant 234 : index
    %c0_106 = arith.constant 0 : index
    %391 = vector.load %arg9[%c234, %c0_106] : memref<256x512xf32, #tpu.memory_space<vmem>>, vector<3x512xf32>
    tpu.vector_store %arg9[%c234, %c0_106], %390 {strides = array<i32>} : memref<256x512xf32, #tpu.memory_space<vmem>>, vector<3x512xf32>,
    %c3_i32 = arith.constant 3 : i32
    %392 = vector.broadcast %c3_i32 : i32 to vector<1x512xi32>
    %393 = arith.subi %16, %392 : vector<1x512xi32>
    %c0_i32_107 = arith.constant 0 : i32
    %394 = vector.broadcast %c0_i32_107 : i32 to vector<1x512xi32>
    %395 = arith.cmpi sge, %393, %394 : vector<1x512xi32>
    %c3_i32_108 = arith.constant 3 : i32
    %396 = vector.broadcast %c3_i32_108 : i32 to vector<1x512xi32>
    %397 = arith.subi %16, %396 : vector<1x512xi32>
    %c16_i32_109 = arith.constant 16 : i32
    %398 = vector.broadcast %c16_i32_109 : i32 to vector<1x512xi32>
    %399 = arith.cmpi slt, %397, %398 : vector<1x512xi32>
    %400 = arith.andi %395, %399 : vector<1x512xi1>
    %cst_110 = arith.constant 0.000000e+00 : f32
    %401 = vector.broadcast %cst_110 : f32 to vector<3x512xf32>
    %402 = vector.shape_cast %400 : vector<1x512xi1> to vector<1x512xi1>
    %403 = vector.broadcast %402 : vector<1x512xi1> to vector<3x512xi1>
    %404 = arith.select %403, %35, %401 : vector<3x512xi1>, vector<3x512xf32>
    %cst_111 = arith.constant 0.000000e+00 : f32
    %405 = vector.broadcast %cst_111 : f32 to vector<3x512xf32>
    %406 = vector.shape_cast %400 : vector<1x512xi1> to vector<1x512xi1>
    %407 = vector.broadcast %406 : vector<1x512xi1> to vector<3x512xi1>
    %408 = arith.select %407, %37, %405 : vector<3x512xi1>, vector<3x512xf32>
    %409 = vector.extract_strided_slice %404 {offsets = [0, 67], sizes = [3, 256], strides = [1, 1]} : vector<3x512xf32> to vector<3x256xf32>
    %410 = vector.extract_strided_slice %408 {offsets = [0, 67], sizes = [3, 256], strides = [1, 1]} : vector<3x512xf32> to vector<3x256xf32>
    %411 = tpu.concatenate %409, %410 in 1 : vector<3x256xf32>, vector<3x256xf32> -> vector<3x512xf32>
    %c21 = arith.constant 21 : index
    %c0_112 = arith.constant 0 : index
    %412 = vector.load %arg9[%c21, %c0_112] : memref<256x512xf32, #tpu.memory_space<vmem>>, vector<3x512xf32>
    tpu.vector_store %arg9[%c21, %c0_112], %411 {strides = array<i32>} : memref<256x512xf32, #tpu.memory_space<vmem>>, vector<3x512xf32>,
    %413 = vector.extract_strided_slice %404 {offsets = [0, 83], sizes = [3, 256], strides = [1, 1]} : vector<3x512xf32> to vector<3x256xf32>
    %414 = vector.extract_strided_slice %408 {offsets = [0, 83], sizes = [3, 256], strides = [1, 1]} : vector<3x512xf32> to vector<3x256xf32>
    %415 = tpu.concatenate %413, %414 in 1 : vector<3x256xf32>, vector<3x256xf32> -> vector<3x512xf32>
    %c48 = arith.constant 48 : index
    %c0_113 = arith.constant 0 : index
    %416 = vector.load %arg9[%c48, %c0_113] : memref<256x512xf32, #tpu.memory_space<vmem>>, vector<3x512xf32>
    tpu.vector_store %arg9[%c48, %c0_113], %415 {strides = array<i32>} : memref<256x512xf32, #tpu.memory_space<vmem>>, vector<3x512xf32>,
    %417 = vector.extract_strided_slice %404 {offsets = [0, 99], sizes = [3, 256], strides = [1, 1]} : vector<3x512xf32> to vector<3x256xf32>
    %418 = vector.extract_strided_slice %408 {offsets = [0, 99], sizes = [3, 256], strides = [1, 1]} : vector<3x512xf32> to vector<3x256xf32>
    %419 = tpu.concatenate %417, %418 in 1 : vector<3x256xf32>, vector<3x256xf32> -> vector<3x512xf32>
    %c75 = arith.constant 75 : index
    %c0_114 = arith.constant 0 : index
    %420 = vector.load %arg9[%c75, %c0_114] : memref<256x512xf32, #tpu.memory_space<vmem>>, vector<3x512xf32>
    tpu.vector_store %arg9[%c75, %c0_114], %419 {strides = array<i32>} : memref<256x512xf32, #tpu.memory_space<vmem>>, vector<3x512xf32>,
    %421 = vector.extract_strided_slice %404 {offsets = [0, 115], sizes = [3, 256], strides = [1, 1]} : vector<3x512xf32> to vector<3x256xf32>
    %422 = vector.extract_strided_slice %408 {offsets = [0, 115], sizes = [3, 256], strides = [1, 1]} : vector<3x512xf32> to vector<3x256xf32>
    %423 = tpu.concatenate %421, %422 in 1 : vector<3x256xf32>, vector<3x256xf32> -> vector<3x512xf32>
    %c102 = arith.constant 102 : index
    %c0_115 = arith.constant 0 : index
    %424 = vector.load %arg9[%c102, %c0_115] : memref<256x512xf32, #tpu.memory_space<vmem>>, vector<3x512xf32>
    tpu.vector_store %arg9[%c102, %c0_115], %423 {strides = array<i32>} : memref<256x512xf32, #tpu.memory_space<vmem>>, vector<3x512xf32>,
    %425 = vector.extract_strided_slice %404 {offsets = [0, 131], sizes = [3, 256], strides = [1, 1]} : vector<3x512xf32> to vector<3x256xf32>
    %426 = vector.extract_strided_slice %408 {offsets = [0, 131], sizes = [3, 256], strides = [1, 1]} : vector<3x512xf32> to vector<3x256xf32>
    %427 = tpu.concatenate %425, %426 in 1 : vector<3x256xf32>, vector<3x256xf32> -> vector<3x512xf32>
    %c129 = arith.constant 129 : index
    %c0_116 = arith.constant 0 : index
    %428 = vector.load %arg9[%c129, %c0_116] : memref<256x512xf32, #tpu.memory_space<vmem>>, vector<3x512xf32>
    tpu.vector_store %arg9[%c129, %c0_116], %427 {strides = array<i32>} : memref<256x512xf32, #tpu.memory_space<vmem>>, vector<3x512xf32>,
    %429 = vector.extract_strided_slice %404 {offsets = [0, 147], sizes = [3, 256], strides = [1, 1]} : vector<3x512xf32> to vector<3x256xf32>
    %430 = vector.extract_strided_slice %408 {offsets = [0, 147], sizes = [3, 256], strides = [1, 1]} : vector<3x512xf32> to vector<3x256xf32>
    %431 = tpu.concatenate %429, %430 in 1 : vector<3x256xf32>, vector<3x256xf32> -> vector<3x512xf32>
    %c156 = arith.constant 156 : index
    %c0_117 = arith.constant 0 : index
    %432 = vector.load %arg9[%c156, %c0_117] : memref<256x512xf32, #tpu.memory_space<vmem>>, vector<3x512xf32>
    tpu.vector_store %arg9[%c156, %c0_117], %431 {strides = array<i32>} : memref<256x512xf32, #tpu.memory_space<vmem>>, vector<3x512xf32>,
    %433 = vector.extract_strided_slice %404 {offsets = [0, 163], sizes = [3, 256], strides = [1, 1]} : vector<3x512xf32> to vector<3x256xf32>
    %434 = vector.extract_strided_slice %408 {offsets = [0, 163], sizes = [3, 256], strides = [1, 1]} : vector<3x512xf32> to vector<3x256xf32>
    %435 = tpu.concatenate %433, %434 in 1 : vector<3x256xf32>, vector<3x256xf32> -> vector<3x512xf32>
    %c183 = arith.constant 183 : index
    %c0_118 = arith.constant 0 : index
    %436 = vector.load %arg9[%c183, %c0_118] : memref<256x512xf32, #tpu.memory_space<vmem>>, vector<3x512xf32>
    tpu.vector_store %arg9[%c183, %c0_118], %435 {strides = array<i32>} : memref<256x512xf32, #tpu.memory_space<vmem>>, vector<3x512xf32>,
    %437 = vector.extract_strided_slice %404 {offsets = [0, 179], sizes = [3, 256], strides = [1, 1]} : vector<3x512xf32> to vector<3x256xf32>
    %438 = vector.extract_strided_slice %408 {offsets = [0, 179], sizes = [3, 256], strides = [1, 1]} : vector<3x512xf32> to vector<3x256xf32>
    %439 = tpu.concatenate %437, %438 in 1 : vector<3x256xf32>, vector<3x256xf32> -> vector<3x512xf32>
    %c210 = arith.constant 210 : index
    %c0_119 = arith.constant 0 : index
    %440 = vector.load %arg9[%c210, %c0_119] : memref<256x512xf32, #tpu.memory_space<vmem>>, vector<3x512xf32>
    tpu.vector_store %arg9[%c210, %c0_119], %439 {strides = array<i32>} : memref<256x512xf32, #tpu.memory_space<vmem>>, vector<3x512xf32>,
    %441 = vector.extract_strided_slice %404 {offsets = [0, 195], sizes = [3, 256], strides = [1, 1]} : vector<3x512xf32> to vector<3x256xf32>
    %442 = vector.extract_strided_slice %408 {offsets = [0, 195], sizes = [3, 256], strides = [1, 1]} : vector<3x512xf32> to vector<3x256xf32>
    %443 = tpu.concatenate %441, %442 in 1 : vector<3x256xf32>, vector<3x256xf32> -> vector<3x512xf32>
    %c237 = arith.constant 237 : index
    %c0_120 = arith.constant 0 : index
    %444 = vector.load %arg9[%c237, %c0_120] : memref<256x512xf32, #tpu.memory_space<vmem>>, vector<3x512xf32>
    tpu.vector_store %arg9[%c237, %c0_120], %443 {strides = array<i32>} : memref<256x512xf32, #tpu.memory_space<vmem>>, vector<3x512xf32>,
    %c4_i32 = arith.constant 4 : i32
    %445 = vector.broadcast %c4_i32 : i32 to vector<1x512xi32>
    %446 = arith.subi %16, %445 : vector<1x512xi32>
    %c0_i32_121 = arith.constant 0 : i32
    %447 = vector.broadcast %c0_i32_121 : i32 to vector<1x512xi32>
    %448 = arith.cmpi sge, %446, %447 : vector<1x512xi32>
    %c4_i32_122 = arith.constant 4 : i32
    %449 = vector.broadcast %c4_i32_122 : i32 to vector<1x512xi32>
    %450 = arith.subi %16, %449 : vector<1x512xi32>
    %c16_i32_123 = arith.constant 16 : i32
    %451 = vector.broadcast %c16_i32_123 : i32 to vector<1x512xi32>
    %452 = arith.cmpi slt, %450, %451 : vector<1x512xi32>
    %453 = arith.andi %448, %452 : vector<1x512xi1>
    %cst_124 = arith.constant 0.000000e+00 : f32
    %454 = vector.broadcast %cst_124 : f32 to vector<3x512xf32>
    %455 = vector.shape_cast %453 : vector<1x512xi1> to vector<1x512xi1>
    %456 = vector.broadcast %455 : vector<1x512xi1> to vector<3x512xi1>
    %457 = arith.select %456, %35, %454 : vector<3x512xi1>, vector<3x512xf32>
    %cst_125 = arith.constant 0.000000e+00 : f32
    %458 = vector.broadcast %cst_125 : f32 to vector<3x512xf32>
    %459 = vector.shape_cast %453 : vector<1x512xi1> to vector<1x512xi1>
    %460 = vector.broadcast %459 : vector<1x512xi1> to vector<3x512xi1>
    %461 = arith.select %460, %37, %458 : vector<3x512xi1>, vector<3x512xf32>
    %462 = vector.extract_strided_slice %457 {offsets = [0, 68], sizes = [3, 256], strides = [1, 1]} : vector<3x512xf32> to vector<3x256xf32>
    %463 = vector.extract_strided_slice %461 {offsets = [0, 68], sizes = [3, 256], strides = [1, 1]} : vector<3x512xf32> to vector<3x256xf32>
    %464 = tpu.concatenate %462, %463 in 1 : vector<3x256xf32>, vector<3x256xf32> -> vector<3x512xf32>
    %c24 = arith.constant 24 : index
    %c0_126 = arith.constant 0 : index
    %465 = vector.load %arg9[%c24, %c0_126] : memref<256x512xf32, #tpu.memory_space<vmem>>, vector<3x512xf32>
    tpu.vector_store %arg9[%c24, %c0_126], %464 {strides = array<i32>} : memref<256x512xf32, #tpu.memory_space<vmem>>, vector<3x512xf32>,
    %466 = vector.extract_strided_slice %457 {offsets = [0, 84], sizes = [3, 256], strides = [1, 1]} : vector<3x512xf32> to vector<3x256xf32>
    %467 = vector.extract_strided_slice %461 {offsets = [0, 84], sizes = [3, 256], strides = [1, 1]} : vector<3x512xf32> to vector<3x256xf32>
    %468 = tpu.concatenate %466, %467 in 1 : vector<3x256xf32>, vector<3x256xf32> -> vector<3x512xf32>
    %c51 = arith.constant 51 : index
    %c0_127 = arith.constant 0 : index
    %469 = vector.load %arg9[%c51, %c0_127] : memref<256x512xf32, #tpu.memory_space<vmem>>, vector<3x512xf32>
    tpu.vector_store %arg9[%c51, %c0_127], %468 {strides = array<i32>} : memref<256x512xf32, #tpu.memory_space<vmem>>, vector<3x512xf32>,
    %470 = vector.extract_strided_slice %457 {offsets = [0, 100], sizes = [3, 256], strides = [1, 1]} : vector<3x512xf32> to vector<3x256xf32>
    %471 = vector.extract_strided_slice %461 {offsets = [0, 100], sizes = [3, 256], strides = [1, 1]} : vector<3x512xf32> to vector<3x256xf32>
    %472 = tpu.concatenate %470, %471 in 1 : vector<3x256xf32>, vector<3x256xf32> -> vector<3x512xf32>
    %c78 = arith.constant 78 : index
    %c0_128 = arith.constant 0 : index
    %473 = vector.load %arg9[%c78, %c0_128] : memref<256x512xf32, #tpu.memory_space<vmem>>, vector<3x512xf32>
    tpu.vector_store %arg9[%c78, %c0_128], %472 {strides = array<i32>} : memref<256x512xf32, #tpu.memory_space<vmem>>, vector<3x512xf32>,
    %474 = vector.extract_strided_slice %457 {offsets = [0, 116], sizes = [3, 256], strides = [1, 1]} : vector<3x512xf32> to vector<3x256xf32>
    %475 = vector.extract_strided_slice %461 {offsets = [0, 116], sizes = [3, 256], strides = [1, 1]} : vector<3x512xf32> to vector<3x256xf32>
    %476 = tpu.concatenate %474, %475 in 1 : vector<3x256xf32>, vector<3x256xf32> -> vector<3x512xf32>
    %c105 = arith.constant 105 : index
    %c0_129 = arith.constant 0 : index
    %477 = vector.load %arg9[%c105, %c0_129] : memref<256x512xf32, #tpu.memory_space<vmem>>, vector<3x512xf32>
    tpu.vector_store %arg9[%c105, %c0_129], %476 {strides = array<i32>} : memref<256x512xf32, #tpu.memory_space<vmem>>, vector<3x512xf32>,
    %478 = vector.extract_strided_slice %457 {offsets = [0, 132], sizes = [3, 256], strides = [1, 1]} : vector<3x512xf32> to vector<3x256xf32>
    %479 = vector.extract_strided_slice %461 {offsets = [0, 132], sizes = [3, 256], strides = [1, 1]} : vector<3x512xf32> to vector<3x256xf32>
    %480 = tpu.concatenate %478, %479 in 1 : vector<3x256xf32>, vector<3x256xf32> -> vector<3x512xf32>
    %c132 = arith.constant 132 : index
    %c0_130 = arith.constant 0 : index
    %481 = vector.load %arg9[%c132, %c0_130] : memref<256x512xf32, #tpu.memory_space<vmem>>, vector<3x512xf32>
    tpu.vector_store %arg9[%c132, %c0_130], %480 {strides = array<i32>} : memref<256x512xf32, #tpu.memory_space<vmem>>, vector<3x512xf32>,
    %482 = vector.extract_strided_slice %457 {offsets = [0, 148], sizes = [3, 256], strides = [1, 1]} : vector<3x512xf32> to vector<3x256xf32>
    %483 = vector.extract_strided_slice %461 {offsets = [0, 148], sizes = [3, 256], strides = [1, 1]} : vector<3x512xf32> to vector<3x256xf32>
    %484 = tpu.concatenate %482, %483 in 1 : vector<3x256xf32>, vector<3x256xf32> -> vector<3x512xf32>
    %c159 = arith.constant 159 : index
    %c0_131 = arith.constant 0 : index
    %485 = vector.load %arg9[%c159, %c0_131] : memref<256x512xf32, #tpu.memory_space<vmem>>, vector<3x512xf32>
    tpu.vector_store %arg9[%c159, %c0_131], %484 {strides = array<i32>} : memref<256x512xf32, #tpu.memory_space<vmem>>, vector<3x512xf32>,
    %486 = vector.extract_strided_slice %457 {offsets = [0, 164], sizes = [3, 256], strides = [1, 1]} : vector<3x512xf32> to vector<3x256xf32>
    %487 = vector.extract_strided_slice %461 {offsets = [0, 164], sizes = [3, 256], strides = [1, 1]} : vector<3x512xf32> to vector<3x256xf32>
    %488 = tpu.concatenate %486, %487 in 1 : vector<3x256xf32>, vector<3x256xf32> -> vector<3x512xf32>
    %c186 = arith.constant 186 : index
    %c0_132 = arith.constant 0 : index
    %489 = vector.load %arg9[%c186, %c0_132] : memref<256x512xf32, #tpu.memory_space<vmem>>, vector<3x512xf32>
    tpu.vector_store %arg9[%c186, %c0_132], %488 {strides = array<i32>} : memref<256x512xf32, #tpu.memory_space<vmem>>, vector<3x512xf32>,
    %490 = vector.extract_strided_slice %457 {offsets = [0, 180], sizes = [3, 256], strides = [1, 1]} : vector<3x512xf32> to vector<3x256xf32>
    %491 = vector.extract_strided_slice %461 {offsets = [0, 180], sizes = [3, 256], strides = [1, 1]} : vector<3x512xf32> to vector<3x256xf32>
    %492 = tpu.concatenate %490, %491 in 1 : vector<3x256xf32>, vector<3x256xf32> -> vector<3x512xf32>
    %c213 = arith.constant 213 : index
    %c0_133 = arith.constant 0 : index
    %493 = vector.load %arg9[%c213, %c0_133] : memref<256x512xf32, #tpu.memory_space<vmem>>, vector<3x512xf32>
    tpu.vector_store %arg9[%c213, %c0_133], %492 {strides = array<i32>} : memref<256x512xf32, #tpu.memory_space<vmem>>, vector<3x512xf32>,
    %494 = vector.extract_strided_slice %457 {offsets = [0, 196], sizes = [3, 256], strides = [1, 1]} : vector<3x512xf32> to vector<3x256xf32>
    %495 = vector.extract_strided_slice %461 {offsets = [0, 196], sizes = [3, 256], strides = [1, 1]} : vector<3x512xf32> to vector<3x256xf32>
    %496 = tpu.concatenate %494, %495 in 1 : vector<3x256xf32>, vector<3x256xf32> -> vector<3x512xf32>
    %c240 = arith.constant 240 : index
    %c0_134 = arith.constant 0 : index
    %497 = vector.load %arg9[%c240, %c0_134] : memref<256x512xf32, #tpu.memory_space<vmem>>, vector<3x512xf32>
    tpu.vector_store %arg9[%c240, %c0_134], %496 {strides = array<i32>} : memref<256x512xf32, #tpu.memory_space<vmem>>, vector<3x512xf32>,
    %cst_135 = arith.constant 0.000000e+00 : f32
    %498 = vector.broadcast %cst_135 : f32 to vector<13x512xf32>
    %c243 = arith.constant 243 : index
    %c0_136 = arith.constant 0 : index
    %499 = vector.load %arg9[%c243, %c0_136] : memref<256x512xf32, #tpu.memory_space<vmem>>, vector<13x512xf32>
    tpu.vector_store %arg9[%c243, %c0_136], %498 {strides = array<i32>} : memref<256x512xf32, #tpu.memory_space<vmem>>, vector<13x512xf32>,
    %c0_137 = arith.constant 0 : index
    %c0_138 = arith.constant 0 : index
    %500 = vector.load %arg2[%c0_137, %c0_138] : memref<64x256xf32, #tpu.memory_space<vmem>>, vector<64x256xf32>
    %c0_139 = arith.constant 0 : index
    %c0_140 = arith.constant 0 : index
    %501 = vector.load %arg9[%c0_139, %c0_140] : memref<256x512xf32, #tpu.memory_space<vmem>>, vector<256x512xf32>
    %cst_141 = arith.constant dense<0.000000e+00> : vector<64x512xf32>
    %502 = tpu.matmul %500, %501, %cst_141 {dimension_numbers = #tpu.dot_dimension_numbers<[1], [0], [0], [1], [0, 0, 1, 1], [], []>} : vector<64x256xf32>, vector<256x512xf32>, vector<64x512xf32> -> vector<64x512xf32>
    %c0_142 = arith.constant 0 : index
    %c0_143 = arith.constant 0 : index
    %503 = vector.load %arg3[%c0_142, %c0_143] : memref<64x1xf32, #tpu.memory_space<vmem>>, vector<64x1xf32>
    %504 = vector.broadcast %503 : vector<64x1xf32> to vector<64x512xf32>
    %505 = arith.addf %502, %504 : vector<64x512xf32>
    %cst_144 = arith.constant 0.000000e+00 : f32
    %506 = vector.broadcast %cst_144 : f32 to vector<64x512xf32>
    %507 = arith.maximumf %505, %506 : vector<64x512xf32>
    %c0_145 = arith.constant 0 : index
    %c0_146 = arith.constant 0 : index
    %508 = vector.load %arg4[%c0_145, %c0_146] : memref<32x64xf32, #tpu.memory_space<vmem>>, vector<32x64xf32>
    %cst_147 = arith.constant dense<0.000000e+00> : vector<32x512xf32>
    %509 = tpu.matmul %508, %507, %cst_147 {dimension_numbers = #tpu.dot_dimension_numbers<[1], [0], [0], [1], [0, 0, 1, 1], [], []>} : vector<32x64xf32>, vector<64x512xf32>, vector<32x512xf32> -> vector<32x512xf32>
    %c0_148 = arith.constant 0 : index
    %c0_149 = arith.constant 0 : index
    %510 = vector.load %arg5[%c0_148, %c0_149] : memref<32x1xf32, #tpu.memory_space<vmem>>, vector<32x1xf32>
    %511 = vector.broadcast %510 : vector<32x1xf32> to vector<32x512xf32>
    %512 = arith.addf %509, %511 : vector<32x512xf32>
    %cst_150 = arith.constant 0.000000e+00 : f32
    %513 = vector.broadcast %cst_150 : f32 to vector<32x512xf32>
    %514 = arith.maximumf %512, %513 : vector<32x512xf32>
    %cst_151 = arith.constant 0.000000e+00 : f32
    %515 = vector.broadcast %cst_151 : f32 to vector<32x128xf32>
    %cst_152 = arith.constant 0.000000e+00 : f32
    %516 = vector.broadcast %cst_152 : f32 to vector<32x128xf32>
    %517 = vector.extract_strided_slice %514 {offsets = [0, 0], sizes = [32, 256], strides = [1, 1]} : vector<32x512xf32> to vector<32x256xf32>
    %518 = tpu.concatenate %515, %517, %516 in 1 : vector<32x128xf32>, vector<32x256xf32>, vector<32x128xf32> -> vector<32x512xf32>
    %519 = vector.extract_strided_slice %514 {offsets = [0, 256], sizes = [32, 256], strides = [1, 1]} : vector<32x512xf32> to vector<32x256xf32>
    %520 = tpu.concatenate %515, %519, %516 in 1 : vector<32x128xf32>, vector<32x256xf32>, vector<32x128xf32> -> vector<32x512xf32>
    %cst_153 = arith.constant 0.000000e+00 : f32
    %521 = vector.broadcast %cst_153 : f32 to vector<3x512xf32>
    %c-2_i32_154 = arith.constant -2 : i32
    %522 = vector.broadcast %c-2_i32_154 : i32 to vector<1x512xi32>
    %523 = arith.subi %33, %522 : vector<1x512xi32>
    %c0_i32_155 = arith.constant 0 : i32
    %524 = vector.broadcast %c0_i32_155 : i32 to vector<1x512xi32>
    %525 = arith.cmpi sge, %523, %524 : vector<1x512xi32>
    %c-2_i32_156 = arith.constant -2 : i32
    %526 = vector.broadcast %c-2_i32_156 : i32 to vector<1x512xi32>
    %527 = arith.subi %33, %526 : vector<1x512xi32>
    %c16_i32_157 = arith.constant 16 : i32
    %528 = vector.broadcast %c16_i32_157 : i32 to vector<1x512xi32>
    %529 = arith.cmpi slt, %527, %528 : vector<1x512xi32>
    %530 = arith.andi %525, %529 : vector<1x512xi1>
    %cst_158 = arith.constant 0.000000e+00 : f32
    %531 = vector.broadcast %cst_158 : f32 to vector<32x512xf32>
    %532 = vector.shape_cast %530 : vector<1x512xi1> to vector<1x512xi1>
    %533 = vector.broadcast %532 : vector<1x512xi1> to vector<32x512xi1>
    %534 = arith.select %533, %518, %531 : vector<32x512xi1>, vector<32x512xf32>
    %cst_159 = arith.constant 0.000000e+00 : f32
    %535 = vector.broadcast %cst_159 : f32 to vector<32x512xf32>
    %536 = vector.shape_cast %530 : vector<1x512xi1> to vector<1x512xi1>
    %537 = vector.broadcast %536 : vector<1x512xi1> to vector<32x512xi1>
    %538 = arith.select %537, %520, %535 : vector<32x512xi1>, vector<32x512xf32>
    %539 = vector.extract_strided_slice %534 {offsets = [0, 94], sizes = [32, 256], strides = [1, 1]} : vector<32x512xf32> to vector<32x256xf32>
    %540 = vector.extract_strided_slice %538 {offsets = [0, 94], sizes = [32, 256], strides = [1, 1]} : vector<32x512xf32> to vector<32x256xf32>
    %541 = tpu.concatenate %539, %540 in 1 : vector<32x256xf32>, vector<32x256xf32> -> vector<32x512xf32>
    %c0_160 = arith.constant 0 : index
    %c0_161 = arith.constant 0 : index
    %542 = vector.load %arg6[%c0_160, %c0_161] : memref<3x800xf32, #tpu.memory_space<vmem>>, vector<3x32xf32>
    %cst_162 = arith.constant dense<0.000000e+00> : vector<3x512xf32>
    %543 = tpu.matmul %542, %541, %cst_162 {dimension_numbers = #tpu.dot_dimension_numbers<[1], [0], [0], [1], [0, 0, 1, 1], [], []>} : vector<3x32xf32>, vector<32x512xf32>, vector<3x512xf32> -> vector<3x512xf32>
    %544 = arith.addf %521, %543 : vector<3x512xf32>
    %545 = vector.extract_strided_slice %534 {offsets = [0, 110], sizes = [32, 256], strides = [1, 1]} : vector<32x512xf32> to vector<32x256xf32>
    %546 = vector.extract_strided_slice %538 {offsets = [0, 110], sizes = [32, 256], strides = [1, 1]} : vector<32x512xf32> to vector<32x256xf32>
    %547 = tpu.concatenate %545, %546 in 1 : vector<32x256xf32>, vector<32x256xf32> -> vector<32x512xf32>
    %c0_163 = arith.constant 0 : index
    %c160 = arith.constant 160 : index
    %548 = vector.load %arg6[%c0_163, %c160] : memref<3x800xf32, #tpu.memory_space<vmem>>, vector<3x32xf32>
    %cst_164 = arith.constant dense<0.000000e+00> : vector<3x512xf32>
    %549 = tpu.matmul %548, %547, %cst_164 {dimension_numbers = #tpu.dot_dimension_numbers<[1], [0], [0], [1], [0, 0, 1, 1], [], []>} : vector<3x32xf32>, vector<32x512xf32>, vector<3x512xf32> -> vector<3x512xf32>
    %550 = arith.addf %544, %549 : vector<3x512xf32>
    %551 = vector.extract_strided_slice %534 {offsets = [0, 126], sizes = [32, 256], strides = [1, 1]} : vector<32x512xf32> to vector<32x256xf32>
    %552 = vector.extract_strided_slice %538 {offsets = [0, 126], sizes = [32, 256], strides = [1, 1]} : vector<32x512xf32> to vector<32x256xf32>
    %553 = tpu.concatenate %551, %552 in 1 : vector<32x256xf32>, vector<32x256xf32> -> vector<32x512xf32>
    %c0_165 = arith.constant 0 : index
    %c320 = arith.constant 320 : index
    %554 = vector.load %arg6[%c0_165, %c320] : memref<3x800xf32, #tpu.memory_space<vmem>>, vector<3x32xf32>
    %cst_166 = arith.constant dense<0.000000e+00> : vector<3x512xf32>
    %555 = tpu.matmul %554, %553, %cst_166 {dimension_numbers = #tpu.dot_dimension_numbers<[1], [0], [0], [1], [0, 0, 1, 1], [], []>} : vector<3x32xf32>, vector<32x512xf32>, vector<3x512xf32> -> vector<3x512xf32>
    %556 = arith.addf %550, %555 : vector<3x512xf32>
    %557 = vector.extract_strided_slice %534 {offsets = [0, 142], sizes = [32, 256], strides = [1, 1]} : vector<32x512xf32> to vector<32x256xf32>
    %558 = vector.extract_strided_slice %538 {offsets = [0, 142], sizes = [32, 256], strides = [1, 1]} : vector<32x512xf32> to vector<32x256xf32>
    %559 = tpu.concatenate %557, %558 in 1 : vector<32x256xf32>, vector<32x256xf32> -> vector<32x512xf32>
    %c0_167 = arith.constant 0 : index
    %c480 = arith.constant 480 : index
    %560 = vector.load %arg6[%c0_167, %c480] : memref<3x800xf32, #tpu.memory_space<vmem>>, vector<3x32xf32>
    %cst_168 = arith.constant dense<0.000000e+00> : vector<3x512xf32>
    %561 = tpu.matmul %560, %559, %cst_168 {dimension_numbers = #tpu.dot_dimension_numbers<[1], [0], [0], [1], [0, 0, 1, 1], [], []>} : vector<3x32xf32>, vector<32x512xf32>, vector<3x512xf32> -> vector<3x512xf32>
    %562 = arith.addf %556, %561 : vector<3x512xf32>
    %563 = vector.extract_strided_slice %534 {offsets = [0, 158], sizes = [32, 256], strides = [1, 1]} : vector<32x512xf32> to vector<32x256xf32>
    %564 = vector.extract_strided_slice %538 {offsets = [0, 158], sizes = [32, 256], strides = [1, 1]} : vector<32x512xf32> to vector<32x256xf32>
    %565 = tpu.concatenate %563, %564 in 1 : vector<32x256xf32>, vector<32x256xf32> -> vector<32x512xf32>
    %c0_169 = arith.constant 0 : index
    %c640 = arith.constant 640 : index
    %566 = vector.load %arg6[%c0_169, %c640] : memref<3x800xf32, #tpu.memory_space<vmem>>, vector<3x32xf32>
    %cst_170 = arith.constant dense<0.000000e+00> : vector<3x512xf32>
    %567 = tpu.matmul %566, %565, %cst_170 {dimension_numbers = #tpu.dot_dimension_numbers<[1], [0], [0], [1], [0, 0, 1, 1], [], []>} : vector<3x32xf32>, vector<32x512xf32>, vector<3x512xf32> -> vector<3x512xf32>
    %568 = arith.addf %562, %567 : vector<3x512xf32>
    %c-1_i32_171 = arith.constant -1 : i32
    %569 = vector.broadcast %c-1_i32_171 : i32 to vector<1x512xi32>
    %570 = arith.subi %33, %569 : vector<1x512xi32>
    %c0_i32_172 = arith.constant 0 : i32
    %571 = vector.broadcast %c0_i32_172 : i32 to vector<1x512xi32>
    %572 = arith.cmpi sge, %570, %571 : vector<1x512xi32>
    %c-1_i32_173 = arith.constant -1 : i32
    %573 = vector.broadcast %c-1_i32_173 : i32 to vector<1x512xi32>
    %574 = arith.subi %33, %573 : vector<1x512xi32>
    %c16_i32_174 = arith.constant 16 : i32
    %575 = vector.broadcast %c16_i32_174 : i32 to vector<1x512xi32>
    %576 = arith.cmpi slt, %574, %575 : vector<1x512xi32>
    %577 = arith.andi %572, %576 : vector<1x512xi1>
    %cst_175 = arith.constant 0.000000e+00 : f32
    %578 = vector.broadcast %cst_175 : f32 to vector<32x512xf32>
    %579 = vector.shape_cast %577 : vector<1x512xi1> to vector<1x512xi1>
    %580 = vector.broadcast %579 : vector<1x512xi1> to vector<32x512xi1>
    %581 = arith.select %580, %518, %578 : vector<32x512xi1>, vector<32x512xf32>
    %cst_176 = arith.constant 0.000000e+00 : f32
    %582 = vector.broadcast %cst_176 : f32 to vector<32x512xf32>
    %583 = vector.shape_cast %577 : vector<1x512xi1> to vector<1x512xi1>
    %584 = vector.broadcast %583 : vector<1x512xi1> to vector<32x512xi1>
    %585 = arith.select %584, %520, %582 : vector<32x512xi1>, vector<32x512xf32>
    %586 = vector.extract_strided_slice %581 {offsets = [0, 95], sizes = [32, 256], strides = [1, 1]} : vector<32x512xf32> to vector<32x256xf32>
    %587 = vector.extract_strided_slice %585 {offsets = [0, 95], sizes = [32, 256], strides = [1, 1]} : vector<32x512xf32> to vector<32x256xf32>
    %588 = tpu.concatenate %586, %587 in 1 : vector<32x256xf32>, vector<32x256xf32> -> vector<32x512xf32>
    %c0_177 = arith.constant 0 : index
    %c32 = arith.constant 32 : index
    %589 = vector.load %arg6[%c0_177, %c32] : memref<3x800xf32, #tpu.memory_space<vmem>>, vector<3x32xf32>
    %cst_178 = arith.constant dense<0.000000e+00> : vector<3x512xf32>
    %590 = tpu.matmul %589, %588, %cst_178 {dimension_numbers = #tpu.dot_dimension_numbers<[1], [0], [0], [1], [0, 0, 1, 1], [], []>} : vector<3x32xf32>, vector<32x512xf32>, vector<3x512xf32> -> vector<3x512xf32>
    %591 = arith.addf %568, %590 : vector<3x512xf32>
    %592 = vector.extract_strided_slice %581 {offsets = [0, 111], sizes = [32, 256], strides = [1, 1]} : vector<32x512xf32> to vector<32x256xf32>
    %593 = vector.extract_strided_slice %585 {offsets = [0, 111], sizes = [32, 256], strides = [1, 1]} : vector<32x512xf32> to vector<32x256xf32>
    %594 = tpu.concatenate %592, %593 in 1 : vector<32x256xf32>, vector<32x256xf32> -> vector<32x512xf32>
    %c0_179 = arith.constant 0 : index
    %c192_180 = arith.constant 192 : index
    %595 = vector.load %arg6[%c0_179, %c192_180] : memref<3x800xf32, #tpu.memory_space<vmem>>, vector<3x32xf32>
    %cst_181 = arith.constant dense<0.000000e+00> : vector<3x512xf32>
    %596 = tpu.matmul %595, %594, %cst_181 {dimension_numbers = #tpu.dot_dimension_numbers<[1], [0], [0], [1], [0, 0, 1, 1], [], []>} : vector<3x32xf32>, vector<32x512xf32>, vector<3x512xf32> -> vector<3x512xf32>
    %597 = arith.addf %591, %596 : vector<3x512xf32>
    %598 = vector.extract_strided_slice %581 {offsets = [0, 127], sizes = [32, 256], strides = [1, 1]} : vector<32x512xf32> to vector<32x256xf32>
    %599 = vector.extract_strided_slice %585 {offsets = [0, 127], sizes = [32, 256], strides = [1, 1]} : vector<32x512xf32> to vector<32x256xf32>
    %600 = tpu.concatenate %598, %599 in 1 : vector<32x256xf32>, vector<32x256xf32> -> vector<32x512xf32>
    %c0_182 = arith.constant 0 : index
    %c352 = arith.constant 352 : index
    %601 = vector.load %arg6[%c0_182, %c352] : memref<3x800xf32, #tpu.memory_space<vmem>>, vector<3x32xf32>
    %cst_183 = arith.constant dense<0.000000e+00> : vector<3x512xf32>
    %602 = tpu.matmul %601, %600, %cst_183 {dimension_numbers = #tpu.dot_dimension_numbers<[1], [0], [0], [1], [0, 0, 1, 1], [], []>} : vector<3x32xf32>, vector<32x512xf32>, vector<3x512xf32> -> vector<3x512xf32>
    %603 = arith.addf %597, %602 : vector<3x512xf32>
    %604 = vector.extract_strided_slice %581 {offsets = [0, 143], sizes = [32, 256], strides = [1, 1]} : vector<32x512xf32> to vector<32x256xf32>
    %605 = vector.extract_strided_slice %585 {offsets = [0, 143], sizes = [32, 256], strides = [1, 1]} : vector<32x512xf32> to vector<32x256xf32>
    %606 = tpu.concatenate %604, %605 in 1 : vector<32x256xf32>, vector<32x256xf32> -> vector<32x512xf32>
    %c0_184 = arith.constant 0 : index
    %c512 = arith.constant 512 : index
    %607 = vector.load %arg6[%c0_184, %c512] : memref<3x800xf32, #tpu.memory_space<vmem>>, vector<3x32xf32>
    %cst_185 = arith.constant dense<0.000000e+00> : vector<3x512xf32>
    %608 = tpu.matmul %607, %606, %cst_185 {dimension_numbers = #tpu.dot_dimension_numbers<[1], [0], [0], [1], [0, 0, 1, 1], [], []>} : vector<3x32xf32>, vector<32x512xf32>, vector<3x512xf32> -> vector<3x512xf32>
    %609 = arith.addf %603, %608 : vector<3x512xf32>
    %610 = vector.extract_strided_slice %581 {offsets = [0, 159], sizes = [32, 256], strides = [1, 1]} : vector<32x512xf32> to vector<32x256xf32>
    %611 = vector.extract_strided_slice %585 {offsets = [0, 159], sizes = [32, 256], strides = [1, 1]} : vector<32x512xf32> to vector<32x256xf32>
    %612 = tpu.concatenate %610, %611 in 1 : vector<32x256xf32>, vector<32x256xf32> -> vector<32x512xf32>
    %c0_186 = arith.constant 0 : index
    %c672 = arith.constant 672 : index
    %613 = vector.load %arg6[%c0_186, %c672] : memref<3x800xf32, #tpu.memory_space<vmem>>, vector<3x32xf32>
    %cst_187 = arith.constant dense<0.000000e+00> : vector<3x512xf32>
    %614 = tpu.matmul %613, %612, %cst_187 {dimension_numbers = #tpu.dot_dimension_numbers<[1], [0], [0], [1], [0, 0, 1, 1], [], []>} : vector<3x32xf32>, vector<32x512xf32>, vector<3x512xf32> -> vector<3x512xf32>
    %615 = arith.addf %609, %614 : vector<3x512xf32>
    %616 = vector.extract_strided_slice %518 {offsets = [0, 96], sizes = [32, 256], strides = [1, 1]} : vector<32x512xf32> to vector<32x256xf32>
    %617 = vector.extract_strided_slice %520 {offsets = [0, 96], sizes = [32, 256], strides = [1, 1]} : vector<32x512xf32> to vector<32x256xf32>
    %618 = tpu.concatenate %616, %617 in 1 : vector<32x256xf32>, vector<32x256xf32> -> vector<32x512xf32>
    %c0_188 = arith.constant 0 : index
    %c64 = arith.constant 64 : index
    %619 = vector.load %arg6[%c0_188, %c64] : memref<3x800xf32, #tpu.memory_space<vmem>>, vector<3x32xf32>
    %cst_189 = arith.constant dense<0.000000e+00> : vector<3x512xf32>
    %620 = tpu.matmul %619, %618, %cst_189 {dimension_numbers = #tpu.dot_dimension_numbers<[1], [0], [0], [1], [0, 0, 1, 1], [], []>} : vector<3x32xf32>, vector<32x512xf32>, vector<3x512xf32> -> vector<3x512xf32>
    %621 = arith.addf %615, %620 : vector<3x512xf32>
    %622 = vector.extract_strided_slice %518 {offsets = [0, 112], sizes = [32, 256], strides = [1, 1]} : vector<32x512xf32> to vector<32x256xf32>
    %623 = vector.extract_strided_slice %520 {offsets = [0, 112], sizes = [32, 256], strides = [1, 1]} : vector<32x512xf32> to vector<32x256xf32>
    %624 = tpu.concatenate %622, %623 in 1 : vector<32x256xf32>, vector<32x256xf32> -> vector<32x512xf32>
    %c0_190 = arith.constant 0 : index
    %c224 = arith.constant 224 : index
    %625 = vector.load %arg6[%c0_190, %c224] : memref<3x800xf32, #tpu.memory_space<vmem>>, vector<3x32xf32>
    %cst_191 = arith.constant dense<0.000000e+00> : vector<3x512xf32>
    %626 = tpu.matmul %625, %624, %cst_191 {dimension_numbers = #tpu.dot_dimension_numbers<[1], [0], [0], [1], [0, 0, 1, 1], [], []>} : vector<3x32xf32>, vector<32x512xf32>, vector<3x512xf32> -> vector<3x512xf32>
    %627 = arith.addf %621, %626 : vector<3x512xf32>
    %628 = vector.extract_strided_slice %518 {offsets = [0, 128], sizes = [32, 256], strides = [1, 1]} : vector<32x512xf32> to vector<32x256xf32>
    %629 = vector.extract_strided_slice %520 {offsets = [0, 128], sizes = [32, 256], strides = [1, 1]} : vector<32x512xf32> to vector<32x256xf32>
    %630 = tpu.concatenate %628, %629 in 1 : vector<32x256xf32>, vector<32x256xf32> -> vector<32x512xf32>
    %c0_192 = arith.constant 0 : index
    %c384 = arith.constant 384 : index
    %631 = vector.load %arg6[%c0_192, %c384] : memref<3x800xf32, #tpu.memory_space<vmem>>, vector<3x32xf32>
    %cst_193 = arith.constant dense<0.000000e+00> : vector<3x512xf32>
    %632 = tpu.matmul %631, %630, %cst_193 {dimension_numbers = #tpu.dot_dimension_numbers<[1], [0], [0], [1], [0, 0, 1, 1], [], []>} : vector<3x32xf32>, vector<32x512xf32>, vector<3x512xf32> -> vector<3x512xf32>
    %633 = arith.addf %627, %632 : vector<3x512xf32>
    %634 = vector.extract_strided_slice %518 {offsets = [0, 144], sizes = [32, 256], strides = [1, 1]} : vector<32x512xf32> to vector<32x256xf32>
    %635 = vector.extract_strided_slice %520 {offsets = [0, 144], sizes = [32, 256], strides = [1, 1]} : vector<32x512xf32> to vector<32x256xf32>
    %636 = tpu.concatenate %634, %635 in 1 : vector<32x256xf32>, vector<32x256xf32> -> vector<32x512xf32>
    %c0_194 = arith.constant 0 : index
    %c544 = arith.constant 544 : index
    %637 = vector.load %arg6[%c0_194, %c544] : memref<3x800xf32, #tpu.memory_space<vmem>>, vector<3x32xf32>
    %cst_195 = arith.constant dense<0.000000e+00> : vector<3x512xf32>
    %638 = tpu.matmul %637, %636, %cst_195 {dimension_numbers = #tpu.dot_dimension_numbers<[1], [0], [0], [1], [0, 0, 1, 1], [], []>} : vector<3x32xf32>, vector<32x512xf32>, vector<3x512xf32> -> vector<3x512xf32>
    %639 = arith.addf %633, %638 : vector<3x512xf32>
    %640 = vector.extract_strided_slice %518 {offsets = [0, 160], sizes = [32, 256], strides = [1, 1]} : vector<32x512xf32> to vector<32x256xf32>
    %641 = vector.extract_strided_slice %520 {offsets = [0, 160], sizes = [32, 256], strides = [1, 1]} : vector<32x512xf32> to vector<32x256xf32>
    %642 = tpu.concatenate %640, %641 in 1 : vector<32x256xf32>, vector<32x256xf32> -> vector<32x512xf32>
    %c0_196 = arith.constant 0 : index
    %c704 = arith.constant 704 : index
    %643 = vector.load %arg6[%c0_196, %c704] : memref<3x800xf32, #tpu.memory_space<vmem>>, vector<3x32xf32>
    %cst_197 = arith.constant dense<0.000000e+00> : vector<3x512xf32>
    %644 = tpu.matmul %643, %642, %cst_197 {dimension_numbers = #tpu.dot_dimension_numbers<[1], [0], [0], [1], [0, 0, 1, 1], [], []>} : vector<3x32xf32>, vector<32x512xf32>, vector<3x512xf32> -> vector<3x512xf32>
    %645 = arith.addf %639, %644 : vector<3x512xf32>
    %c1_i32_198 = arith.constant 1 : i32
    %646 = vector.broadcast %c1_i32_198 : i32 to vector<1x512xi32>
    %647 = arith.subi %33, %646 : vector<1x512xi32>
    %c0_i32_199 = arith.constant 0 : i32
    %648 = vector.broadcast %c0_i32_199 : i32 to vector<1x512xi32>
    %649 = arith.cmpi sge, %647, %648 : vector<1x512xi32>
    %c1_i32_200 = arith.constant 1 : i32
    %650 = vector.broadcast %c1_i32_200 : i32 to vector<1x512xi32>
    %651 = arith.subi %33, %650 : vector<1x512xi32>
    %c16_i32_201 = arith.constant 16 : i32
    %652 = vector.broadcast %c16_i32_201 : i32 to vector<1x512xi32>
    %653 = arith.cmpi slt, %651, %652 : vector<1x512xi32>
    %654 = arith.andi %649, %653 : vector<1x512xi1>
    %cst_202 = arith.constant 0.000000e+00 : f32
    %655 = vector.broadcast %cst_202 : f32 to vector<32x512xf32>
    %656 = vector.shape_cast %654 : vector<1x512xi1> to vector<1x512xi1>
    %657 = vector.broadcast %656 : vector<1x512xi1> to vector<32x512xi1>
    %658 = arith.select %657, %518, %655 : vector<32x512xi1>, vector<32x512xf32>
    %cst_203 = arith.constant 0.000000e+00 : f32
    %659 = vector.broadcast %cst_203 : f32 to vector<32x512xf32>
    %660 = vector.shape_cast %654 : vector<1x512xi1> to vector<1x512xi1>
    %661 = vector.broadcast %660 : vector<1x512xi1> to vector<32x512xi1>
    %662 = arith.select %661, %520, %659 : vector<32x512xi1>, vector<32x512xf32>
    %663 = vector.extract_strided_slice %658 {offsets = [0, 97], sizes = [32, 256], strides = [1, 1]} : vector<32x512xf32> to vector<32x256xf32>
    %664 = vector.extract_strided_slice %662 {offsets = [0, 97], sizes = [32, 256], strides = [1, 1]} : vector<32x512xf32> to vector<32x256xf32>
    %665 = tpu.concatenate %663, %664 in 1 : vector<32x256xf32>, vector<32x256xf32> -> vector<32x512xf32>
    %c0_204 = arith.constant 0 : index
    %c96_205 = arith.constant 96 : index
    %666 = vector.load %arg6[%c0_204, %c96_205] : memref<3x800xf32, #tpu.memory_space<vmem>>, vector<3x32xf32>
    %cst_206 = arith.constant dense<0.000000e+00> : vector<3x512xf32>
    %667 = tpu.matmul %666, %665, %cst_206 {dimension_numbers = #tpu.dot_dimension_numbers<[1], [0], [0], [1], [0, 0, 1, 1], [], []>} : vector<3x32xf32>, vector<32x512xf32>, vector<3x512xf32> -> vector<3x512xf32>
    %668 = arith.addf %645, %667 : vector<3x512xf32>
    %669 = vector.extract_strided_slice %658 {offsets = [0, 113], sizes = [32, 256], strides = [1, 1]} : vector<32x512xf32> to vector<32x256xf32>
    %670 = vector.extract_strided_slice %662 {offsets = [0, 113], sizes = [32, 256], strides = [1, 1]} : vector<32x512xf32> to vector<32x256xf32>
    %671 = tpu.concatenate %669, %670 in 1 : vector<32x256xf32>, vector<32x256xf32> -> vector<32x512xf32>
    %c0_207 = arith.constant 0 : index
    %c256 = arith.constant 256 : index
    %672 = vector.load %arg6[%c0_207, %c256] : memref<3x800xf32, #tpu.memory_space<vmem>>, vector<3x32xf32>
    %cst_208 = arith.constant dense<0.000000e+00> : vector<3x512xf32>
    %673 = tpu.matmul %672, %671, %cst_208 {dimension_numbers = #tpu.dot_dimension_numbers<[1], [0], [0], [1], [0, 0, 1, 1], [], []>} : vector<3x32xf32>, vector<32x512xf32>, vector<3x512xf32> -> vector<3x512xf32>
    %674 = arith.addf %668, %673 : vector<3x512xf32>
    %675 = vector.extract_strided_slice %658 {offsets = [0, 129], sizes = [32, 256], strides = [1, 1]} : vector<32x512xf32> to vector<32x256xf32>
    %676 = vector.extract_strided_slice %662 {offsets = [0, 129], sizes = [32, 256], strides = [1, 1]} : vector<32x512xf32> to vector<32x256xf32>
    %677 = tpu.concatenate %675, %676 in 1 : vector<32x256xf32>, vector<32x256xf32> -> vector<32x512xf32>
    %c0_209 = arith.constant 0 : index
    %c416 = arith.constant 416 : index
    %678 = vector.load %arg6[%c0_209, %c416] : memref<3x800xf32, #tpu.memory_space<vmem>>, vector<3x32xf32>
    %cst_210 = arith.constant dense<0.000000e+00> : vector<3x512xf32>
    %679 = tpu.matmul %678, %677, %cst_210 {dimension_numbers = #tpu.dot_dimension_numbers<[1], [0], [0], [1], [0, 0, 1, 1], [], []>} : vector<3x32xf32>, vector<32x512xf32>, vector<3x512xf32> -> vector<3x512xf32>
    %680 = arith.addf %674, %679 : vector<3x512xf32>
    %681 = vector.extract_strided_slice %658 {offsets = [0, 145], sizes = [32, 256], strides = [1, 1]} : vector<32x512xf32> to vector<32x256xf32>
    %682 = vector.extract_strided_slice %662 {offsets = [0, 145], sizes = [32, 256], strides = [1, 1]} : vector<32x512xf32> to vector<32x256xf32>
    %683 = tpu.concatenate %681, %682 in 1 : vector<32x256xf32>, vector<32x256xf32> -> vector<32x512xf32>
    %c0_211 = arith.constant 0 : index
    %c576 = arith.constant 576 : index
    %684 = vector.load %arg6[%c0_211, %c576] : memref<3x800xf32, #tpu.memory_space<vmem>>, vector<3x32xf32>
    %cst_212 = arith.constant dense<0.000000e+00> : vector<3x512xf32>
    %685 = tpu.matmul %684, %683, %cst_212 {dimension_numbers = #tpu.dot_dimension_numbers<[1], [0], [0], [1], [0, 0, 1, 1], [], []>} : vector<3x32xf32>, vector<32x512xf32>, vector<3x512xf32> -> vector<3x512xf32>
    %686 = arith.addf %680, %685 : vector<3x512xf32>
    %687 = vector.extract_strided_slice %658 {offsets = [0, 161], sizes = [32, 256], strides = [1, 1]} : vector<32x512xf32> to vector<32x256xf32>
    %688 = vector.extract_strided_slice %662 {offsets = [0, 161], sizes = [32, 256], strides = [1, 1]} : vector<32x512xf32> to vector<32x256xf32>
    %689 = tpu.concatenate %687, %688 in 1 : vector<32x256xf32>, vector<32x256xf32> -> vector<32x512xf32>
    %c0_213 = arith.constant 0 : index
    %c736 = arith.constant 736 : index
    %690 = vector.load %arg6[%c0_213, %c736] : memref<3x800xf32, #tpu.memory_space<vmem>>, vector<3x32xf32>
    %cst_214 = arith.constant dense<0.000000e+00> : vector<3x512xf32>
    %691 = tpu.matmul %690, %689, %cst_214 {dimension_numbers = #tpu.dot_dimension_numbers<[1], [0], [0], [1], [0, 0, 1, 1], [], []>} : vector<3x32xf32>, vector<32x512xf32>, vector<3x512xf32> -> vector<3x512xf32>
    %692 = arith.addf %686, %691 : vector<3x512xf32>
    %c2_i32_215 = arith.constant 2 : i32
    %693 = vector.broadcast %c2_i32_215 : i32 to vector<1x512xi32>
    %694 = arith.subi %33, %693 : vector<1x512xi32>
    %c0_i32_216 = arith.constant 0 : i32
    %695 = vector.broadcast %c0_i32_216 : i32 to vector<1x512xi32>
    %696 = arith.cmpi sge, %694, %695 : vector<1x512xi32>
    %c2_i32_217 = arith.constant 2 : i32
    %697 = vector.broadcast %c2_i32_217 : i32 to vector<1x512xi32>
    %698 = arith.subi %33, %697 : vector<1x512xi32>
    %c16_i32_218 = arith.constant 16 : i32
    %699 = vector.broadcast %c16_i32_218 : i32 to vector<1x512xi32>
    %700 = arith.cmpi slt, %698, %699 : vector<1x512xi32>
    %701 = arith.andi %696, %700 : vector<1x512xi1>
    %cst_219 = arith.constant 0.000000e+00 : f32
    %702 = vector.broadcast %cst_219 : f32 to vector<32x512xf32>
    %703 = vector.shape_cast %701 : vector<1x512xi1> to vector<1x512xi1>
    %704 = vector.broadcast %703 : vector<1x512xi1> to vector<32x512xi1>
    %705 = arith.select %704, %518, %702 : vector<32x512xi1>, vector<32x512xf32>
    %cst_220 = arith.constant 0.000000e+00 : f32
    %706 = vector.broadcast %cst_220 : f32 to vector<32x512xf32>
    %707 = vector.shape_cast %701 : vector<1x512xi1> to vector<1x512xi1>
    %708 = vector.broadcast %707 : vector<1x512xi1> to vector<32x512xi1>
    %709 = arith.select %708, %520, %706 : vector<32x512xi1>, vector<32x512xf32>
    %710 = vector.extract_strided_slice %705 {offsets = [0, 98], sizes = [32, 256], strides = [1, 1]} : vector<32x512xf32> to vector<32x256xf32>
    %711 = vector.extract_strided_slice %709 {offsets = [0, 98], sizes = [32, 256], strides = [1, 1]} : vector<32x512xf32> to vector<32x256xf32>
    %712 = tpu.concatenate %710, %711 in 1 : vector<32x256xf32>, vector<32x256xf32> -> vector<32x512xf32>
    %c0_221 = arith.constant 0 : index
    %c128 = arith.constant 128 : index
    %713 = vector.load %arg6[%c0_221, %c128] : memref<3x800xf32, #tpu.memory_space<vmem>>, vector<3x32xf32>
    %cst_222 = arith.constant dense<0.000000e+00> : vector<3x512xf32>
    %714 = tpu.matmul %713, %712, %cst_222 {dimension_numbers = #tpu.dot_dimension_numbers<[1], [0], [0], [1], [0, 0, 1, 1], [], []>} : vector<3x32xf32>, vector<32x512xf32>, vector<3x512xf32> -> vector<3x512xf32>
    %715 = arith.addf %692, %714 : vector<3x512xf32>
    %716 = vector.extract_strided_slice %705 {offsets = [0, 114], sizes = [32, 256], strides = [1, 1]} : vector<32x512xf32> to vector<32x256xf32>
    %717 = vector.extract_strided_slice %709 {offsets = [0, 114], sizes = [32, 256], strides = [1, 1]} : vector<32x512xf32> to vector<32x256xf32>
    %718 = tpu.concatenate %716, %717 in 1 : vector<32x256xf32>, vector<32x256xf32> -> vector<32x512xf32>
    %c0_223 = arith.constant 0 : index
    %c288 = arith.constant 288 : index
    %719 = vector.load %arg6[%c0_223, %c288] : memref<3x800xf32, #tpu.memory_space<vmem>>, vector<3x32xf32>
    %cst_224 = arith.constant dense<0.000000e+00> : vector<3x512xf32>
    %720 = tpu.matmul %719, %718, %cst_224 {dimension_numbers = #tpu.dot_dimension_numbers<[1], [0], [0], [1], [0, 0, 1, 1], [], []>} : vector<3x32xf32>, vector<32x512xf32>, vector<3x512xf32> -> vector<3x512xf32>
    %721 = arith.addf %715, %720 : vector<3x512xf32>
    %722 = vector.extract_strided_slice %705 {offsets = [0, 130], sizes = [32, 256], strides = [1, 1]} : vector<32x512xf32> to vector<32x256xf32>
    %723 = vector.extract_strided_slice %709 {offsets = [0, 130], sizes = [32, 256], strides = [1, 1]} : vector<32x512xf32> to vector<32x256xf32>
    %724 = tpu.concatenate %722, %723 in 1 : vector<32x256xf32>, vector<32x256xf32> -> vector<32x512xf32>
    %c0_225 = arith.constant 0 : index
    %c448 = arith.constant 448 : index
    %725 = vector.load %arg6[%c0_225, %c448] : memref<3x800xf32, #tpu.memory_space<vmem>>, vector<3x32xf32>
    %cst_226 = arith.constant dense<0.000000e+00> : vector<3x512xf32>
    %726 = tpu.matmul %725, %724, %cst_226 {dimension_numbers = #tpu.dot_dimension_numbers<[1], [0], [0], [1], [0, 0, 1, 1], [], []>} : vector<3x32xf32>, vector<32x512xf32>, vector<3x512xf32> -> vector<3x512xf32>
    %727 = arith.addf %721, %726 : vector<3x512xf32>
    %728 = vector.extract_strided_slice %705 {offsets = [0, 146], sizes = [32, 256], strides = [1, 1]} : vector<32x512xf32> to vector<32x256xf32>
    %729 = vector.extract_strided_slice %709 {offsets = [0, 146], sizes = [32, 256], strides = [1, 1]} : vector<32x512xf32> to vector<32x256xf32>
    %730 = tpu.concatenate %728, %729 in 1 : vector<32x256xf32>, vector<32x256xf32> -> vector<32x512xf32>
    %c0_227 = arith.constant 0 : index
    %c608 = arith.constant 608 : index
    %731 = vector.load %arg6[%c0_227, %c608] : memref<3x800xf32, #tpu.memory_space<vmem>>, vector<3x32xf32>
    %cst_228 = arith.constant dense<0.000000e+00> : vector<3x512xf32>
    %732 = tpu.matmul %731, %730, %cst_228 {dimension_numbers = #tpu.dot_dimension_numbers<[1], [0], [0], [1], [0, 0, 1, 1], [], []>} : vector<3x32xf32>, vector<32x512xf32>, vector<3x512xf32> -> vector<3x512xf32>
    %733 = arith.addf %727, %732 : vector<3x512xf32>
    %734 = vector.extract_strided_slice %705 {offsets = [0, 162], sizes = [32, 256], strides = [1, 1]} : vector<32x512xf32> to vector<32x256xf32>
    %735 = vector.extract_strided_slice %709 {offsets = [0, 162], sizes = [32, 256], strides = [1, 1]} : vector<32x512xf32> to vector<32x256xf32>
    %736 = tpu.concatenate %734, %735 in 1 : vector<32x256xf32>, vector<32x256xf32> -> vector<32x512xf32>
    %c0_229 = arith.constant 0 : index
    %c768 = arith.constant 768 : index
    %737 = vector.load %arg6[%c0_229, %c768] : memref<3x800xf32, #tpu.memory_space<vmem>>, vector<3x32xf32>
    %cst_230 = arith.constant dense<0.000000e+00> : vector<3x512xf32>
    %738 = tpu.matmul %737, %736, %cst_230 {dimension_numbers = #tpu.dot_dimension_numbers<[1], [0], [0], [1], [0, 0, 1, 1], [], []>} : vector<3x32xf32>, vector<32x512xf32>, vector<3x512xf32> -> vector<3x512xf32>
    %739 = arith.addf %733, %738 : vector<3x512xf32>
    %c0_231 = arith.constant 0 : index
    %c0_232 = arith.constant 0 : index
    %740 = vector.load %arg7[%c0_231, %c0_232] : memref<3x1xf32, #tpu.memory_space<vmem>>, vector<3x1xf32>
    %741 = vector.broadcast %740 : vector<3x1xf32> to vector<3x512xf32>
    %742 = arith.addf %739, %741 : vector<3x512xf32>
    %cst_233 = arith.constant 0.000000e+00 : f32
    %743 = vector.broadcast %cst_233 : f32 to vector<3x512xf32>
    %744 = arith.maximumf %742, %743 : vector<3x512xf32>
    %745 = vector.extract_strided_slice %744 {offsets = [0, 0], sizes = [3, 256], strides = [1, 1]} : vector<3x512xf32> to vector<3x256xf32>
    %c0_234 = arith.constant 0 : index
    %c0_235 = arith.constant 0 : index
    %c0_236 = arith.constant 0 : index
    %746 = vector.load %arg8[%c0_234, %c0_235, %c0_236] : memref<2x3x256xf32, #tpu.memory_space<vmem>>, vector<1x3x256xf32>
    %747 = vector.shape_cast %746 : vector<1x3x256xf32> to vector<3x256xf32>
    %748 = vector.shape_cast %745 : vector<3x256xf32> to vector<1x3x256xf32>
    tpu.vector_store %arg8[%c0_234, %c0_235, %c0_236], %748 {strides = array<i32>} : memref<2x3x256xf32, #tpu.memory_space<vmem>>, vector<1x3x256xf32>,
    %749 = vector.extract_strided_slice %744 {offsets = [0, 256], sizes = [3, 256], strides = [1, 1]} : vector<3x512xf32> to vector<3x256xf32>
    %c1_237 = arith.constant 1 : index
    %c0_238 = arith.constant 0 : index
    %c0_239 = arith.constant 0 : index
    %750 = vector.load %arg8[%c1_237, %c0_238, %c0_239] : memref<2x3x256xf32, #tpu.memory_space<vmem>>, vector<1x3x256xf32>
    %751 = vector.shape_cast %750 : vector<1x3x256xf32> to vector<3x256xf32>
    %752 = vector.shape_cast %749 : vector<3x256xf32> to vector<1x3x256xf32>
    tpu.vector_store %arg8[%c1_237, %c0_238, %c0_239], %752 {strides = array<i32>} : memref<2x3x256xf32, #tpu.memory_space<vmem>>, vector<1x3x256xf32>,
    return
  }
  func.func @transform_0(%arg0: i32) -> (i32, i32, i32) {
    %c0_i32 = arith.constant 0 : i32
    %c0_i32_0 = arith.constant 0 : i32
    %c0_i32_1 = arith.constant 0 : i32
    return %arg0, %c0_i32, %c0_i32_0 : i32, i32, i32
  }
  func.func @transform_1(%arg0: i32) -> (i32, i32) {
    %c0_i32 = arith.constant 0 : i32
    %c0_i32_0 = arith.constant 0 : i32
    %c0_i32_1 = arith.constant 0 : i32
    return %c0_i32, %c0_i32_0 : i32, i32
  }
  func.func @transform_2(%arg0: i32) -> (i32, i32) {
    %c0_i32 = arith.constant 0 : i32
    %c0_i32_0 = arith.constant 0 : i32
    %c0_i32_1 = arith.constant 0 : i32
    return %c0_i32, %c0_i32_0 : i32, i32
  }
  func.func @transform_3(%arg0: i32) -> (i32, i32) {
    %c0_i32 = arith.constant 0 : i32
    %c0_i32_0 = arith.constant 0 : i32
    %c0_i32_1 = arith.constant 0 : i32
    return %c0_i32, %c0_i32_0 : i32, i32
  }
  func.func @transform_4(%arg0: i32) -> (i32, i32) {
    %c0_i32 = arith.constant 0 : i32
    %c0_i32_0 = arith.constant 0 : i32
    %c0_i32_1 = arith.constant 0 : i32
    return %c0_i32, %c0_i32_0 : i32, i32
  }
  func.func @transform_5(%arg0: i32) -> (i32, i32) {
    %c0_i32 = arith.constant 0 : i32
    %c0_i32_0 = arith.constant 0 : i32
    %c0_i32_1 = arith.constant 0 : i32
    return %c0_i32, %c0_i32_0 : i32, i32
  }
  func.func @transform_6(%arg0: i32) -> (i32, i32) {
    %c0_i32 = arith.constant 0 : i32
    %c0_i32_0 = arith.constant 0 : i32
    %c0_i32_1 = arith.constant 0 : i32
    return %c0_i32, %c0_i32_0 : i32, i32
  }
  func.func @transform_7(%arg0: i32) -> (i32, i32, i32) {
    %c0_i32 = arith.constant 0 : i32
    %c0_i32_0 = arith.constant 0 : i32
    %c0_i32_1 = arith.constant 0 : i32
    return %arg0, %c0_i32, %c0_i32_0 : i32, i32, i32
  }
}

</mosaic_0001>

<llo_original>
// kernel: srcnn_forward.1
$region0: #{srcnn_forward.1}
  #allocation0 [shape = 'u32[]', space=smem, size = 0x4, offset = 0x4, fixed_abs, tag = 'smem constant byte address 0x4 - core index']
  #allocation1 [shape = 'u32[72,128]{1,0:T(1,128)}', space=vmem, size = 0x9000, scoped, tag = 'internal scratch']
  #allocation2 [shape = 'f32[256,512]{1,0:T(8,128)}', space=vmem, size = 0x80000, scoped, tag = 'scratch operand']
  %s0 = inlined_call_operand.vmem [shape: f32[2,3,512], index: 0, kind: input, shape index: {}]
  %s1 = inlined_call_operand.vmem [shape: f32[64,256], index: 1, kind: input, shape index: {}]
  %s2 = inlined_call_operand.vmem [shape: f32[64,1], index: 2, kind: input, shape index: {}]
  %s3 = inlined_call_operand.vmem [shape: f32[32,64], index: 3, kind: input, shape index: {}]
  %s4 = inlined_call_operand.vmem [shape: f32[32,1], index: 4, kind: input, shape index: {}]
  %s5 = inlined_call_operand.vmem [shape: f32[3,800], index: 5, kind: input, shape index: {}]
  %s6 = inlined_call_operand.vmem [shape: f32[3,1], index: 6, kind: input, shape index: {}]
  %s7 = inlined_call_operand.vmem [shape: f32[2,3,256], index: 7, kind: output, shape index: {}]
  %s8 = sld [smem:[#allocation0]]
  $region38: #{srcnn_forward.1} parent=0
    _
  %s10 = ssub.s32 1, %s8
  %s11 = scalar_select 0, %s10, %s8
  // Predicated region
  $region2: #{srcnn_forward.1} parent=0 // pred_check
    _
  $region3: #{srcnn_forward.1} parent=0 // pred_check_branch
    %13 = sbr.rel (0) target = $region5
  $region4: #{srcnn_forward.1} parent=0 // pred_region
    _
  $region5: #{srcnn_forward.1} parent=0 // pred_fallthru
    _
  // Predicated region
  $region6: #{srcnn_forward.1} parent=0 // pred_check
    _
  $region7: #{srcnn_forward.1} parent=0 // pred_check_branch
    %15 = sbr.rel (0) target = $region9
  $region8: #{srcnn_forward.1} parent=0 // pred_region
    _
  $region9: #{srcnn_forward.1} parent=0 // pred_fallthru
    _
  // Predicated region
  $region10: #{srcnn_forward.1} parent=0 // pred_check
    _
  $region11: #{srcnn_forward.1} parent=0 // pred_check_branch
    %17 = sbr.rel (0) target = $region13
  $region12: #{srcnn_forward.1} parent=0 // pred_region
    _
  $region13: #{srcnn_forward.1} parent=0 // pred_fallthru
    _
  // Predicated region
  $region14: #{srcnn_forward.1} parent=0 // pred_check
    _
  $region15: #{srcnn_forward.1} parent=0 // pred_check_branch
    %19 = sbr.rel (0) target = $region17
  $region16: #{srcnn_forward.1} parent=0 // pred_region
    _
  $region17: #{srcnn_forward.1} parent=0 // pred_fallthru
    _
  // Predicated region
  $region18: #{srcnn_forward.1} parent=0 // pred_check
    _
  $region19: #{srcnn_forward.1} parent=0 // pred_check_branch
    %21 = sbr.rel (0) target = $region21
  $region20: #{srcnn_forward.1} parent=0 // pred_region
    _
  $region21: #{srcnn_forward.1} parent=0 // pred_fallthru
    _
  // Predicated region
  $region22: #{srcnn_forward.1} parent=0 // pred_check
    _
  $region23: #{srcnn_forward.1} parent=0 // pred_check_branch
    %23 = sbr.rel (0) target = $region25
  $region24: #{srcnn_forward.1} parent=0 // pred_region
    _
  $region25: #{srcnn_forward.1} parent=0 // pred_fallthru
    _
  // Predicated region
  $region26: #{srcnn_forward.1} parent=0 // pred_check
    _
  $region27: #{srcnn_forward.1} parent=0 // pred_check_branch
    %25 = sbr.rel (0) target = $region29
  $region28: #{srcnn_forward.1} parent=0 // pred_region
    _
  $region29: #{srcnn_forward.1} parent=0 // pred_fallthru
    _
  %v26 = vlaneseq
  %v27 = vand.u32 %v26, 127
  %v28 = vadd.s32 %v27, 128
  %v29 = vadd.s32 %v27, 256
  %v30 = vadd.s32 %v27, 384
  %vm31 = vcmp.lt.s32.totalorder %v27, 0
  %v32 = vsub.s32 0, %v27
  %v33 = vsel %vm31, %v32, %v27
  %v34 = vshrl.u32 %v33, 4
  %v35 = vand.u32 %v33, 15
  %v36 = vsub.s32 0, %v35
  %v37 = vsel %vm31, %v36, %v35
  %vm38 = vcmp.lt.s32.totalorder %v28, 0
  %v39 = vsub.s32 0, %v28
  %v40 = vsel %vm38, %v39, %v28
  %v41 = vshrl.u32 %v40, 4
  %v42 = vand.u32 %v40, 15
  %v43 = vsub.s32 0, %v42
  %v44 = vsel %vm38, %v43, %v42
  %vm45 = vcmp.lt.s32.totalorder %v29, 0
  %v46 = vsub.s32 0, %v29
  %v47 = vsel %vm45, %v46, %v29
  %v48 = vshrl.u32 %v47, 4
  %v49 = vand.u32 %v47, 15
  %v50 = vsub.s32 0, %v49
  %v51 = vsel %vm45, %v50, %v49
  %vm52 = vcmp.lt.s32.totalorder %v30, 0
  %v53 = vsub.s32 0, %v30
  %v54 = vsel %vm52, %v53, %v30
  %v55 = vshrl.u32 %v54, 4
  %v56 = vand.u32 %v54, 15
  %v57 = vsub.s32 0, %v56
  %v58 = vsel %vm52, %v57, %v56
  %vm59 = vcmp.ne.s32.totalorder %v37, 0
  %vm60 = vcmp.ne.s32.totalorder %v44, 0
  %vm61 = vcmp.ne.s32.totalorder %v51, 0
  %vm62 = vcmp.ne.s32.totalorder %v58, 0
  %vm63 = vcmp.lt.s32.totalorder %v37, 0
  %vm64 = vcmp.lt.s32.totalorder %v44, 0
  %vm65 = vcmp.lt.s32.totalorder %v51, 0
  %vm66 = vcmp.lt.s32.totalorder %v58, 0
  %vm67 = vmand %vm63, %vm59
  %vm68 = vmand %vm64, %vm60
  %vm69 = vmand %vm65, %vm61
  %vm70 = vmand %vm66, %vm62
  %v71 = vadd.s32 %v37, 16
  %v72 = vadd.s32 %v44, 16
  %v73 = vadd.s32 %v51, 16
  %v74 = vadd.s32 %v58, 16
  %v75 = vsel %vm67, %v71, %v37
  %v76 = vsel %vm68, %v72, %v44
  %v77 = vsel %vm69, %v73, %v51
  %v78 = vsel %vm70, %v74, %v58
  %v79 = vld [vmem:[%s0] sm:$0x77]
  %v80 = vld [vmem:[%s0 + $0x8] sm:$0x77]
  %s81 = scalar_lea.vmem %s0, 16
  %v82 = vld [vmem:[%s81] sm:$0x77]
  %v83 = vld [vmem:[%s81 + $0x8] sm:$0x77]
  %v84 = vsub.s32 %v75, 4294967292
  %v85 = vsub.s32 %v76, 4294967292
  %v86 = vsub.s32 %v77, 4294967292
  %v87 = vsub.s32 %v78, 4294967292
  %vm88 = vcmp.ge.s32.totalorder %v84, 0
  %vm89 = vcmp.ge.s32.totalorder %v85, 0
  %vm90 = vcmp.ge.s32.totalorder %v86, 0
  %vm91 = vcmp.ge.s32.totalorder %v87, 0
  %vm92 = vcmp.lt.s32.totalorder %v84, 16
  %vm93 = vcmp.lt.s32.totalorder %v85, 16
  %vm94 = vcmp.lt.s32.totalorder %v86, 16
  %vm95 = vcmp.lt.s32.totalorder %v87, 16
  %vm96 = vmand %vm88, %vm92
  %vm97 = vmand %vm89, %vm93
  %vm98 = vmand %vm90, %vm94
  %vm99 = vmand %vm91, %vm95
  %v100 = vsel %vm96, 1, 0
  %v101 = vsel %vm97, 1, 0
  %v102 = vsel %vm98, 1, 0
  %v103 = vsel %vm99, 1, 0
  %vm104 = vcmp.eq.s32.totalorder %v100, 1
  %vm105 = vcmp.eq.s32.totalorder %v101, 1
  %vm106 = vcmp.eq.s32.totalorder %v102, 1
  %vm107 = vcmp.eq.s32.totalorder %v103, 1
  %110 = vst [vmem:[#allocation1] ss:$2 sm:$0xff] %v79
  %s111 = scalar_lea.vmem [#allocation1], 16
  %112 = vst [vmem:[%s111] ss:$2 sm:$0xff] %v80
  %v113 = vld.sshfl [vmem:[#allocation1] sm:$0xff pattern:$0x75316420]
  %v114 = vld.sshfl [vmem:[#allocation1 + $0x8] sm:$0xff pattern:$0x75316420]
  %v115 = vld.sshfl [vmem:[#allocation1 + $0x10] sm:$0xff pattern:$0x75316420]
  %v116 = vld.sshfl [vmem:[#allocation1 + $0x18] sm:$0xff pattern:$0x75316420]
  %v121 = vsel %vm104, %v113, 0.0
  %v122 = vsel %vm105, %v114, 0.0
  %v123 = vsel %vm106, %v115, 0.0
  %v124 = vsel %vm107, %v116, 0.0
  %127 = vst [vmem:[#allocation1] ss:$2 sm:$0xff] %v82
  %s128 = scalar_lea.vmem [#allocation1], 16
  %129 = vst [vmem:[%s128] ss:$2 sm:$0xff] %v83
  %v130 = vld.sshfl [vmem:[#allocation1] sm:$0xff pattern:$0x75316420]
  %v131 = vld.sshfl [vmem:[#allocation1 + $0x8] sm:$0xff pattern:$0x75316420]
  %v132 = vld.sshfl [vmem:[#allocation1 + $0x10] sm:$0xff pattern:$0x75316420]
  %v133 = vld.sshfl [vmem:[#allocation1 + $0x18] sm:$0xff pattern:$0x75316420]
  %v138 = vsel %vm104, %v130, 0.0
  %v139 = vsel %vm105, %v131, 0.0
  %v140 = vsel %vm106, %v132, 0.0
  %v141 = vsel %vm107, %v133, 0.0
  %145 = vrot.lane.b32.xlu0 %v121, 68
  %v146 = vpop.permute.xlu0 %145
  %147 = vrot.lane.b32.xlu0 %v122, 68
  %v148 = vpop.permute.xlu0 %147
  %149 = vrot.lane.b32.xlu0 %v123, 68
  %v150 = vpop.permute.xlu0 %149
  %vm151 = vcmask 556032
  %v152 = vsel %vm151, %v146, %v148
  %v153 = vsel %vm151, %v148, %v150
  %159 = vrot.lane.b32.xlu0 %v138, 68
  %v160 = vpop.permute.xlu0 %159
  %161 = vrot.lane.b32.xlu0 %v139, 68
  %v162 = vpop.permute.xlu0 %161
  %163 = vrot.lane.b32.xlu0 %v140, 68
  %v164 = vpop.permute.xlu0 %163
  %v165 = vsel %vm151, %v160, %v162
  %v166 = vsel %vm151, %v162, %v164
  %169 = vst [vmem:[#allocation2] sm:$0x7] %v152
  %170 = vst [vmem:[#allocation2 + $0x8] sm:$0x7] %v153
  %171 = vst [vmem:[#allocation2 + $0x10] sm:$0x7] %v165
  %172 = vst [vmem:[#allocation2 + $0x18] sm:$0x7] %v166
  %173 = vrot.lane.b32.xlu0 %v121, 52
  %v174 = vpop.permute.xlu0 %173
  %175 = vrot.lane.b32.xlu0 %v122, 52
  %v176 = vpop.permute.xlu0 %175
  %177 = vrot.lane.b32.xlu0 %v123, 52
  %v178 = vpop.permute.xlu0 %177
  %vm179 = vcmask 424960
  %v180 = vsel %vm179, %v174, %v176
  %v181 = vsel %vm179, %v176, %v178
  %182 = vrot.lane.b32.xlu0 %v138, 52
  %v183 = vpop.permute.xlu0 %182
  %184 = vrot.lane.b32.xlu0 %v139, 52
  %v185 = vpop.permute.xlu0 %184
  %186 = vrot.lane.b32.xlu0 %v140, 52
  %v187 = vpop.permute.xlu0 %186
  %v188 = vsel %vm179, %v183, %v185
  %v189 = vsel %vm179, %v185, %v187
  %v190 = vrot.slane %v180, 5
  %v191 = vrot.slane %v181, 5
  %v192 = vrot.slane %v188, 5
  %v193 = vrot.slane %v189, 5
  %198 = vst [vmem:[#allocation2 + $0x60] sm:$0x38] %v190
  %199 = vst [vmem:[#allocation2 + $0x68] sm:$0x38] %v191
  %200 = vst [vmem:[#allocation2 + $0x70] sm:$0x38] %v192
  %201 = vst [vmem:[#allocation2 + $0x78] sm:$0x38] %v193
  %202 = vrot.lane.b32.xlu0 %v121, 36
  %v203 = vpop.permute.xlu0 %202
  %204 = vrot.lane.b32.xlu0 %v122, 36
  %v205 = vpop.permute.xlu0 %204
  %206 = vrot.lane.b32.xlu0 %v123, 36
  %v207 = vpop.permute.xlu0 %206
  %vm208 = vcmask 293888
  %v209 = vsel %vm208, %v203, %v205
  %v210 = vsel %vm208, %v205, %v207
  %211 = vrot.lane.b32.xlu0 %v138, 36
  %v212 = vpop.permute.xlu0 %211
  %213 = vrot.lane.b32.xlu0 %v139, 36
  %v214 = vpop.permute.xlu0 %213
  %215 = vrot.lane.b32.xlu0 %v140, 36
  %v216 = vpop.permute.xlu0 %215
  %v217 = vsel %vm208, %v212, %v214
  %v218 = vsel %vm208, %v214, %v216
  %v219 = vrot.slane %v209, 2
  %v220 = vrot.slane %v210, 2
  %v221 = vrot.slane %v217, 2
  %v222 = vrot.slane %v218, 2
  %227 = vst [vmem:[#allocation2 + $0xc0] sm:$0xc0] %v219
  %228 = vst [vmem:[#allocation2 + $0xc8] sm:$0xc0] %v220
  %229 = vst [vmem:[#allocation2 + $0xd0] sm:$0xc0] %v221
  %230 = vst [vmem:[#allocation2 + $0xd8] sm:$0xc0] %v222
  %231 = vst [vmem:[#allocation2 + $0xe0] sm:$0x1] %v219
  %232 = vst [vmem:[#allocation2 + $0xe8] sm:$0x1] %v220
  %233 = vst [vmem:[#allocation2 + $0xf0] sm:$0x1] %v221
  %234 = vst [vmem:[#allocation2 + $0xf8] sm:$0x1] %v222
  %235 = vrot.lane.b32.xlu0 %v121, 20
  %v236 = vpop.permute.xlu0 %235
  %237 = vrot.lane.b32.xlu0 %v122, 20
  %v238 = vpop.permute.xlu0 %237
  %239 = vrot.lane.b32.xlu0 %v123, 20
  %v240 = vpop.permute.xlu0 %239
  %vm241 = vcmask 162816
  %v242 = vsel %vm241, %v236, %v238
  %v243 = vsel %vm241, %v238, %v240
  %244 = vrot.lane.b32.xlu0 %v138, 20
  %v245 = vpop.permute.xlu0 %244
  %246 = vrot.lane.b32.xlu0 %v139, 20
  %v247 = vpop.permute.xlu0 %246
  %248 = vrot.lane.b32.xlu0 %v140, 20
  %v249 = vpop.permute.xlu0 %248
  %v250 = vsel %vm241, %v245, %v247
  %v251 = vsel %vm241, %v247, %v249
  %v252 = vrot.slane %v242, 7
  %v253 = vrot.slane %v243, 7
  %v254 = vrot.slane %v250, 7
  %v255 = vrot.slane %v251, 7
  %260 = vst [vmem:[#allocation2 + $0x140] sm:$0xe] %v252
  %261 = vst [vmem:[#allocation2 + $0x148] sm:$0xe] %v253
  %262 = vst [vmem:[#allocation2 + $0x150] sm:$0xe] %v254
  %263 = vst [vmem:[#allocation2 + $0x158] sm:$0xe] %v255
  %264 = vrot.lane.b32.xlu0 %v121, 4
  %v265 = vpop.permute.xlu0 %264
  %266 = vrot.lane.b32.xlu0 %v122, 4
  %v267 = vpop.permute.xlu0 %266
  %268 = vrot.lane.b32.xlu0 %v123, 4
  %v269 = vpop.permute.xlu0 %268
  %vm270 = vcmask 31744
  %v271 = vsel %vm270, %v265, %v267
  %v272 = vsel %vm270, %v267, %v269
  %273 = vrot.lane.b32.xlu0 %v138, 4
  %v274 = vpop.permute.xlu0 %273
  %275 = vrot.lane.b32.xlu0 %v139, 4
  %v276 = vpop.permute.xlu0 %275
  %277 = vrot.lane.b32.xlu0 %v140, 4
  %v278 = vpop.permute.xlu0 %277
  %v279 = vsel %vm270, %v274, %v276
  %v280 = vsel %vm270, %v276, %v278
  %v281 = vrot.slane %v271, 4
  %v282 = vrot.slane %v272, 4
  %v283 = vrot.slane %v279, 4
  %v284 = vrot.slane %v280, 4
  %289 = vst [vmem:[#allocation2 + $0x1a0] sm:$0x70] %v281
  %290 = vst [vmem:[#allocation2 + $0x1a8] sm:$0x70] %v282
  %291 = vst [vmem:[#allocation2 + $0x1b0] sm:$0x70] %v283
  %292 = vst [vmem:[#allocation2 + $0x1b8] sm:$0x70] %v284
  %294 = vrot.lane.b32.xlu0 %v122, 116
  %v295 = vpop.permute.xlu0 %294
  %296 = vrot.lane.b32.xlu0 %v123, 116
  %v297 = vpop.permute.xlu0 %296
  %298 = vrot.lane.b32.xlu0 %v124, 116
  %v299 = vpop.permute.xlu0 %298
  %vm300 = vcmask 949248
  %v301 = vsel %vm300, %v295, %v297
  %v302 = vsel %vm300, %v297, %v299
  %304 = vrot.lane.b32.xlu0 %v139, 116
  %v305 = vpop.permute.xlu0 %304
  %306 = vrot.lane.b32.xlu0 %v140, 116
  %v307 = vpop.permute.xlu0 %306
  %308 = vrot.lane.b32.xlu0 %v141, 116
  %v309 = vpop.permute.xlu0 %308
  %v310 = vsel %vm300, %v305, %v307
  %v311 = vsel %vm300, %v307, %v309
  %v312 = vrot.slane %v301, 1
  %v313 = vrot.slane %v302, 1
  %v314 = vrot.slane %v310, 1
  %v315 = vrot.slane %v311, 1
  %320 = vst [vmem:[#allocation2 + $0x200] sm:$0x80] %v312
  %321 = vst [vmem:[#allocation2 + $0x208] sm:$0x80] %v313
  %322 = vst [vmem:[#allocation2 + $0x210] sm:$0x80] %v314
  %323 = vst [vmem:[#allocation2 + $0x218] sm:$0x80] %v315
  %324 = vst [vmem:[#allocation2 + $0x220] sm:$0x3] %v312
  %325 = vst [vmem:[#allocation2 + $0x228] sm:$0x3] %v313
  %326 = vst [vmem:[#allocation2 + $0x230] sm:$0x3] %v314
  %327 = vst [vmem:[#allocation2 + $0x238] sm:$0x3] %v315
  %328 = vrot.lane.b32.xlu0 %v122, 100
  %v329 = vpop.permute.xlu0 %328
  %330 = vrot.lane.b32.xlu0 %v123, 100
  %v331 = vpop.permute.xlu0 %330
  %332 = vrot.lane.b32.xlu0 %v124, 100
  %v333 = vpop.permute.xlu0 %332
  %vm334 = vcmask 818176
  %v335 = vsel %vm334, %v329, %v331
  %v336 = vsel %vm334, %v331, %v333
  %337 = vrot.lane.b32.xlu0 %v139, 100
  %v338 = vpop.permute.xlu0 %337
  %339 = vrot.lane.b32.xlu0 %v140, 100
  %v340 = vpop.permute.xlu0 %339
  %341 = vrot.lane.b32.xlu0 %v141, 100
  %v342 = vpop.permute.xlu0 %341
  %v343 = vsel %vm334, %v338, %v340
  %v344 = vsel %vm334, %v340, %v342
  %v345 = vrot.slane %v335, 6
  %v346 = vrot.slane %v336, 6
  %v347 = vrot.slane %v343, 6
  %v348 = vrot.slane %v344, 6
  %353 = vst [vmem:[#allocation2 + $0x280] sm:$0x1c] %v345
  %354 = vst [vmem:[#allocation2 + $0x288] sm:$0x1c] %v346
  %355 = vst [vmem:[#allocation2 + $0x290] sm:$0x1c] %v347
  %356 = vst [vmem:[#allocation2 + $0x298] sm:$0x1c] %v348
  %357 = vrot.lane.b32.xlu0 %v122, 84
  %v358 = vpop.permute.xlu0 %357
  %359 = vrot.lane.b32.xlu0 %v123, 84
  %v360 = vpop.permute.xlu0 %359
  %361 = vrot.lane.b32.xlu0 %v124, 84
  %v362 = vpop.permute.xlu0 %361
  %vm363 = vcmask 687104
  %v364 = vsel %vm363, %v358, %v360
  %v365 = vsel %vm363, %v360, %v362
  %366 = vrot.lane.b32.xlu0 %v139, 84
  %v367 = vpop.permute.xlu0 %366
  %368 = vrot.lane.b32.xlu0 %v140, 84
  %v369 = vpop.permute.xlu0 %368
  %370 = vrot.lane.b32.xlu0 %v141, 84
  %v371 = vpop.permute.xlu0 %370
  %v372 = vsel %vm363, %v367, %v369
  %v373 = vsel %vm363, %v369, %v371
  %v374 = vrot.slane %v364, 3
  %v375 = vrot.slane %v365, 3
  %v376 = vrot.slane %v372, 3
  %v377 = vrot.slane %v373, 3
  %382 = vst [vmem:[#allocation2 + $0x2e0] sm:$0xe0] %v374
  %383 = vst [vmem:[#allocation2 + $0x2e8] sm:$0xe0] %v375
  %384 = vst [vmem:[#allocation2 + $0x2f0] sm:$0xe0] %v376
  %385 = vst [vmem:[#allocation2 + $0x2f8] sm:$0xe0] %v377
  %386 = vrot.lane.b32.xlu0 %v124, 68
  %v387 = vpop.permute.xlu0 %386
  %v388 = vsel %vm151, %v150, %v387
  %390 = vrot.lane.b32.xlu0 %v141, 68
  %v391 = vpop.permute.xlu0 %390
  %v392 = vsel %vm151, %v164, %v391
  %394 = vst [vmem:[#allocation2 + $0x360] sm:$0x7] %v153
  %395 = vst [vmem:[#allocation2 + $0x368] sm:$0x7] %v388
  %396 = vst [vmem:[#allocation2 + $0x370] sm:$0x7] %v166
  %397 = vst [vmem:[#allocation2 + $0x378] sm:$0x7] %v392
  %v398 = vsub.s32 %v75, 4294967293
  %v399 = vsub.s32 %v76, 4294967293
  %v400 = vsub.s32 %v77, 4294967293
  %v401 = vsub.s32 %v78, 4294967293
  %vm402 = vcmp.ge.s32.totalorder %v398, 0
  %vm403 = vcmp.ge.s32.totalorder %v399, 0
  %vm404 = vcmp.ge.s32.totalorder %v400, 0
  %vm405 = vcmp.ge.s32.totalorder %v401, 0
  %vm406 = vcmp.lt.s32.totalorder %v398, 16
  %vm407 = vcmp.lt.s32.totalorder %v399, 16
  %vm408 = vcmp.lt.s32.totalorder %v400, 16
  %vm409 = vcmp.lt.s32.totalorder %v401, 16
  %vm410 = vmand %vm402, %vm406
  %vm411 = vmand %vm403, %vm407
  %vm412 = vmand %vm404, %vm408
  %vm413 = vmand %vm405, %vm409
  %v414 = vsel %vm410, 1, 0
  %v415 = vsel %vm411, 1, 0
  %v416 = vsel %vm412, 1, 0
  %v417 = vsel %vm413, 1, 0
  %vm418 = vcmp.eq.s32.totalorder %v414, 1
  %vm419 = vcmp.eq.s32.totalorder %v415, 1
  %vm420 = vcmp.eq.s32.totalorder %v416, 1
  %vm421 = vcmp.eq.s32.totalorder %v417, 1
  %422 = vst [vmem:[#allocation1] ss:$2 sm:$0xff] %v79
  %s423 = scalar_lea.vmem [#allocation1], 16
  %424 = vst [vmem:[%s423] ss:$2 sm:$0xff] %v80
  %v425 = vld.sshfl [vmem:[#allocation1] sm:$0xff pattern:$0x75316420]
  %v426 = vld.sshfl [vmem:[#allocation1 + $0x8] sm:$0xff pattern:$0x75316420]
  %v427 = vld.sshfl [vmem:[#allocation1 + $0x10] sm:$0xff pattern:$0x75316420]
  %v428 = vld.sshfl [vmem:[#allocation1 + $0x18] sm:$0xff pattern:$0x75316420]
  %v433 = vsel %vm418, %v425, 0.0
  %v434 = vsel %vm419, %v426, 0.0
  %v435 = vsel %vm420, %v427, 0.0
  %v436 = vsel %vm421, %v428, 0.0
  %437 = vst [vmem:[#allocation1] ss:$2 sm:$0xff] %v82
  %s438 = scalar_lea.vmem [#allocation1], 16
  %439 = vst [vmem:[%s438] ss:$2 sm:$0xff] %v83
  %v440 = vld.sshfl [vmem:[#allocation1] sm:$0xff pattern:$0x75316420]
  %v441 = vld.sshfl [vmem:[#allocation1 + $0x8] sm:$0xff pattern:$0x75316420]
  %v442 = vld.sshfl [vmem:[#allocation1 + $0x10] sm:$0xff pattern:$0x75316420]
  %v443 = vld.sshfl [vmem:[#allocation1 + $0x18] sm:$0xff pattern:$0x75316420]
  %v448 = vsel %vm418, %v440, 0.0
  %v449 = vsel %vm419, %v441, 0.0
  %v450 = vsel %vm420, %v442, 0.0
  %v451 = vsel %vm421, %v443, 0.0
  %455 = vrot.lane.b32.xlu0 %v433, 67
  %v456 = vpop.permute.xlu0 %455
  %457 = vrot.lane.b32.xlu0 %v434, 67
  %v458 = vpop.permute.xlu0 %457
  %459 = vrot.lane.b32.xlu0 %v435, 67
  %v460 = vpop.permute.xlu0 %459
  %vm461 = vcmask 547840
  %v462 = vsel %vm461, %v456, %v458
  %v463 = vsel %vm461, %v458, %v460
  %467 = vrot.lane.b32.xlu0 %v448, 67
  %v468 = vpop.permute.xlu0 %467
  %469 = vrot.lane.b32.xlu0 %v449, 67
  %v470 = vpop.permute.xlu0 %469
  %471 = vrot.lane.b32.xlu0 %v450, 67
  %v472 = vpop.permute.xlu0 %471
  %v473 = vsel %vm461, %v468, %v470
  %v474 = vsel %vm461, %v470, %v472
  %v475 = vrot.slane %v462, 5
  %v476 = vrot.slane %v463, 5
  %v477 = vrot.slane %v473, 5
  %v478 = vrot.slane %v474, 5
  %483 = vst [vmem:[#allocation2] sm:$0x38] %v475
  %484 = vst [vmem:[#allocation2 + $0x8] sm:$0x38] %v476
  %485 = vst [vmem:[#allocation2 + $0x10] sm:$0x38] %v477
  %486 = vst [vmem:[#allocation2 + $0x18] sm:$0x38] %v478
  %487 = vrot.lane.b32.xlu0 %v433, 51
  %v488 = vpop.permute.xlu0 %487
  %489 = vrot.lane.b32.xlu0 %v434, 51
  %v490 = vpop.permute.xlu0 %489
  %491 = vrot.lane.b32.xlu0 %v435, 51
  %v492 = vpop.permute.xlu0 %491
  %vm493 = vcmask 416768
  %v494 = vsel %vm493, %v488, %v490
  %v495 = vsel %vm493, %v490, %v492
  %496 = vrot.lane.b32.xlu0 %v448, 51
  %v497 = vpop.permute.xlu0 %496
  %498 = vrot.lane.b32.xlu0 %v449, 51
  %v499 = vpop.permute.xlu0 %498
  %500 = vrot.lane.b32.xlu0 %v450, 51
  %v501 = vpop.permute.xlu0 %500
  %v502 = vsel %vm493, %v497, %v499
  %v503 = vsel %vm493, %v499, %v501
  %v504 = vrot.slane %v494, 2
  %v505 = vrot.slane %v495, 2
  %v506 = vrot.slane %v502, 2
  %v507 = vrot.slane %v503, 2
  %512 = vst [vmem:[#allocation2 + $0x60] sm:$0xc0] %v504
  %513 = vst [vmem:[#allocation2 + $0x68] sm:$0xc0] %v505
  %514 = vst [vmem:[#allocation2 + $0x70] sm:$0xc0] %v506
  %515 = vst [vmem:[#allocation2 + $0x78] sm:$0xc0] %v507
  %516 = vst [vmem:[#allocation2 + $0x80] sm:$0x1] %v504
  %517 = vst [vmem:[#allocation2 + $0x88] sm:$0x1] %v505
  %518 = vst [vmem:[#allocation2 + $0x90] sm:$0x1] %v506
  %519 = vst [vmem:[#allocation2 + $0x98] sm:$0x1] %v507
  %520 = vrot.lane.b32.xlu0 %v433, 35
  %v521 = vpop.permute.xlu0 %520
  %522 = vrot.lane.b32.xlu0 %v434, 35
  %v523 = vpop.permute.xlu0 %522
  %524 = vrot.lane.b32.xlu0 %v435, 35
  %v525 = vpop.permute.xlu0 %524
  %vm526 = vcmask 285696
  %v527 = vsel %vm526, %v521, %v523
  %v528 = vsel %vm526, %v523, %v525
  %529 = vrot.lane.b32.xlu0 %v448, 35
  %v530 = vpop.permute.xlu0 %529
  %531 = vrot.lane.b32.xlu0 %v449, 35
  %v532 = vpop.permute.xlu0 %531
  %533 = vrot.lane.b32.xlu0 %v450, 35
  %v534 = vpop.permute.xlu0 %533
  %v535 = vsel %vm526, %v530, %v532
  %v536 = vsel %vm526, %v532, %v534
  %v537 = vrot.slane %v527, 7
  %v538 = vrot.slane %v528, 7
  %v539 = vrot.slane %v535, 7
  %v540 = vrot.slane %v536, 7
  %545 = vst [vmem:[#allocation2 + $0xe0] sm:$0xe] %v537
  %546 = vst [vmem:[#allocation2 + $0xe8] sm:$0xe] %v538
  %547 = vst [vmem:[#allocation2 + $0xf0] sm:$0xe] %v539
  %548 = vst [vmem:[#allocation2 + $0xf8] sm:$0xe] %v540
  %549 = vrot.lane.b32.xlu0 %v433, 19
  %v550 = vpop.permute.xlu0 %549
  %551 = vrot.lane.b32.xlu0 %v434, 19
  %v552 = vpop.permute.xlu0 %551
  %553 = vrot.lane.b32.xlu0 %v435, 19
  %v554 = vpop.permute.xlu0 %553
  %vm555 = vcmask 154624
  %v556 = vsel %vm555, %v550, %v552
  %v557 = vsel %vm555, %v552, %v554
  %558 = vrot.lane.b32.xlu0 %v448, 19
  %v559 = vpop.permute.xlu0 %558
  %560 = vrot.lane.b32.xlu0 %v449, 19
  %v561 = vpop.permute.xlu0 %560
  %562 = vrot.lane.b32.xlu0 %v450, 19
  %v563 = vpop.permute.xlu0 %562
  %v564 = vsel %vm555, %v559, %v561
  %v565 = vsel %vm555, %v561, %v563
  %v566 = vrot.slane %v556, 4
  %v567 = vrot.slane %v557, 4
  %v568 = vrot.slane %v564, 4
  %v569 = vrot.slane %v565, 4
  %574 = vst [vmem:[#allocation2 + $0x140] sm:$0x70] %v566
  %575 = vst [vmem:[#allocation2 + $0x148] sm:$0x70] %v567
  %576 = vst [vmem:[#allocation2 + $0x150] sm:$0x70] %v568
  %577 = vst [vmem:[#allocation2 + $0x158] sm:$0x70] %v569
  %578 = vrot.lane.b32.xlu0 %v433, 3
  %v579 = vpop.permute.xlu0 %578
  %580 = vrot.lane.b32.xlu0 %v434, 3
  %v581 = vpop.permute.xlu0 %580
  %582 = vrot.lane.b32.xlu0 %v435, 3
  %v583 = vpop.permute.xlu0 %582
  %vm584 = vcmask 23552
  %v585 = vsel %vm584, %v579, %v581
  %v586 = vsel %vm584, %v581, %v583
  %587 = vrot.lane.b32.xlu0 %v448, 3
  %v588 = vpop.permute.xlu0 %587
  %589 = vrot.lane.b32.xlu0 %v449, 3
  %v590 = vpop.permute.xlu0 %589
  %591 = vrot.lane.b32.xlu0 %v450, 3
  %v592 = vpop.permute.xlu0 %591
  %v593 = vsel %vm584, %v588, %v590
  %v594 = vsel %vm584, %v590, %v592
  %v595 = vrot.slane %v585, 1
  %v596 = vrot.slane %v586, 1
  %v597 = vrot.slane %v593, 1
  %v598 = vrot.slane %v594, 1
  %603 = vst [vmem:[#allocation2 + $0x1a0] sm:$0x80] %v595
  %604 = vst [vmem:[#allocation2 + $0x1a8] sm:$0x80] %v596
  %605 = vst [vmem:[#allocation2 + $0x1b0] sm:$0x80] %v597
  %606 = vst [vmem:[#allocation2 + $0x1b8] sm:$0x80] %v598
  %607 = vst [vmem:[#allocation2 + $0x1c0] sm:$0x3] %v595
  %608 = vst [vmem:[#allocation2 + $0x1c8] sm:$0x3] %v596
  %609 = vst [vmem:[#allocation2 + $0x1d0] sm:$0x3] %v597
  %610 = vst [vmem:[#allocation2 + $0x1d8] sm:$0x3] %v598
  %612 = vrot.lane.b32.xlu0 %v434, 115
  %v613 = vpop.permute.xlu0 %612
  %614 = vrot.lane.b32.xlu0 %v435, 115
  %v615 = vpop.permute.xlu0 %614
  %616 = vrot.lane.b32.xlu0 %v436, 115
  %v617 = vpop.permute.xlu0 %616
  %vm618 = vcmask 941056
  %v619 = vsel %vm618, %v613, %v615
  %v620 = vsel %vm618, %v615, %v617
  %622 = vrot.lane.b32.xlu0 %v449, 115
  %v623 = vpop.permute.xlu0 %622
  %624 = vrot.lane.b32.xlu0 %v450, 115
  %v625 = vpop.permute.xlu0 %624
  %626 = vrot.lane.b32.xlu0 %v451, 115
  %v627 = vpop.permute.xlu0 %626
  %v628 = vsel %vm618, %v623, %v625
  %v629 = vsel %vm618, %v625, %v627
  %v630 = vrot.slane %v619, 6
  %v631 = vrot.slane %v620, 6
  %v632 = vrot.slane %v628, 6
  %v633 = vrot.slane %v629, 6
  %638 = vst [vmem:[#allocation2 + $0x220] sm:$0x1c] %v630
  %639 = vst [vmem:[#allocation2 + $0x228] sm:$0x1c] %v631
  %640 = vst [vmem:[#allocation2 + $0x230] sm:$0x1c] %v632
  %641 = vst [vmem:[#allocation2 + $0x238] sm:$0x1c] %v633
  %642 = vrot.lane.b32.xlu0 %v434, 99
  %v643 = vpop.permute.xlu0 %642
  %644 = vrot.lane.b32.xlu0 %v435, 99
  %v645 = vpop.permute.xlu0 %644
  %646 = vrot.lane.b32.xlu0 %v436, 99
  %v647 = vpop.permute.xlu0 %646
  %vm648 = vcmask 809984
  %v649 = vsel %vm648, %v643, %v645
  %v650 = vsel %vm648, %v645, %v647
  %651 = vrot.lane.b32.xlu0 %v449, 99
  %v652 = vpop.permute.xlu0 %651
  %653 = vrot.lane.b32.xlu0 %v450, 99
  %v654 = vpop.permute.xlu0 %653
  %655 = vrot.lane.b32.xlu0 %v451, 99
  %v656 = vpop.permute.xlu0 %655
  %v657 = vsel %vm648, %v652, %v654
  %v658 = vsel %vm648, %v654, %v656
  %v659 = vrot.slane %v649, 3
  %v660 = vrot.slane %v650, 3
  %v661 = vrot.slane %v657, 3
  %v662 = vrot.slane %v658, 3
  %667 = vst [vmem:[#allocation2 + $0x280] sm:$0xe0] %v659
  %668 = vst [vmem:[#allocation2 + $0x288] sm:$0xe0] %v660
  %669 = vst [vmem:[#allocation2 + $0x290] sm:$0xe0] %v661
  %670 = vst [vmem:[#allocation2 + $0x298] sm:$0xe0] %v662
  %671 = vrot.lane.b32.xlu0 %v434, 83
  %v672 = vpop.permute.xlu0 %671
  %673 = vrot.lane.b32.xlu0 %v435, 83
  %v674 = vpop.permute.xlu0 %673
  %675 = vrot.lane.b32.xlu0 %v436, 83
  %v676 = vpop.permute.xlu0 %675
  %vm677 = vcmask 678912
  %v678 = vsel %vm677, %v672, %v674
  %v679 = vsel %vm677, %v674, %v676
  %682 = vrot.lane.b32.xlu0 %v449, 83
  %v683 = vpop.permute.xlu0 %682
  %684 = vrot.lane.b32.xlu0 %v450, 83
  %v685 = vpop.permute.xlu0 %684
  %686 = vrot.lane.b32.xlu0 %v451, 83
  %v687 = vpop.permute.xlu0 %686
  %v688 = vsel %vm677, %v683, %v685
  %v689 = vsel %vm677, %v685, %v687
  %692 = vst [vmem:[#allocation2 + $0x300] sm:$0x7] %v678
  %693 = vst [vmem:[#allocation2 + $0x308] sm:$0x7] %v679
  %694 = vst [vmem:[#allocation2 + $0x310] sm:$0x7] %v688
  %695 = vst [vmem:[#allocation2 + $0x318] sm:$0x7] %v689
  %696 = vrot.lane.b32.xlu0 %v436, 67
  %v697 = vpop.permute.xlu0 %696
  %v698 = vsel %vm461, %v460, %v697
  %699 = vrot.lane.b32.xlu0 %v451, 67
  %v700 = vpop.permute.xlu0 %699
  %v701 = vsel %vm461, %v472, %v700
  %v702 = vrot.slane %v698, 5
  %v703 = vrot.slane %v701, 5
  %706 = vst [vmem:[#allocation2 + $0x360] sm:$0x38] %v476
  %707 = vst [vmem:[#allocation2 + $0x368] sm:$0x38] %v702
  %708 = vst [vmem:[#allocation2 + $0x370] sm:$0x38] %v478
  %709 = vst [vmem:[#allocation2 + $0x378] sm:$0x38] %v703
  %v710 = vsub.s32 %v75, 4294967294
  %v711 = vsub.s32 %v76, 4294967294
  %v712 = vsub.s32 %v77, 4294967294
  %v713 = vsub.s32 %v78, 4294967294
  %vm714 = vcmp.ge.s32.totalorder %v710, 0
  %vm715 = vcmp.ge.s32.totalorder %v711, 0
  %vm716 = vcmp.ge.s32.totalorder %v712, 0
  %vm717 = vcmp.ge.s32.totalorder %v713, 0
  %vm718 = vcmp.lt.s32.totalorder %v710, 16
  %vm719 = vcmp.lt.s32.totalorder %v711, 16
  %vm720 = vcmp.lt.s32.totalorder %v712, 16
  %vm721 = vcmp.lt.s32.totalorder %v713, 16
  %vm722 = vmand %vm714, %vm718
  %vm723 = vmand %vm715, %vm719
  %vm724 = vmand %vm716, %vm720
  %vm725 = vmand %vm717, %vm721
  %v726 = vsel %vm722, 1, 0
  %v727 = vsel %vm723, 1, 0
  %v728 = vsel %vm724, 1, 0
  %v729 = vsel %vm725, 1, 0
  %vm730 = vcmp.eq.s32.totalorder %v726, 1
  %vm731 = vcmp.eq.s32.totalorder %v727, 1
  %vm732 = vcmp.eq.s32.totalorder %v728, 1
  %vm733 = vcmp.eq.s32.totalorder %v729, 1
  %734 = vst [vmem:[#allocation1] ss:$2 sm:$0xff] %v79
  %s735 = scalar_lea.vmem [#allocation1], 16
  %736 = vst [vmem:[%s735] ss:$2 sm:$0xff] %v80
  %v737 = vld.sshfl [vmem:[#allocation1] sm:$0xff pattern:$0x75316420]
  %v738 = vld.sshfl [vmem:[#allocation1 + $0x8] sm:$0xff pattern:$0x75316420]
  %v739 = vld.sshfl [vmem:[#allocation1 + $0x10] sm:$0xff pattern:$0x75316420]
  %v740 = vld.sshfl [vmem:[#allocation1 + $0x18] sm:$0xff pattern:$0x75316420]
  %v745 = vsel %vm730, %v737, 0.0
  %v746 = vsel %vm731, %v738, 0.0
  %v747 = vsel %vm732, %v739, 0.0
  %v748 = vsel %vm733, %v740, 0.0
  %749 = vst [vmem:[#allocation1] ss:$2 sm:$0xff] %v82
  %s750 = scalar_lea.vmem [#allocation1], 16
  %751 = vst [vmem:[%s750] ss:$2 sm:$0xff] %v83
  %v752 = vld.sshfl [vmem:[#allocation1] sm:$0xff pattern:$0x75316420]
  %v753 = vld.sshfl [vmem:[#allocation1 + $0x8] sm:$0xff pattern:$0x75316420]
  %v754 = vld.sshfl [vmem:[#allocation1 + $0x10] sm:$0xff pattern:$0x75316420]
  %v755 = vld.sshfl [vmem:[#allocation1 + $0x18] sm:$0xff pattern:$0x75316420]
  %v760 = vsel %vm730, %v752, 0.0
  %v761 = vsel %vm731, %v753, 0.0
  %v762 = vsel %vm732, %v754, 0.0
  %v763 = vsel %vm733, %v755, 0.0
  %767 = vrot.lane.b32.xlu0 %v745, 66
  %v768 = vpop.permute.xlu0 %767
  %769 = vrot.lane.b32.xlu0 %v746, 66
  %v770 = vpop.permute.xlu0 %769
  %771 = vrot.lane.b32.xlu0 %v747, 66
  %v772 = vpop.permute.xlu0 %771
  %vm773 = vcmask 539648
  %v774 = vsel %vm773, %v768, %v770
  %v775 = vsel %vm773, %v770, %v772
  %779 = vrot.lane.b32.xlu0 %v760, 66
  %v780 = vpop.permute.xlu0 %779
  %781 = vrot.lane.b32.xlu0 %v761, 66
  %v782 = vpop.permute.xlu0 %781
  %783 = vrot.lane.b32.xlu0 %v762, 66
  %v784 = vpop.permute.xlu0 %783
  %v785 = vsel %vm773, %v780, %v782
  %v786 = vsel %vm773, %v782, %v784
  %v787 = vrot.slane %v774, 2
  %v788 = vrot.slane %v775, 2
  %v789 = vrot.slane %v785, 2
  %v790 = vrot.slane %v786, 2
  %795 = vst [vmem:[#allocation2] sm:$0xc0] %v787
  %796 = vst [vmem:[#allocation2 + $0x8] sm:$0xc0] %v788
  %797 = vst [vmem:[#allocation2 + $0x10] sm:$0xc0] %v789
  %798 = vst [vmem:[#allocation2 + $0x18] sm:$0xc0] %v790
  %799 = vst [vmem:[#allocation2 + $0x20] sm:$0x1] %v787
  %800 = vst [vmem:[#allocation2 + $0x28] sm:$0x1] %v788
  %801 = vst [vmem:[#allocation2 + $0x30] sm:$0x1] %v789
  %802 = vst [vmem:[#allocation2 + $0x38] sm:$0x1] %v790
  %803 = vrot.lane.b32.xlu0 %v745, 50
  %v804 = vpop.permute.xlu0 %803
  %805 = vrot.lane.b32.xlu0 %v746, 50
  %v806 = vpop.permute.xlu0 %805
  %807 = vrot.lane.b32.xlu0 %v747, 50
  %v808 = vpop.permute.xlu0 %807
  %vm809 = vcmask 408576
  %v810 = vsel %vm809, %v804, %v806
  %v811 = vsel %vm809, %v806, %v808
  %812 = vrot.lane.b32.xlu0 %v760, 50
  %v813 = vpop.permute.xlu0 %812
  %814 = vrot.lane.b32.xlu0 %v761, 50
  %v815 = vpop.permute.xlu0 %814
  %816 = vrot.lane.b32.xlu0 %v762, 50
  %v817 = vpop.permute.xlu0 %816
  %v818 = vsel %vm809, %v813, %v815
  %v819 = vsel %vm809, %v815, %v817
  %v820 = vrot.slane %v810, 7
  %v821 = vrot.slane %v811, 7
  %v822 = vrot.slane %v818, 7
  %v823 = vrot.slane %v819, 7
  %828 = vst [vmem:[#allocation2 + $0x80] sm:$0xe] %v820
  %829 = vst [vmem:[#allocation2 + $0x88] sm:$0xe] %v821
  %830 = vst [vmem:[#allocation2 + $0x90] sm:$0xe] %v822
  %831 = vst [vmem:[#allocation2 + $0x98] sm:$0xe] %v823
  %832 = vrot.lane.b32.xlu0 %v745, 34
  %v833 = vpop.permute.xlu0 %832
  %834 = vrot.lane.b32.xlu0 %v746, 34
  %v835 = vpop.permute.xlu0 %834
  %836 = vrot.lane.b32.xlu0 %v747, 34
  %v837 = vpop.permute.xlu0 %836
  %vm838 = vcmask 277504
  %v839 = vsel %vm838, %v833, %v835
  %v840 = vsel %vm838, %v835, %v837
  %841 = vrot.lane.b32.xlu0 %v760, 34
  %v842 = vpop.permute.xlu0 %841
  %843 = vrot.lane.b32.xlu0 %v761, 34
  %v844 = vpop.permute.xlu0 %843
  %845 = vrot.lane.b32.xlu0 %v762, 34
  %v846 = vpop.permute.xlu0 %845
  %v847 = vsel %vm838, %v842, %v844
  %v848 = vsel %vm838, %v844, %v846
  %v849 = vrot.slane %v839, 4
  %v850 = vrot.slane %v840, 4
  %v851 = vrot.slane %v847, 4
  %v852 = vrot.slane %v848, 4
  %857 = vst [vmem:[#allocation2 + $0xe0] sm:$0x70] %v849
  %858 = vst [vmem:[#allocation2 + $0xe8] sm:$0x70] %v850
  %859 = vst [vmem:[#allocation2 + $0xf0] sm:$0x70] %v851
  %860 = vst [vmem:[#allocation2 + $0xf8] sm:$0x70] %v852
  %861 = vrot.lane.b32.xlu0 %v745, 18
  %v862 = vpop.permute.xlu0 %861
  %863 = vrot.lane.b32.xlu0 %v746, 18
  %v864 = vpop.permute.xlu0 %863
  %865 = vrot.lane.b32.xlu0 %v747, 18
  %v866 = vpop.permute.xlu0 %865
  %vm867 = vcmask 146432
  %v868 = vsel %vm867, %v862, %v864
  %v869 = vsel %vm867, %v864, %v866
  %870 = vrot.lane.b32.xlu0 %v760, 18
  %v871 = vpop.permute.xlu0 %870
  %872 = vrot.lane.b32.xlu0 %v761, 18
  %v873 = vpop.permute.xlu0 %872
  %874 = vrot.lane.b32.xlu0 %v762, 18
  %v875 = vpop.permute.xlu0 %874
  %v876 = vsel %vm867, %v871, %v873
  %v877 = vsel %vm867, %v873, %v875
  %v878 = vrot.slane %v868, 1
  %v879 = vrot.slane %v869, 1
  %v880 = vrot.slane %v876, 1
  %v881 = vrot.slane %v877, 1
  %886 = vst [vmem:[#allocation2 + $0x140] sm:$0x80] %v878
  %887 = vst [vmem:[#allocation2 + $0x148] sm:$0x80] %v879
  %888 = vst [vmem:[#allocation2 + $0x150] sm:$0x80] %v880
  %889 = vst [vmem:[#allocation2 + $0x158] sm:$0x80] %v881
  %890 = vst [vmem:[#allocation2 + $0x160] sm:$0x3] %v878
  %891 = vst [vmem:[#allocation2 + $0x168] sm:$0x3] %v879
  %892 = vst [vmem:[#allocation2 + $0x170] sm:$0x3] %v880
  %893 = vst [vmem:[#allocation2 + $0x178] sm:$0x3] %v881
  %894 = vrot.lane.b32.xlu0 %v745, 2
  %v895 = vpop.permute.xlu0 %894
  %896 = vrot.lane.b32.xlu0 %v746, 2
  %v897 = vpop.permute.xlu0 %896
  %898 = vrot.lane.b32.xlu0 %v747, 2
  %v899 = vpop.permute.xlu0 %898
  %vm900 = vcmask 15360
  %v901 = vsel %vm900, %v895, %v897
  %v902 = vsel %vm900, %v897, %v899
  %903 = vrot.lane.b32.xlu0 %v760, 2
  %v904 = vpop.permute.xlu0 %903
  %905 = vrot.lane.b32.xlu0 %v761, 2
  %v906 = vpop.permute.xlu0 %905
  %907 = vrot.lane.b32.xlu0 %v762, 2
  %v908 = vpop.permute.xlu0 %907
  %v909 = vsel %vm900, %v904, %v906
  %v910 = vsel %vm900, %v906, %v908
  %v911 = vrot.slane %v901, 6
  %v912 = vrot.slane %v902, 6
  %v913 = vrot.slane %v909, 6
  %v914 = vrot.slane %v910, 6
  %919 = vst [vmem:[#allocation2 + $0x1c0] sm:$0x1c] %v911
  %920 = vst [vmem:[#allocation2 + $0x1c8] sm:$0x1c] %v912
  %921 = vst [vmem:[#allocation2 + $0x1d0] sm:$0x1c] %v913
  %922 = vst [vmem:[#allocation2 + $0x1d8] sm:$0x1c] %v914
  %924 = vrot.lane.b32.xlu0 %v746, 114
  %v925 = vpop.permute.xlu0 %924
  %926 = vrot.lane.b32.xlu0 %v747, 114
  %v927 = vpop.permute.xlu0 %926
  %928 = vrot.lane.b32.xlu0 %v748, 114
  %v929 = vpop.permute.xlu0 %928
  %vm930 = vcmask 932864
  %v931 = vsel %vm930, %v925, %v927
  %v932 = vsel %vm930, %v927, %v929
  %934 = vrot.lane.b32.xlu0 %v761, 114
  %v935 = vpop.permute.xlu0 %934
  %936 = vrot.lane.b32.xlu0 %v762, 114
  %v937 = vpop.permute.xlu0 %936
  %938 = vrot.lane.b32.xlu0 %v763, 114
  %v939 = vpop.permute.xlu0 %938
  %v940 = vsel %vm930, %v935, %v937
  %v941 = vsel %vm930, %v937, %v939
  %v942 = vrot.slane %v931, 3
  %v943 = vrot.slane %v932, 3
  %v944 = vrot.slane %v940, 3
  %v945 = vrot.slane %v941, 3
  %950 = vst [vmem:[#allocation2 + $0x220] sm:$0xe0] %v942
  %951 = vst [vmem:[#allocation2 + $0x228] sm:$0xe0] %v943
  %952 = vst [vmem:[#allocation2 + $0x230] sm:$0xe0] %v944
  %953 = vst [vmem:[#allocation2 + $0x238] sm:$0xe0] %v945
  %954 = vrot.lane.b32.xlu0 %v746, 98
  %v955 = vpop.permute.xlu0 %954
  %956 = vrot.lane.b32.xlu0 %v747, 98
  %v957 = vpop.permute.xlu0 %956
  %958 = vrot.lane.b32.xlu0 %v748, 98
  %v959 = vpop.permute.xlu0 %958
  %vm960 = vcmask 801792
  %v961 = vsel %vm960, %v955, %v957
  %v962 = vsel %vm960, %v957, %v959
  %965 = vrot.lane.b32.xlu0 %v761, 98
  %v966 = vpop.permute.xlu0 %965
  %967 = vrot.lane.b32.xlu0 %v762, 98
  %v968 = vpop.permute.xlu0 %967
  %969 = vrot.lane.b32.xlu0 %v763, 98
  %v970 = vpop.permute.xlu0 %969
  %v971 = vsel %vm960, %v966, %v968
  %v972 = vsel %vm960, %v968, %v970
  %975 = vst [vmem:[#allocation2 + $0x2a0] sm:$0x7] %v961
  %976 = vst [vmem:[#allocation2 + $0x2a8] sm:$0x7] %v962
  %977 = vst [vmem:[#allocation2 + $0x2b0] sm:$0x7] %v971
  %978 = vst [vmem:[#allocation2 + $0x2b8] sm:$0x7] %v972
  %979 = vrot.lane.b32.xlu0 %v746, 82
  %v980 = vpop.permute.xlu0 %979
  %981 = vrot.lane.b32.xlu0 %v747, 82
  %v982 = vpop.permute.xlu0 %981
  %983 = vrot.lane.b32.xlu0 %v748, 82
  %v984 = vpop.permute.xlu0 %983
  %vm985 = vcmask 670720
  %v986 = vsel %vm985, %v980, %v982
  %v987 = vsel %vm985, %v982, %v984
  %988 = vrot.lane.b32.xlu0 %v761, 82
  %v989 = vpop.permute.xlu0 %988
  %990 = vrot.lane.b32.xlu0 %v762, 82
  %v991 = vpop.permute.xlu0 %990
  %992 = vrot.lane.b32.xlu0 %v763, 82
  %v993 = vpop.permute.xlu0 %992
  %v994 = vsel %vm985, %v989, %v991
  %v995 = vsel %vm985, %v991, %v993
  %v996 = vrot.slane %v986, 5
  %v997 = vrot.slane %v987, 5
  %v998 = vrot.slane %v994, 5
  %v999 = vrot.slane %v995, 5
  %1004 = vst [vmem:[#allocation2 + $0x300] sm:$0x38] %v996
  %1005 = vst [vmem:[#allocation2 + $0x308] sm:$0x38] %v997
  %1006 = vst [vmem:[#allocation2 + $0x310] sm:$0x38] %v998
  %1007 = vst [vmem:[#allocation2 + $0x318] sm:$0x38] %v999
  %1008 = vrot.lane.b32.xlu0 %v748, 66
  %v1009 = vpop.permute.xlu0 %1008
  %v1010 = vsel %vm773, %v772, %v1009
  %1011 = vrot.lane.b32.xlu0 %v763, 66
  %v1012 = vpop.permute.xlu0 %1011
  %v1013 = vsel %vm773, %v784, %v1012
  %v1014 = vrot.slane %v1010, 2
  %v1015 = vrot.slane %v1013, 2
  %1018 = vst [vmem:[#allocation2 + $0x360] sm:$0xc0] %v788
  %1019 = vst [vmem:[#allocation2 + $0x368] sm:$0xc0] %v1014
  %1020 = vst [vmem:[#allocation2 + $0x370] sm:$0xc0] %v790
  %1021 = vst [vmem:[#allocation2 + $0x378] sm:$0xc0] %v1015
  %1022 = vst [vmem:[#allocation2 + $0x380] sm:$0x1] %v788
  %1023 = vst [vmem:[#allocation2 + $0x388] sm:$0x1] %v1014
  %1024 = vst [vmem:[#allocation2 + $0x390] sm:$0x1] %v790
  %1025 = vst [vmem:[#allocation2 + $0x398] sm:$0x1] %v1015
  %v1026 = vsub.s32 %v75, 4294967295
  %v1027 = vsub.s32 %v76, 4294967295
  %v1028 = vsub.s32 %v77, 4294967295
  %v1029 = vsub.s32 %v78, 4294967295
  %vm1030 = vcmp.ge.s32.totalorder %v1026, 0
  %vm1031 = vcmp.ge.s32.totalorder %v1027, 0
  %vm1032 = vcmp.ge.s32.totalorder %v1028, 0
  %vm1033 = vcmp.ge.s32.totalorder %v1029, 0
  %vm1034 = vcmp.lt.s32.totalorder %v1026, 16
  %vm1035 = vcmp.lt.s32.totalorder %v1027, 16
  %vm1036 = vcmp.lt.s32.totalorder %v1028, 16
  %vm1037 = vcmp.lt.s32.totalorder %v1029, 16
  %vm1038 = vmand %vm1030, %vm1034
  %vm1039 = vmand %vm1031, %vm1035
  %vm1040 = vmand %vm1032, %vm1036
  %vm1041 = vmand %vm1033, %vm1037
  %v1042 = vsel %vm1038, 1, 0
  %v1043 = vsel %vm1039, 1, 0
  %v1044 = vsel %vm1040, 1, 0
  %v1045 = vsel %vm1041, 1, 0
  %vm1046 = vcmp.eq.s32.totalorder %v1042, 1
  %vm1047 = vcmp.eq.s32.totalorder %v1043, 1
  %vm1048 = vcmp.eq.s32.totalorder %v1044, 1
  %vm1049 = vcmp.eq.s32.totalorder %v1045, 1
  %1050 = vst [vmem:[#allocation1] ss:$2 sm:$0xff] %v79
  %s1051 = scalar_lea.vmem [#allocation1], 16
  %1052 = vst [vmem:[%s1051] ss:$2 sm:$0xff] %v80
  %v1053 = vld.sshfl [vmem:[#allocation1] sm:$0xff pattern:$0x75316420]
  %v1054 = vld.sshfl [vmem:[#allocation1 + $0x8] sm:$0xff pattern:$0x75316420]
  %v1055 = vld.sshfl [vmem:[#allocation1 + $0x10] sm:$0xff pattern:$0x75316420]
  %v1056 = vld.sshfl [vmem:[#allocation1 + $0x18] sm:$0xff pattern:$0x75316420]
  %v1061 = vsel %vm1046, %v1053, 0.0
  %v1062 = vsel %vm1047, %v1054, 0.0
  %v1063 = vsel %vm1048, %v1055, 0.0
  %v1064 = vsel %vm1049, %v1056, 0.0
  %1065 = vst [vmem:[#allocation1] ss:$2 sm:$0xff] %v82
  %s1066 = scalar_lea.vmem [#allocation1], 16
  %1067 = vst [vmem:[%s1066] ss:$2 sm:$0xff] %v83
  %v1068 = vld.sshfl [vmem:[#allocation1] sm:$0xff pattern:$0x75316420]
  %v1069 = vld.sshfl [vmem:[#allocation1 + $0x8] sm:$0xff pattern:$0x75316420]
  %v1070 = vld.sshfl [vmem:[#allocation1 + $0x10] sm:$0xff pattern:$0x75316420]
  %v1071 = vld.sshfl [vmem:[#allocation1 + $0x18] sm:$0xff pattern:$0x75316420]
  %v1076 = vsel %vm1046, %v1068, 0.0
  %v1077 = vsel %vm1047, %v1069, 0.0
  %v1078 = vsel %vm1048, %v1070, 0.0
  %v1079 = vsel %vm1049, %v1071, 0.0
  %1083 = vrot.lane.b32.xlu0 %v1061, 65
  %v1084 = vpop.permute.xlu0 %1083
  %1085 = vrot.lane.b32.xlu0 %v1062, 65
  %v1086 = vpop.permute.xlu0 %1085
  %1087 = vrot.lane.b32.xlu0 %v1063, 65
  %v1088 = vpop.permute.xlu0 %1087
  %vm1089 = vcmask 531456
  %v1090 = vsel %vm1089, %v1084, %v1086
  %v1091 = vsel %vm1089, %v1086, %v1088
  %1095 = vrot.lane.b32.xlu0 %v1076, 65
  %v1096 = vpop.permute.xlu0 %1095
  %1097 = vrot.lane.b32.xlu0 %v1077, 65
  %v1098 = vpop.permute.xlu0 %1097
  %1099 = vrot.lane.b32.xlu0 %v1078, 65
  %v1100 = vpop.permute.xlu0 %1099
  %v1101 = vsel %vm1089, %v1096, %v1098
  %v1102 = vsel %vm1089, %v1098, %v1100
  %v1103 = vrot.slane %v1090, 7
  %v1104 = vrot.slane %v1091, 7
  %v1105 = vrot.slane %v1101, 7
  %v1106 = vrot.slane %v1102, 7
  %1111 = vst [vmem:[#allocation2 + $0x20] sm:$0xe] %v1103
  %1112 = vst [vmem:[#allocation2 + $0x28] sm:$0xe] %v1104
  %1113 = vst [vmem:[#allocation2 + $0x30] sm:$0xe] %v1105
  %1114 = vst [vmem:[#allocation2 + $0x38] sm:$0xe] %v1106
  %1115 = vrot.lane.b32.xlu0 %v1061, 49
  %v1116 = vpop.permute.xlu0 %1115
  %1117 = vrot.lane.b32.xlu0 %v1062, 49
  %v1118 = vpop.permute.xlu0 %1117
  %1119 = vrot.lane.b32.xlu0 %v1063, 49
  %v1120 = vpop.permute.xlu0 %1119
  %vm1121 = vcmask 400384
  %v1122 = vsel %vm1121, %v1116, %v1118
  %v1123 = vsel %vm1121, %v1118, %v1120
  %1124 = vrot.lane.b32.xlu0 %v1076, 49
  %v1125 = vpop.permute.xlu0 %1124
  %1126 = vrot.lane.b32.xlu0 %v1077, 49
  %v1127 = vpop.permute.xlu0 %1126
  %1128 = vrot.lane.b32.xlu0 %v1078, 49
  %v1129 = vpop.permute.xlu0 %1128
  %v1130 = vsel %vm1121, %v1125, %v1127
  %v1131 = vsel %vm1121, %v1127, %v1129
  %v1132 = vrot.slane %v1122, 4
  %v1133 = vrot.slane %v1123, 4
  %v1134 = vrot.slane %v1130, 4
  %v1135 = vrot.slane %v1131, 4
  %1140 = vst [vmem:[#allocation2 + $0x80] sm:$0x70] %v1132
  %1141 = vst [vmem:[#allocation2 + $0x88] sm:$0x70] %v1133
  %1142 = vst [vmem:[#allocation2 + $0x90] sm:$0x70] %v1134
  %1143 = vst [vmem:[#allocation2 + $0x98] sm:$0x70] %v1135
  %1144 = vrot.lane.b32.xlu0 %v1061, 33
  %v1145 = vpop.permute.xlu0 %1144
  %1146 = vrot.lane.b32.xlu0 %v1062, 33
  %v1147 = vpop.permute.xlu0 %1146
  %1148 = vrot.lane.b32.xlu0 %v1063, 33
  %v1149 = vpop.permute.xlu0 %1148
  %vm1150 = vcmask 269312
  %v1151 = vsel %vm1150, %v1145, %v1147
  %v1152 = vsel %vm1150, %v1147, %v1149
  %1153 = vrot.lane.b32.xlu0 %v1076, 33
  %v1154 = vpop.permute.xlu0 %1153
  %1155 = vrot.lane.b32.xlu0 %v1077, 33
  %v1156 = vpop.permute.xlu0 %1155
  %1157 = vrot.lane.b32.xlu0 %v1078, 33
  %v1158 = vpop.permute.xlu0 %1157
  %v1159 = vsel %vm1150, %v1154, %v1156
  %v1160 = vsel %vm1150, %v1156, %v1158
  %v1161 = vrot.slane %v1151, 1
  %v1162 = vrot.slane %v1152, 1
  %v1163 = vrot.slane %v1159, 1
  %v1164 = vrot.slane %v1160, 1
  %1169 = vst [vmem:[#allocation2 + $0xe0] sm:$0x80] %v1161
  %1170 = vst [vmem:[#allocation2 + $0xe8] sm:$0x80] %v1162
  %1171 = vst [vmem:[#allocation2 + $0xf0] sm:$0x80] %v1163
  %1172 = vst [vmem:[#allocation2 + $0xf8] sm:$0x80] %v1164
  %1173 = vst [vmem:[#allocation2 + $0x100] sm:$0x3] %v1161
  %1174 = vst [vmem:[#allocation2 + $0x108] sm:$0x3] %v1162
  %1175 = vst [vmem:[#allocation2 + $0x110] sm:$0x3] %v1163
  %1176 = vst [vmem:[#allocation2 + $0x118] sm:$0x3] %v1164
  %1177 = vrot.lane.b32.xlu0 %v1061, 17
  %v1178 = vpop.permute.xlu0 %1177
  %1179 = vrot.lane.b32.xlu0 %v1062, 17
  %v1180 = vpop.permute.xlu0 %1179
  %1181 = vrot.lane.b32.xlu0 %v1063, 17
  %v1182 = vpop.permute.xlu0 %1181
  %vm1183 = vcmask 138240
  %v1184 = vsel %vm1183, %v1178, %v1180
  %v1185 = vsel %vm1183, %v1180, %v1182
  %1186 = vrot.lane.b32.xlu0 %v1076, 17
  %v1187 = vpop.permute.xlu0 %1186
  %1188 = vrot.lane.b32.xlu0 %v1077, 17
  %v1189 = vpop.permute.xlu0 %1188
  %1190 = vrot.lane.b32.xlu0 %v1078, 17
  %v1191 = vpop.permute.xlu0 %1190
  %v1192 = vsel %vm1183, %v1187, %v1189
  %v1193 = vsel %vm1183, %v1189, %v1191
  %v1194 = vrot.slane %v1184, 6
  %v1195 = vrot.slane %v1185, 6
  %v1196 = vrot.slane %v1192, 6
  %v1197 = vrot.slane %v1193, 6
  %1202 = vst [vmem:[#allocation2 + $0x160] sm:$0x1c] %v1194
  %1203 = vst [vmem:[#allocation2 + $0x168] sm:$0x1c] %v1195
  %1204 = vst [vmem:[#allocation2 + $0x170] sm:$0x1c] %v1196
  %1205 = vst [vmem:[#allocation2 + $0x178] sm:$0x1c] %v1197
  %1206 = vrot.lane.b32.xlu0 %v1061, 1
  %v1207 = vpop.permute.xlu0 %1206
  %1208 = vrot.lane.b32.xlu0 %v1062, 1
  %v1209 = vpop.permute.xlu0 %1208
  %1210 = vrot.lane.b32.xlu0 %v1063, 1
  %v1211 = vpop.permute.xlu0 %1210
  %vm1212 = vcmask 7168
  %v1213 = vsel %vm1212, %v1207, %v1209
  %v1214 = vsel %vm1212, %v1209, %v1211
  %1215 = vrot.lane.b32.xlu0 %v1076, 1
  %v1216 = vpop.permute.xlu0 %1215
  %1217 = vrot.lane.b32.xlu0 %v1077, 1
  %v1218 = vpop.permute.xlu0 %1217
  %1219 = vrot.lane.b32.xlu0 %v1078, 1
  %v1220 = vpop.permute.xlu0 %1219
  %v1221 = vsel %vm1212, %v1216, %v1218
  %v1222 = vsel %vm1212, %v1218, %v1220
  %v1223 = vrot.slane %v1213, 3
  %v1224 = vrot.slane %v1214, 3
  %v1225 = vrot.slane %v1221, 3
  %v1226 = vrot.slane %v1222, 3
  %1231 = vst [vmem:[#allocation2 + $0x1c0] sm:$0xe0] %v1223
  %1232 = vst [vmem:[#allocation2 + $0x1c8] sm:$0xe0] %v1224
  %1233 = vst [vmem:[#allocation2 + $0x1d0] sm:$0xe0] %v1225
  %1234 = vst [vmem:[#allocation2 + $0x1d8] sm:$0xe0] %v1226
  %1236 = vrot.lane.b32.xlu0 %v1062, 113
  %v1237 = vpop.permute.xlu0 %1236
  %1238 = vrot.lane.b32.xlu0 %v1063, 113
  %v1239 = vpop.permute.xlu0 %1238
  %1240 = vrot.lane.b32.xlu0 %v1064, 113
  %v1241 = vpop.permute.xlu0 %1240
  %vm1242 = vcmask 924672
  %v1243 = vsel %vm1242, %v1237, %v1239
  %v1244 = vsel %vm1242, %v1239, %v1241
  %1248 = vrot.lane.b32.xlu0 %v1077, 113
  %v1249 = vpop.permute.xlu0 %1248
  %1250 = vrot.lane.b32.xlu0 %v1078, 113
  %v1251 = vpop.permute.xlu0 %1250
  %1252 = vrot.lane.b32.xlu0 %v1079, 113
  %v1253 = vpop.permute.xlu0 %1252
  %v1254 = vsel %vm1242, %v1249, %v1251
  %v1255 = vsel %vm1242, %v1251, %v1253
  %1258 = vst [vmem:[#allocation2 + $0x240] sm:$0x7] %v1243
  %1259 = vst [vmem:[#allocation2 + $0x248] sm:$0x7] %v1244
  %1260 = vst [vmem:[#allocation2 + $0x250] sm:$0x7] %v1254
  %1261 = vst [vmem:[#allocation2 + $0x258] sm:$0x7] %v1255
  %1262 = vrot.lane.b32.xlu0 %v1062, 97
  %v1263 = vpop.permute.xlu0 %1262
  %1264 = vrot.lane.b32.xlu0 %v1063, 97
  %v1265 = vpop.permute.xlu0 %1264
  %1266 = vrot.lane.b32.xlu0 %v1064, 97
  %v1267 = vpop.permute.xlu0 %1266
  %vm1268 = vcmask 793600
  %v1269 = vsel %vm1268, %v1263, %v1265
  %v1270 = vsel %vm1268, %v1265, %v1267
  %1271 = vrot.lane.b32.xlu0 %v1077, 97
  %v1272 = vpop.permute.xlu0 %1271
  %1273 = vrot.lane.b32.xlu0 %v1078, 97
  %v1274 = vpop.permute.xlu0 %1273
  %1275 = vrot.lane.b32.xlu0 %v1079, 97
  %v1276 = vpop.permute.xlu0 %1275
  %v1277 = vsel %vm1268, %v1272, %v1274
  %v1278 = vsel %vm1268, %v1274, %v1276
  %v1279 = vrot.slane %v1269, 5
  %v1280 = vrot.slane %v1270, 5
  %v1281 = vrot.slane %v1277, 5
  %v1282 = vrot.slane %v1278, 5
  %1287 = vst [vmem:[#allocation2 + $0x2a0] sm:$0x38] %v1279
  %1288 = vst [vmem:[#allocation2 + $0x2a8] sm:$0x38] %v1280
  %1289 = vst [vmem:[#allocation2 + $0x2b0] sm:$0x38] %v1281
  %1290 = vst [vmem:[#allocation2 + $0x2b8] sm:$0x38] %v1282
  %1291 = vrot.lane.b32.xlu0 %v1062, 81
  %v1292 = vpop.permute.xlu0 %1291
  %1293 = vrot.lane.b32.xlu0 %v1063, 81
  %v1294 = vpop.permute.xlu0 %1293
  %1295 = vrot.lane.b32.xlu0 %v1064, 81
  %v1296 = vpop.permute.xlu0 %1295
  %vm1297 = vcmask 662528
  %v1298 = vsel %vm1297, %v1292, %v1294
  %v1299 = vsel %vm1297, %v1294, %v1296
  %1300 = vrot.lane.b32.xlu0 %v1077, 81
  %v1301 = vpop.permute.xlu0 %1300
  %1302 = vrot.lane.b32.xlu0 %v1078, 81
  %v1303 = vpop.permute.xlu0 %1302
  %1304 = vrot.lane.b32.xlu0 %v1079, 81
  %v1305 = vpop.permute.xlu0 %1304
  %v1306 = vsel %vm1297, %v1301, %v1303
  %v1307 = vsel %vm1297, %v1303, %v1305
  %v1308 = vrot.slane %v1298, 2
  %v1309 = vrot.slane %v1299, 2
  %v1310 = vrot.slane %v1306, 2
  %v1311 = vrot.slane %v1307, 2
  %1316 = vst [vmem:[#allocation2 + $0x300] sm:$0xc0] %v1308
  %1317 = vst [vmem:[#allocation2 + $0x308] sm:$0xc0] %v1309
  %1318 = vst [vmem:[#allocation2 + $0x310] sm:$0xc0] %v1310
  %1319 = vst [vmem:[#allocation2 + $0x318] sm:$0xc0] %v1311
  %1320 = vst [vmem:[#allocation2 + $0x320] sm:$0x1] %v1308
  %1321 = vst [vmem:[#allocation2 + $0x328] sm:$0x1] %v1309
  %1322 = vst [vmem:[#allocation2 + $0x330] sm:$0x1] %v1310
  %1323 = vst [vmem:[#allocation2 + $0x338] sm:$0x1] %v1311
  %1324 = vrot.lane.b32.xlu0 %v1064, 65
  %v1325 = vpop.permute.xlu0 %1324
  %v1326 = vsel %vm1089, %v1088, %v1325
  %1327 = vrot.lane.b32.xlu0 %v1079, 65
  %v1328 = vpop.permute.xlu0 %1327
  %v1329 = vsel %vm1089, %v1100, %v1328
  %v1330 = vrot.slane %v1326, 7
  %v1331 = vrot.slane %v1329, 7
  %1334 = vst [vmem:[#allocation2 + $0x380] sm:$0xe] %v1104
  %1335 = vst [vmem:[#allocation2 + $0x388] sm:$0xe] %v1330
  %1336 = vst [vmem:[#allocation2 + $0x390] sm:$0xe] %v1106
  %1337 = vst [vmem:[#allocation2 + $0x398] sm:$0xe] %v1331
  %1338 = vst [vmem:[#allocation1] ss:$2 sm:$0xff] %v79
  %s1339 = scalar_lea.vmem [#allocation1], 16
  %1340 = vst [vmem:[%s1339] ss:$2 sm:$0xff] %v80
  %v1341 = vld.sshfl [vmem:[#allocation1] sm:$0xff pattern:$0x75316420]
  %v1342 = vld.sshfl [vmem:[#allocation1 + $0x8] sm:$0xff pattern:$0x75316420]
  %v1343 = vld.sshfl [vmem:[#allocation1 + $0x10] sm:$0xff pattern:$0x75316420]
  %1344 = vrot.lane.b32.xlu0 %v1341, 64
  %v1345 = vpop.permute.xlu0 %1344
  %1346 = vrot.lane.b32.xlu0 %v1342, 64
  %v1347 = vpop.permute.xlu0 %1346
  %1348 = vrot.lane.b32.xlu0 %v1343, 64
  %v1349 = vpop.permute.xlu0 %1348
  %vm1350 = vcmask 523264
  %v1351 = vsel %vm1350, %v1345, %v1347
  %v1352 = vsel %vm1350, %v1347, %v1349
  %1353 = vst [vmem:[#allocation1] ss:$2 sm:$0xff] %v82
  %s1354 = scalar_lea.vmem [#allocation1], 16
  %1355 = vst [vmem:[%s1354] ss:$2 sm:$0xff] %v83
  %v1356 = vld.sshfl [vmem:[#allocation1] sm:$0xff pattern:$0x75316420]
  %v1357 = vld.sshfl [vmem:[#allocation1 + $0x8] sm:$0xff pattern:$0x75316420]
  %v1358 = vld.sshfl [vmem:[#allocation1 + $0x10] sm:$0xff pattern:$0x75316420]
  %1359 = vrot.lane.b32.xlu0 %v1356, 64
  %v1360 = vpop.permute.xlu0 %1359
  %1361 = vrot.lane.b32.xlu0 %v1357, 64
  %v1362 = vpop.permute.xlu0 %1361
  %1363 = vrot.lane.b32.xlu0 %v1358, 64
  %v1364 = vpop.permute.xlu0 %1363
  %v1365 = vsel %vm1350, %v1360, %v1362
  %v1366 = vsel %vm1350, %v1362, %v1364
  %v1367 = vrot.slane %v1351, 4
  %v1368 = vrot.slane %v1352, 4
  %v1369 = vrot.slane %v1365, 4
  %v1370 = vrot.slane %v1366, 4
  %1375 = vst [vmem:[#allocation2 + $0x20] sm:$0x70] %v1367
  %1376 = vst [vmem:[#allocation2 + $0x28] sm:$0x70] %v1368
  %1377 = vst [vmem:[#allocation2 + $0x30] sm:$0x70] %v1369
  %1378 = vst [vmem:[#allocation2 + $0x38] sm:$0x70] %v1370
  %1379 = vst [vmem:[#allocation1] ss:$2 sm:$0xff] %v79
  %s1380 = scalar_lea.vmem [#allocation1], 16
  %1381 = vst [vmem:[%s1380] ss:$2 sm:$0xff] %v80
  %v1382 = vld.sshfl [vmem:[#allocation1] sm:$0xff pattern:$0x75316420]
  %v1383 = vld.sshfl [vmem:[#allocation1 + $0x8] sm:$0xff pattern:$0x75316420]
  %v1384 = vld.sshfl [vmem:[#allocation1 + $0x10] sm:$0xff pattern:$0x75316420]
  %1385 = vrot.lane.b32.xlu0 %v1382, 48
  %v1386 = vpop.permute.xlu0 %1385
  %1387 = vrot.lane.b32.xlu0 %v1383, 48
  %v1388 = vpop.permute.xlu0 %1387
  %1389 = vrot.lane.b32.xlu0 %v1384, 48
  %v1390 = vpop.permute.xlu0 %1389
  %vm1391 = vcmask 392192
  %v1392 = vsel %vm1391, %v1386, %v1388
  %v1393 = vsel %vm1391, %v1388, %v1390
  %1394 = vst [vmem:[#allocation1] ss:$2 sm:$0xff] %v82
  %s1395 = scalar_lea.vmem [#allocation1], 16
  %1396 = vst [vmem:[%s1395] ss:$2 sm:$0xff] %v83
  %v1397 = vld.sshfl [vmem:[#allocation1] sm:$0xff pattern:$0x75316420]
  %v1398 = vld.sshfl [vmem:[#allocation1 + $0x8] sm:$0xff pattern:$0x75316420]
  %v1399 = vld.sshfl [vmem:[#allocation1 + $0x10] sm:$0xff pattern:$0x75316420]
  %1400 = vrot.lane.b32.xlu0 %v1397, 48
  %v1401 = vpop.permute.xlu0 %1400
  %1402 = vrot.lane.b32.xlu0 %v1398, 48
  %v1403 = vpop.permute.xlu0 %1402
  %1404 = vrot.lane.b32.xlu0 %v1399, 48
  %v1405 = vpop.permute.xlu0 %1404
  %v1406 = vsel %vm1391, %v1401, %v1403
  %v1407 = vsel %vm1391, %v1403, %v1405
  %v1408 = vrot.slane %v1392, 1
  %v1409 = vrot.slane %v1393, 1
  %v1410 = vrot.slane %v1406, 1
  %v1411 = vrot.slane %v1407, 1
  %1416 = vst [vmem:[#allocation2 + $0x80] sm:$0x80] %v1408
  %1417 = vst [vmem:[#allocation2 + $0x88] sm:$0x80] %v1409
  %1418 = vst [vmem:[#allocation2 + $0x90] sm:$0x80] %v1410
  %1419 = vst [vmem:[#allocation2 + $0x98] sm:$0x80] %v1411
  %1420 = vst [vmem:[#allocation2 + $0xa0] sm:$0x3] %v1408
  %1421 = vst [vmem:[#allocation2 + $0xa8] sm:$0x3] %v1409
  %1422 = vst [vmem:[#allocation2 + $0xb0] sm:$0x3] %v1410
  %1423 = vst [vmem:[#allocation2 + $0xb8] sm:$0x3] %v1411
  %1424 = vst [vmem:[#allocation1] ss:$2 sm:$0xff] %v79
  %s1425 = scalar_lea.vmem [#allocation1], 16
  %1426 = vst [vmem:[%s1425] ss:$2 sm:$0xff] %v80
  %v1427 = vld.sshfl [vmem:[#allocation1] sm:$0xff pattern:$0x75316420]
  %v1428 = vld.sshfl [vmem:[#allocation1 + $0x8] sm:$0xff pattern:$0x75316420]
  %v1429 = vld.sshfl [vmem:[#allocation1 + $0x10] sm:$0xff pattern:$0x75316420]
  %1430 = vrot.lane.b32.xlu0 %v1427, 32
  %v1431 = vpop.permute.xlu0 %1430
  %1432 = vrot.lane.b32.xlu0 %v1428, 32
  %v1433 = vpop.permute.xlu0 %1432
  %1434 = vrot.lane.b32.xlu0 %v1429, 32
  %v1435 = vpop.permute.xlu0 %1434
  %vm1436 = vcmask 261120
  %v1437 = vsel %vm1436, %v1431, %v1433
  %v1438 = vsel %vm1436, %v1433, %v1435
  %1439 = vst [vmem:[#allocation1] ss:$2 sm:$0xff] %v82
  %s1440 = scalar_lea.vmem [#allocation1], 16
  %1441 = vst [vmem:[%s1440] ss:$2 sm:$0xff] %v83
  %v1442 = vld.sshfl [vmem:[#allocation1] sm:$0xff pattern:$0x75316420]
  %v1443 = vld.sshfl [vmem:[#allocation1 + $0x8] sm:$0xff pattern:$0x75316420]
  %v1444 = vld.sshfl [vmem:[#allocation1 + $0x10] sm:$0xff pattern:$0x75316420]
  %1445 = vrot.lane.b32.xlu0 %v1442, 32
  %v1446 = vpop.permute.xlu0 %1445
  %1447 = vrot.lane.b32.xlu0 %v1443, 32
  %v1448 = vpop.permute.xlu0 %1447
  %1449 = vrot.lane.b32.xlu0 %v1444, 32
  %v1450 = vpop.permute.xlu0 %1449
  %v1451 = vsel %vm1436, %v1446, %v1448
  %v1452 = vsel %vm1436, %v1448, %v1450
  %v1453 = vrot.slane %v1437, 6
  %v1454 = vrot.slane %v1438, 6
  %v1455 = vrot.slane %v1451, 6
  %v1456 = vrot.slane %v1452, 6
  %1461 = vst [vmem:[#allocation2 + $0x100] sm:$0x1c] %v1453
  %1462 = vst [vmem:[#allocation2 + $0x108] sm:$0x1c] %v1454
  %1463 = vst [vmem:[#allocation2 + $0x110] sm:$0x1c] %v1455
  %1464 = vst [vmem:[#allocation2 + $0x118] sm:$0x1c] %v1456
  %1465 = vst [vmem:[#allocation1] ss:$2 sm:$0xff] %v79
  %s1466 = scalar_lea.vmem [#allocation1], 16
  %1467 = vst [vmem:[%s1466] ss:$2 sm:$0xff] %v80
  %v1468 = vld.sshfl [vmem:[#allocation1] sm:$0xff pattern:$0x75316420]
  %v1469 = vld.sshfl [vmem:[#allocation1 + $0x8] sm:$0xff pattern:$0x75316420]
  %v1470 = vld.sshfl [vmem:[#allocation1 + $0x10] sm:$0xff pattern:$0x75316420]
  %1471 = vrot.lane.b32.xlu0 %v1468, 16
  %v1472 = vpop.permute.xlu0 %1471
  %1473 = vrot.lane.b32.xlu0 %v1469, 16
  %v1474 = vpop.permute.xlu0 %1473
  %1475 = vrot.lane.b32.xlu0 %v1470, 16
  %v1476 = vpop.permute.xlu0 %1475
  %vm1477 = vcmask 130048
  %v1478 = vsel %vm1477, %v1472, %v1474
  %v1479 = vsel %vm1477, %v1474, %v1476
  %1480 = vst [vmem:[#allocation1] ss:$2 sm:$0xff] %v82
  %s1481 = scalar_lea.vmem [#allocation1], 16
  %1482 = vst [vmem:[%s1481] ss:$2 sm:$0xff] %v83
  %v1483 = vld.sshfl [vmem:[#allocation1] sm:$0xff pattern:$0x75316420]
  %v1484 = vld.sshfl [vmem:[#allocation1 + $0x8] sm:$0xff pattern:$0x75316420]
  %v1485 = vld.sshfl [vmem:[#allocation1 + $0x10] sm:$0xff pattern:$0x75316420]
  %1486 = vrot.lane.b32.xlu0 %v1483, 16
  %v1487 = vpop.permute.xlu0 %1486
  %1488 = vrot.lane.b32.xlu0 %v1484, 16
  %v1489 = vpop.permute.xlu0 %1488
  %1490 = vrot.lane.b32.xlu0 %v1485, 16
  %v1491 = vpop.permute.xlu0 %1490
  %v1492 = vsel %vm1477, %v1487, %v1489
  %v1493 = vsel %vm1477, %v1489, %v1491
  %v1494 = vrot.slane %v1478, 3
  %v1495 = vrot.slane %v1479, 3
  %v1496 = vrot.slane %v1492, 3
  %v1497 = vrot.slane %v1493, 3
  %1502 = vst [vmem:[#allocation2 + $0x160] sm:$0xe0] %v1494
  %1503 = vst [vmem:[#allocation2 + $0x168] sm:$0xe0] %v1495
  %1504 = vst [vmem:[#allocation2 + $0x170] sm:$0xe0] %v1496
  %1505 = vst [vmem:[#allocation2 + $0x178] sm:$0xe0] %v1497
  %1506 = vst [vmem:[#allocation1] ss:$2 sm:$0xff] %v79
  %s1507 = scalar_lea.vmem [#allocation1], 16
  %1508 = vst [vmem:[%s1507] ss:$2 sm:$0xff] %v80
  %v1509 = vld.sshfl [vmem:[#allocation1 + $0x8] sm:$0xff pattern:$0x75316420]
  %v1510 = vld.sshfl [vmem:[#allocation1 + $0x10] sm:$0xff pattern:$0x75316420]
  %1513 = vst [vmem:[#allocation1] ss:$2 sm:$0xff] %v82
  %s1514 = scalar_lea.vmem [#allocation1], 16
  %1515 = vst [vmem:[%s1514] ss:$2 sm:$0xff] %v83
  %v1516 = vld.sshfl [vmem:[#allocation1 + $0x8] sm:$0xff pattern:$0x75316420]
  %v1517 = vld.sshfl [vmem:[#allocation1 + $0x10] sm:$0xff pattern:$0x75316420]
  %1520 = vst [vmem:[#allocation2 + $0x1e0] sm:$0x7] %v1509
  %1521 = vst [vmem:[#allocation2 + $0x1e8] sm:$0x7] %v1510
  %1522 = vst [vmem:[#allocation2 + $0x1f0] sm:$0x7] %v1516
  %1523 = vst [vmem:[#allocation2 + $0x1f8] sm:$0x7] %v1517
  %1524 = vst [vmem:[#allocation1] ss:$2 sm:$0xff] %v79
  %s1525 = scalar_lea.vmem [#allocation1], 16
  %1526 = vst [vmem:[%s1525] ss:$2 sm:$0xff] %v80
  %v1527 = vld.sshfl [vmem:[#allocation1 + $0x8] sm:$0xff pattern:$0x75316420]
  %v1528 = vld.sshfl [vmem:[#allocation1 + $0x10] sm:$0xff pattern:$0x75316420]
  %v1529 = vld.sshfl [vmem:[#allocation1 + $0x18] sm:$0xff pattern:$0x75316420]
  %1530 = vrot.lane.b32.xlu0 %v1527, 112
  %v1531 = vpop.permute.xlu0 %1530
  %1532 = vrot.lane.b32.xlu0 %v1528, 112
  %v1533 = vpop.permute.xlu0 %1532
  %1534 = vrot.lane.b32.xlu0 %v1529, 112
  %v1535 = vpop.permute.xlu0 %1534
  %vm1536 = vcmask 916480
  %v1537 = vsel %vm1536, %v1531, %v1533
  %v1538 = vsel %vm1536, %v1533, %v1535
  %1539 = vst [vmem:[#allocation1] ss:$2 sm:$0xff] %v82
  %s1540 = scalar_lea.vmem [#allocation1], 16
  %1541 = vst [vmem:[%s1540] ss:$2 sm:$0xff] %v83
  %v1542 = vld.sshfl [vmem:[#allocation1 + $0x8] sm:$0xff pattern:$0x75316420]
  %v1543 = vld.sshfl [vmem:[#allocation1 + $0x10] sm:$0xff pattern:$0x75316420]
  %v1544 = vld.sshfl [vmem:[#allocation1 + $0x18] sm:$0xff pattern:$0x75316420]
  %1545 = vrot.lane.b32.xlu0 %v1542, 112
  %v1546 = vpop.permute.xlu0 %1545
  %1547 = vrot.lane.b32.xlu0 %v1543, 112
  %v1548 = vpop.permute.xlu0 %1547
  %1549 = vrot.lane.b32.xlu0 %v1544, 112
  %v1550 = vpop.permute.xlu0 %1549
  %v1551 = vsel %vm1536, %v1546, %v1548
  %v1552 = vsel %vm1536, %v1548, %v1550
  %v1553 = vrot.slane %v1537, 5
  %v1554 = vrot.slane %v1538, 5
  %v1555 = vrot.slane %v1551, 5
  %v1556 = vrot.slane %v1552, 5
  %1561 = vst [vmem:[#allocation2 + $0x240] sm:$0x38] %v1553
  %1562 = vst [vmem:[#allocation2 + $0x248] sm:$0x38] %v1554
  %1563 = vst [vmem:[#allocation2 + $0x250] sm:$0x38] %v1555
  %1564 = vst [vmem:[#allocation2 + $0x258] sm:$0x38] %v1556
  %1565 = vst [vmem:[#allocation1] ss:$2 sm:$0xff] %v79
  %s1566 = scalar_lea.vmem [#allocation1], 16
  %1567 = vst [vmem:[%s1566] ss:$2 sm:$0xff] %v80
  %v1568 = vld.sshfl [vmem:[#allocation1 + $0x8] sm:$0xff pattern:$0x75316420]
  %v1569 = vld.sshfl [vmem:[#allocation1 + $0x10] sm:$0xff pattern:$0x75316420]
  %v1570 = vld.sshfl [vmem:[#allocation1 + $0x18] sm:$0xff pattern:$0x75316420]
  %1571 = vrot.lane.b32.xlu0 %v1568, 96
  %v1572 = vpop.permute.xlu0 %1571
  %1573 = vrot.lane.b32.xlu0 %v1569, 96
  %v1574 = vpop.permute.xlu0 %1573
  %1575 = vrot.lane.b32.xlu0 %v1570, 96
  %v1576 = vpop.permute.xlu0 %1575
  %vm1577 = vcmask 785408
  %v1578 = vsel %vm1577, %v1572, %v1574
  %v1579 = vsel %vm1577, %v1574, %v1576
  %1580 = vst [vmem:[#allocation1] ss:$2 sm:$0xff] %v82
  %s1581 = scalar_lea.vmem [#allocation1], 16
  %1582 = vst [vmem:[%s1581] ss:$2 sm:$0xff] %v83
  %v1583 = vld.sshfl [vmem:[#allocation1 + $0x8] sm:$0xff pattern:$0x75316420]
  %v1584 = vld.sshfl [vmem:[#allocation1 + $0x10] sm:$0xff pattern:$0x75316420]
  %v1585 = vld.sshfl [vmem:[#allocation1 + $0x18] sm:$0xff pattern:$0x75316420]
  %1586 = vrot.lane.b32.xlu0 %v1583, 96
  %v1587 = vpop.permute.xlu0 %1586
  %1588 = vrot.lane.b32.xlu0 %v1584, 96
  %v1589 = vpop.permute.xlu0 %1588
  %1590 = vrot.lane.b32.xlu0 %v1585, 96
  %v1591 = vpop.permute.xlu0 %1590
  %v1592 = vsel %vm1577, %v1587, %v1589
  %v1593 = vsel %vm1577, %v1589, %v1591
  %v1594 = vrot.slane %v1578, 2
  %v1595 = vrot.slane %v1579, 2
  %v1596 = vrot.slane %v1592, 2
  %v1597 = vrot.slane %v1593, 2
  %1602 = vst [vmem:[#allocation2 + $0x2a0] sm:$0xc0] %v1594
  %1603 = vst [vmem:[#allocation2 + $0x2a8] sm:$0xc0] %v1595
  %1604 = vst [vmem:[#allocation2 + $0x2b0] sm:$0xc0] %v1596
  %1605 = vst [vmem:[#allocation2 + $0x2b8] sm:$0xc0] %v1597
  %1606 = vst [vmem:[#allocation2 + $0x2c0] sm:$0x1] %v1594
  %1607 = vst [vmem:[#allocation2 + $0x2c8] sm:$0x1] %v1595
  %1608 = vst [vmem:[#allocation2 + $0x2d0] sm:$0x1] %v1596
  %1609 = vst [vmem:[#allocation2 + $0x2d8] sm:$0x1] %v1597
  %1610 = vst [vmem:[#allocation1] ss:$2 sm:$0xff] %v79
  %s1611 = scalar_lea.vmem [#allocation1], 16
  %1612 = vst [vmem:[%s1611] ss:$2 sm:$0xff] %v80
  %v1613 = vld.sshfl [vmem:[#allocation1 + $0x8] sm:$0xff pattern:$0x75316420]
  %v1614 = vld.sshfl [vmem:[#allocation1 + $0x10] sm:$0xff pattern:$0x75316420]
  %v1615 = vld.sshfl [vmem:[#allocation1 + $0x18] sm:$0xff pattern:$0x75316420]
  %1616 = vrot.lane.b32.xlu0 %v1613, 80
  %v1617 = vpop.permute.xlu0 %1616
  %1618 = vrot.lane.b32.xlu0 %v1614, 80
  %v1619 = vpop.permute.xlu0 %1618
  %1620 = vrot.lane.b32.xlu0 %v1615, 80
  %v1621 = vpop.permute.xlu0 %1620
  %vm1622 = vcmask 654336
  %v1623 = vsel %vm1622, %v1617, %v1619
  %v1624 = vsel %vm1622, %v1619, %v1621
  %1625 = vst [vmem:[#allocation1] ss:$2 sm:$0xff] %v82
  %s1626 = scalar_lea.vmem [#allocation1], 16
  %1627 = vst [vmem:[%s1626] ss:$2 sm:$0xff] %v83
  %v1628 = vld.sshfl [vmem:[#allocation1 + $0x8] sm:$0xff pattern:$0x75316420]
  %v1629 = vld.sshfl [vmem:[#allocation1 + $0x10] sm:$0xff pattern:$0x75316420]
  %v1630 = vld.sshfl [vmem:[#allocation1 + $0x18] sm:$0xff pattern:$0x75316420]
  %1631 = vrot.lane.b32.xlu0 %v1628, 80
  %v1632 = vpop.permute.xlu0 %1631
  %1633 = vrot.lane.b32.xlu0 %v1629, 80
  %v1634 = vpop.permute.xlu0 %1633
  %1635 = vrot.lane.b32.xlu0 %v1630, 80
  %v1636 = vpop.permute.xlu0 %1635
  %v1637 = vsel %vm1622, %v1632, %v1634
  %v1638 = vsel %vm1622, %v1634, %v1636
  %v1639 = vrot.slane %v1623, 7
  %v1640 = vrot.slane %v1624, 7
  %v1641 = vrot.slane %v1637, 7
  %v1642 = vrot.slane %v1638, 7
  %1647 = vst [vmem:[#allocation2 + $0x320] sm:$0xe] %v1639
  %1648 = vst [vmem:[#allocation2 + $0x328] sm:$0xe] %v1640
  %1649 = vst [vmem:[#allocation2 + $0x330] sm:$0xe] %v1641
  %1650 = vst [vmem:[#allocation2 + $0x338] sm:$0xe] %v1642
  %1651 = vst [vmem:[#allocation1] ss:$2 sm:$0xff] %v79
  %s1652 = scalar_lea.vmem [#allocation1], 16
  %1653 = vst [vmem:[%s1652] ss:$2 sm:$0xff] %v80
  %v1654 = vld.sshfl [vmem:[#allocation1 + $0x8] sm:$0xff pattern:$0x75316420]
  %v1655 = vld.sshfl [vmem:[#allocation1 + $0x10] sm:$0xff pattern:$0x75316420]
  %v1656 = vld.sshfl [vmem:[#allocation1 + $0x18] sm:$0xff pattern:$0x75316420]
  %1657 = vrot.lane.b32.xlu0 %v1654, 64
  %v1658 = vpop.permute.xlu0 %1657
  %1659 = vrot.lane.b32.xlu0 %v1655, 64
  %v1660 = vpop.permute.xlu0 %1659
  %1661 = vrot.lane.b32.xlu0 %v1656, 64
  %v1662 = vpop.permute.xlu0 %1661
  %v1663 = vsel %vm1350, %v1658, %v1660
  %v1664 = vsel %vm1350, %v1660, %v1662
  %1665 = vst [vmem:[#allocation1] ss:$2 sm:$0xff] %v82
  %s1666 = scalar_lea.vmem [#allocation1], 16
  %1667 = vst [vmem:[%s1666] ss:$2 sm:$0xff] %v83
  %v1668 = vld.sshfl [vmem:[#allocation1 + $0x8] sm:$0xff pattern:$0x75316420]
  %v1669 = vld.sshfl [vmem:[#allocation1 + $0x10] sm:$0xff pattern:$0x75316420]
  %v1670 = vld.sshfl [vmem:[#allocation1 + $0x18] sm:$0xff pattern:$0x75316420]
  %1671 = vrot.lane.b32.xlu0 %v1668, 64
  %v1672 = vpop.permute.xlu0 %1671
  %1673 = vrot.lane.b32.xlu0 %v1669, 64
  %v1674 = vpop.permute.xlu0 %1673
  %1675 = vrot.lane.b32.xlu0 %v1670, 64
  %v1676 = vpop.permute.xlu0 %1675
  %v1677 = vsel %vm1350, %v1672, %v1674
  %v1678 = vsel %vm1350, %v1674, %v1676
  %v1679 = vrot.slane %v1663, 4
  %v1680 = vrot.slane %v1664, 4
  %v1681 = vrot.slane %v1677, 4
  %v1682 = vrot.slane %v1678, 4
  %1687 = vst [vmem:[#allocation2 + $0x380] sm:$0x70] %v1679
  %1688 = vst [vmem:[#allocation2 + $0x388] sm:$0x70] %v1680
  %1689 = vst [vmem:[#allocation2 + $0x390] sm:$0x70] %v1681
  %1690 = vst [vmem:[#allocation2 + $0x398] sm:$0x70] %v1682
  %v1691 = vsub.s32 %v75, 1
  %v1692 = vsub.s32 %v76, 1
  %v1693 = vsub.s32 %v77, 1
  %v1694 = vsub.s32 %v78, 1
  %vm1695 = vcmp.ge.s32.totalorder %v1691, 0
  %vm1696 = vcmp.ge.s32.totalorder %v1692, 0
  %vm1697 = vcmp.ge.s32.totalorder %v1693, 0
  %vm1698 = vcmp.ge.s32.totalorder %v1694, 0
  %vm1699 = vcmp.lt.s32.totalorder %v1691, 16
  %vm1700 = vcmp.lt.s32.totalorder %v1692, 16
  %vm1701 = vcmp.lt.s32.totalorder %v1693, 16
  %vm1702 = vcmp.lt.s32.totalorder %v1694, 16
  %vm1703 = vmand %vm1695, %vm1699
  %vm1704 = vmand %vm1696, %vm1700
  %vm1705 = vmand %vm1697, %vm1701
  %vm1706 = vmand %vm1698, %vm1702
  %v1707 = vsel %vm1703, 1, 0
  %v1708 = vsel %vm1704, 1, 0
  %v1709 = vsel %vm1705, 1, 0
  %v1710 = vsel %vm1706, 1, 0
  %vm1711 = vcmp.eq.s32.totalorder %v1707, 1
  %vm1712 = vcmp.eq.s32.totalorder %v1708, 1
  %vm1713 = vcmp.eq.s32.totalorder %v1709, 1
  %vm1714 = vcmp.eq.s32.totalorder %v1710, 1
  %1715 = vst [vmem:[#allocation1] ss:$2 sm:$0xff] %v79
  %s1716 = scalar_lea.vmem [#allocation1], 16
  %1717 = vst [vmem:[%s1716] ss:$2 sm:$0xff] %v80
  %v1718 = vld.sshfl [vmem:[#allocation1] sm:$0xff pattern:$0x75316420]
  %v1719 = vld.sshfl [vmem:[#allocation1 + $0x8] sm:$0xff pattern:$0x75316420]
  %v1720 = vld.sshfl [vmem:[#allocation1 + $0x10] sm:$0xff pattern:$0x75316420]
  %v1721 = vld.sshfl [vmem:[#allocation1 + $0x18] sm:$0xff pattern:$0x75316420]
  %v1726 = vsel %vm1711, %v1718, 0.0
  %v1727 = vsel %vm1712, %v1719, 0.0
  %v1728 = vsel %vm1713, %v1720, 0.0
  %v1729 = vsel %vm1714, %v1721, 0.0
  %1730 = vst [vmem:[#allocation1] ss:$2 sm:$0xff] %v82
  %s1731 = scalar_lea.vmem [#allocation1], 16
  %1732 = vst [vmem:[%s1731] ss:$2 sm:$0xff] %v83
  %v1733 = vld.sshfl [vmem:[#allocation1] sm:$0xff pattern:$0x75316420]
  %v1734 = vld.sshfl [vmem:[#allocation1 + $0x8] sm:$0xff pattern:$0x75316420]
  %v1735 = vld.sshfl [vmem:[#allocation1 + $0x10] sm:$0xff pattern:$0x75316420]
  %v1736 = vld.sshfl [vmem:[#allocation1 + $0x18] sm:$0xff pattern:$0x75316420]
  %v1741 = vsel %vm1711, %v1733, 0.0
  %v1742 = vsel %vm1712, %v1734, 0.0
  %v1743 = vsel %vm1713, %v1735, 0.0
  %v1744 = vsel %vm1714, %v1736, 0.0
  %1748 = vrot.lane.b32.xlu0 %v1726, 63
  %v1749 = vpop.permute.xlu0 %1748
  %1750 = vrot.lane.b32.xlu0 %v1727, 63
  %v1751 = vpop.permute.xlu0 %1750
  %1752 = vrot.lane.b32.xlu0 %v1728, 63
  %v1753 = vpop.permute.xlu0 %1752
  %vm1754 = vcmask 515072
  %v1755 = vsel %vm1754, %v1749, %v1751
  %v1756 = vsel %vm1754, %v1751, %v1753
  %1760 = vrot.lane.b32.xlu0 %v1741, 63
  %v1761 = vpop.permute.xlu0 %1760
  %1762 = vrot.lane.b32.xlu0 %v1742, 63
  %v1763 = vpop.permute.xlu0 %1762
  %1764 = vrot.lane.b32.xlu0 %v1743, 63
  %v1765 = vpop.permute.xlu0 %1764
  %v1766 = vsel %vm1754, %v1761, %v1763
  %v1767 = vsel %vm1754, %v1763, %v1765
  %v1768 = vrot.slane %v1755, 1
  %v1769 = vrot.slane %v1756, 1
  %v1770 = vrot.slane %v1766, 1
  %v1771 = vrot.slane %v1767, 1
  %1776 = vst [vmem:[#allocation2 + $0x20] sm:$0x80] %v1768
  %1777 = vst [vmem:[#allocation2 + $0x28] sm:$0x80] %v1769
  %1778 = vst [vmem:[#allocation2 + $0x30] sm:$0x80] %v1770
  %1779 = vst [vmem:[#allocation2 + $0x38] sm:$0x80] %v1771
  %1780 = vst [vmem:[#allocation2 + $0x40] sm:$0x3] %v1768
  %1781 = vst [vmem:[#allocation2 + $0x48] sm:$0x3] %v1769
  %1782 = vst [vmem:[#allocation2 + $0x50] sm:$0x3] %v1770
  %1783 = vst [vmem:[#allocation2 + $0x58] sm:$0x3] %v1771
  %1784 = vrot.lane.b32.xlu0 %v1726, 47
  %v1785 = vpop.permute.xlu0 %1784
  %1786 = vrot.lane.b32.xlu0 %v1727, 47
  %v1787 = vpop.permute.xlu0 %1786
  %1788 = vrot.lane.b32.xlu0 %v1728, 47
  %v1789 = vpop.permute.xlu0 %1788
  %vm1790 = vcmask 384000
  %v1791 = vsel %vm1790, %v1785, %v1787
  %v1792 = vsel %vm1790, %v1787, %v1789
  %1793 = vrot.lane.b32.xlu0 %v1741, 47
  %v1794 = vpop.permute.xlu0 %1793
  %1795 = vrot.lane.b32.xlu0 %v1742, 47
  %v1796 = vpop.permute.xlu0 %1795
  %1797 = vrot.lane.b32.xlu0 %v1743, 47
  %v1798 = vpop.permute.xlu0 %1797
  %v1799 = vsel %vm1790, %v1794, %v1796
  %v1800 = vsel %vm1790, %v1796, %v1798
  %v1801 = vrot.slane %v1791, 6
  %v1802 = vrot.slane %v1792, 6
  %v1803 = vrot.slane %v1799, 6
  %v1804 = vrot.slane %v1800, 6
  %1809 = vst [vmem:[#allocation2 + $0xa0] sm:$0x1c] %v1801
  %1810 = vst [vmem:[#allocation2 + $0xa8] sm:$0x1c] %v1802
  %1811 = vst [vmem:[#allocation2 + $0xb0] sm:$0x1c] %v1803
  %1812 = vst [vmem:[#allocation2 + $0xb8] sm:$0x1c] %v1804
  %1813 = vrot.lane.b32.xlu0 %v1726, 31
  %v1814 = vpop.permute.xlu0 %1813
  %1815 = vrot.lane.b32.xlu0 %v1727, 31
  %v1816 = vpop.permute.xlu0 %1815
  %1817 = vrot.lane.b32.xlu0 %v1728, 31
  %v1818 = vpop.permute.xlu0 %1817
  %vm1819 = vcmask 252928
  %v1820 = vsel %vm1819, %v1814, %v1816
  %v1821 = vsel %vm1819, %v1816, %v1818
  %1822 = vrot.lane.b32.xlu0 %v1741, 31
  %v1823 = vpop.permute.xlu0 %1822
  %1824 = vrot.lane.b32.xlu0 %v1742, 31
  %v1825 = vpop.permute.xlu0 %1824
  %1826 = vrot.lane.b32.xlu0 %v1743, 31
  %v1827 = vpop.permute.xlu0 %1826
  %v1828 = vsel %vm1819, %v1823, %v1825
  %v1829 = vsel %vm1819, %v1825, %v1827
  %v1830 = vrot.slane %v1820, 3
  %v1831 = vrot.slane %v1821, 3
  %v1832 = vrot.slane %v1828, 3
  %v1833 = vrot.slane %v1829, 3
  %1838 = vst [vmem:[#allocation2 + $0x100] sm:$0xe0] %v1830
  %1839 = vst [vmem:[#allocation2 + $0x108] sm:$0xe0] %v1831
  %1840 = vst [vmem:[#allocation2 + $0x110] sm:$0xe0] %v1832
  %1841 = vst [vmem:[#allocation2 + $0x118] sm:$0xe0] %v1833
  %1842 = vrot.lane.b32.xlu0 %v1726, 15
  %v1843 = vpop.permute.xlu0 %1842
  %1844 = vrot.lane.b32.xlu0 %v1727, 15
  %v1845 = vpop.permute.xlu0 %1844
  %1846 = vrot.lane.b32.xlu0 %v1728, 15
  %v1847 = vpop.permute.xlu0 %1846
  %vm1848 = vcmask 121856
  %v1849 = vsel %vm1848, %v1843, %v1845
  %v1850 = vsel %vm1848, %v1845, %v1847
  %1853 = vrot.lane.b32.xlu0 %v1741, 15
  %v1854 = vpop.permute.xlu0 %1853
  %1855 = vrot.lane.b32.xlu0 %v1742, 15
  %v1856 = vpop.permute.xlu0 %1855
  %1857 = vrot.lane.b32.xlu0 %v1743, 15
  %v1858 = vpop.permute.xlu0 %1857
  %v1859 = vsel %vm1848, %v1854, %v1856
  %v1860 = vsel %vm1848, %v1856, %v1858
  %1863 = vst [vmem:[#allocation2 + $0x180] sm:$0x7] %v1849
  %1864 = vst [vmem:[#allocation2 + $0x188] sm:$0x7] %v1850
  %1865 = vst [vmem:[#allocation2 + $0x190] sm:$0x7] %v1859
  %1866 = vst [vmem:[#allocation2 + $0x198] sm:$0x7] %v1860
  %1868 = vrot.lane.b32.xlu0 %v1727, 127
  %v1869 = vpop.permute.xlu0 %1868
  %1870 = vrot.lane.b32.xlu0 %v1728, 127
  %v1871 = vpop.permute.xlu0 %1870
  %1872 = vrot.lane.b32.xlu0 %v1729, 127
  %v1873 = vpop.permute.xlu0 %1872
  %vm1874 = vcmask 1039360
  %v1875 = vsel %vm1874, %v1869, %v1871
  %v1876 = vsel %vm1874, %v1871, %v1873
  %1878 = vrot.lane.b32.xlu0 %v1742, 127
  %v1879 = vpop.permute.xlu0 %1878
  %1880 = vrot.lane.b32.xlu0 %v1743, 127
  %v1881 = vpop.permute.xlu0 %1880
  %1882 = vrot.lane.b32.xlu0 %v1744, 127
  %v1883 = vpop.permute.xlu0 %1882
  %v1884 = vsel %vm1874, %v1879, %v1881
  %v1885 = vsel %vm1874, %v1881, %v1883
  %v1886 = vrot.slane %v1875, 5
  %v1887 = vrot.slane %v1876, 5
  %v1888 = vrot.slane %v1884, 5
  %v1889 = vrot.slane %v1885, 5
  %1894 = vst [vmem:[#allocation2 + $0x1e0] sm:$0x38] %v1886
  %1895 = vst [vmem:[#allocation2 + $0x1e8] sm:$0x38] %v1887
  %1896 = vst [vmem:[#allocation2 + $0x1f0] sm:$0x38] %v1888
  %1897 = vst [vmem:[#allocation2 + $0x1f8] sm:$0x38] %v1889
  %1898 = vrot.lane.b32.xlu0 %v1727, 111
  %v1899 = vpop.permute.xlu0 %1898
  %1900 = vrot.lane.b32.xlu0 %v1728, 111
  %v1901 = vpop.permute.xlu0 %1900
  %1902 = vrot.lane.b32.xlu0 %v1729, 111
  %v1903 = vpop.permute.xlu0 %1902
  %vm1904 = vcmask 908288
  %v1905 = vsel %vm1904, %v1899, %v1901
  %v1906 = vsel %vm1904, %v1901, %v1903
  %1907 = vrot.lane.b32.xlu0 %v1742, 111
  %v1908 = vpop.permute.xlu0 %1907
  %1909 = vrot.lane.b32.xlu0 %v1743, 111
  %v1910 = vpop.permute.xlu0 %1909
  %1911 = vrot.lane.b32.xlu0 %v1744, 111
  %v1912 = vpop.permute.xlu0 %1911
  %v1913 = vsel %vm1904, %v1908, %v1910
  %v1914 = vsel %vm1904, %v1910, %v1912
  %v1915 = vrot.slane %v1905, 2
  %v1916 = vrot.slane %v1906, 2
  %v1917 = vrot.slane %v1913, 2
  %v1918 = vrot.slane %v1914, 2
  %1923 = vst [vmem:[#allocation2 + $0x240] sm:$0xc0] %v1915
  %1924 = vst [vmem:[#allocation2 + $0x248] sm:$0xc0] %v1916
  %1925 = vst [vmem:[#allocation2 + $0x250] sm:$0xc0] %v1917
  %1926 = vst [vmem:[#allocation2 + $0x258] sm:$0xc0] %v1918
  %1927 = vst [vmem:[#allocation2 + $0x260] sm:$0x1] %v1915
  %1928 = vst [vmem:[#allocation2 + $0x268] sm:$0x1] %v1916
  %1929 = vst [vmem:[#allocation2 + $0x270] sm:$0x1] %v1917
  %1930 = vst [vmem:[#allocation2 + $0x278] sm:$0x1] %v1918
  %1931 = vrot.lane.b32.xlu0 %v1727, 95
  %v1932 = vpop.permute.xlu0 %1931
  %1933 = vrot.lane.b32.xlu0 %v1728, 95
  %v1934 = vpop.permute.xlu0 %1933
  %1935 = vrot.lane.b32.xlu0 %v1729, 95
  %v1936 = vpop.permute.xlu0 %1935
  %vm1937 = vcmask 777216
  %v1938 = vsel %vm1937, %v1932, %v1934
  %v1939 = vsel %vm1937, %v1934, %v1936
  %1940 = vrot.lane.b32.xlu0 %v1742, 95
  %v1941 = vpop.permute.xlu0 %1940
  %1942 = vrot.lane.b32.xlu0 %v1743, 95
  %v1943 = vpop.permute.xlu0 %1942
  %1944 = vrot.lane.b32.xlu0 %v1744, 95
  %v1945 = vpop.permute.xlu0 %1944
  %v1946 = vsel %vm1937, %v1941, %v1943
  %v1947 = vsel %vm1937, %v1943, %v1945
  %v1948 = vrot.slane %v1938, 7
  %v1949 = vrot.slane %v1939, 7
  %v1950 = vrot.slane %v1946, 7
  %v1951 = vrot.slane %v1947, 7
  %1956 = vst [vmem:[#allocation2 + $0x2c0] sm:$0xe] %v1948
  %1957 = vst [vmem:[#allocation2 + $0x2c8] sm:$0xe] %v1949
  %1958 = vst [vmem:[#allocation2 + $0x2d0] sm:$0xe] %v1950
  %1959 = vst [vmem:[#allocation2 + $0x2d8] sm:$0xe] %v1951
  %1960 = vrot.lane.b32.xlu0 %v1727, 79
  %v1961 = vpop.permute.xlu0 %1960
  %1962 = vrot.lane.b32.xlu0 %v1728, 79
  %v1963 = vpop.permute.xlu0 %1962
  %1964 = vrot.lane.b32.xlu0 %v1729, 79
  %v1965 = vpop.permute.xlu0 %1964
  %vm1966 = vcmask 646144
  %v1967 = vsel %vm1966, %v1961, %v1963
  %v1968 = vsel %vm1966, %v1963, %v1965
  %1969 = vrot.lane.b32.xlu0 %v1742, 79
  %v1970 = vpop.permute.xlu0 %1969
  %1971 = vrot.lane.b32.xlu0 %v1743, 79
  %v1972 = vpop.permute.xlu0 %1971
  %1973 = vrot.lane.b32.xlu0 %v1744, 79
  %v1974 = vpop.permute.xlu0 %1973
  %v1975 = vsel %vm1966, %v1970, %v1972
  %v1976 = vsel %vm1966, %v1972, %v1974
  %v1977 = vrot.slane %v1967, 4
  %v1978 = vrot.slane %v1968, 4
  %v1979 = vrot.slane %v1975, 4
  %v1980 = vrot.slane %v1976, 4
  %1985 = vst [vmem:[#allocation2 + $0x320] sm:$0x70] %v1977
  %1986 = vst [vmem:[#allocation2 + $0x328] sm:$0x70] %v1978
  %1987 = vst [vmem:[#allocation2 + $0x330] sm:$0x70] %v1979
  %1988 = vst [vmem:[#allocation2 + $0x338] sm:$0x70] %v1980
  %1989 = vrot.lane.b32.xlu0 %v1729, 63
  %v1990 = vpop.permute.xlu0 %1989
  %v1991 = vsel %vm1754, %v1753, %v1990
  %1992 = vrot.lane.b32.xlu0 %v1744, 63
  %v1993 = vpop.permute.xlu0 %1992
  %v1994 = vsel %vm1754, %v1765, %v1993
  %v1995 = vrot.slane %v1991, 1
  %v1996 = vrot.slane %v1994, 1
  %1999 = vst [vmem:[#allocation2 + $0x380] sm:$0x80] %v1769
  %2000 = vst [vmem:[#allocation2 + $0x388] sm:$0x80] %v1995
  %2001 = vst [vmem:[#allocation2 + $0x390] sm:$0x80] %v1771
  %2002 = vst [vmem:[#allocation2 + $0x398] sm:$0x80] %v1996
  %2003 = vst [vmem:[#allocation2 + $0x3a0] sm:$0x3] %v1769
  %2004 = vst [vmem:[#allocation2 + $0x3a8] sm:$0x3] %v1995
  %2005 = vst [vmem:[#allocation2 + $0x3b0] sm:$0x3] %v1771
  %2006 = vst [vmem:[#allocation2 + $0x3b8] sm:$0x3] %v1996
  %v2007 = vsub.s32 %v75, 2
  %v2008 = vsub.s32 %v76, 2
  %v2009 = vsub.s32 %v77, 2
  %v2010 = vsub.s32 %v78, 2
  %vm2011 = vcmp.ge.s32.totalorder %v2007, 0
  %vm2012 = vcmp.ge.s32.totalorder %v2008, 0
  %vm2013 = vcmp.ge.s32.totalorder %v2009, 0
  %vm2014 = vcmp.ge.s32.totalorder %v2010, 0
  %vm2015 = vcmp.lt.s32.totalorder %v2007, 16
  %vm2016 = vcmp.lt.s32.totalorder %v2008, 16
  %vm2017 = vcmp.lt.s32.totalorder %v2009, 16
  %vm2018 = vcmp.lt.s32.totalorder %v2010, 16
  %vm2019 = vmand %vm2011, %vm2015
  %vm2020 = vmand %vm2012, %vm2016
  %vm2021 = vmand %vm2013, %vm2017
  %vm2022 = vmand %vm2014, %vm2018
  %v2023 = vsel %vm2019, 1, 0
  %v2024 = vsel %vm2020, 1, 0
  %v2025 = vsel %vm2021, 1, 0
  %v2026 = vsel %vm2022, 1, 0
  %vm2027 = vcmp.eq.s32.totalorder %v2023, 1
  %vm2028 = vcmp.eq.s32.totalorder %v2024, 1
  %vm2029 = vcmp.eq.s32.totalorder %v2025, 1
  %vm2030 = vcmp.eq.s32.totalorder %v2026, 1
  %2031 = vst [vmem:[#allocation1] ss:$2 sm:$0xff] %v79
  %s2032 = scalar_lea.vmem [#allocation1], 16
  %2033 = vst [vmem:[%s2032] ss:$2 sm:$0xff] %v80
  %v2034 = vld.sshfl [vmem:[#allocation1] sm:$0xff pattern:$0x75316420]
  %v2035 = vld.sshfl [vmem:[#allocation1 + $0x8] sm:$0xff pattern:$0x75316420]
  %v2036 = vld.sshfl [vmem:[#allocation1 + $0x10] sm:$0xff pattern:$0x75316420]
  %v2037 = vld.sshfl [vmem:[#allocation1 + $0x18] sm:$0xff pattern:$0x75316420]
  %v2042 = vsel %vm2027, %v2034, 0.0
  %v2043 = vsel %vm2028, %v2035, 0.0
  %v2044 = vsel %vm2029, %v2036, 0.0
  %v2045 = vsel %vm2030, %v2037, 0.0
  %2046 = vst [vmem:[#allocation1] ss:$2 sm:$0xff] %v82
  %s2047 = scalar_lea.vmem [#allocation1], 16
  %2048 = vst [vmem:[%s2047] ss:$2 sm:$0xff] %v83
  %v2049 = vld.sshfl [vmem:[#allocation1] sm:$0xff pattern:$0x75316420]
  %v2050 = vld.sshfl [vmem:[#allocation1 + $0x8] sm:$0xff pattern:$0x75316420]
  %v2051 = vld.sshfl [vmem:[#allocation1 + $0x10] sm:$0xff pattern:$0x75316420]
  %v2052 = vld.sshfl [vmem:[#allocation1 + $0x18] sm:$0xff pattern:$0x75316420]
  %v2057 = vsel %vm2027, %v2049, 0.0
  %v2058 = vsel %vm2028, %v2050, 0.0
  %v2059 = vsel %vm2029, %v2051, 0.0
  %v2060 = vsel %vm2030, %v2052, 0.0
  %2064 = vrot.lane.b32.xlu0 %v2042, 62
  %v2065 = vpop.permute.xlu0 %2064
  %2066 = vrot.lane.b32.xlu0 %v2043, 62
  %v2067 = vpop.permute.xlu0 %2066
  %2068 = vrot.lane.b32.xlu0 %v2044, 62
  %v2069 = vpop.permute.xlu0 %2068
  %vm2070 = vcmask 506880
  %v2071 = vsel %vm2070, %v2065, %v2067
  %v2072 = vsel %vm2070, %v2067, %v2069
  %2076 = vrot.lane.b32.xlu0 %v2057, 62
  %v2077 = vpop.permute.xlu0 %2076
  %2078 = vrot.lane.b32.xlu0 %v2058, 62
  %v2079 = vpop.permute.xlu0 %2078
  %2080 = vrot.lane.b32.xlu0 %v2059, 62
  %v2081 = vpop.permute.xlu0 %2080
  %v2082 = vsel %vm2070, %v2077, %v2079
  %v2083 = vsel %vm2070, %v2079, %v2081
  %v2084 = vrot.slane %v2071, 6
  %v2085 = vrot.slane %v2072, 6
  %v2086 = vrot.slane %v2082, 6
  %v2087 = vrot.slane %v2083, 6
  %2092 = vst [vmem:[#allocation2 + $0x40] sm:$0x1c] %v2084
  %2093 = vst [vmem:[#allocation2 + $0x48] sm:$0x1c] %v2085
  %2094 = vst [vmem:[#allocation2 + $0x50] sm:$0x1c] %v2086
  %2095 = vst [vmem:[#allocation2 + $0x58] sm:$0x1c] %v2087
  %2096 = vrot.lane.b32.xlu0 %v2042, 46
  %v2097 = vpop.permute.xlu0 %2096
  %2098 = vrot.lane.b32.xlu0 %v2043, 46
  %v2099 = vpop.permute.xlu0 %2098
  %2100 = vrot.lane.b32.xlu0 %v2044, 46
  %v2101 = vpop.permute.xlu0 %2100
  %vm2102 = vcmask 375808
  %v2103 = vsel %vm2102, %v2097, %v2099
  %v2104 = vsel %vm2102, %v2099, %v2101
  %2105 = vrot.lane.b32.xlu0 %v2057, 46
  %v2106 = vpop.permute.xlu0 %2105
  %2107 = vrot.lane.b32.xlu0 %v2058, 46
  %v2108 = vpop.permute.xlu0 %2107
  %2109 = vrot.lane.b32.xlu0 %v2059, 46
  %v2110 = vpop.permute.xlu0 %2109
  %v2111 = vsel %vm2102, %v2106, %v2108
  %v2112 = vsel %vm2102, %v2108, %v2110
  %v2113 = vrot.slane %v2103, 3
  %v2114 = vrot.slane %v2104, 3
  %v2115 = vrot.slane %v2111, 3
  %v2116 = vrot.slane %v2112, 3
  %2121 = vst [vmem:[#allocation2 + $0xa0] sm:$0xe0] %v2113
  %2122 = vst [vmem:[#allocation2 + $0xa8] sm:$0xe0] %v2114
  %2123 = vst [vmem:[#allocation2 + $0xb0] sm:$0xe0] %v2115
  %2124 = vst [vmem:[#allocation2 + $0xb8] sm:$0xe0] %v2116
  %2125 = vrot.lane.b32.xlu0 %v2042, 30
  %v2126 = vpop.permute.xlu0 %2125
  %2127 = vrot.lane.b32.xlu0 %v2043, 30
  %v2128 = vpop.permute.xlu0 %2127
  %2129 = vrot.lane.b32.xlu0 %v2044, 30
  %v2130 = vpop.permute.xlu0 %2129
  %vm2131 = vcmask 244736
  %v2132 = vsel %vm2131, %v2126, %v2128
  %v2133 = vsel %vm2131, %v2128, %v2130
  %2136 = vrot.lane.b32.xlu0 %v2057, 30
  %v2137 = vpop.permute.xlu0 %2136
  %2138 = vrot.lane.b32.xlu0 %v2058, 30
  %v2139 = vpop.permute.xlu0 %2138
  %2140 = vrot.lane.b32.xlu0 %v2059, 30
  %v2141 = vpop.permute.xlu0 %2140
  %v2142 = vsel %vm2131, %v2137, %v2139
  %v2143 = vsel %vm2131, %v2139, %v2141
  %2146 = vst [vmem:[#allocation2 + $0x120] sm:$0x7] %v2132
  %2147 = vst [vmem:[#allocation2 + $0x128] sm:$0x7] %v2133
  %2148 = vst [vmem:[#allocation2 + $0x130] sm:$0x7] %v2142
  %2149 = vst [vmem:[#allocation2 + $0x138] sm:$0x7] %v2143
  %2150 = vrot.lane.b32.xlu0 %v2042, 14
  %v2151 = vpop.permute.xlu0 %2150
  %2152 = vrot.lane.b32.xlu0 %v2043, 14
  %v2153 = vpop.permute.xlu0 %2152
  %2154 = vrot.lane.b32.xlu0 %v2044, 14
  %v2155 = vpop.permute.xlu0 %2154
  %vm2156 = vcmask 113664
  %v2157 = vsel %vm2156, %v2151, %v2153
  %v2158 = vsel %vm2156, %v2153, %v2155
  %2159 = vrot.lane.b32.xlu0 %v2057, 14
  %v2160 = vpop.permute.xlu0 %2159
  %2161 = vrot.lane.b32.xlu0 %v2058, 14
  %v2162 = vpop.permute.xlu0 %2161
  %2163 = vrot.lane.b32.xlu0 %v2059, 14
  %v2164 = vpop.permute.xlu0 %2163
  %v2165 = vsel %vm2156, %v2160, %v2162
  %v2166 = vsel %vm2156, %v2162, %v2164
  %v2167 = vrot.slane %v2157, 5
  %v2168 = vrot.slane %v2158, 5
  %v2169 = vrot.slane %v2165, 5
  %v2170 = vrot.slane %v2166, 5
  %2175 = vst [vmem:[#allocation2 + $0x180] sm:$0x38] %v2167
  %2176 = vst [vmem:[#allocation2 + $0x188] sm:$0x38] %v2168
  %2177 = vst [vmem:[#allocation2 + $0x190] sm:$0x38] %v2169
  %2178 = vst [vmem:[#allocation2 + $0x198] sm:$0x38] %v2170
  %2180 = vrot.lane.b32.xlu0 %v2043, 126
  %v2181 = vpop.permute.xlu0 %2180
  %2182 = vrot.lane.b32.xlu0 %v2044, 126
  %v2183 = vpop.permute.xlu0 %2182
  %2184 = vrot.lane.b32.xlu0 %v2045, 126
  %v2185 = vpop.permute.xlu0 %2184
  %vm2186 = vcmask 1031168
  %v2187 = vsel %vm2186, %v2181, %v2183
  %v2188 = vsel %vm2186, %v2183, %v2185
  %2190 = vrot.lane.b32.xlu0 %v2058, 126
  %v2191 = vpop.permute.xlu0 %2190
  %2192 = vrot.lane.b32.xlu0 %v2059, 126
  %v2193 = vpop.permute.xlu0 %2192
  %2194 = vrot.lane.b32.xlu0 %v2060, 126
  %v2195 = vpop.permute.xlu0 %2194
  %v2196 = vsel %vm2186, %v2191, %v2193
  %v2197 = vsel %vm2186, %v2193, %v2195
  %v2198 = vrot.slane %v2187, 2
  %v2199 = vrot.slane %v2188, 2
  %v2200 = vrot.slane %v2196, 2
  %v2201 = vrot.slane %v2197, 2
  %2206 = vst [vmem:[#allocation2 + $0x1e0] sm:$0xc0] %v2198
  %2207 = vst [vmem:[#allocation2 + $0x1e8] sm:$0xc0] %v2199
  %2208 = vst [vmem:[#allocation2 + $0x1f0] sm:$0xc0] %v2200
  %2209 = vst [vmem:[#allocation2 + $0x1f8] sm:$0xc0] %v2201
  %2210 = vst [vmem:[#allocation2 + $0x200] sm:$0x1] %v2198
  %2211 = vst [vmem:[#allocation2 + $0x208] sm:$0x1] %v2199
  %2212 = vst [vmem:[#allocation2 + $0x210] sm:$0x1] %v2200
  %2213 = vst [vmem:[#allocation2 + $0x218] sm:$0x1] %v2201
  %2214 = vrot.lane.b32.xlu0 %v2043, 110
  %v2215 = vpop.permute.xlu0 %2214
  %2216 = vrot.lane.b32.xlu0 %v2044, 110
  %v2217 = vpop.permute.xlu0 %2216
  %2218 = vrot.lane.b32.xlu0 %v2045, 110
  %v2219 = vpop.permute.xlu0 %2218
  %vm2220 = vcmask 900096
  %v2221 = vsel %vm2220, %v2215, %v2217
  %v2222 = vsel %vm2220, %v2217, %v2219
  %2223 = vrot.lane.b32.xlu0 %v2058, 110
  %v2224 = vpop.permute.xlu0 %2223
  %2225 = vrot.lane.b32.xlu0 %v2059, 110
  %v2226 = vpop.permute.xlu0 %2225
  %2227 = vrot.lane.b32.xlu0 %v2060, 110
  %v2228 = vpop.permute.xlu0 %2227
  %v2229 = vsel %vm2220, %v2224, %v2226
  %v2230 = vsel %vm2220, %v2226, %v2228
  %v2231 = vrot.slane %v2221, 7
  %v2232 = vrot.slane %v2222, 7
  %v2233 = vrot.slane %v2229, 7
  %v2234 = vrot.slane %v2230, 7
  %2239 = vst [vmem:[#allocation2 + $0x260] sm:$0xe] %v2231
  %2240 = vst [vmem:[#allocation2 + $0x268] sm:$0xe] %v2232
  %2241 = vst [vmem:[#allocation2 + $0x270] sm:$0xe] %v2233
  %2242 = vst [vmem:[#allocation2 + $0x278] sm:$0xe] %v2234
  %2243 = vrot.lane.b32.xlu0 %v2043, 94
  %v2244 = vpop.permute.xlu0 %2243
  %2245 = vrot.lane.b32.xlu0 %v2044, 94
  %v2246 = vpop.permute.xlu0 %2245
  %2247 = vrot.lane.b32.xlu0 %v2045, 94
  %v2248 = vpop.permute.xlu0 %2247
  %vm2249 = vcmask 769024
  %v2250 = vsel %vm2249, %v2244, %v2246
  %v2251 = vsel %vm2249, %v2246, %v2248
  %2252 = vrot.lane.b32.xlu0 %v2058, 94
  %v2253 = vpop.permute.xlu0 %2252
  %2254 = vrot.lane.b32.xlu0 %v2059, 94
  %v2255 = vpop.permute.xlu0 %2254
  %2256 = vrot.lane.b32.xlu0 %v2060, 94
  %v2257 = vpop.permute.xlu0 %2256
  %v2258 = vsel %vm2249, %v2253, %v2255
  %v2259 = vsel %vm2249, %v2255, %v2257
  %v2260 = vrot.slane %v2250, 4
  %v2261 = vrot.slane %v2251, 4
  %v2262 = vrot.slane %v2258, 4
  %v2263 = vrot.slane %v2259, 4
  %2268 = vst [vmem:[#allocation2 + $0x2c0] sm:$0x70] %v2260
  %2269 = vst [vmem:[#allocation2 + $0x2c8] sm:$0x70] %v2261
  %2270 = vst [vmem:[#allocation2 + $0x2d0] sm:$0x70] %v2262
  %2271 = vst [vmem:[#allocation2 + $0x2d8] sm:$0x70] %v2263
  %2272 = vrot.lane.b32.xlu0 %v2043, 78
  %v2273 = vpop.permute.xlu0 %2272
  %2274 = vrot.lane.b32.xlu0 %v2044, 78
  %v2275 = vpop.permute.xlu0 %2274
  %2276 = vrot.lane.b32.xlu0 %v2045, 78
  %v2277 = vpop.permute.xlu0 %2276
  %vm2278 = vcmask 637952
  %v2279 = vsel %vm2278, %v2273, %v2275
  %v2280 = vsel %vm2278, %v2275, %v2277
  %2281 = vrot.lane.b32.xlu0 %v2058, 78
  %v2282 = vpop.permute.xlu0 %2281
  %2283 = vrot.lane.b32.xlu0 %v2059, 78
  %v2284 = vpop.permute.xlu0 %2283
  %2285 = vrot.lane.b32.xlu0 %v2060, 78
  %v2286 = vpop.permute.xlu0 %2285
  %v2287 = vsel %vm2278, %v2282, %v2284
  %v2288 = vsel %vm2278, %v2284, %v2286
  %v2289 = vrot.slane %v2279, 1
  %v2290 = vrot.slane %v2280, 1
  %v2291 = vrot.slane %v2287, 1
  %v2292 = vrot.slane %v2288, 1
  %2297 = vst [vmem:[#allocation2 + $0x320] sm:$0x80] %v2289
  %2298 = vst [vmem:[#allocation2 + $0x328] sm:$0x80] %v2290
  %2299 = vst [vmem:[#allocation2 + $0x330] sm:$0x80] %v2291
  %2300 = vst [vmem:[#allocation2 + $0x338] sm:$0x80] %v2292
  %2301 = vst [vmem:[#allocation2 + $0x340] sm:$0x3] %v2289
  %2302 = vst [vmem:[#allocation2 + $0x348] sm:$0x3] %v2290
  %2303 = vst [vmem:[#allocation2 + $0x350] sm:$0x3] %v2291
  %2304 = vst [vmem:[#allocation2 + $0x358] sm:$0x3] %v2292
  %2305 = vrot.lane.b32.xlu0 %v2045, 62
  %v2306 = vpop.permute.xlu0 %2305
  %v2307 = vsel %vm2070, %v2069, %v2306
  %2308 = vrot.lane.b32.xlu0 %v2060, 62
  %v2309 = vpop.permute.xlu0 %2308
  %v2310 = vsel %vm2070, %v2081, %v2309
  %v2311 = vrot.slane %v2307, 6
  %v2312 = vrot.slane %v2310, 6
  %2315 = vst [vmem:[#allocation2 + $0x3a0] sm:$0x1c] %v2085
  %2316 = vst [vmem:[#allocation2 + $0x3a8] sm:$0x1c] %v2311
  %2317 = vst [vmem:[#allocation2 + $0x3b0] sm:$0x1c] %v2087
  %2318 = vst [vmem:[#allocation2 + $0x3b8] sm:$0x1c] %v2312
  %v2319 = vsub.s32 %v75, 3
  %v2320 = vsub.s32 %v76, 3
  %v2321 = vsub.s32 %v77, 3
  %v2322 = vsub.s32 %v78, 3
  %vm2323 = vcmp.ge.s32.totalorder %v2319, 0
  %vm2324 = vcmp.ge.s32.totalorder %v2320, 0
  %vm2325 = vcmp.ge.s32.totalorder %v2321, 0
  %vm2326 = vcmp.ge.s32.totalorder %v2322, 0
  %vm2327 = vcmp.lt.s32.totalorder %v2319, 16
  %vm2328 = vcmp.lt.s32.totalorder %v2320, 16
  %vm2329 = vcmp.lt.s32.totalorder %v2321, 16
  %vm2330 = vcmp.lt.s32.totalorder %v2322, 16
  %vm2331 = vmand %vm2323, %vm2327
  %vm2332 = vmand %vm2324, %vm2328
  %vm2333 = vmand %vm2325, %vm2329
  %vm2334 = vmand %vm2326, %vm2330
  %v2335 = vsel %vm2331, 1, 0
  %v2336 = vsel %vm2332, 1, 0
  %v2337 = vsel %vm2333, 1, 0
  %v2338 = vsel %vm2334, 1, 0
  %vm2339 = vcmp.eq.s32.totalorder %v2335, 1
  %vm2340 = vcmp.eq.s32.totalorder %v2336, 1
  %vm2341 = vcmp.eq.s32.totalorder %v2337, 1
  %vm2342 = vcmp.eq.s32.totalorder %v2338, 1
  %2343 = vst [vmem:[#allocation1] ss:$2 sm:$0xff] %v79
  %s2344 = scalar_lea.vmem [#allocation1], 16
  %2345 = vst [vmem:[%s2344] ss:$2 sm:$0xff] %v80
  %v2346 = vld.sshfl [vmem:[#allocation1] sm:$0xff pattern:$0x75316420]
  %v2347 = vld.sshfl [vmem:[#allocation1 + $0x8] sm:$0xff pattern:$0x75316420]
  %v2348 = vld.sshfl [vmem:[#allocation1 + $0x10] sm:$0xff pattern:$0x75316420]
  %v2349 = vld.sshfl [vmem:[#allocation1 + $0x18] sm:$0xff pattern:$0x75316420]
  %v2354 = vsel %vm2339, %v2346, 0.0
  %v2355 = vsel %vm2340, %v2347, 0.0
  %v2356 = vsel %vm2341, %v2348, 0.0
  %v2357 = vsel %vm2342, %v2349, 0.0
  %2358 = vst [vmem:[#allocation1] ss:$2 sm:$0xff] %v82
  %s2359 = scalar_lea.vmem [#allocation1], 16
  %2360 = vst [vmem:[%s2359] ss:$2 sm:$0xff] %v83
  %v2361 = vld.sshfl [vmem:[#allocation1] sm:$0xff pattern:$0x75316420]
  %v2362 = vld.sshfl [vmem:[#allocation1 + $0x8] sm:$0xff pattern:$0x75316420]
  %v2363 = vld.sshfl [vmem:[#allocation1 + $0x10] sm:$0xff pattern:$0x75316420]
  %v2364 = vld.sshfl [vmem:[#allocation1 + $0x18] sm:$0xff pattern:$0x75316420]
  %v2369 = vsel %vm2339, %v2361, 0.0
  %v2370 = vsel %vm2340, %v2362, 0.0
  %v2371 = vsel %vm2341, %v2363, 0.0
  %v2372 = vsel %vm2342, %v2364, 0.0
  %2376 = vrot.lane.b32.xlu0 %v2354, 61
  %v2377 = vpop.permute.xlu0 %2376
  %2378 = vrot.lane.b32.xlu0 %v2355, 61
  %v2379 = vpop.permute.xlu0 %2378
  %2380 = vrot.lane.b32.xlu0 %v2356, 61
  %v2381 = vpop.permute.xlu0 %2380
  %vm2382 = vcmask 498688
  %v2383 = vsel %vm2382, %v2377, %v2379
  %v2384 = vsel %vm2382, %v2379, %v2381
  %2388 = vrot.lane.b32.xlu0 %v2369, 61
  %v2389 = vpop.permute.xlu0 %2388
  %2390 = vrot.lane.b32.xlu0 %v2370, 61
  %v2391 = vpop.permute.xlu0 %2390
  %2392 = vrot.lane.b32.xlu0 %v2371, 61
  %v2393 = vpop.permute.xlu0 %2392
  %v2394 = vsel %vm2382, %v2389, %v2391
  %v2395 = vsel %vm2382, %v2391, %v2393
  %v2396 = vrot.slane %v2383, 3
  %v2397 = vrot.slane %v2384, 3
  %v2398 = vrot.slane %v2394, 3
  %v2399 = vrot.slane %v2395, 3
  %2404 = vst [vmem:[#allocation2 + $0x40] sm:$0xe0] %v2396
  %2405 = vst [vmem:[#allocation2 + $0x48] sm:$0xe0] %v2397
  %2406 = vst [vmem:[#allocation2 + $0x50] sm:$0xe0] %v2398
  %2407 = vst [vmem:[#allocation2 + $0x58] sm:$0xe0] %v2399
  %2408 = vrot.lane.b32.xlu0 %v2354, 45
  %v2409 = vpop.permute.xlu0 %2408
  %2410 = vrot.lane.b32.xlu0 %v2355, 45
  %v2411 = vpop.permute.xlu0 %2410
  %2412 = vrot.lane.b32.xlu0 %v2356, 45
  %v2413 = vpop.permute.xlu0 %2412
  %vm2414 = vcmask 367616
  %v2415 = vsel %vm2414, %v2409, %v2411
  %v2416 = vsel %vm2414, %v2411, %v2413
  %2419 = vrot.lane.b32.xlu0 %v2369, 45
  %v2420 = vpop.permute.xlu0 %2419
  %2421 = vrot.lane.b32.xlu0 %v2370, 45
  %v2422 = vpop.permute.xlu0 %2421
  %2423 = vrot.lane.b32.xlu0 %v2371, 45
  %v2424 = vpop.permute.xlu0 %2423
  %v2425 = vsel %vm2414, %v2420, %v2422
  %v2426 = vsel %vm2414, %v2422, %v2424
  %2429 = vst [vmem:[#allocation2 + $0xc0] sm:$0x7] %v2415
  %2430 = vst [vmem:[#allocation2 + $0xc8] sm:$0x7] %v2416
  %2431 = vst [vmem:[#allocation2 + $0xd0] sm:$0x7] %v2425
  %2432 = vst [vmem:[#allocation2 + $0xd8] sm:$0x7] %v2426
  %2433 = vrot.lane.b32.xlu0 %v2354, 29
  %v2434 = vpop.permute.xlu0 %2433
  %2435 = vrot.lane.b32.xlu0 %v2355, 29
  %v2436 = vpop.permute.xlu0 %2435
  %2437 = vrot.lane.b32.xlu0 %v2356, 29
  %v2438 = vpop.permute.xlu0 %2437
  %vm2439 = vcmask 236544
  %v2440 = vsel %vm2439, %v2434, %v2436
  %v2441 = vsel %vm2439, %v2436, %v2438
  %2442 = vrot.lane.b32.xlu0 %v2369, 29
  %v2443 = vpop.permute.xlu0 %2442
  %2444 = vrot.lane.b32.xlu0 %v2370, 29
  %v2445 = vpop.permute.xlu0 %2444
  %2446 = vrot.lane.b32.xlu0 %v2371, 29
  %v2447 = vpop.permute.xlu0 %2446
  %v2448 = vsel %vm2439, %v2443, %v2445
  %v2449 = vsel %vm2439, %v2445, %v2447
  %v2450 = vrot.slane %v2440, 5
  %v2451 = vrot.slane %v2441, 5
  %v2452 = vrot.slane %v2448, 5
  %v2453 = vrot.slane %v2449, 5
  %2458 = vst [vmem:[#allocation2 + $0x120] sm:$0x38] %v2450
  %2459 = vst [vmem:[#allocation2 + $0x128] sm:$0x38] %v2451
  %2460 = vst [vmem:[#allocation2 + $0x130] sm:$0x38] %v2452
  %2461 = vst [vmem:[#allocation2 + $0x138] sm:$0x38] %v2453
  %2462 = vrot.lane.b32.xlu0 %v2354, 13
  %v2463 = vpop.permute.xlu0 %2462
  %2464 = vrot.lane.b32.xlu0 %v2355, 13
  %v2465 = vpop.permute.xlu0 %2464
  %2466 = vrot.lane.b32.xlu0 %v2356, 13
  %v2467 = vpop.permute.xlu0 %2466
  %vm2468 = vcmask 105472
  %v2469 = vsel %vm2468, %v2463, %v2465
  %v2470 = vsel %vm2468, %v2465, %v2467
  %2471 = vrot.lane.b32.xlu0 %v2369, 13
  %v2472 = vpop.permute.xlu0 %2471
  %2473 = vrot.lane.b32.xlu0 %v2370, 13
  %v2474 = vpop.permute.xlu0 %2473
  %2475 = vrot.lane.b32.xlu0 %v2371, 13
  %v2476 = vpop.permute.xlu0 %2475
  %v2477 = vsel %vm2468, %v2472, %v2474
  %v2478 = vsel %vm2468, %v2474, %v2476
  %v2479 = vrot.slane %v2469, 2
  %v2480 = vrot.slane %v2470, 2
  %v2481 = vrot.slane %v2477, 2
  %v2482 = vrot.slane %v2478, 2
  %2487 = vst [vmem:[#allocation2 + $0x180] sm:$0xc0] %v2479
  %2488 = vst [vmem:[#allocation2 + $0x188] sm:$0xc0] %v2480
  %2489 = vst [vmem:[#allocation2 + $0x190] sm:$0xc0] %v2481
  %2490 = vst [vmem:[#allocation2 + $0x198] sm:$0xc0] %v2482
  %2491 = vst [vmem:[#allocation2 + $0x1a0] sm:$0x1] %v2479
  %2492 = vst [vmem:[#allocation2 + $0x1a8] sm:$0x1] %v2480
  %2493 = vst [vmem:[#allocation2 + $0x1b0] sm:$0x1] %v2481
  %2494 = vst [vmem:[#allocation2 + $0x1b8] sm:$0x1] %v2482
  %2496 = vrot.lane.b32.xlu0 %v2355, 125
  %v2497 = vpop.permute.xlu0 %2496
  %2498 = vrot.lane.b32.xlu0 %v2356, 125
  %v2499 = vpop.permute.xlu0 %2498
  %2500 = vrot.lane.b32.xlu0 %v2357, 125
  %v2501 = vpop.permute.xlu0 %2500
  %vm2502 = vcmask 1022976
  %v2503 = vsel %vm2502, %v2497, %v2499
  %v2504 = vsel %vm2502, %v2499, %v2501
  %2506 = vrot.lane.b32.xlu0 %v2370, 125
  %v2507 = vpop.permute.xlu0 %2506
  %2508 = vrot.lane.b32.xlu0 %v2371, 125
  %v2509 = vpop.permute.xlu0 %2508
  %2510 = vrot.lane.b32.xlu0 %v2372, 125
  %v2511 = vpop.permute.xlu0 %2510
  %v2512 = vsel %vm2502, %v2507, %v2509
  %v2513 = vsel %vm2502, %v2509, %v2511
  %v2514 = vrot.slane %v2503, 7
  %v2515 = vrot.slane %v2504, 7
  %v2516 = vrot.slane %v2512, 7
  %v2517 = vrot.slane %v2513, 7
  %2522 = vst [vmem:[#allocation2 + $0x200] sm:$0xe] %v2514
  %2523 = vst [vmem:[#allocation2 + $0x208] sm:$0xe] %v2515
  %2524 = vst [vmem:[#allocation2 + $0x210] sm:$0xe] %v2516
  %2525 = vst [vmem:[#allocation2 + $0x218] sm:$0xe] %v2517
  %2526 = vrot.lane.b32.xlu0 %v2355, 109
  %v2527 = vpop.permute.xlu0 %2526
  %2528 = vrot.lane.b32.xlu0 %v2356, 109
  %v2529 = vpop.permute.xlu0 %2528
  %2530 = vrot.lane.b32.xlu0 %v2357, 109
  %v2531 = vpop.permute.xlu0 %2530
  %vm2532 = vcmask 891904
  %v2533 = vsel %vm2532, %v2527, %v2529
  %v2534 = vsel %vm2532, %v2529, %v2531
  %2535 = vrot.lane.b32.xlu0 %v2370, 109
  %v2536 = vpop.permute.xlu0 %2535
  %2537 = vrot.lane.b32.xlu0 %v2371, 109
  %v2538 = vpop.permute.xlu0 %2537
  %2539 = vrot.lane.b32.xlu0 %v2372, 109
  %v2540 = vpop.permute.xlu0 %2539
  %v2541 = vsel %vm2532, %v2536, %v2538
  %v2542 = vsel %vm2532, %v2538, %v2540
  %v2543 = vrot.slane %v2533, 4
  %v2544 = vrot.slane %v2534, 4
  %v2545 = vrot.slane %v2541, 4
  %v2546 = vrot.slane %v2542, 4
  %2551 = vst [vmem:[#allocation2 + $0x260] sm:$0x70] %v2543
  %2552 = vst [vmem:[#allocation2 + $0x268] sm:$0x70] %v2544
  %2553 = vst [vmem:[#allocation2 + $0x270] sm:$0x70] %v2545
  %2554 = vst [vmem:[#allocation2 + $0x278] sm:$0x70] %v2546
  %2555 = vrot.lane.b32.xlu0 %v2355, 93
  %v2556 = vpop.permute.xlu0 %2555
  %2557 = vrot.lane.b32.xlu0 %v2356, 93
  %v2558 = vpop.permute.xlu0 %2557
  %2559 = vrot.lane.b32.xlu0 %v2357, 93
  %v2560 = vpop.permute.xlu0 %2559
  %vm2561 = vcmask 760832
  %v2562 = vsel %vm2561, %v2556, %v2558
  %v2563 = vsel %vm2561, %v2558, %v2560
  %2564 = vrot.lane.b32.xlu0 %v2370, 93
  %v2565 = vpop.permute.xlu0 %2564
  %2566 = vrot.lane.b32.xlu0 %v2371, 93
  %v2567 = vpop.permute.xlu0 %2566
  %2568 = vrot.lane.b32.xlu0 %v2372, 93
  %v2569 = vpop.permute.xlu0 %2568
  %v2570 = vsel %vm2561, %v2565, %v2567
  %v2571 = vsel %vm2561, %v2567, %v2569
  %v2572 = vrot.slane %v2562, 1
  %v2573 = vrot.slane %v2563, 1
  %v2574 = vrot.slane %v2570, 1
  %v2575 = vrot.slane %v2571, 1
  %2580 = vst [vmem:[#allocation2 + $0x2c0] sm:$0x80] %v2572
  %2581 = vst [vmem:[#allocation2 + $0x2c8] sm:$0x80] %v2573
  %2582 = vst [vmem:[#allocation2 + $0x2d0] sm:$0x80] %v2574
  %2583 = vst [vmem:[#allocation2 + $0x2d8] sm:$0x80] %v2575
  %2584 = vst [vmem:[#allocation2 + $0x2e0] sm:$0x3] %v2572
  %2585 = vst [vmem:[#allocation2 + $0x2e8] sm:$0x3] %v2573
  %2586 = vst [vmem:[#allocation2 + $0x2f0] sm:$0x3] %v2574
  %2587 = vst [vmem:[#allocation2 + $0x2f8] sm:$0x3] %v2575
  %2588 = vrot.lane.b32.xlu0 %v2355, 77
  %v2589 = vpop.permute.xlu0 %2588
  %2590 = vrot.lane.b32.xlu0 %v2356, 77
  %v2591 = vpop.permute.xlu0 %2590
  %2592 = vrot.lane.b32.xlu0 %v2357, 77
  %v2593 = vpop.permute.xlu0 %2592
  %vm2594 = vcmask 629760
  %v2595 = vsel %vm2594, %v2589, %v2591
  %v2596 = vsel %vm2594, %v2591, %v2593
  %2597 = vrot.lane.b32.xlu0 %v2370, 77
  %v2598 = vpop.permute.xlu0 %2597
  %2599 = vrot.lane.b32.xlu0 %v2371, 77
  %v2600 = vpop.permute.xlu0 %2599
  %2601 = vrot.lane.b32.xlu0 %v2372, 77
  %v2602 = vpop.permute.xlu0 %2601
  %v2603 = vsel %vm2594, %v2598, %v2600
  %v2604 = vsel %vm2594, %v2600, %v2602
  %v2605 = vrot.slane %v2595, 6
  %v2606 = vrot.slane %v2596, 6
  %v2607 = vrot.slane %v2603, 6
  %v2608 = vrot.slane %v2604, 6
  %2613 = vst [vmem:[#allocation2 + $0x340] sm:$0x1c] %v2605
  %2614 = vst [vmem:[#allocation2 + $0x348] sm:$0x1c] %v2606
  %2615 = vst [vmem:[#allocation2 + $0x350] sm:$0x1c] %v2607
  %2616 = vst [vmem:[#allocation2 + $0x358] sm:$0x1c] %v2608
  %2617 = vrot.lane.b32.xlu0 %v2357, 61
  %v2618 = vpop.permute.xlu0 %2617
  %v2619 = vsel %vm2382, %v2381, %v2618
  %2620 = vrot.lane.b32.xlu0 %v2372, 61
  %v2621 = vpop.permute.xlu0 %2620
  %v2622 = vsel %vm2382, %v2393, %v2621
  %v2623 = vrot.slane %v2619, 3
  %v2624 = vrot.slane %v2622, 3
  %2627 = vst [vmem:[#allocation2 + $0x3a0] sm:$0xe0] %v2397
  %2628 = vst [vmem:[#allocation2 + $0x3a8] sm:$0xe0] %v2623
  %2629 = vst [vmem:[#allocation2 + $0x3b0] sm:$0xe0] %v2399
  %2630 = vst [vmem:[#allocation2 + $0x3b8] sm:$0xe0] %v2624
  %v2631 = vsub.s32 %v75, 4
  %v2632 = vsub.s32 %v76, 4
  %v2633 = vsub.s32 %v77, 4
  %v2634 = vsub.s32 %v78, 4
  %vm2635 = vcmp.ge.s32.totalorder %v2631, 0
  %vm2636 = vcmp.ge.s32.totalorder %v2632, 0
  %vm2637 = vcmp.ge.s32.totalorder %v2633, 0
  %vm2638 = vcmp.ge.s32.totalorder %v2634, 0
  %vm2639 = vcmp.lt.s32.totalorder %v2631, 16
  %vm2640 = vcmp.lt.s32.totalorder %v2632, 16
  %vm2641 = vcmp.lt.s32.totalorder %v2633, 16
  %vm2642 = vcmp.lt.s32.totalorder %v2634, 16
  %vm2643 = vmand %vm2635, %vm2639
  %vm2644 = vmand %vm2636, %vm2640
  %vm2645 = vmand %vm2637, %vm2641
  %vm2646 = vmand %vm2638, %vm2642
  %v2647 = vsel %vm2643, 1, 0
  %v2648 = vsel %vm2644, 1, 0
  %v2649 = vsel %vm2645, 1, 0
  %v2650 = vsel %vm2646, 1, 0
  %vm2651 = vcmp.eq.s32.totalorder %v2647, 1
  %vm2652 = vcmp.eq.s32.totalorder %v2648, 1
  %vm2653 = vcmp.eq.s32.totalorder %v2649, 1
  %vm2654 = vcmp.eq.s32.totalorder %v2650, 1
  %2655 = vst [vmem:[#allocation1] ss:$2 sm:$0xff] %v79
  %s2656 = scalar_lea.vmem [#allocation1], 16
  %2657 = vst [vmem:[%s2656] ss:$2 sm:$0xff] %v80
  %v2658 = vld.sshfl [vmem:[#allocation1] sm:$0xff pattern:$0x75316420]
  %v2659 = vld.sshfl [vmem:[#allocation1 + $0x8] sm:$0xff pattern:$0x75316420]
  %v2660 = vld.sshfl [vmem:[#allocation1 + $0x10] sm:$0xff pattern:$0x75316420]
  %v2661 = vld.sshfl [vmem:[#allocation1 + $0x18] sm:$0xff pattern:$0x75316420]
  %v2666 = vsel %vm2651, %v2658, 0.0
  %v2667 = vsel %vm2652, %v2659, 0.0
  %v2668 = vsel %vm2653, %v2660, 0.0
  %v2669 = vsel %vm2654, %v2661, 0.0
  %2670 = vst [vmem:[#allocation1] ss:$2 sm:$0xff] %v82
  %s2671 = scalar_lea.vmem [#allocation1], 16
  %2672 = vst [vmem:[%s2671] ss:$2 sm:$0xff] %v83
  %v2673 = vld.sshfl [vmem:[#allocation1] sm:$0xff pattern:$0x75316420]
  %v2674 = vld.sshfl [vmem:[#allocation1 + $0x8] sm:$0xff pattern:$0x75316420]
  %v2675 = vld.sshfl [vmem:[#allocation1 + $0x10] sm:$0xff pattern:$0x75316420]
  %v2676 = vld.sshfl [vmem:[#allocation1 + $0x18] sm:$0xff pattern:$0x75316420]
  %v2681 = vsel %vm2651, %v2673, 0.0
  %v2682 = vsel %vm2652, %v2674, 0.0
  %v2683 = vsel %vm2653, %v2675, 0.0
  %v2684 = vsel %vm2654, %v2676, 0.0
  %2688 = vrot.lane.b32.xlu0 %v2666, 60
  %v2689 = vpop.permute.xlu0 %2688
  %2690 = vrot.lane.b32.xlu0 %v2667, 60
  %v2691 = vpop.permute.xlu0 %2690
  %2692 = vrot.lane.b32.xlu0 %v2668, 60
  %v2693 = vpop.permute.xlu0 %2692
  %vm2694 = vcmask 490496
  %v2695 = vsel %vm2694, %v2689, %v2691
  %v2696 = vsel %vm2694, %v2691, %v2693
  %2702 = vrot.lane.b32.xlu0 %v2681, 60
  %v2703 = vpop.permute.xlu0 %2702
  %2704 = vrot.lane.b32.xlu0 %v2682, 60
  %v2705 = vpop.permute.xlu0 %2704
  %2706 = vrot.lane.b32.xlu0 %v2683, 60
  %v2707 = vpop.permute.xlu0 %2706
  %v2708 = vsel %vm2694, %v2703, %v2705
  %v2709 = vsel %vm2694, %v2705, %v2707
  %2712 = vst [vmem:[#allocation2 + $0x60] sm:$0x7] %v2695
  %2713 = vst [vmem:[#allocation2 + $0x68] sm:$0x7] %v2696
  %2714 = vst [vmem:[#allocation2 + $0x70] sm:$0x7] %v2708
  %2715 = vst [vmem:[#allocation2 + $0x78] sm:$0x7] %v2709
  %2716 = vrot.lane.b32.xlu0 %v2666, 44
  %v2717 = vpop.permute.xlu0 %2716
  %2718 = vrot.lane.b32.xlu0 %v2667, 44
  %v2719 = vpop.permute.xlu0 %2718
  %2720 = vrot.lane.b32.xlu0 %v2668, 44
  %v2721 = vpop.permute.xlu0 %2720
  %vm2722 = vcmask 359424
  %v2723 = vsel %vm2722, %v2717, %v2719
  %v2724 = vsel %vm2722, %v2719, %v2721
  %2725 = vrot.lane.b32.xlu0 %v2681, 44
  %v2726 = vpop.permute.xlu0 %2725
  %2727 = vrot.lane.b32.xlu0 %v2682, 44
  %v2728 = vpop.permute.xlu0 %2727
  %2729 = vrot.lane.b32.xlu0 %v2683, 44
  %v2730 = vpop.permute.xlu0 %2729
  %v2731 = vsel %vm2722, %v2726, %v2728
  %v2732 = vsel %vm2722, %v2728, %v2730
  %v2733 = vrot.slane %v2723, 5
  %v2734 = vrot.slane %v2724, 5
  %v2735 = vrot.slane %v2731, 5
  %v2736 = vrot.slane %v2732, 5
  %2741 = vst [vmem:[#allocation2 + $0xc0] sm:$0x38] %v2733
  %2742 = vst [vmem:[#allocation2 + $0xc8] sm:$0x38] %v2734
  %2743 = vst [vmem:[#allocation2 + $0xd0] sm:$0x38] %v2735
  %2744 = vst [vmem:[#allocation2 + $0xd8] sm:$0x38] %v2736
  %2745 = vrot.lane.b32.xlu0 %v2666, 28
  %v2746 = vpop.permute.xlu0 %2745
  %2747 = vrot.lane.b32.xlu0 %v2667, 28
  %v2748 = vpop.permute.xlu0 %2747
  %2749 = vrot.lane.b32.xlu0 %v2668, 28
  %v2750 = vpop.permute.xlu0 %2749
  %vm2751 = vcmask 228352
  %v2752 = vsel %vm2751, %v2746, %v2748
  %v2753 = vsel %vm2751, %v2748, %v2750
  %2754 = vrot.lane.b32.xlu0 %v2681, 28
  %v2755 = vpop.permute.xlu0 %2754
  %2756 = vrot.lane.b32.xlu0 %v2682, 28
  %v2757 = vpop.permute.xlu0 %2756
  %2758 = vrot.lane.b32.xlu0 %v2683, 28
  %v2759 = vpop.permute.xlu0 %2758
  %v2760 = vsel %vm2751, %v2755, %v2757
  %v2761 = vsel %vm2751, %v2757, %v2759
  %v2762 = vrot.slane %v2752, 2
  %v2763 = vrot.slane %v2753, 2
  %v2764 = vrot.slane %v2760, 2
  %v2765 = vrot.slane %v2761, 2
  %2770 = vst [vmem:[#allocation2 + $0x120] sm:$0xc0] %v2762
  %2771 = vst [vmem:[#allocation2 + $0x128] sm:$0xc0] %v2763
  %2772 = vst [vmem:[#allocation2 + $0x130] sm:$0xc0] %v2764
  %2773 = vst [vmem:[#allocation2 + $0x138] sm:$0xc0] %v2765
  %2774 = vst [vmem:[#allocation2 + $0x140] sm:$0x1] %v2762
  %2775 = vst [vmem:[#allocation2 + $0x148] sm:$0x1] %v2763
  %2776 = vst [vmem:[#allocation2 + $0x150] sm:$0x1] %v2764
  %2777 = vst [vmem:[#allocation2 + $0x158] sm:$0x1] %v2765
  %2778 = vrot.lane.b32.xlu0 %v2666, 12
  %v2779 = vpop.permute.xlu0 %2778
  %2780 = vrot.lane.b32.xlu0 %v2667, 12
  %v2781 = vpop.permute.xlu0 %2780
  %2782 = vrot.lane.b32.xlu0 %v2668, 12
  %v2783 = vpop.permute.xlu0 %2782
  %vm2784 = vcmask 97280
  %v2785 = vsel %vm2784, %v2779, %v2781
  %v2786 = vsel %vm2784, %v2781, %v2783
  %2787 = vrot.lane.b32.xlu0 %v2681, 12
  %v2788 = vpop.permute.xlu0 %2787
  %2789 = vrot.lane.b32.xlu0 %v2682, 12
  %v2790 = vpop.permute.xlu0 %2789
  %2791 = vrot.lane.b32.xlu0 %v2683, 12
  %v2792 = vpop.permute.xlu0 %2791
  %v2793 = vsel %vm2784, %v2788, %v2790
  %v2794 = vsel %vm2784, %v2790, %v2792
  %v2795 = vrot.slane %v2785, 7
  %v2796 = vrot.slane %v2786, 7
  %v2797 = vrot.slane %v2793, 7
  %v2798 = vrot.slane %v2794, 7
  %2803 = vst [vmem:[#allocation2 + $0x1a0] sm:$0xe] %v2795
  %2804 = vst [vmem:[#allocation2 + $0x1a8] sm:$0xe] %v2796
  %2805 = vst [vmem:[#allocation2 + $0x1b0] sm:$0xe] %v2797
  %2806 = vst [vmem:[#allocation2 + $0x1b8] sm:$0xe] %v2798
  %2808 = vrot.lane.b32.xlu0 %v2667, 124
  %v2809 = vpop.permute.xlu0 %2808
  %2810 = vrot.lane.b32.xlu0 %v2668, 124
  %v2811 = vpop.permute.xlu0 %2810
  %2812 = vrot.lane.b32.xlu0 %v2669, 124
  %v2813 = vpop.permute.xlu0 %2812
  %vm2814 = vcmask 1014784
  %v2815 = vsel %vm2814, %v2809, %v2811
  %v2816 = vsel %vm2814, %v2811, %v2813
  %2818 = vrot.lane.b32.xlu0 %v2682, 124
  %v2819 = vpop.permute.xlu0 %2818
  %2820 = vrot.lane.b32.xlu0 %v2683, 124
  %v2821 = vpop.permute.xlu0 %2820
  %2822 = vrot.lane.b32.xlu0 %v2684, 124
  %v2823 = vpop.permute.xlu0 %2822
  %v2824 = vsel %vm2814, %v2819, %v2821
  %v2825 = vsel %vm2814, %v2821, %v2823
  %v2826 = vrot.slane %v2815, 4
  %v2827 = vrot.slane %v2816, 4
  %v2828 = vrot.slane %v2824, 4
  %v2829 = vrot.slane %v2825, 4
  %2834 = vst [vmem:[#allocation2 + $0x200] sm:$0x70] %v2826
  %2835 = vst [vmem:[#allocation2 + $0x208] sm:$0x70] %v2827
  %2836 = vst [vmem:[#allocation2 + $0x210] sm:$0x70] %v2828
  %2837 = vst [vmem:[#allocation2 + $0x218] sm:$0x70] %v2829
  %2838 = vrot.lane.b32.xlu0 %v2667, 108
  %v2839 = vpop.permute.xlu0 %2838
  %2840 = vrot.lane.b32.xlu0 %v2668, 108
  %v2841 = vpop.permute.xlu0 %2840
  %2842 = vrot.lane.b32.xlu0 %v2669, 108
  %v2843 = vpop.permute.xlu0 %2842
  %vm2844 = vcmask 883712
  %v2845 = vsel %vm2844, %v2839, %v2841
  %v2846 = vsel %vm2844, %v2841, %v2843
  %2847 = vrot.lane.b32.xlu0 %v2682, 108
  %v2848 = vpop.permute.xlu0 %2847
  %2849 = vrot.lane.b32.xlu0 %v2683, 108
  %v2850 = vpop.permute.xlu0 %2849
  %2851 = vrot.lane.b32.xlu0 %v2684, 108
  %v2852 = vpop.permute.xlu0 %2851
  %v2853 = vsel %vm2844, %v2848, %v2850
  %v2854 = vsel %vm2844, %v2850, %v2852
  %v2855 = vrot.slane %v2845, 1
  %v2856 = vrot.slane %v2846, 1
  %v2857 = vrot.slane %v2853, 1
  %v2858 = vrot.slane %v2854, 1
  %2863 = vst [vmem:[#allocation2 + $0x260] sm:$0x80] %v2855
  %2864 = vst [vmem:[#allocation2 + $0x268] sm:$0x80] %v2856
  %2865 = vst [vmem:[#allocation2 + $0x270] sm:$0x80] %v2857
  %2866 = vst [vmem:[#allocation2 + $0x278] sm:$0x80] %v2858
  %2867 = vst [vmem:[#allocation2 + $0x280] sm:$0x3] %v2855
  %2868 = vst [vmem:[#allocation2 + $0x288] sm:$0x3] %v2856
  %2869 = vst [vmem:[#allocation2 + $0x290] sm:$0x3] %v2857
  %2870 = vst [vmem:[#allocation2 + $0x298] sm:$0x3] %v2858
  %2871 = vrot.lane.b32.xlu0 %v2667, 92
  %v2872 = vpop.permute.xlu0 %2871
  %2873 = vrot.lane.b32.xlu0 %v2668, 92
  %v2874 = vpop.permute.xlu0 %2873
  %2875 = vrot.lane.b32.xlu0 %v2669, 92
  %v2876 = vpop.permute.xlu0 %2875
  %vm2877 = vcmask 752640
  %v2878 = vsel %vm2877, %v2872, %v2874
  %v2879 = vsel %vm2877, %v2874, %v2876
  %2880 = vrot.lane.b32.xlu0 %v2682, 92
  %v2881 = vpop.permute.xlu0 %2880
  %2882 = vrot.lane.b32.xlu0 %v2683, 92
  %v2883 = vpop.permute.xlu0 %2882
  %2884 = vrot.lane.b32.xlu0 %v2684, 92
  %v2885 = vpop.permute.xlu0 %2884
  %v2886 = vsel %vm2877, %v2881, %v2883
  %v2887 = vsel %vm2877, %v2883, %v2885
  %v2888 = vrot.slane %v2878, 6
  %v2889 = vrot.slane %v2879, 6
  %v2890 = vrot.slane %v2886, 6
  %v2891 = vrot.slane %v2887, 6
  %2896 = vst [vmem:[#allocation2 + $0x2e0] sm:$0x1c] %v2888
  %2897 = vst [vmem:[#allocation2 + $0x2e8] sm:$0x1c] %v2889
  %2898 = vst [vmem:[#allocation2 + $0x2f0] sm:$0x1c] %v2890
  %2899 = vst [vmem:[#allocation2 + $0x2f8] sm:$0x1c] %v2891
  %2900 = vrot.lane.b32.xlu0 %v2667, 76
  %v2901 = vpop.permute.xlu0 %2900
  %2902 = vrot.lane.b32.xlu0 %v2668, 76
  %v2903 = vpop.permute.xlu0 %2902
  %2904 = vrot.lane.b32.xlu0 %v2669, 76
  %v2905 = vpop.permute.xlu0 %2904
  %vm2906 = vcmask 621568
  %v2907 = vsel %vm2906, %v2901, %v2903
  %v2908 = vsel %vm2906, %v2903, %v2905
  %2909 = vrot.lane.b32.xlu0 %v2682, 76
  %v2910 = vpop.permute.xlu0 %2909
  %2911 = vrot.lane.b32.xlu0 %v2683, 76
  %v2912 = vpop.permute.xlu0 %2911
  %2913 = vrot.lane.b32.xlu0 %v2684, 76
  %v2914 = vpop.permute.xlu0 %2913
  %v2915 = vsel %vm2906, %v2910, %v2912
  %v2916 = vsel %vm2906, %v2912, %v2914
  %v2917 = vrot.slane %v2907, 3
  %v2918 = vrot.slane %v2908, 3
  %v2919 = vrot.slane %v2915, 3
  %v2920 = vrot.slane %v2916, 3
  %2925 = vst [vmem:[#allocation2 + $0x340] sm:$0xe0] %v2917
  %2926 = vst [vmem:[#allocation2 + $0x348] sm:$0xe0] %v2918
  %2927 = vst [vmem:[#allocation2 + $0x350] sm:$0xe0] %v2919
  %2928 = vst [vmem:[#allocation2 + $0x358] sm:$0xe0] %v2920
  %2929 = vrot.lane.b32.xlu0 %v2669, 60
  %v2930 = vpop.permute.xlu0 %2929
  %v2931 = vsel %vm2694, %v2693, %v2930
  %2933 = vrot.lane.b32.xlu0 %v2684, 60
  %v2934 = vpop.permute.xlu0 %2933
  %v2935 = vsel %vm2694, %v2707, %v2934
  %2937 = vst [vmem:[#allocation2 + $0x3c0] sm:$0x7] %v2696
  %2938 = vst [vmem:[#allocation2 + $0x3c8] sm:$0x7] %v2931
  %2939 = vst [vmem:[#allocation2 + $0x3d0] sm:$0x7] %v2709
  %2940 = vst [vmem:[#allocation2 + $0x3d8] sm:$0x7] %v2935
  %2941 = vst [vmem:[#allocation2 + $0x3c0] sm:$0xf8] 0.0
  %2942 = vst [vmem:[#allocation2 + $0x3c8] sm:$0xf8] 0.0
  %2943 = vst [vmem:[#allocation2 + $0x3d0] sm:$0xf8] 0.0
  %2944 = vst [vmem:[#allocation2 + $0x3d8] sm:$0xf8] 0.0
  %2945 = vst [vmem:[#allocation2 + $0x3e0] sm:$0xff] 0.0
  %2946 = vst [vmem:[#allocation2 + $0x3e8] sm:$0xff] 0.0
  %2947 = vst [vmem:[#allocation2 + $0x3f0] sm:$0xff] 0.0
  %2948 = vst [vmem:[#allocation2 + $0x3f8] sm:$0xff] 0.0
  %v2949 = vld [vmem:[%s1] sm:$0xff]
  %v2950 = vld [vmem:[%s1 + $0x8] sm:$0xff]
  %v2951 = vld [vmem:[%s1 + $0x10] sm:$0xff]
  %v2952 = vld [vmem:[%s1 + $0x18] sm:$0xff]
  %v2953 = vld [vmem:[%s1 + $0x20] sm:$0xff]
  %v2954 = vld [vmem:[%s1 + $0x28] sm:$0xff]
  %v2955 = vld [vmem:[%s1 + $0x30] sm:$0xff]
  %v2956 = vld [vmem:[%s1 + $0x38] sm:$0xff]
  %v2957 = vld [vmem:[%s1 + $0x40] sm:$0xff]
  %v2958 = vld [vmem:[%s1 + $0x48] sm:$0xff]
  %v2959 = vld [vmem:[%s1 + $0x50] sm:$0xff]
  %v2960 = vld [vmem:[%s1 + $0x58] sm:$0xff]
  %v2961 = vld [vmem:[%s1 + $0x60] sm:$0xff]
  %v2962 = vld [vmem:[%s1 + $0x68] sm:$0xff]
  %v2963 = vld [vmem:[%s1 + $0x70] sm:$0xff]
  %v2964 = vld [vmem:[%s1 + $0x78] sm:$0xff]
  %v2965 = vld [vmem:[#allocation2] sm:$0xff]
  %v2966 = vld [vmem:[#allocation2 + $0x8] sm:$0xff]
  %v2967 = vld [vmem:[#allocation2 + $0x10] sm:$0xff]
  %v2968 = vld [vmem:[#allocation2 + $0x18] sm:$0xff]
  %v2969 = vld [vmem:[#allocation2 + $0x20] sm:$0xff]
  %v2970 = vld [vmem:[#allocation2 + $0x28] sm:$0xff]
  %v2971 = vld [vmem:[#allocation2 + $0x30] sm:$0xff]
  %v2972 = vld [vmem:[#allocation2 + $0x38] sm:$0xff]
  %v2973 = vld [vmem:[#allocation2 + $0x40] sm:$0xff]
  %v2974 = vld [vmem:[#allocation2 + $0x48] sm:$0xff]
  %v2975 = vld [vmem:[#allocation2 + $0x50] sm:$0xff]
  %v2976 = vld [vmem:[#allocation2 + $0x58] sm:$0xff]
  %v2977 = vld [vmem:[#allocation2 + $0x60] sm:$0xff]
  %v2978 = vld [vmem:[#allocation2 + $0x68] sm:$0xff]
  %v2979 = vld [vmem:[#allocation2 + $0x70] sm:$0xff]
  %v2980 = vld [vmem:[#allocation2 + $0x78] sm:$0xff]
  %v2981 = vld [vmem:[#allocation2 + $0x80] sm:$0xff]
  %v2982 = vld [vmem:[#allocation2 + $0x88] sm:$0xff]
  %v2983 = vld [vmem:[#allocation2 + $0x90] sm:$0xff]
  %v2984 = vld [vmem:[#allocation2 + $0x98] sm:$0xff]
  %v2985 = vld [vmem:[#allocation2 + $0xa0] sm:$0xff]
  %v2986 = vld [vmem:[#allocation2 + $0xa8] sm:$0xff]
  %v2987 = vld [vmem:[#allocation2 + $0xb0] sm:$0xff]
  %v2988 = vld [vmem:[#allocation2 + $0xb8] sm:$0xff]
  %v2989 = vld [vmem:[#allocation2 + $0xc0] sm:$0xff]
  %v2990 = vld [vmem:[#allocation2 + $0xc8] sm:$0xff]
  %v2991 = vld [vmem:[#allocation2 + $0xd0] sm:$0xff]
  %v2992 = vld [vmem:[#allocation2 + $0xd8] sm:$0xff]
  %v2993 = vld [vmem:[#allocation2 + $0xe0] sm:$0xff]
  %v2994 = vld [vmem:[#allocation2 + $0xe8] sm:$0xff]
  %v2995 = vld [vmem:[#allocation2 + $0xf0] sm:$0xff]
  %v2996 = vld [vmem:[#allocation2 + $0xf8] sm:$0xff]
  %v2997 = vld [vmem:[#allocation2 + $0x100] sm:$0xff]
  %v2998 = vld [vmem:[#allocation2 + $0x108] sm:$0xff]
  %v2999 = vld [vmem:[#allocation2 + $0x110] sm:$0xff]
  %v3000 = vld [vmem:[#allocation2 + $0x118] sm:$0xff]
  %v3001 = vld [vmem:[#allocation2 + $0x120] sm:$0xff]
  %v3002 = vld [vmem:[#allocation2 + $0x128] sm:$0xff]
  %v3003 = vld [vmem:[#allocation2 + $0x130] sm:$0xff]
  %v3004 = vld [vmem:[#allocation2 + $0x138] sm:$0xff]
  %v3005 = vld [vmem:[#allocation2 + $0x140] sm:$0xff]
  %v3006 = vld [vmem:[#allocation2 + $0x148] sm:$0xff]
  %v3007 = vld [vmem:[#allocation2 + $0x150] sm:$0xff]
  %v3008 = vld [vmem:[#allocation2 + $0x158] sm:$0xff]
  %v3009 = vld [vmem:[#allocation2 + $0x160] sm:$0xff]
  %v3010 = vld [vmem:[#allocation2 + $0x168] sm:$0xff]
  %v3011 = vld [vmem:[#allocation2 + $0x170] sm:$0xff]
  %v3012 = vld [vmem:[#allocation2 + $0x178] sm:$0xff]
  %v3013 = vld [vmem:[#allocation2 + $0x180] sm:$0xff]
  %v3014 = vld [vmem:[#allocation2 + $0x188] sm:$0xff]
  %v3015 = vld [vmem:[#allocation2 + $0x190] sm:$0xff]
  %v3016 = vld [vmem:[#allocation2 + $0x198] sm:$0xff]
  %v3017 = vld [vmem:[#allocation2 + $0x1a0] sm:$0xff]
  %v3018 = vld [vmem:[#allocation2 + $0x1a8] sm:$0xff]
  %v3019 = vld [vmem:[#allocation2 + $0x1b0] sm:$0xff]
  %v3020 = vld [vmem:[#allocation2 + $0x1b8] sm:$0xff]
  %v3021 = vld [vmem:[#allocation2 + $0x1c0] sm:$0xff]
  %v3022 = vld [vmem:[#allocation2 + $0x1c8] sm:$0xff]
  %v3023 = vld [vmem:[#allocation2 + $0x1d0] sm:$0xff]
  %v3024 = vld [vmem:[#allocation2 + $0x1d8] sm:$0xff]
  %v3025 = vld [vmem:[#allocation2 + $0x1e0] sm:$0xff]
  %v3026 = vld [vmem:[#allocation2 + $0x1e8] sm:$0xff]
  %v3027 = vld [vmem:[#allocation2 + $0x1f0] sm:$0xff]
  %v3028 = vld [vmem:[#allocation2 + $0x1f8] sm:$0xff]
  %v3029 = vld [vmem:[#allocation2 + $0x200] sm:$0xff]
  %v3030 = vld [vmem:[#allocation2 + $0x208] sm:$0xff]
  %v3031 = vld [vmem:[#allocation2 + $0x210] sm:$0xff]
  %v3032 = vld [vmem:[#allocation2 + $0x218] sm:$0xff]
  %v3033 = vld [vmem:[#allocation2 + $0x220] sm:$0xff]
  %v3034 = vld [vmem:[#allocation2 + $0x228] sm:$0xff]
  %v3035 = vld [vmem:[#allocation2 + $0x230] sm:$0xff]
  %v3036 = vld [vmem:[#allocation2 + $0x238] sm:$0xff]
  %v3037 = vld [vmem:[#allocation2 + $0x240] sm:$0xff]
  %v3038 = vld [vmem:[#allocation2 + $0x248] sm:$0xff]
  %v3039 = vld [vmem:[#allocation2 + $0x250] sm:$0xff]
  %v3040 = vld [vmem:[#allocation2 + $0x258] sm:$0xff]
  %v3041 = vld [vmem:[#allocation2 + $0x260] sm:$0xff]
  %v3042 = vld [vmem:[#allocation2 + $0x268] sm:$0xff]
  %v3043 = vld [vmem:[#allocation2 + $0x270] sm:$0xff]
  %v3044 = vld [vmem:[#allocation2 + $0x278] sm:$0xff]
  %v3045 = vld [vmem:[#allocation2 + $0x280] sm:$0xff]
  %v3046 = vld [vmem:[#allocation2 + $0x288] sm:$0xff]
  %v3047 = vld [vmem:[#allocation2 + $0x290] sm:$0xff]
  %v3048 = vld [vmem:[#allocation2 + $0x298] sm:$0xff]
  %v3049 = vld [vmem:[#allocation2 + $0x2a0] sm:$0xff]
  %v3050 = vld [vmem:[#allocation2 + $0x2a8] sm:$0xff]
  %v3051 = vld [vmem:[#allocation2 + $0x2b0] sm:$0xff]
  %v3052 = vld [vmem:[#allocation2 + $0x2b8] sm:$0xff]
  %v3053 = vld [vmem:[#allocation2 + $0x2c0] sm:$0xff]
  %v3054 = vld [vmem:[#allocation2 + $0x2c8] sm:$0xff]
  %v3055 = vld [vmem:[#allocation2 + $0x2d0] sm:$0xff]
  %v3056 = vld [vmem:[#allocation2 + $0x2d8] sm:$0xff]
  %v3057 = vld [vmem:[#allocation2 + $0x2e0] sm:$0xff]
  %v3058 = vld [vmem:[#allocation2 + $0x2e8] sm:$0xff]
  %v3059 = vld [vmem:[#allocation2 + $0x2f0] sm:$0xff]
  %v3060 = vld [vmem:[#allocation2 + $0x2f8] sm:$0xff]
  %v3061 = vld [vmem:[#allocation2 + $0x300] sm:$0xff]
  %v3062 = vld [vmem:[#allocation2 + $0x308] sm:$0xff]
  %v3063 = vld [vmem:[#allocation2 + $0x310] sm:$0xff]
  %v3064 = vld [vmem:[#allocation2 + $0x318] sm:$0xff]
  %v3065 = vld [vmem:[#allocation2 + $0x320] sm:$0xff]
  %v3066 = vld [vmem:[#allocation2 + $0x328] sm:$0xff]
  %v3067 = vld [vmem:[#allocation2 + $0x330] sm:$0xff]
  %v3068 = vld [vmem:[#allocation2 + $0x338] sm:$0xff]
  %v3069 = vld [vmem:[#allocation2 + $0x340] sm:$0xff]
  %v3070 = vld [vmem:[#allocation2 + $0x348] sm:$0xff]
  %v3071 = vld [vmem:[#allocation2 + $0x350] sm:$0xff]
  %v3072 = vld [vmem:[#allocation2 + $0x358] sm:$0xff]
  %v3073 = vld [vmem:[#allocation2 + $0x360] sm:$0xff]
  %v3074 = vld [vmem:[#allocation2 + $0x368] sm:$0xff]
  %v3075 = vld [vmem:[#allocation2 + $0x370] sm:$0xff]
  %v3076 = vld [vmem:[#allocation2 + $0x378] sm:$0xff]
  %v3077 = vld [vmem:[#allocation2 + $0x380] sm:$0xff]
  %v3078 = vld [vmem:[#allocation2 + $0x388] sm:$0xff]
  %v3079 = vld [vmem:[#allocation2 + $0x390] sm:$0xff]
  %v3080 = vld [vmem:[#allocation2 + $0x398] sm:$0xff]
  %v3081 = vld [vmem:[#allocation2 + $0x3a0] sm:$0xff]
  %v3082 = vld [vmem:[#allocation2 + $0x3a8] sm:$0xff]
  %v3083 = vld [vmem:[#allocation2 + $0x3b0] sm:$0xff]
  %v3084 = vld [vmem:[#allocation2 + $0x3b8] sm:$0xff]
  %v3085 = vld [vmem:[#allocation2 + $0x3c0] sm:$0xff]
  %v3086 = vld [vmem:[#allocation2 + $0x3c8] sm:$0xff]
  %v3087 = vld [vmem:[#allocation2 + $0x3d0] sm:$0xff]
  %v3088 = vld [vmem:[#allocation2 + $0x3d8] sm:$0xff]
  %v3089 = vld [vmem:[#allocation2 + $0x3e0] sm:$0xff]
  %v3090 = vld [vmem:[#allocation2 + $0x3e8] sm:$0xff]
  %v3091 = vld [vmem:[#allocation2 + $0x3f0] sm:$0xff]
  %v3092 = vld [vmem:[#allocation2 + $0x3f8] sm:$0xff]
  %v3093 = vld [vmem:[%s2] sm:$0xff]
  %v3094 = vld [vmem:[%s2 + $0x8] sm:$0xff]
  %v3095 = vld [vmem:[%s2 + $0x10] sm:$0xff]
  %v3096 = vld [vmem:[%s2 + $0x18] sm:$0xff]
  %v3097 = vld [vmem:[%s2 + $0x20] sm:$0xff]
  %v3098 = vld [vmem:[%s2 + $0x28] sm:$0xff]
  %v3099 = vld [vmem:[%s2 + $0x30] sm:$0xff]
  %v3100 = vld [vmem:[%s2 + $0x38] sm:$0xff]
  %3102 = vset.pattern.permute.xlu0 0
  %3103 = vperm.xlu0 %3102, %v3093
  %v3104 = vpop.permute.xlu0 %3103
  %3107 = vset.pattern.permute.xlu0 0
  %3108 = vperm.xlu0 %3107, %v3094
  %v3109 = vpop.permute.xlu0 %3108
  %3112 = vset.pattern.permute.xlu0 0
  %3113 = vperm.xlu0 %3112, %v3095
  %v3114 = vpop.permute.xlu0 %3113
  %3117 = vset.pattern.permute.xlu0 0
  %3118 = vperm.xlu0 %3117, %v3096
  %v3119 = vpop.permute.xlu0 %3118
  %3122 = vset.pattern.permute.xlu0 0
  %3123 = vperm.xlu0 %3122, %v3097
  %v3124 = vpop.permute.xlu0 %3123
  %3127 = vset.pattern.permute.xlu0 0
  %3128 = vperm.xlu0 %3127, %v3098
  %v3129 = vpop.permute.xlu0 %3128
  %3132 = vset.pattern.permute.xlu0 0
  %3133 = vperm.xlu0 %3132, %v3099
  %v3134 = vpop.permute.xlu0 %3133
  %3137 = vset.pattern.permute.xlu0 0
  %3138 = vperm.xlu0 %3137, %v3100
  %v3139 = vpop.permute.xlu0 %3138
  %3141 = vmatpush.msra.mxu0 %v3025
  %3142 = vmatpush.msra.mxu0 %v3021
  %3143 = vmatpush.msra.mxu0 %v3017
  %3144 = vmatpush.msra.mxu0 %v3013
  %3145 = vmatpush.msra.mxu0 %v3009
  %3146 = vmatpush.msra.mxu0 %v3005
  %3147 = vmatpush.msra.mxu0 %v3001
  %3148 = vmatpush.msra.mxu0 %v2997
  %3149 = vmatpush.msra.mxu0 %v2993
  %3150 = vmatpush.msra.mxu0 %v2989
  %3151 = vmatpush.msra.mxu0 %v2985
  %3152 = vmatpush.msra.mxu0 %v2981
  %3153 = vmatpush.msra.mxu0 %v2977
  %3154 = vmatpush.msra.mxu0 %v2973
  %3155 = vmatpush.msra.mxu0 %v2969
  %3156 = vmatpush.msra.mxu0 %v2965
  %3157 = vmatmul.f32.gmra.mxu0 %v2949
  %v3158 = vpop.f32.mrf.mxu0
  %v3159 = vadd.f32 %v3104, %v3158
  %3160 = vmatmul.f32.gmra.mxu0 %v2951
  %v3161 = vpop.f32.mrf.mxu0
  %v3162 = vadd.f32 %v3109, %v3161
  %3163 = vmatmul.f32.gmra.mxu0 %v2953
  %v3164 = vpop.f32.mrf.mxu0
  %v3165 = vadd.f32 %v3114, %v3164
  %3166 = vmatmul.f32.gmra.mxu0 %v2955
  %v3167 = vpop.f32.mrf.mxu0
  %v3168 = vadd.f32 %v3119, %v3167
  %3169 = vmatmul.f32.gmra.mxu0 %v2957
  %v3170 = vpop.f32.mrf.mxu0
  %v3171 = vadd.f32 %v3124, %v3170
  %3172 = vmatmul.f32.gmra.mxu0 %v2959
  %v3173 = vpop.f32.mrf.mxu0
  %v3174 = vadd.f32 %v3129, %v3173
  %3175 = vmatmul.f32.gmra.mxu0 %v2961
  %v3176 = vpop.f32.mrf.mxu0
  %v3177 = vadd.f32 %v3134, %v3176
  %3178 = vmatmul.f32.gmra.mxu0 %v2963
  %v3179 = vpop.f32.mrf.mxu0
  %v3180 = vadd.f32 %v3139, %v3179
  %3181 = vdwg.mxu0
  %3182 = vmatpush.msra.mxu0 %v3089
  %3183 = vmatpush.msra.mxu0 %v3085
  %3184 = vmatpush.msra.mxu0 %v3081
  %3185 = vmatpush.msra.mxu0 %v3077
  %3186 = vmatpush.msra.mxu0 %v3073
  %3187 = vmatpush.msra.mxu0 %v3069
  %3188 = vmatpush.msra.mxu0 %v3065
  %3189 = vmatpush.msra.mxu0 %v3061
  %3190 = vmatpush.msra.mxu0 %v3057
  %3191 = vmatpush.msra.mxu0 %v3053
  %3192 = vmatpush.msra.mxu0 %v3049
  %3193 = vmatpush.msra.mxu0 %v3045
  %3194 = vmatpush.msra.mxu0 %v3041
  %3195 = vmatpush.msra.mxu0 %v3037
  %3196 = vmatpush.msra.mxu0 %v3033
  %3197 = vmatpush.msra.mxu0 %v3029
  %3198 = vmatmul.f32.gmra.mxu0 %v2950
  %v3199 = vpop.f32.mrf.mxu0
  %v3200 = vadd.f32 %v3159, %v3199
  %3201 = vmatmul.f32.gmra.mxu0 %v2952
  %v3202 = vpop.f32.mrf.mxu0
  %v3203 = vadd.f32 %v3162, %v3202
  %3204 = vmatmul.f32.gmra.mxu0 %v2954
  %v3205 = vpop.f32.mrf.mxu0
  %v3206 = vadd.f32 %v3165, %v3205
  %3207 = vmatmul.f32.gmra.mxu0 %v2956
  %v3208 = vpop.f32.mrf.mxu0
  %v3209 = vadd.f32 %v3168, %v3208
  %3210 = vmatmul.f32.gmra.mxu0 %v2958
  %v3211 = vpop.f32.mrf.mxu0
  %v3212 = vadd.f32 %v3171, %v3211
  %3213 = vmatmul.f32.gmra.mxu0 %v2960
  %v3214 = vpop.f32.mrf.mxu0
  %v3215 = vadd.f32 %v3174, %v3214
  %3216 = vmatmul.f32.gmra.mxu0 %v2962
  %v3217 = vpop.f32.mrf.mxu0
  %v3218 = vadd.f32 %v3177, %v3217
  %3219 = vmatmul.f32.gmra.mxu0 %v2964
  %v3220 = vpop.f32.mrf.mxu0
  %v3221 = vadd.f32 %v3180, %v3220
  %3222 = vdwg.mxu0
  %3223 = vmatpush.msra.mxu0 %v3026
  %3224 = vmatpush.msra.mxu0 %v3022
  %3225 = vmatpush.msra.mxu0 %v3018
  %3226 = vmatpush.msra.mxu0 %v3014
  %3227 = vmatpush.msra.mxu0 %v3010
  %3228 = vmatpush.msra.mxu0 %v3006
  %3229 = vmatpush.msra.mxu0 %v3002
  %3230 = vmatpush.msra.mxu0 %v2998
  %3231 = vmatpush.msra.mxu0 %v2994
  %3232 = vmatpush.msra.mxu0 %v2990
  %3233 = vmatpush.msra.mxu0 %v2986
  %3234 = vmatpush.msra.mxu0 %v2982
  %3235 = vmatpush.msra.mxu0 %v2978
  %3236 = vmatpush.msra.mxu0 %v2974
  %3237 = vmatpush.msra.mxu0 %v2970
  %3238 = vmatpush.msra.mxu0 %v2966
  %3239 = vmatmul.f32.gmra.mxu0 %v2949
  %v3240 = vpop.f32.mrf.mxu0
  %v3241 = vadd.f32 %v3104, %v3240
  %3242 = vmatmul.f32.gmra.mxu0 %v2951
  %v3243 = vpop.f32.mrf.mxu0
  %v3244 = vadd.f32 %v3109, %v3243
  %3245 = vmatmul.f32.gmra.mxu0 %v2953
  %v3246 = vpop.f32.mrf.mxu0
  %v3247 = vadd.f32 %v3114, %v3246
  %3248 = vmatmul.f32.gmra.mxu0 %v2955
  %v3249 = vpop.f32.mrf.mxu0
  %v3250 = vadd.f32 %v3119, %v3249
  %3251 = vmatmul.f32.gmra.mxu0 %v2957
  %v3252 = vpop.f32.mrf.mxu0
  %v3253 = vadd.f32 %v3124, %v3252
  %3254 = vmatmul.f32.gmra.mxu0 %v2959
  %v3255 = vpop.f32.mrf.mxu0
  %v3256 = vadd.f32 %v3129, %v3255
  %3257 = vmatmul.f32.gmra.mxu0 %v2961
  %v3258 = vpop.f32.mrf.mxu0
  %v3259 = vadd.f32 %v3134, %v3258
  %3260 = vmatmul.f32.gmra.mxu0 %v2963
  %v3261 = vpop.f32.mrf.mxu0
  %v3262 = vadd.f32 %v3139, %v3261
  %3263 = vdwg.mxu0
  %3264 = vmatpush.msra.mxu0 %v3090
  %3265 = vmatpush.msra.mxu0 %v3086
  %3266 = vmatpush.msra.mxu0 %v3082
  %3267 = vmatpush.msra.mxu0 %v3078
  %3268 = vmatpush.msra.mxu0 %v3074
  %3269 = vmatpush.msra.mxu0 %v3070
  %3270 = vmatpush.msra.mxu0 %v3066
  %3271 = vmatpush.msra.mxu0 %v3062
  %3272 = vmatpush.msra.mxu0 %v3058
  %3273 = vmatpush.msra.mxu0 %v3054
  %3274 = vmatpush.msra.mxu0 %v3050
  %3275 = vmatpush.msra.mxu0 %v3046
  %3276 = vmatpush.msra.mxu0 %v3042
  %3277 = vmatpush.msra.mxu0 %v3038
  %3278 = vmatpush.msra.mxu0 %v3034
  %3279 = vmatpush.msra.mxu0 %v3030
  %3280 = vmatmul.f32.gmra.mxu0 %v2950
  %v3281 = vpop.f32.mrf.mxu0
  %v3282 = vadd.f32 %v3241, %v3281
  %3283 = vmatmul.f32.gmra.mxu0 %v2952
  %v3284 = vpop.f32.mrf.mxu0
  %v3285 = vadd.f32 %v3244, %v3284
  %3286 = vmatmul.f32.gmra.mxu0 %v2954
  %v3287 = vpop.f32.mrf.mxu0
  %v3288 = vadd.f32 %v3247, %v3287
  %3289 = vmatmul.f32.gmra.mxu0 %v2956
  %v3290 = vpop.f32.mrf.mxu0
  %v3291 = vadd.f32 %v3250, %v3290
  %3292 = vmatmul.f32.gmra.mxu0 %v2958
  %v3293 = vpop.f32.mrf.mxu0
  %v3294 = vadd.f32 %v3253, %v3293
  %3295 = vmatmul.f32.gmra.mxu0 %v2960
  %v3296 = vpop.f32.mrf.mxu0
  %v3297 = vadd.f32 %v3256, %v3296
  %3298 = vmatmul.f32.gmra.mxu0 %v2962
  %v3299 = vpop.f32.mrf.mxu0
  %v3300 = vadd.f32 %v3259, %v3299
  %3301 = vmatmul.f32.gmra.mxu0 %v2964
  %v3302 = vpop.f32.mrf.mxu0
  %v3303 = vadd.f32 %v3262, %v3302
  %3304 = vdwg.mxu0
  %3305 = vmatpush.msra.mxu0 %v3027
  %3306 = vmatpush.msra.mxu0 %v3023
  %3307 = vmatpush.msra.mxu0 %v3019
  %3308 = vmatpush.msra.mxu0 %v3015
  %3309 = vmatpush.msra.mxu0 %v3011
  %3310 = vmatpush.msra.mxu0 %v3007
  %3311 = vmatpush.msra.mxu0 %v3003
  %3312 = vmatpush.msra.mxu0 %v2999
  %3313 = vmatpush.msra.mxu0 %v2995
  %3314 = vmatpush.msra.mxu0 %v2991
  %3315 = vmatpush.msra.mxu0 %v2987
  %3316 = vmatpush.msra.mxu0 %v2983
  %3317 = vmatpush.msra.mxu0 %v2979
  %3318 = vmatpush.msra.mxu0 %v2975
  %3319 = vmatpush.msra.mxu0 %v2971
  %3320 = vmatpush.msra.mxu0 %v2967
  %3321 = vmatmul.f32.gmra.mxu0 %v2949
  %v3322 = vpop.f32.mrf.mxu0
  %v3323 = vadd.f32 %v3104, %v3322
  %3324 = vmatmul.f32.gmra.mxu0 %v2951
  %v3325 = vpop.f32.mrf.mxu0
  %v3326 = vadd.f32 %v3109, %v3325
  %3327 = vmatmul.f32.gmra.mxu0 %v2953
  %v3328 = vpop.f32.mrf.mxu0
  %v3329 = vadd.f32 %v3114, %v3328
  %3330 = vmatmul.f32.gmra.mxu0 %v2955
  %v3331 = vpop.f32.mrf.mxu0
  %v3332 = vadd.f32 %v3119, %v3331
  %3333 = vmatmul.f32.gmra.mxu0 %v2957
  %v3334 = vpop.f32.mrf.mxu0
  %v3335 = vadd.f32 %v3124, %v3334
  %3336 = vmatmul.f32.gmra.mxu0 %v2959
  %v3337 = vpop.f32.mrf.mxu0
  %v3338 = vadd.f32 %v3129, %v3337
  %3339 = vmatmul.f32.gmra.mxu0 %v2961
  %v3340 = vpop.f32.mrf.mxu0
  %v3341 = vadd.f32 %v3134, %v3340
  %3342 = vmatmul.f32.gmra.mxu0 %v2963
  %v3343 = vpop.f32.mrf.mxu0
  %v3344 = vadd.f32 %v3139, %v3343
  %3345 = vdwg.mxu0
  %3346 = vmatpush.msra.mxu0 %v3091
  %3347 = vmatpush.msra.mxu0 %v3087
  %3348 = vmatpush.msra.mxu0 %v3083
  %3349 = vmatpush.msra.mxu0 %v3079
  %3350 = vmatpush.msra.mxu0 %v3075
  %3351 = vmatpush.msra.mxu0 %v3071
  %3352 = vmatpush.msra.mxu0 %v3067
  %3353 = vmatpush.msra.mxu0 %v3063
  %3354 = vmatpush.msra.mxu0 %v3059
  %3355 = vmatpush.msra.mxu0 %v3055
  %3356 = vmatpush.msra.mxu0 %v3051
  %3357 = vmatpush.msra.mxu0 %v3047
  %3358 = vmatpush.msra.mxu0 %v3043
  %3359 = vmatpush.msra.mxu0 %v3039
  %3360 = vmatpush.msra.mxu0 %v3035
  %3361 = vmatpush.msra.mxu0 %v3031
  %3362 = vmatmul.f32.gmra.mxu0 %v2950
  %v3363 = vpop.f32.mrf.mxu0
  %v3364 = vadd.f32 %v3323, %v3363
  %3365 = vmatmul.f32.gmra.mxu0 %v2952
  %v3366 = vpop.f32.mrf.mxu0
  %v3367 = vadd.f32 %v3326, %v3366
  %3368 = vmatmul.f32.gmra.mxu0 %v2954
  %v3369 = vpop.f32.mrf.mxu0
  %v3370 = vadd.f32 %v3329, %v3369
  %3371 = vmatmul.f32.gmra.mxu0 %v2956
  %v3372 = vpop.f32.mrf.mxu0
  %v3373 = vadd.f32 %v3332, %v3372
  %3374 = vmatmul.f32.gmra.mxu0 %v2958
  %v3375 = vpop.f32.mrf.mxu0
  %v3376 = vadd.f32 %v3335, %v3375
  %3377 = vmatmul.f32.gmra.mxu0 %v2960
  %v3378 = vpop.f32.mrf.mxu0
  %v3379 = vadd.f32 %v3338, %v3378
  %3380 = vmatmul.f32.gmra.mxu0 %v2962
  %v3381 = vpop.f32.mrf.mxu0
  %v3382 = vadd.f32 %v3341, %v3381
  %3383 = vmatmul.f32.gmra.mxu0 %v2964
  %v3384 = vpop.f32.mrf.mxu0
  %v3385 = vadd.f32 %v3344, %v3384
  %3386 = vdwg.mxu0
  %3387 = vmatpush.msra.mxu0 %v3028
  %3388 = vmatpush.msra.mxu0 %v3024
  %3389 = vmatpush.msra.mxu0 %v3020
  %3390 = vmatpush.msra.mxu0 %v3016
  %3391 = vmatpush.msra.mxu0 %v3012
  %3392 = vmatpush.msra.mxu0 %v3008
  %3393 = vmatpush.msra.mxu0 %v3004
  %3394 = vmatpush.msra.mxu0 %v3000
  %3395 = vmatpush.msra.mxu0 %v2996
  %3396 = vmatpush.msra.mxu0 %v2992
  %3397 = vmatpush.msra.mxu0 %v2988
  %3398 = vmatpush.msra.mxu0 %v2984
  %3399 = vmatpush.msra.mxu0 %v2980
  %3400 = vmatpush.msra.mxu0 %v2976
  %3401 = vmatpush.msra.mxu0 %v2972
  %3402 = vmatpush.msra.mxu0 %v2968
  %3403 = vmatmul.f32.gmra.mxu0 %v2949
  %v3404 = vpop.f32.mrf.mxu0
  %v3405 = vadd.f32 %v3104, %v3404
  %3406 = vmatmul.f32.gmra.mxu0 %v2951
  %v3407 = vpop.f32.mrf.mxu0
  %v3408 = vadd.f32 %v3109, %v3407
  %3409 = vmatmul.f32.gmra.mxu0 %v2953
  %v3410 = vpop.f32.mrf.mxu0
  %v3411 = vadd.f32 %v3114, %v3410
  %3412 = vmatmul.f32.gmra.mxu0 %v2955
  %v3413 = vpop.f32.mrf.mxu0
  %v3414 = vadd.f32 %v3119, %v3413
  %3415 = vmatmul.f32.gmra.mxu0 %v2957
  %v3416 = vpop.f32.mrf.mxu0
  %v3417 = vadd.f32 %v3124, %v3416
  %3418 = vmatmul.f32.gmra.mxu0 %v2959
  %v3419 = vpop.f32.mrf.mxu0
  %v3420 = vadd.f32 %v3129, %v3419
  %3421 = vmatmul.f32.gmra.mxu0 %v2961
  %v3422 = vpop.f32.mrf.mxu0
  %v3423 = vadd.f32 %v3134, %v3422
  %3424 = vmatmul.f32.gmra.mxu0 %v2963
  %v3425 = vpop.f32.mrf.mxu0
  %v3426 = vadd.f32 %v3139, %v3425
  %3427 = vdwg.mxu0
  %3428 = vmatpush.msra.mxu0 %v3092
  %3429 = vmatpush.msra.mxu0 %v3088
  %3430 = vmatpush.msra.mxu0 %v3084
  %3431 = vmatpush.msra.mxu0 %v3080
  %3432 = vmatpush.msra.mxu0 %v3076
  %3433 = vmatpush.msra.mxu0 %v3072
  %3434 = vmatpush.msra.mxu0 %v3068
  %3435 = vmatpush.msra.mxu0 %v3064
  %3436 = vmatpush.msra.mxu0 %v3060
  %3437 = vmatpush.msra.mxu0 %v3056
  %3438 = vmatpush.msra.mxu0 %v3052
  %3439 = vmatpush.msra.mxu0 %v3048
  %3440 = vmatpush.msra.mxu0 %v3044
  %3441 = vmatpush.msra.mxu0 %v3040
  %3442 = vmatpush.msra.mxu0 %v3036
  %3443 = vmatpush.msra.mxu0 %v3032
  %3444 = vmatmul.f32.gmra.mxu0 %v2950
  %v3445 = vpop.f32.mrf.mxu0
  %v3446 = vadd.f32 %v3405, %v3445
  %3447 = vmatmul.f32.gmra.mxu0 %v2952
  %v3448 = vpop.f32.mrf.mxu0
  %v3449 = vadd.f32 %v3408, %v3448
  %3450 = vmatmul.f32.gmra.mxu0 %v2954
  %v3451 = vpop.f32.mrf.mxu0
  %v3452 = vadd.f32 %v3411, %v3451
  %3453 = vmatmul.f32.gmra.mxu0 %v2956
  %v3454 = vpop.f32.mrf.mxu0
  %v3455 = vadd.f32 %v3414, %v3454
  %3456 = vmatmul.f32.gmra.mxu0 %v2958
  %v3457 = vpop.f32.mrf.mxu0
  %v3458 = vadd.f32 %v3417, %v3457
  %3459 = vmatmul.f32.gmra.mxu0 %v2960
  %v3460 = vpop.f32.mrf.mxu0
  %v3461 = vadd.f32 %v3420, %v3460
  %3462 = vmatmul.f32.gmra.mxu0 %v2962
  %v3463 = vpop.f32.mrf.mxu0
  %v3464 = vadd.f32 %v3423, %v3463
  %3465 = vmatmul.f32.gmra.mxu0 %v2964
  %v3466 = vpop.f32.mrf.mxu0
  %v3467 = vadd.f32 %v3426, %v3466
  %3468 = vdwg.mxu0
  %v3469 = vmax.f32 %v3200, 0.0
  %v3470 = vmax.f32 %v3282, 0.0
  %v3471 = vmax.f32 %v3364, 0.0
  %v3472 = vmax.f32 %v3446, 0.0
  %v3473 = vmax.f32 %v3203, 0.0
  %v3474 = vmax.f32 %v3285, 0.0
  %v3475 = vmax.f32 %v3367, 0.0
  %v3476 = vmax.f32 %v3449, 0.0
  %v3477 = vmax.f32 %v3206, 0.0
  %v3478 = vmax.f32 %v3288, 0.0
  %v3479 = vmax.f32 %v3370, 0.0
  %v3480 = vmax.f32 %v3452, 0.0
  %v3481 = vmax.f32 %v3209, 0.0
  %v3482 = vmax.f32 %v3291, 0.0
  %v3483 = vmax.f32 %v3373, 0.0
  %v3484 = vmax.f32 %v3455, 0.0
  %v3485 = vmax.f32 %v3212, 0.0
  %v3486 = vmax.f32 %v3294, 0.0
  %v3487 = vmax.f32 %v3376, 0.0
  %v3488 = vmax.f32 %v3458, 0.0
  %v3489 = vmax.f32 %v3215, 0.0
  %v3490 = vmax.f32 %v3297, 0.0
  %v3491 = vmax.f32 %v3379, 0.0
  %v3492 = vmax.f32 %v3461, 0.0
  %v3493 = vmax.f32 %v3218, 0.0
  %v3494 = vmax.f32 %v3300, 0.0
  %v3495 = vmax.f32 %v3382, 0.0
  %v3496 = vmax.f32 %v3464, 0.0
  %v3497 = vmax.f32 %v3221, 0.0
  %v3498 = vmax.f32 %v3303, 0.0
  %v3499 = vmax.f32 %v3385, 0.0
  %v3500 = vmax.f32 %v3467, 0.0
  %v3501 = vld [vmem:[%s3] sm:$0xff]
  %v3502 = vld [vmem:[%s3 + $0x8] sm:$0xff]
  %v3503 = vld [vmem:[%s3 + $0x10] sm:$0xff]
  %v3504 = vld [vmem:[%s3 + $0x18] sm:$0xff]
  %v3505 = vld [vmem:[%s4] sm:$0xff]
  %v3506 = vld [vmem:[%s4 + $0x8] sm:$0xff]
  %v3507 = vld [vmem:[%s4 + $0x10] sm:$0xff]
  %v3508 = vld [vmem:[%s4 + $0x18] sm:$0xff]
  %3510 = vset.pattern.permute.xlu0 0
  %3511 = vperm.xlu0 %3510, %v3505
  %v3512 = vpop.permute.xlu0 %3511
  %3515 = vset.pattern.permute.xlu0 0
  %3516 = vperm.xlu0 %3515, %v3506
  %v3517 = vpop.permute.xlu0 %3516
  %3520 = vset.pattern.permute.xlu0 0
  %3521 = vperm.xlu0 %3520, %v3507
  %v3522 = vpop.permute.xlu0 %3521
  %3525 = vset.pattern.permute.xlu0 0
  %3526 = vperm.xlu0 %3525, %v3508
  %v3527 = vpop.permute.xlu0 %3526
  %v3530 = vsel %vm1350, %v3501, 0
  %v3533 = vsel %vm1350, %v3502, 0
  %v3536 = vsel %vm1350, %v3503, 0
  %v3539 = vsel %vm1350, %v3504, 0
  %3541 = vmatpush.msra.mxu0 0.0
  %3542 = vmatpush.msra.mxu0 0.0
  %3543 = vmatpush.msra.mxu0 0.0
  %3544 = vmatpush.msra.mxu0 0.0
  %3545 = vmatpush.msra.mxu0 0.0
  %3546 = vmatpush.msra.mxu0 0.0
  %3547 = vmatpush.msra.mxu0 0.0
  %3548 = vmatpush.msra.mxu0 0.0
  %3549 = vmatpush.msra.mxu0 %v3497
  %3550 = vmatpush.msra.mxu0 %v3493
  %3551 = vmatpush.msra.mxu0 %v3489
  %3552 = vmatpush.msra.mxu0 %v3485
  %3553 = vmatpush.msra.mxu0 %v3481
  %3554 = vmatpush.msra.mxu0 %v3477
  %3555 = vmatpush.msra.mxu0 %v3473
  %3556 = vmatpush.msra.mxu0 %v3469
  %3557 = vmatmul.f32.gmra.mxu0 %v3530
  %v3558 = vpop.f32.mrf.mxu0
  %v3559 = vadd.f32 %v3512, %v3558
  %3560 = vmatmul.f32.gmra.mxu0 %v3533
  %v3561 = vpop.f32.mrf.mxu0
  %v3562 = vadd.f32 %v3517, %v3561
  %3563 = vmatmul.f32.gmra.mxu0 %v3536
  %v3564 = vpop.f32.mrf.mxu0
  %v3565 = vadd.f32 %v3522, %v3564
  %3566 = vmatmul.f32.gmra.mxu0 %v3539
  %v3567 = vpop.f32.mrf.mxu0
  %v3568 = vadd.f32 %v3527, %v3567
  %3569 = vdwg.mxu0
  %3570 = vmatpush.msra.mxu0 0.0
  %3571 = vmatpush.msra.mxu0 0.0
  %3572 = vmatpush.msra.mxu0 0.0
  %3573 = vmatpush.msra.mxu0 0.0
  %3574 = vmatpush.msra.mxu0 0.0
  %3575 = vmatpush.msra.mxu0 0.0
  %3576 = vmatpush.msra.mxu0 0.0
  %3577 = vmatpush.msra.mxu0 0.0
  %3578 = vmatpush.msra.mxu0 %v3498
  %3579 = vmatpush.msra.mxu0 %v3494
  %3580 = vmatpush.msra.mxu0 %v3490
  %3581 = vmatpush.msra.mxu0 %v3486
  %3582 = vmatpush.msra.mxu0 %v3482
  %3583 = vmatpush.msra.mxu0 %v3478
  %3584 = vmatpush.msra.mxu0 %v3474
  %3585 = vmatpush.msra.mxu0 %v3470
  %3586 = vmatmul.f32.gmra.mxu0 %v3530
  %v3587 = vpop.f32.mrf.mxu0
  %v3588 = vadd.f32 %v3512, %v3587
  %3589 = vmatmul.f32.gmra.mxu0 %v3533
  %v3590 = vpop.f32.mrf.mxu0
  %v3591 = vadd.f32 %v3517, %v3590
  %3592 = vmatmul.f32.gmra.mxu0 %v3536
  %v3593 = vpop.f32.mrf.mxu0
  %v3594 = vadd.f32 %v3522, %v3593
  %3595 = vmatmul.f32.gmra.mxu0 %v3539
  %v3596 = vpop.f32.mrf.mxu0
  %v3597 = vadd.f32 %v3527, %v3596
  %3598 = vdwg.mxu0
  %3599 = vmatpush.msra.mxu0 0.0
  %3600 = vmatpush.msra.mxu0 0.0
  %3601 = vmatpush.msra.mxu0 0.0
  %3602 = vmatpush.msra.mxu0 0.0
  %3603 = vmatpush.msra.mxu0 0.0
  %3604 = vmatpush.msra.mxu0 0.0
  %3605 = vmatpush.msra.mxu0 0.0
  %3606 = vmatpush.msra.mxu0 0.0
  %3607 = vmatpush.msra.mxu0 %v3499
  %3608 = vmatpush.msra.mxu0 %v3495
  %3609 = vmatpush.msra.mxu0 %v3491
  %3610 = vmatpush.msra.mxu0 %v3487
  %3611 = vmatpush.msra.mxu0 %v3483
  %3612 = vmatpush.msra.mxu0 %v3479
  %3613 = vmatpush.msra.mxu0 %v3475
  %3614 = vmatpush.msra.mxu0 %v3471
  %3615 = vmatmul.f32.gmra.mxu0 %v3530
  %v3616 = vpop.f32.mrf.mxu0
  %v3617 = vadd.f32 %v3512, %v3616
  %3618 = vmatmul.f32.gmra.mxu0 %v3533
  %v3619 = vpop.f32.mrf.mxu0
  %v3620 = vadd.f32 %v3517, %v3619
  %3621 = vmatmul.f32.gmra.mxu0 %v3536
  %v3622 = vpop.f32.mrf.mxu0
  %v3623 = vadd.f32 %v3522, %v3622
  %3624 = vmatmul.f32.gmra.mxu0 %v3539
  %v3625 = vpop.f32.mrf.mxu0
  %v3626 = vadd.f32 %v3527, %v3625
  %3627 = vdwg.mxu0
  %3628 = vmatpush.msra.mxu0 0.0
  %3629 = vmatpush.msra.mxu0 0.0
  %3630 = vmatpush.msra.mxu0 0.0
  %3631 = vmatpush.msra.mxu0 0.0
  %3632 = vmatpush.msra.mxu0 0.0
  %3633 = vmatpush.msra.mxu0 0.0
  %3634 = vmatpush.msra.mxu0 0.0
  %3635 = vmatpush.msra.mxu0 0.0
  %3636 = vmatpush.msra.mxu0 %v3500
  %3637 = vmatpush.msra.mxu0 %v3496
  %3638 = vmatpush.msra.mxu0 %v3492
  %3639 = vmatpush.msra.mxu0 %v3488
  %3640 = vmatpush.msra.mxu0 %v3484
  %3641 = vmatpush.msra.mxu0 %v3480
  %3642 = vmatpush.msra.mxu0 %v3476
  %3643 = vmatpush.msra.mxu0 %v3472
  %3644 = vmatmul.f32.gmra.mxu0 %v3530
  %v3645 = vpop.f32.mrf.mxu0
  %v3646 = vadd.f32 %v3512, %v3645
  %3647 = vmatmul.f32.gmra.mxu0 %v3533
  %v3648 = vpop.f32.mrf.mxu0
  %v3649 = vadd.f32 %v3517, %v3648
  %3650 = vmatmul.f32.gmra.mxu0 %v3536
  %v3651 = vpop.f32.mrf.mxu0
  %v3652 = vadd.f32 %v3522, %v3651
  %3653 = vmatmul.f32.gmra.mxu0 %v3539
  %v3654 = vpop.f32.mrf.mxu0
  %v3655 = vadd.f32 %v3527, %v3654
  %3656 = vdwg.mxu0
  %v3657 = vmax.f32 %v3559, 0.0
  %v3658 = vmax.f32 %v3588, 0.0
  %v3659 = vmax.f32 %v3617, 0.0
  %v3660 = vmax.f32 %v3646, 0.0
  %v3661 = vmax.f32 %v3562, 0.0
  %v3662 = vmax.f32 %v3591, 0.0
  %v3663 = vmax.f32 %v3620, 0.0
  %v3664 = vmax.f32 %v3649, 0.0
  %v3665 = vmax.f32 %v3565, 0.0
  %v3666 = vmax.f32 %v3594, 0.0
  %v3667 = vmax.f32 %v3623, 0.0
  %v3668 = vmax.f32 %v3652, 0.0
  %v3669 = vmax.f32 %v3568, 0.0
  %v3670 = vmax.f32 %v3597, 0.0
  %v3671 = vmax.f32 %v3626, 0.0
  %v3672 = vmax.f32 %v3655, 0.0
  %v3673 = vsel %vm731, %v3657, 0.0
  %v3674 = vsel %vm732, %v3658, 0.0
  %v3675 = vsel %vm731, %v3661, 0.0
  %v3676 = vsel %vm732, %v3662, 0.0
  %v3677 = vsel %vm731, %v3665, 0.0
  %v3678 = vsel %vm732, %v3666, 0.0
  %v3679 = vsel %vm731, %v3669, 0.0
  %v3680 = vsel %vm732, %v3670, 0.0
  %v3681 = vsel %vm731, %v3659, 0.0
  %v3682 = vsel %vm732, %v3660, 0.0
  %v3683 = vsel %vm731, %v3663, 0.0
  %v3684 = vsel %vm732, %v3664, 0.0
  %v3685 = vsel %vm731, %v3667, 0.0
  %v3686 = vsel %vm732, %v3668, 0.0
  %v3687 = vsel %vm731, %v3671, 0.0
  %v3688 = vsel %vm732, %v3672, 0.0
  %3698 = vrot.lane.b32.xlu0 0.0, 34
  %v3699 = vpop.permute.xlu0 %3698
  %3700 = vrot.lane.b32.xlu0 %v3673, 34
  %v3701 = vpop.permute.xlu0 %3700
  %3702 = vrot.lane.b32.xlu0 %v3674, 34
  %v3703 = vpop.permute.xlu0 %3702
  %3704 = vrot.lane.b32.xlu0 %v3675, 34
  %v3705 = vpop.permute.xlu0 %3704
  %3706 = vrot.lane.b32.xlu0 %v3676, 34
  %v3707 = vpop.permute.xlu0 %3706
  %3708 = vrot.lane.b32.xlu0 %v3677, 34
  %v3709 = vpop.permute.xlu0 %3708
  %3710 = vrot.lane.b32.xlu0 %v3678, 34
  %v3711 = vpop.permute.xlu0 %3710
  %3712 = vrot.lane.b32.xlu0 %v3679, 34
  %v3713 = vpop.permute.xlu0 %3712
  %3714 = vrot.lane.b32.xlu0 %v3680, 34
  %v3715 = vpop.permute.xlu0 %3714
  %v3716 = vsel %vm838, %v3699, %v3701
  %v3717 = vsel %vm838, %v3701, %v3703
  %v3718 = vsel %vm838, %v3699, %v3705
  %v3719 = vsel %vm838, %v3705, %v3707
  %v3720 = vsel %vm838, %v3699, %v3709
  %v3721 = vsel %vm838, %v3709, %v3711
  %v3722 = vsel %vm838, %v3699, %v3713
  %v3723 = vsel %vm838, %v3713, %v3715
  %3740 = vrot.lane.b32.xlu0 %v3681, 34
  %v3741 = vpop.permute.xlu0 %3740
  %3742 = vrot.lane.b32.xlu0 %v3682, 34
  %v3743 = vpop.permute.xlu0 %3742
  %3744 = vrot.lane.b32.xlu0 %v3683, 34
  %v3745 = vpop.permute.xlu0 %3744
  %3746 = vrot.lane.b32.xlu0 %v3684, 34
  %v3747 = vpop.permute.xlu0 %3746
  %3748 = vrot.lane.b32.xlu0 %v3685, 34
  %v3749 = vpop.permute.xlu0 %3748
  %3750 = vrot.lane.b32.xlu0 %v3686, 34
  %v3751 = vpop.permute.xlu0 %3750
  %3752 = vrot.lane.b32.xlu0 %v3687, 34
  %v3753 = vpop.permute.xlu0 %3752
  %3754 = vrot.lane.b32.xlu0 %v3688, 34
  %v3755 = vpop.permute.xlu0 %3754
  %v3756 = vsel %vm838, %v3699, %v3741
  %v3757 = vsel %vm838, %v3741, %v3743
  %v3758 = vsel %vm838, %v3699, %v3745
  %v3759 = vsel %vm838, %v3745, %v3747
  %v3760 = vsel %vm838, %v3699, %v3749
  %v3761 = vsel %vm838, %v3749, %v3751
  %v3762 = vsel %vm838, %v3699, %v3753
  %v3763 = vsel %vm838, %v3753, %v3755
  %v3772 = vld [vmem:[%s5] sm:$0x7]
  %3773 = vrot.lane.b32.xlu0 0.0, 18
  %v3774 = vpop.permute.xlu0 %3773
  %3775 = vrot.lane.b32.xlu0 %v3673, 18
  %v3776 = vpop.permute.xlu0 %3775
  %3777 = vrot.lane.b32.xlu0 %v3674, 18
  %v3778 = vpop.permute.xlu0 %3777
  %3779 = vrot.lane.b32.xlu0 %v3675, 18
  %v3780 = vpop.permute.xlu0 %3779
  %3781 = vrot.lane.b32.xlu0 %v3676, 18
  %v3782 = vpop.permute.xlu0 %3781
  %3783 = vrot.lane.b32.xlu0 %v3677, 18
  %v3784 = vpop.permute.xlu0 %3783
  %3785 = vrot.lane.b32.xlu0 %v3678, 18
  %v3786 = vpop.permute.xlu0 %3785
  %3787 = vrot.lane.b32.xlu0 %v3679, 18
  %v3788 = vpop.permute.xlu0 %3787
  %3789 = vrot.lane.b32.xlu0 %v3680, 18
  %v3790 = vpop.permute.xlu0 %3789
  %v3791 = vsel %vm867, %v3774, %v3776
  %v3792 = vsel %vm867, %v3776, %v3778
  %v3793 = vsel %vm867, %v3774, %v3780
  %v3794 = vsel %vm867, %v3780, %v3782
  %v3795 = vsel %vm867, %v3774, %v3784
  %v3796 = vsel %vm867, %v3784, %v3786
  %v3797 = vsel %vm867, %v3774, %v3788
  %v3798 = vsel %vm867, %v3788, %v3790
  %3807 = vrot.lane.b32.xlu0 %v3681, 18
  %v3808 = vpop.permute.xlu0 %3807
  %3809 = vrot.lane.b32.xlu0 %v3682, 18
  %v3810 = vpop.permute.xlu0 %3809
  %3811 = vrot.lane.b32.xlu0 %v3683, 18
  %v3812 = vpop.permute.xlu0 %3811
  %3813 = vrot.lane.b32.xlu0 %v3684, 18
  %v3814 = vpop.permute.xlu0 %3813
  %3815 = vrot.lane.b32.xlu0 %v3685, 18
  %v3816 = vpop.permute.xlu0 %3815
  %3817 = vrot.lane.b32.xlu0 %v3686, 18
  %v3818 = vpop.permute.xlu0 %3817
  %3819 = vrot.lane.b32.xlu0 %v3687, 18
  %v3820 = vpop.permute.xlu0 %3819
  %3821 = vrot.lane.b32.xlu0 %v3688, 18
  %v3822 = vpop.permute.xlu0 %3821
  %v3823 = vsel %vm867, %v3774, %v3808
  %v3824 = vsel %vm867, %v3808, %v3810
  %v3825 = vsel %vm867, %v3774, %v3812
  %v3826 = vsel %vm867, %v3812, %v3814
  %v3827 = vsel %vm867, %v3774, %v3816
  %v3828 = vsel %vm867, %v3816, %v3818
  %v3829 = vsel %vm867, %v3774, %v3820
  %v3830 = vsel %vm867, %v3820, %v3822
  %v3839 = vld [vmem:[%s5 + $0x4] sm:$0x7]
  %3841 = vst [vmem:[#allocation1] ss:$2 sm:$0xff] %v3839
  %v3842 = vld.sshfl [vmem:[#allocation1] sm:$0xff pattern:$0x75316420]
  %3843 = vrot.lane.b32.xlu0 %v3842, 96
  %v3844 = vpop.permute.xlu0 %3843
  %v3845 = vsel %vm1436, %v3844, 0
  %3847 = vmatpush.msra.mxu0 0.0
  %3848 = vmatpush.msra.mxu0 0.0
  %3849 = vmatpush.msra.mxu0 0.0
  %3850 = vmatpush.msra.mxu0 0.0
  %3851 = vmatpush.msra.mxu0 0.0
  %3852 = vmatpush.msra.mxu0 0.0
  %3853 = vmatpush.msra.mxu0 0.0
  %3854 = vmatpush.msra.mxu0 0.0
  %3855 = vmatpush.msra.mxu0 0.0
  %3856 = vmatpush.msra.mxu0 0.0
  %3857 = vmatpush.msra.mxu0 0.0
  %3858 = vmatpush.msra.mxu0 0.0
  %3859 = vmatpush.msra.mxu0 %v3797
  %3860 = vmatpush.msra.mxu0 %v3795
  %3861 = vmatpush.msra.mxu0 %v3793
  %3862 = vmatpush.msra.mxu0 %v3791
  %3863 = vmatmul.f32.gmra.mxu0 %v3845
  %v3864 = vpop.f32.mrf.mxu0
  %v3865 = vadd.f32 0.0, %v3864
  %3866 = vdwg.mxu0
  %3867 = vmatpush.msra.mxu0 0.0
  %3868 = vmatpush.msra.mxu0 0.0
  %3869 = vmatpush.msra.mxu0 0.0
  %3870 = vmatpush.msra.mxu0 0.0
  %3871 = vmatpush.msra.mxu0 0.0
  %3872 = vmatpush.msra.mxu0 0.0
  %3873 = vmatpush.msra.mxu0 0.0
  %3874 = vmatpush.msra.mxu0 0.0
  %3875 = vmatpush.msra.mxu0 0.0
  %3876 = vmatpush.msra.mxu0 0.0
  %3877 = vmatpush.msra.mxu0 0.0
  %3878 = vmatpush.msra.mxu0 0.0
  %3879 = vmatpush.msra.mxu0 %v3798
  %3880 = vmatpush.msra.mxu0 %v3796
  %3881 = vmatpush.msra.mxu0 %v3794
  %3882 = vmatpush.msra.mxu0 %v3792
  %3883 = vmatmul.f32.gmra.mxu0 %v3845
  %v3884 = vpop.f32.mrf.mxu0
  %v3885 = vadd.f32 0.0, %v3884
  %3886 = vdwg.mxu0
  %3887 = vmatpush.msra.mxu0 0.0
  %3888 = vmatpush.msra.mxu0 0.0
  %3889 = vmatpush.msra.mxu0 0.0
  %3890 = vmatpush.msra.mxu0 0.0
  %3891 = vmatpush.msra.mxu0 0.0
  %3892 = vmatpush.msra.mxu0 0.0
  %3893 = vmatpush.msra.mxu0 0.0
  %3894 = vmatpush.msra.mxu0 0.0
  %3895 = vmatpush.msra.mxu0 0.0
  %3896 = vmatpush.msra.mxu0 0.0
  %3897 = vmatpush.msra.mxu0 0.0
  %3898 = vmatpush.msra.mxu0 0.0
  %3899 = vmatpush.msra.mxu0 %v3829
  %3900 = vmatpush.msra.mxu0 %v3827
  %3901 = vmatpush.msra.mxu0 %v3825
  %3902 = vmatpush.msra.mxu0 %v3823
  %3903 = vmatmul.f32.gmra.mxu0 %v3845
  %v3904 = vpop.f32.mrf.mxu0
  %v3905 = vadd.f32 0.0, %v3904
  %3906 = vdwg.mxu0
  %3907 = vmatpush.msra.mxu0 0.0
  %3908 = vmatpush.msra.mxu0 0.0
  %3909 = vmatpush.msra.mxu0 0.0
  %3910 = vmatpush.msra.mxu0 0.0
  %3911 = vmatpush.msra.mxu0 0.0
  %3912 = vmatpush.msra.mxu0 0.0
  %3913 = vmatpush.msra.mxu0 0.0
  %3914 = vmatpush.msra.mxu0 0.0
  %3915 = vmatpush.msra.mxu0 0.0
  %3916 = vmatpush.msra.mxu0 0.0
  %3917 = vmatpush.msra.mxu0 0.0
  %3918 = vmatpush.msra.mxu0 0.0
  %3919 = vmatpush.msra.mxu0 %v3830
  %3920 = vmatpush.msra.mxu0 %v3828
  %3921 = vmatpush.msra.mxu0 %v3826
  %3922 = vmatpush.msra.mxu0 %v3824
  %3923 = vmatmul.f32.gmra.mxu0 %v3845
  %v3924 = vpop.f32.mrf.mxu0
  %v3925 = vadd.f32 0.0, %v3924
  %3926 = vdwg.mxu0
  %v3928 = vsel %vm1436, %v3772, 0
  %3930 = vmatpush.msra.mxu0 0.0
  %3931 = vmatpush.msra.mxu0 0.0
  %3932 = vmatpush.msra.mxu0 0.0
  %3933 = vmatpush.msra.mxu0 0.0
  %3934 = vmatpush.msra.mxu0 0.0
  %3935 = vmatpush.msra.mxu0 0.0
  %3936 = vmatpush.msra.mxu0 0.0
  %3937 = vmatpush.msra.mxu0 0.0
  %3938 = vmatpush.msra.mxu0 0.0
  %3939 = vmatpush.msra.mxu0 0.0
  %3940 = vmatpush.msra.mxu0 0.0
  %3941 = vmatpush.msra.mxu0 0.0
  %3942 = vmatpush.msra.mxu0 %v3722
  %3943 = vmatpush.msra.mxu0 %v3720
  %3944 = vmatpush.msra.mxu0 %v3718
  %3945 = vmatpush.msra.mxu0 %v3716
  %3946 = vmatmul.f32.gmra.mxu0 %v3928
  %v3947 = vpop.f32.mrf.mxu0
  %v3948 = vadd.f32 %v3865, %v3947
  %3949 = vdwg.mxu0
  %3950 = vmatpush.msra.mxu0 0.0
  %3951 = vmatpush.msra.mxu0 0.0
  %3952 = vmatpush.msra.mxu0 0.0
  %3953 = vmatpush.msra.mxu0 0.0
  %3954 = vmatpush.msra.mxu0 0.0
  %3955 = vmatpush.msra.mxu0 0.0
  %3956 = vmatpush.msra.mxu0 0.0
  %3957 = vmatpush.msra.mxu0 0.0
  %3958 = vmatpush.msra.mxu0 0.0
  %3959 = vmatpush.msra.mxu0 0.0
  %3960 = vmatpush.msra.mxu0 0.0
  %3961 = vmatpush.msra.mxu0 0.0
  %3962 = vmatpush.msra.mxu0 %v3723
  %3963 = vmatpush.msra.mxu0 %v3721
  %3964 = vmatpush.msra.mxu0 %v3719
  %3965 = vmatpush.msra.mxu0 %v3717
  %3966 = vmatmul.f32.gmra.mxu0 %v3928
  %v3967 = vpop.f32.mrf.mxu0
  %v3968 = vadd.f32 %v3885, %v3967
  %3969 = vdwg.mxu0
  %3970 = vmatpush.msra.mxu0 0.0
  %3971 = vmatpush.msra.mxu0 0.0
  %3972 = vmatpush.msra.mxu0 0.0
  %3973 = vmatpush.msra.mxu0 0.0
  %3974 = vmatpush.msra.mxu0 0.0
  %3975 = vmatpush.msra.mxu0 0.0
  %3976 = vmatpush.msra.mxu0 0.0
  %3977 = vmatpush.msra.mxu0 0.0
  %3978 = vmatpush.msra.mxu0 0.0
  %3979 = vmatpush.msra.mxu0 0.0
  %3980 = vmatpush.msra.mxu0 0.0
  %3981 = vmatpush.msra.mxu0 0.0
  %3982 = vmatpush.msra.mxu0 %v3762
  %3983 = vmatpush.msra.mxu0 %v3760
  %3984 = vmatpush.msra.mxu0 %v3758
  %3985 = vmatpush.msra.mxu0 %v3756
  %3986 = vmatmul.f32.gmra.mxu0 %v3928
  %v3987 = vpop.f32.mrf.mxu0
  %v3988 = vadd.f32 %v3905, %v3987
  %3989 = vdwg.mxu0
  %3990 = vmatpush.msra.mxu0 0.0
  %3991 = vmatpush.msra.mxu0 0.0
  %3992 = vmatpush.msra.mxu0 0.0
  %3993 = vmatpush.msra.mxu0 0.0
  %3994 = vmatpush.msra.mxu0 0.0
  %3995 = vmatpush.msra.mxu0 0.0
  %3996 = vmatpush.msra.mxu0 0.0
  %3997 = vmatpush.msra.mxu0 0.0
  %3998 = vmatpush.msra.mxu0 0.0
  %3999 = vmatpush.msra.mxu0 0.0
  %4000 = vmatpush.msra.mxu0 0.0
  %4001 = vmatpush.msra.mxu0 0.0
  %4002 = vmatpush.msra.mxu0 %v3763
  %4003 = vmatpush.msra.mxu0 %v3761
  %4004 = vmatpush.msra.mxu0 %v3759
  %4005 = vmatpush.msra.mxu0 %v3757
  %4006 = vmatmul.f32.gmra.mxu0 %v3928
  %v4007 = vpop.f32.mrf.mxu0
  %v4008 = vadd.f32 %v3925, %v4007
  %4009 = vdwg.mxu0
  %4010 = vrot.lane.b32.xlu0 0.0, 2
  %v4011 = vpop.permute.xlu0 %4010
  %4012 = vrot.lane.b32.xlu0 %v3673, 2
  %v4013 = vpop.permute.xlu0 %4012
  %4014 = vrot.lane.b32.xlu0 %v3674, 2
  %v4015 = vpop.permute.xlu0 %4014
  %4016 = vrot.lane.b32.xlu0 %v3675, 2
  %v4017 = vpop.permute.xlu0 %4016
  %4018 = vrot.lane.b32.xlu0 %v3676, 2
  %v4019 = vpop.permute.xlu0 %4018
  %4020 = vrot.lane.b32.xlu0 %v3677, 2
  %v4021 = vpop.permute.xlu0 %4020
  %4022 = vrot.lane.b32.xlu0 %v3678, 2
  %v4023 = vpop.permute.xlu0 %4022
  %4024 = vrot.lane.b32.xlu0 %v3679, 2
  %v4025 = vpop.permute.xlu0 %4024
  %4026 = vrot.lane.b32.xlu0 %v3680, 2
  %v4027 = vpop.permute.xlu0 %4026
  %v4028 = vsel %vm900, %v4011, %v4013
  %v4029 = vsel %vm900, %v4013, %v4015
  %v4030 = vsel %vm900, %v4011, %v4017
  %v4031 = vsel %vm900, %v4017, %v4019
  %v4032 = vsel %vm900, %v4011, %v4021
  %v4033 = vsel %vm900, %v4021, %v4023
  %v4034 = vsel %vm900, %v4011, %v4025
  %v4035 = vsel %vm900, %v4025, %v4027
  %4044 = vrot.lane.b32.xlu0 %v3681, 2
  %v4045 = vpop.permute.xlu0 %4044
  %4046 = vrot.lane.b32.xlu0 %v3682, 2
  %v4047 = vpop.permute.xlu0 %4046
  %4048 = vrot.lane.b32.xlu0 %v3683, 2
  %v4049 = vpop.permute.xlu0 %4048
  %4050 = vrot.lane.b32.xlu0 %v3684, 2
  %v4051 = vpop.permute.xlu0 %4050
  %4052 = vrot.lane.b32.xlu0 %v3685, 2
  %v4053 = vpop.permute.xlu0 %4052
  %4054 = vrot.lane.b32.xlu0 %v3686, 2
  %v4055 = vpop.permute.xlu0 %4054
  %4056 = vrot.lane.b32.xlu0 %v3687, 2
  %v4057 = vpop.permute.xlu0 %4056
  %4058 = vrot.lane.b32.xlu0 %v3688, 2
  %v4059 = vpop.permute.xlu0 %4058
  %v4060 = vsel %vm900, %v4011, %v4045
  %v4061 = vsel %vm900, %v4045, %v4047
  %v4062 = vsel %vm900, %v4011, %v4049
  %v4063 = vsel %vm900, %v4049, %v4051
  %v4064 = vsel %vm900, %v4011, %v4053
  %v4065 = vsel %vm900, %v4053, %v4055
  %v4066 = vsel %vm900, %v4011, %v4057
  %v4067 = vsel %vm900, %v4057, %v4059
  %v4076 = vld [vmem:[%s5 + $0x8] sm:$0x7]
  %4078 = vst [vmem:[#allocation1] ss:$2 sm:$0xff] %v4076
  %v4079 = vld.sshfl [vmem:[#allocation1] sm:$0xff pattern:$0x75316420]
  %4080 = vrot.lane.b32.xlu0 %v4079, 64
  %v4081 = vpop.permute.xlu0 %4080
  %v4082 = vsel %vm1436, %v4081, 0
  %4084 = vmatpush.msra.mxu0 0.0
  %4085 = vmatpush.msra.mxu0 0.0
  %4086 = vmatpush.msra.mxu0 0.0
  %4087 = vmatpush.msra.mxu0 0.0
  %4088 = vmatpush.msra.mxu0 0.0
  %4089 = vmatpush.msra.mxu0 0.0
  %4090 = vmatpush.msra.mxu0 0.0
  %4091 = vmatpush.msra.mxu0 0.0
  %4092 = vmatpush.msra.mxu0 0.0
  %4093 = vmatpush.msra.mxu0 0.0
  %4094 = vmatpush.msra.mxu0 0.0
  %4095 = vmatpush.msra.mxu0 0.0
  %4096 = vmatpush.msra.mxu0 %v4034
  %4097 = vmatpush.msra.mxu0 %v4032
  %4098 = vmatpush.msra.mxu0 %v4030
  %4099 = vmatpush.msra.mxu0 %v4028
  %4100 = vmatmul.f32.gmra.mxu0 %v4082
  %v4101 = vpop.f32.mrf.mxu0
  %v4102 = vadd.f32 0.0, %v4101
  %4103 = vdwg.mxu0
  %4104 = vmatpush.msra.mxu0 0.0
  %4105 = vmatpush.msra.mxu0 0.0
  %4106 = vmatpush.msra.mxu0 0.0
  %4107 = vmatpush.msra.mxu0 0.0
  %4108 = vmatpush.msra.mxu0 0.0
  %4109 = vmatpush.msra.mxu0 0.0
  %4110 = vmatpush.msra.mxu0 0.0
  %4111 = vmatpush.msra.mxu0 0.0
  %4112 = vmatpush.msra.mxu0 0.0
  %4113 = vmatpush.msra.mxu0 0.0
  %4114 = vmatpush.msra.mxu0 0.0
  %4115 = vmatpush.msra.mxu0 0.0
  %4116 = vmatpush.msra.mxu0 %v4035
  %4117 = vmatpush.msra.mxu0 %v4033
  %4118 = vmatpush.msra.mxu0 %v4031
  %4119 = vmatpush.msra.mxu0 %v4029
  %4120 = vmatmul.f32.gmra.mxu0 %v4082
  %v4121 = vpop.f32.mrf.mxu0
  %v4122 = vadd.f32 0.0, %v4121
  %4123 = vdwg.mxu0
  %4124 = vmatpush.msra.mxu0 0.0
  %4125 = vmatpush.msra.mxu0 0.0
  %4126 = vmatpush.msra.mxu0 0.0
  %4127 = vmatpush.msra.mxu0 0.0
  %4128 = vmatpush.msra.mxu0 0.0
  %4129 = vmatpush.msra.mxu0 0.0
  %4130 = vmatpush.msra.mxu0 0.0
  %4131 = vmatpush.msra.mxu0 0.0
  %4132 = vmatpush.msra.mxu0 0.0
  %4133 = vmatpush.msra.mxu0 0.0
  %4134 = vmatpush.msra.mxu0 0.0
  %4135 = vmatpush.msra.mxu0 0.0
  %4136 = vmatpush.msra.mxu0 %v4066
  %4137 = vmatpush.msra.mxu0 %v4064
  %4138 = vmatpush.msra.mxu0 %v4062
  %4139 = vmatpush.msra.mxu0 %v4060
  %4140 = vmatmul.f32.gmra.mxu0 %v4082
  %v4141 = vpop.f32.mrf.mxu0
  %v4142 = vadd.f32 0.0, %v4141
  %4143 = vdwg.mxu0
  %4144 = vmatpush.msra.mxu0 0.0
  %4145 = vmatpush.msra.mxu0 0.0
  %4146 = vmatpush.msra.mxu0 0.0
  %4147 = vmatpush.msra.mxu0 0.0
  %4148 = vmatpush.msra.mxu0 0.0
  %4149 = vmatpush.msra.mxu0 0.0
  %4150 = vmatpush.msra.mxu0 0.0
  %4151 = vmatpush.msra.mxu0 0.0
  %4152 = vmatpush.msra.mxu0 0.0
  %4153 = vmatpush.msra.mxu0 0.0
  %4154 = vmatpush.msra.mxu0 0.0
  %4155 = vmatpush.msra.mxu0 0.0
  %4156 = vmatpush.msra.mxu0 %v4067
  %4157 = vmatpush.msra.mxu0 %v4065
  %4158 = vmatpush.msra.mxu0 %v4063
  %4159 = vmatpush.msra.mxu0 %v4061
  %4160 = vmatmul.f32.gmra.mxu0 %v4082
  %v4161 = vpop.f32.mrf.mxu0
  %v4162 = vadd.f32 0.0, %v4161
  %4163 = vdwg.mxu0
  %v4164 = vadd.f32 %v3948, %v4102
  %v4165 = vadd.f32 %v3968, %v4122
  %v4166 = vadd.f32 %v3988, %v4142
  %v4167 = vadd.f32 %v4008, %v4162
  %4168 = vrot.lane.b32.xlu0 %v3673, 114
  %v4169 = vpop.permute.xlu0 %4168
  %4170 = vrot.lane.b32.xlu0 %v3674, 114
  %v4171 = vpop.permute.xlu0 %4170
  %4172 = vrot.lane.b32.xlu0 0.0, 114
  %v4173 = vpop.permute.xlu0 %4172
  %4174 = vrot.lane.b32.xlu0 %v3675, 114
  %v4175 = vpop.permute.xlu0 %4174
  %4176 = vrot.lane.b32.xlu0 %v3676, 114
  %v4177 = vpop.permute.xlu0 %4176
  %4178 = vrot.lane.b32.xlu0 %v3677, 114
  %v4179 = vpop.permute.xlu0 %4178
  %4180 = vrot.lane.b32.xlu0 %v3678, 114
  %v4181 = vpop.permute.xlu0 %4180
  %4182 = vrot.lane.b32.xlu0 %v3679, 114
  %v4183 = vpop.permute.xlu0 %4182
  %4184 = vrot.lane.b32.xlu0 %v3680, 114
  %v4185 = vpop.permute.xlu0 %4184
  %v4186 = vsel %vm930, %v4169, %v4171
  %v4187 = vsel %vm930, %v4171, %v4173
  %v4188 = vsel %vm930, %v4175, %v4177
  %v4189 = vsel %vm930, %v4177, %v4173
  %v4190 = vsel %vm930, %v4179, %v4181
  %v4191 = vsel %vm930, %v4181, %v4173
  %v4192 = vsel %vm930, %v4183, %v4185
  %v4193 = vsel %vm930, %v4185, %v4173
  %4202 = vrot.lane.b32.xlu0 %v3681, 114
  %v4203 = vpop.permute.xlu0 %4202
  %4204 = vrot.lane.b32.xlu0 %v3682, 114
  %v4205 = vpop.permute.xlu0 %4204
  %4206 = vrot.lane.b32.xlu0 %v3683, 114
  %v4207 = vpop.permute.xlu0 %4206
  %4208 = vrot.lane.b32.xlu0 %v3684, 114
  %v4209 = vpop.permute.xlu0 %4208
  %4210 = vrot.lane.b32.xlu0 %v3685, 114
  %v4211 = vpop.permute.xlu0 %4210
  %4212 = vrot.lane.b32.xlu0 %v3686, 114
  %v4213 = vpop.permute.xlu0 %4212
  %4214 = vrot.lane.b32.xlu0 %v3687, 114
  %v4215 = vpop.permute.xlu0 %4214
  %4216 = vrot.lane.b32.xlu0 %v3688, 114
  %v4217 = vpop.permute.xlu0 %4216
  %v4218 = vsel %vm930, %v4203, %v4205
  %v4219 = vsel %vm930, %v4205, %v4173
  %v4220 = vsel %vm930, %v4207, %v4209
  %v4221 = vsel %vm930, %v4209, %v4173
  %v4222 = vsel %vm930, %v4211, %v4213
  %v4223 = vsel %vm930, %v4213, %v4173
  %v4224 = vsel %vm930, %v4215, %v4217
  %v4225 = vsel %vm930, %v4217, %v4173
  %v4234 = vld [vmem:[%s5 + $0xc] sm:$0x7]
  %4236 = vst [vmem:[#allocation1] ss:$2 sm:$0xff] %v4234
  %v4237 = vld.sshfl [vmem:[#allocation1] sm:$0xff pattern:$0x75316420]
  %4238 = vrot.lane.b32.xlu0 %v4237, 32
  %v4239 = vpop.permute.xlu0 %4238
  %v4240 = vsel %vm1436, %v4239, 0
  %4242 = vmatpush.msra.mxu0 0.0
  %4243 = vmatpush.msra.mxu0 0.0
  %4244 = vmatpush.msra.mxu0 0.0
  %4245 = vmatpush.msra.mxu0 0.0
  %4246 = vmatpush.msra.mxu0 0.0
  %4247 = vmatpush.msra.mxu0 0.0
  %4248 = vmatpush.msra.mxu0 0.0
  %4249 = vmatpush.msra.mxu0 0.0
  %4250 = vmatpush.msra.mxu0 0.0
  %4251 = vmatpush.msra.mxu0 0.0
  %4252 = vmatpush.msra.mxu0 0.0
  %4253 = vmatpush.msra.mxu0 0.0
  %4254 = vmatpush.msra.mxu0 %v4192
  %4255 = vmatpush.msra.mxu0 %v4190
  %4256 = vmatpush.msra.mxu0 %v4188
  %4257 = vmatpush.msra.mxu0 %v4186
  %4258 = vmatmul.f32.gmra.mxu0 %v4240
  %v4259 = vpop.f32.mrf.mxu0
  %v4260 = vadd.f32 0.0, %v4259
  %4261 = vdwg.mxu0
  %4262 = vmatpush.msra.mxu0 0.0
  %4263 = vmatpush.msra.mxu0 0.0
  %4264 = vmatpush.msra.mxu0 0.0
  %4265 = vmatpush.msra.mxu0 0.0
  %4266 = vmatpush.msra.mxu0 0.0
  %4267 = vmatpush.msra.mxu0 0.0
  %4268 = vmatpush.msra.mxu0 0.0
  %4269 = vmatpush.msra.mxu0 0.0
  %4270 = vmatpush.msra.mxu0 0.0
  %4271 = vmatpush.msra.mxu0 0.0
  %4272 = vmatpush.msra.mxu0 0.0
  %4273 = vmatpush.msra.mxu0 0.0
  %4274 = vmatpush.msra.mxu0 %v4193
  %4275 = vmatpush.msra.mxu0 %v4191
  %4276 = vmatpush.msra.mxu0 %v4189
  %4277 = vmatpush.msra.mxu0 %v4187
  %4278 = vmatmul.f32.gmra.mxu0 %v4240
  %v4279 = vpop.f32.mrf.mxu0
  %v4280 = vadd.f32 0.0, %v4279
  %4281 = vdwg.mxu0
  %4282 = vmatpush.msra.mxu0 0.0
  %4283 = vmatpush.msra.mxu0 0.0
  %4284 = vmatpush.msra.mxu0 0.0
  %4285 = vmatpush.msra.mxu0 0.0
  %4286 = vmatpush.msra.mxu0 0.0
  %4287 = vmatpush.msra.mxu0 0.0
  %4288 = vmatpush.msra.mxu0 0.0
  %4289 = vmatpush.msra.mxu0 0.0
  %4290 = vmatpush.msra.mxu0 0.0
  %4291 = vmatpush.msra.mxu0 0.0
  %4292 = vmatpush.msra.mxu0 0.0
  %4293 = vmatpush.msra.mxu0 0.0
  %4294 = vmatpush.msra.mxu0 %v4224
  %4295 = vmatpush.msra.mxu0 %v4222
  %4296 = vmatpush.msra.mxu0 %v4220
  %4297 = vmatpush.msra.mxu0 %v4218
  %4298 = vmatmul.f32.gmra.mxu0 %v4240
  %v4299 = vpop.f32.mrf.mxu0
  %v4300 = vadd.f32 0.0, %v4299
  %4301 = vdwg.mxu0
  %4302 = vmatpush.msra.mxu0 0.0
  %4303 = vmatpush.msra.mxu0 0.0
  %4304 = vmatpush.msra.mxu0 0.0
  %4305 = vmatpush.msra.mxu0 0.0
  %4306 = vmatpush.msra.mxu0 0.0
  %4307 = vmatpush.msra.mxu0 0.0
  %4308 = vmatpush.msra.mxu0 0.0
  %4309 = vmatpush.msra.mxu0 0.0
  %4310 = vmatpush.msra.mxu0 0.0
  %4311 = vmatpush.msra.mxu0 0.0
  %4312 = vmatpush.msra.mxu0 0.0
  %4313 = vmatpush.msra.mxu0 0.0
  %4314 = vmatpush.msra.mxu0 %v4225
  %4315 = vmatpush.msra.mxu0 %v4223
  %4316 = vmatpush.msra.mxu0 %v4221
  %4317 = vmatpush.msra.mxu0 %v4219
  %4318 = vmatmul.f32.gmra.mxu0 %v4240
  %v4319 = vpop.f32.mrf.mxu0
  %v4320 = vadd.f32 0.0, %v4319
  %4321 = vdwg.mxu0
  %v4322 = vadd.f32 %v4164, %v4260
  %v4323 = vadd.f32 %v4165, %v4280
  %v4324 = vadd.f32 %v4166, %v4300
  %v4325 = vadd.f32 %v4167, %v4320
  %4326 = vrot.lane.b32.xlu0 %v3673, 98
  %v4327 = vpop.permute.xlu0 %4326
  %4328 = vrot.lane.b32.xlu0 %v3674, 98
  %v4329 = vpop.permute.xlu0 %4328
  %4330 = vrot.lane.b32.xlu0 0.0, 98
  %v4331 = vpop.permute.xlu0 %4330
  %4332 = vrot.lane.b32.xlu0 %v3675, 98
  %v4333 = vpop.permute.xlu0 %4332
  %4334 = vrot.lane.b32.xlu0 %v3676, 98
  %v4335 = vpop.permute.xlu0 %4334
  %4336 = vrot.lane.b32.xlu0 %v3677, 98
  %v4337 = vpop.permute.xlu0 %4336
  %4338 = vrot.lane.b32.xlu0 %v3678, 98
  %v4339 = vpop.permute.xlu0 %4338
  %4340 = vrot.lane.b32.xlu0 %v3679, 98
  %v4341 = vpop.permute.xlu0 %4340
  %4342 = vrot.lane.b32.xlu0 %v3680, 98
  %v4343 = vpop.permute.xlu0 %4342
  %v4344 = vsel %vm960, %v4327, %v4329
  %v4345 = vsel %vm960, %v4329, %v4331
  %v4346 = vsel %vm960, %v4333, %v4335
  %v4347 = vsel %vm960, %v4335, %v4331
  %v4348 = vsel %vm960, %v4337, %v4339
  %v4349 = vsel %vm960, %v4339, %v4331
  %v4350 = vsel %vm960, %v4341, %v4343
  %v4351 = vsel %vm960, %v4343, %v4331
  %4360 = vrot.lane.b32.xlu0 %v3681, 98
  %v4361 = vpop.permute.xlu0 %4360
  %4362 = vrot.lane.b32.xlu0 %v3682, 98
  %v4363 = vpop.permute.xlu0 %4362
  %4364 = vrot.lane.b32.xlu0 %v3683, 98
  %v4365 = vpop.permute.xlu0 %4364
  %4366 = vrot.lane.b32.xlu0 %v3684, 98
  %v4367 = vpop.permute.xlu0 %4366
  %4368 = vrot.lane.b32.xlu0 %v3685, 98
  %v4369 = vpop.permute.xlu0 %4368
  %4370 = vrot.lane.b32.xlu0 %v3686, 98
  %v4371 = vpop.permute.xlu0 %4370
  %4372 = vrot.lane.b32.xlu0 %v3687, 98
  %v4373 = vpop.permute.xlu0 %4372
  %4374 = vrot.lane.b32.xlu0 %v3688, 98
  %v4375 = vpop.permute.xlu0 %4374
  %v4376 = vsel %vm960, %v4361, %v4363
  %v4377 = vsel %vm960, %v4363, %v4331
  %v4378 = vsel %vm960, %v4365, %v4367
  %v4379 = vsel %vm960, %v4367, %v4331
  %v4380 = vsel %vm960, %v4369, %v4371
  %v4381 = vsel %vm960, %v4371, %v4331
  %v4382 = vsel %vm960, %v4373, %v4375
  %v4383 = vsel %vm960, %v4375, %v4331
  %v4392 = vld [vmem:[%s5 + $0x14] sm:$0x7]
  %v4394 = vsel %vm1436, %v4392, 0
  %4396 = vmatpush.msra.mxu0 0.0
  %4397 = vmatpush.msra.mxu0 0.0
  %4398 = vmatpush.msra.mxu0 0.0
  %4399 = vmatpush.msra.mxu0 0.0
  %4400 = vmatpush.msra.mxu0 0.0
  %4401 = vmatpush.msra.mxu0 0.0
  %4402 = vmatpush.msra.mxu0 0.0
  %4403 = vmatpush.msra.mxu0 0.0
  %4404 = vmatpush.msra.mxu0 0.0
  %4405 = vmatpush.msra.mxu0 0.0
  %4406 = vmatpush.msra.mxu0 0.0
  %4407 = vmatpush.msra.mxu0 0.0
  %4408 = vmatpush.msra.mxu0 %v4350
  %4409 = vmatpush.msra.mxu0 %v4348
  %4410 = vmatpush.msra.mxu0 %v4346
  %4411 = vmatpush.msra.mxu0 %v4344
  %4412 = vmatmul.f32.gmra.mxu0 %v4394
  %v4413 = vpop.f32.mrf.mxu0
  %v4414 = vadd.f32 0.0, %v4413
  %4415 = vdwg.mxu0
  %4416 = vmatpush.msra.mxu0 0.0
  %4417 = vmatpush.msra.mxu0 0.0
  %4418 = vmatpush.msra.mxu0 0.0
  %4419 = vmatpush.msra.mxu0 0.0
  %4420 = vmatpush.msra.mxu0 0.0
  %4421 = vmatpush.msra.mxu0 0.0
  %4422 = vmatpush.msra.mxu0 0.0
  %4423 = vmatpush.msra.mxu0 0.0
  %4424 = vmatpush.msra.mxu0 0.0
  %4425 = vmatpush.msra.mxu0 0.0
  %4426 = vmatpush.msra.mxu0 0.0
  %4427 = vmatpush.msra.mxu0 0.0
  %4428 = vmatpush.msra.mxu0 %v4351
  %4429 = vmatpush.msra.mxu0 %v4349
  %4430 = vmatpush.msra.mxu0 %v4347
  %4431 = vmatpush.msra.mxu0 %v4345
  %4432 = vmatmul.f32.gmra.mxu0 %v4394
  %v4433 = vpop.f32.mrf.mxu0
  %v4434 = vadd.f32 0.0, %v4433
  %4435 = vdwg.mxu0
  %4436 = vmatpush.msra.mxu0 0.0
  %4437 = vmatpush.msra.mxu0 0.0
  %4438 = vmatpush.msra.mxu0 0.0
  %4439 = vmatpush.msra.mxu0 0.0
  %4440 = vmatpush.msra.mxu0 0.0
  %4441 = vmatpush.msra.mxu0 0.0
  %4442 = vmatpush.msra.mxu0 0.0
  %4443 = vmatpush.msra.mxu0 0.0
  %4444 = vmatpush.msra.mxu0 0.0
  %4445 = vmatpush.msra.mxu0 0.0
  %4446 = vmatpush.msra.mxu0 0.0
  %4447 = vmatpush.msra.mxu0 0.0
  %4448 = vmatpush.msra.mxu0 %v4382
  %4449 = vmatpush.msra.mxu0 %v4380
  %4450 = vmatpush.msra.mxu0 %v4378
  %4451 = vmatpush.msra.mxu0 %v4376
  %4452 = vmatmul.f32.gmra.mxu0 %v4394
  %v4453 = vpop.f32.mrf.mxu0
  %v4454 = vadd.f32 0.0, %v4453
  %4455 = vdwg.mxu0
  %4456 = vmatpush.msra.mxu0 0.0
  %4457 = vmatpush.msra.mxu0 0.0
  %4458 = vmatpush.msra.mxu0 0.0
  %4459 = vmatpush.msra.mxu0 0.0
  %4460 = vmatpush.msra.mxu0 0.0
  %4461 = vmatpush.msra.mxu0 0.0
  %4462 = vmatpush.msra.mxu0 0.0
  %4463 = vmatpush.msra.mxu0 0.0
  %4464 = vmatpush.msra.mxu0 0.0
  %4465 = vmatpush.msra.mxu0 0.0
  %4466 = vmatpush.msra.mxu0 0.0
  %4467 = vmatpush.msra.mxu0 0.0
  %4468 = vmatpush.msra.mxu0 %v4383
  %4469 = vmatpush.msra.mxu0 %v4381
  %4470 = vmatpush.msra.mxu0 %v4379
  %4471 = vmatpush.msra.mxu0 %v4377
  %4472 = vmatmul.f32.gmra.mxu0 %v4394
  %v4473 = vpop.f32.mrf.mxu0
  %v4474 = vadd.f32 0.0, %v4473
  %4475 = vdwg.mxu0
  %v4476 = vadd.f32 %v4322, %v4414
  %v4477 = vadd.f32 %v4323, %v4434
  %v4478 = vadd.f32 %v4324, %v4454
  %v4479 = vadd.f32 %v4325, %v4474
  %v4480 = vsel %vm1047, %v3657, 0.0
  %v4481 = vsel %vm1048, %v3658, 0.0
  %v4482 = vsel %vm1047, %v3661, 0.0
  %v4483 = vsel %vm1048, %v3662, 0.0
  %v4484 = vsel %vm1047, %v3665, 0.0
  %v4485 = vsel %vm1048, %v3666, 0.0
  %v4486 = vsel %vm1047, %v3669, 0.0
  %v4487 = vsel %vm1048, %v3670, 0.0
  %v4488 = vsel %vm1047, %v3659, 0.0
  %v4489 = vsel %vm1048, %v3660, 0.0
  %v4490 = vsel %vm1047, %v3663, 0.0
  %v4491 = vsel %vm1048, %v3664, 0.0
  %v4492 = vsel %vm1047, %v3667, 0.0
  %v4493 = vsel %vm1048, %v3668, 0.0
  %v4494 = vsel %vm1047, %v3671, 0.0
  %v4495 = vsel %vm1048, %v3672, 0.0
  %4504 = vrot.lane.b32.xlu0 0.0, 33
  %v4505 = vpop.permute.xlu0 %4504
  %4506 = vrot.lane.b32.xlu0 %v4480, 33
  %v4507 = vpop.permute.xlu0 %4506
  %4508 = vrot.lane.b32.xlu0 %v4481, 33
  %v4509 = vpop.permute.xlu0 %4508
  %4510 = vrot.lane.b32.xlu0 %v4482, 33
  %v4511 = vpop.permute.xlu0 %4510
  %4512 = vrot.lane.b32.xlu0 %v4483, 33
  %v4513 = vpop.permute.xlu0 %4512
  %4514 = vrot.lane.b32.xlu0 %v4484, 33
  %v4515 = vpop.permute.xlu0 %4514
  %4516 = vrot.lane.b32.xlu0 %v4485, 33
  %v4517 = vpop.permute.xlu0 %4516
  %4518 = vrot.lane.b32.xlu0 %v4486, 33
  %v4519 = vpop.permute.xlu0 %4518
  %4520 = vrot.lane.b32.xlu0 %v4487, 33
  %v4521 = vpop.permute.xlu0 %4520
  %v4522 = vsel %vm1150, %v4505, %v4507
  %v4523 = vsel %vm1150, %v4507, %v4509
  %v4524 = vsel %vm1150, %v4505, %v4511
  %v4525 = vsel %vm1150, %v4511, %v4513
  %v4526 = vsel %vm1150, %v4505, %v4515
  %v4527 = vsel %vm1150, %v4515, %v4517
  %v4528 = vsel %vm1150, %v4505, %v4519
  %v4529 = vsel %vm1150, %v4519, %v4521
  %4546 = vrot.lane.b32.xlu0 %v4488, 33
  %v4547 = vpop.permute.xlu0 %4546
  %4548 = vrot.lane.b32.xlu0 %v4489, 33
  %v4549 = vpop.permute.xlu0 %4548
  %4550 = vrot.lane.b32.xlu0 %v4490, 33
  %v4551 = vpop.permute.xlu0 %4550
  %4552 = vrot.lane.b32.xlu0 %v4491, 33
  %v4553 = vpop.permute.xlu0 %4552
  %4554 = vrot.lane.b32.xlu0 %v4492, 33
  %v4555 = vpop.permute.xlu0 %4554
  %4556 = vrot.lane.b32.xlu0 %v4493, 33
  %v4557 = vpop.permute.xlu0 %4556
  %4558 = vrot.lane.b32.xlu0 %v4494, 33
  %v4559 = vpop.permute.xlu0 %4558
  %4560 = vrot.lane.b32.xlu0 %v4495, 33
  %v4561 = vpop.permute.xlu0 %4560
  %v4562 = vsel %vm1150, %v4505, %v4547
  %v4563 = vsel %vm1150, %v4547, %v4549
  %v4564 = vsel %vm1150, %v4505, %v4551
  %v4565 = vsel %vm1150, %v4551, %v4553
  %v4566 = vsel %vm1150, %v4505, %v4555
  %v4567 = vsel %vm1150, %v4555, %v4557
  %v4568 = vsel %vm1150, %v4505, %v4559
  %v4569 = vsel %vm1150, %v4559, %v4561
  %v4578 = vld [vmem:[%s5] sm:$0x7]
  %4580 = vst [vmem:[#allocation1] ss:$2 sm:$0xff] %v4578
  %v4581 = vld.sshfl [vmem:[#allocation1] sm:$0xff pattern:$0x75316420]
  %4582 = vrot.lane.b32.xlu0 %v4581, 96
  %v4583 = vpop.permute.xlu0 %4582
  %v4584 = vsel %vm1436, %v4583, 0
  %4586 = vmatpush.msra.mxu0 0.0
  %4587 = vmatpush.msra.mxu0 0.0
  %4588 = vmatpush.msra.mxu0 0.0
  %4589 = vmatpush.msra.mxu0 0.0
  %4590 = vmatpush.msra.mxu0 0.0
  %4591 = vmatpush.msra.mxu0 0.0
  %4592 = vmatpush.msra.mxu0 0.0
  %4593 = vmatpush.msra.mxu0 0.0
  %4594 = vmatpush.msra.mxu0 0.0
  %4595 = vmatpush.msra.mxu0 0.0
  %4596 = vmatpush.msra.mxu0 0.0
  %4597 = vmatpush.msra.mxu0 0.0
  %4598 = vmatpush.msra.mxu0 %v4528
  %4599 = vmatpush.msra.mxu0 %v4526
  %4600 = vmatpush.msra.mxu0 %v4524
  %4601 = vmatpush.msra.mxu0 %v4522
  %4602 = vmatmul.f32.gmra.mxu0 %v4584
  %v4603 = vpop.f32.mrf.mxu0
  %v4604 = vadd.f32 0.0, %v4603
  %4605 = vdwg.mxu0
  %4606 = vmatpush.msra.mxu0 0.0
  %4607 = vmatpush.msra.mxu0 0.0
  %4608 = vmatpush.msra.mxu0 0.0
  %4609 = vmatpush.msra.mxu0 0.0
  %4610 = vmatpush.msra.mxu0 0.0
  %4611 = vmatpush.msra.mxu0 0.0
  %4612 = vmatpush.msra.mxu0 0.0
  %4613 = vmatpush.msra.mxu0 0.0
  %4614 = vmatpush.msra.mxu0 0.0
  %4615 = vmatpush.msra.mxu0 0.0
  %4616 = vmatpush.msra.mxu0 0.0
  %4617 = vmatpush.msra.mxu0 0.0
  %4618 = vmatpush.msra.mxu0 %v4529
  %4619 = vmatpush.msra.mxu0 %v4527
  %4620 = vmatpush.msra.mxu0 %v4525
  %4621 = vmatpush.msra.mxu0 %v4523
  %4622 = vmatmul.f32.gmra.mxu0 %v4584
  %v4623 = vpop.f32.mrf.mxu0
  %v4624 = vadd.f32 0.0, %v4623
  %4625 = vdwg.mxu0
  %4626 = vmatpush.msra.mxu0 0.0
  %4627 = vmatpush.msra.mxu0 0.0
  %4628 = vmatpush.msra.mxu0 0.0
  %4629 = vmatpush.msra.mxu0 0.0
  %4630 = vmatpush.msra.mxu0 0.0
  %4631 = vmatpush.msra.mxu0 0.0
  %4632 = vmatpush.msra.mxu0 0.0
  %4633 = vmatpush.msra.mxu0 0.0
  %4634 = vmatpush.msra.mxu0 0.0
  %4635 = vmatpush.msra.mxu0 0.0
  %4636 = vmatpush.msra.mxu0 0.0
  %4637 = vmatpush.msra.mxu0 0.0
  %4638 = vmatpush.msra.mxu0 %v4568
  %4639 = vmatpush.msra.mxu0 %v4566
  %4640 = vmatpush.msra.mxu0 %v4564
  %4641 = vmatpush.msra.mxu0 %v4562
  %4642 = vmatmul.f32.gmra.mxu0 %v4584
  %v4643 = vpop.f32.mrf.mxu0
  %v4644 = vadd.f32 0.0, %v4643
  %4645 = vdwg.mxu0
  %4646 = vmatpush.msra.mxu0 0.0
  %4647 = vmatpush.msra.mxu0 0.0
  %4648 = vmatpush.msra.mxu0 0.0
  %4649 = vmatpush.msra.mxu0 0.0
  %4650 = vmatpush.msra.mxu0 0.0
  %4651 = vmatpush.msra.mxu0 0.0
  %4652 = vmatpush.msra.mxu0 0.0
  %4653 = vmatpush.msra.mxu0 0.0
  %4654 = vmatpush.msra.mxu0 0.0
  %4655 = vmatpush.msra.mxu0 0.0
  %4656 = vmatpush.msra.mxu0 0.0
  %4657 = vmatpush.msra.mxu0 0.0
  %4658 = vmatpush.msra.mxu0 %v4569
  %4659 = vmatpush.msra.mxu0 %v4567
  %4660 = vmatpush.msra.mxu0 %v4565
  %4661 = vmatpush.msra.mxu0 %v4563
  %4662 = vmatmul.f32.gmra.mxu0 %v4584
  %v4663 = vpop.f32.mrf.mxu0
  %v4664 = vadd.f32 0.0, %v4663
  %4665 = vdwg.mxu0
  %v4666 = vadd.f32 %v4476, %v4604
  %v4667 = vadd.f32 %v4477, %v4624
  %v4668 = vadd.f32 %v4478, %v4644
  %v4669 = vadd.f32 %v4479, %v4664
  %4670 = vrot.lane.b32.xlu0 0.0, 17
  %v4671 = vpop.permute.xlu0 %4670
  %4672 = vrot.lane.b32.xlu0 %v4480, 17
  %v4673 = vpop.permute.xlu0 %4672
  %4674 = vrot.lane.b32.xlu0 %v4481, 17
  %v4675 = vpop.permute.xlu0 %4674
  %4676 = vrot.lane.b32.xlu0 %v4482, 17
  %v4677 = vpop.permute.xlu0 %4676
  %4678 = vrot.lane.b32.xlu0 %v4483, 17
  %v4679 = vpop.permute.xlu0 %4678
  %4680 = vrot.lane.b32.xlu0 %v4484, 17
  %v4681 = vpop.permute.xlu0 %4680
  %4682 = vrot.lane.b32.xlu0 %v4485, 17
  %v4683 = vpop.permute.xlu0 %4682
  %4684 = vrot.lane.b32.xlu0 %v4486, 17
  %v4685 = vpop.permute.xlu0 %4684
  %4686 = vrot.lane.b32.xlu0 %v4487, 17
  %v4687 = vpop.permute.xlu0 %4686
  %v4688 = vsel %vm1183, %v4671, %v4673
  %v4689 = vsel %vm1183, %v4673, %v4675
  %v4690 = vsel %vm1183, %v4671, %v4677
  %v4691 = vsel %vm1183, %v4677, %v4679
  %v4692 = vsel %vm1183, %v4671, %v4681
  %v4693 = vsel %vm1183, %v4681, %v4683
  %v4694 = vsel %vm1183, %v4671, %v4685
  %v4695 = vsel %vm1183, %v4685, %v4687
  %4704 = vrot.lane.b32.xlu0 %v4488, 17
  %v4705 = vpop.permute.xlu0 %4704
  %4706 = vrot.lane.b32.xlu0 %v4489, 17
  %v4707 = vpop.permute.xlu0 %4706
  %4708 = vrot.lane.b32.xlu0 %v4490, 17
  %v4709 = vpop.permute.xlu0 %4708
  %4710 = vrot.lane.b32.xlu0 %v4491, 17
  %v4711 = vpop.permute.xlu0 %4710
  %4712 = vrot.lane.b32.xlu0 %v4492, 17
  %v4713 = vpop.permute.xlu0 %4712
  %4714 = vrot.lane.b32.xlu0 %v4493, 17
  %v4715 = vpop.permute.xlu0 %4714
  %4716 = vrot.lane.b32.xlu0 %v4494, 17
  %v4717 = vpop.permute.xlu0 %4716
  %4718 = vrot.lane.b32.xlu0 %v4495, 17
  %v4719 = vpop.permute.xlu0 %4718
  %v4720 = vsel %vm1183, %v4671, %v4705
  %v4721 = vsel %vm1183, %v4705, %v4707
  %v4722 = vsel %vm1183, %v4671, %v4709
  %v4723 = vsel %vm1183, %v4709, %v4711
  %v4724 = vsel %vm1183, %v4671, %v4713
  %v4725 = vsel %vm1183, %v4713, %v4715
  %v4726 = vsel %vm1183, %v4671, %v4717
  %v4727 = vsel %vm1183, %v4717, %v4719
  %v4736 = vld [vmem:[%s5 + $0x4] sm:$0x7]
  %4738 = vst [vmem:[#allocation1] ss:$2 sm:$0xff] %v4736
  %v4739 = vld.sshfl [vmem:[#allocation1] sm:$0xff pattern:$0x75316420]
  %4740 = vrot.lane.b32.xlu0 %v4739, 64
  %v4741 = vpop.permute.xlu0 %4740
  %v4742 = vsel %vm1436, %v4741, 0
  %4744 = vmatpush.msra.mxu0 0.0
  %4745 = vmatpush.msra.mxu0 0.0
  %4746 = vmatpush.msra.mxu0 0.0
  %4747 = vmatpush.msra.mxu0 0.0
  %4748 = vmatpush.msra.mxu0 0.0
  %4749 = vmatpush.msra.mxu0 0.0
  %4750 = vmatpush.msra.mxu0 0.0
  %4751 = vmatpush.msra.mxu0 0.0
  %4752 = vmatpush.msra.mxu0 0.0
  %4753 = vmatpush.msra.mxu0 0.0
  %4754 = vmatpush.msra.mxu0 0.0
  %4755 = vmatpush.msra.mxu0 0.0
  %4756 = vmatpush.msra.mxu0 %v4694
  %4757 = vmatpush.msra.mxu0 %v4692
  %4758 = vmatpush.msra.mxu0 %v4690
  %4759 = vmatpush.msra.mxu0 %v4688
  %4760 = vmatmul.f32.gmra.mxu0 %v4742
  %v4761 = vpop.f32.mrf.mxu0
  %v4762 = vadd.f32 0.0, %v4761
  %4763 = vdwg.mxu0
  %4764 = vmatpush.msra.mxu0 0.0
  %4765 = vmatpush.msra.mxu0 0.0
  %4766 = vmatpush.msra.mxu0 0.0
  %4767 = vmatpush.msra.mxu0 0.0
  %4768 = vmatpush.msra.mxu0 0.0
  %4769 = vmatpush.msra.mxu0 0.0
  %4770 = vmatpush.msra.mxu0 0.0
  %4771 = vmatpush.msra.mxu0 0.0
  %4772 = vmatpush.msra.mxu0 0.0
  %4773 = vmatpush.msra.mxu0 0.0
  %4774 = vmatpush.msra.mxu0 0.0
  %4775 = vmatpush.msra.mxu0 0.0
  %4776 = vmatpush.msra.mxu0 %v4695
  %4777 = vmatpush.msra.mxu0 %v4693
  %4778 = vmatpush.msra.mxu0 %v4691
  %4779 = vmatpush.msra.mxu0 %v4689
  %4780 = vmatmul.f32.gmra.mxu0 %v4742
  %v4781 = vpop.f32.mrf.mxu0
  %v4782 = vadd.f32 0.0, %v4781
  %4783 = vdwg.mxu0
  %4784 = vmatpush.msra.mxu0 0.0
  %4785 = vmatpush.msra.mxu0 0.0
  %4786 = vmatpush.msra.mxu0 0.0
  %4787 = vmatpush.msra.mxu0 0.0
  %4788 = vmatpush.msra.mxu0 0.0
  %4789 = vmatpush.msra.mxu0 0.0
  %4790 = vmatpush.msra.mxu0 0.0
  %4791 = vmatpush.msra.mxu0 0.0
  %4792 = vmatpush.msra.mxu0 0.0
  %4793 = vmatpush.msra.mxu0 0.0
  %4794 = vmatpush.msra.mxu0 0.0
  %4795 = vmatpush.msra.mxu0 0.0
  %4796 = vmatpush.msra.mxu0 %v4726
  %4797 = vmatpush.msra.mxu0 %v4724
  %4798 = vmatpush.msra.mxu0 %v4722
  %4799 = vmatpush.msra.mxu0 %v4720
  %4800 = vmatmul.f32.gmra.mxu0 %v4742
  %v4801 = vpop.f32.mrf.mxu0
  %v4802 = vadd.f32 0.0, %v4801
  %4803 = vdwg.mxu0
  %4804 = vmatpush.msra.mxu0 0.0
  %4805 = vmatpush.msra.mxu0 0.0
  %4806 = vmatpush.msra.mxu0 0.0
  %4807 = vmatpush.msra.mxu0 0.0
  %4808 = vmatpush.msra.mxu0 0.0
  %4809 = vmatpush.msra.mxu0 0.0
  %4810 = vmatpush.msra.mxu0 0.0
  %4811 = vmatpush.msra.mxu0 0.0
  %4812 = vmatpush.msra.mxu0 0.0
  %4813 = vmatpush.msra.mxu0 0.0
  %4814 = vmatpush.msra.mxu0 0.0
  %4815 = vmatpush.msra.mxu0 0.0
  %4816 = vmatpush.msra.mxu0 %v4727
  %4817 = vmatpush.msra.mxu0 %v4725
  %4818 = vmatpush.msra.mxu0 %v4723
  %4819 = vmatpush.msra.mxu0 %v4721
  %4820 = vmatmul.f32.gmra.mxu0 %v4742
  %v4821 = vpop.f32.mrf.mxu0
  %v4822 = vadd.f32 0.0, %v4821
  %4823 = vdwg.mxu0
  %v4824 = vadd.f32 %v4666, %v4762
  %v4825 = vadd.f32 %v4667, %v4782
  %v4826 = vadd.f32 %v4668, %v4802
  %v4827 = vadd.f32 %v4669, %v4822
  %4828 = vrot.lane.b32.xlu0 0.0, 1
  %v4829 = vpop.permute.xlu0 %4828
  %4830 = vrot.lane.b32.xlu0 %v4480, 1
  %v4831 = vpop.permute.xlu0 %4830
  %4832 = vrot.lane.b32.xlu0 %v4481, 1
  %v4833 = vpop.permute.xlu0 %4832
  %4834 = vrot.lane.b32.xlu0 %v4482, 1
  %v4835 = vpop.permute.xlu0 %4834
  %4836 = vrot.lane.b32.xlu0 %v4483, 1
  %v4837 = vpop.permute.xlu0 %4836
  %4838 = vrot.lane.b32.xlu0 %v4484, 1
  %v4839 = vpop.permute.xlu0 %4838
  %4840 = vrot.lane.b32.xlu0 %v4485, 1
  %v4841 = vpop.permute.xlu0 %4840
  %4842 = vrot.lane.b32.xlu0 %v4486, 1
  %v4843 = vpop.permute.xlu0 %4842
  %4844 = vrot.lane.b32.xlu0 %v4487, 1
  %v4845 = vpop.permute.xlu0 %4844
  %v4846 = vsel %vm1212, %v4829, %v4831
  %v4847 = vsel %vm1212, %v4831, %v4833
  %v4848 = vsel %vm1212, %v4829, %v4835
  %v4849 = vsel %vm1212, %v4835, %v4837
  %v4850 = vsel %vm1212, %v4829, %v4839
  %v4851 = vsel %vm1212, %v4839, %v4841
  %v4852 = vsel %vm1212, %v4829, %v4843
  %v4853 = vsel %vm1212, %v4843, %v4845
  %4862 = vrot.lane.b32.xlu0 %v4488, 1
  %v4863 = vpop.permute.xlu0 %4862
  %4864 = vrot.lane.b32.xlu0 %v4489, 1
  %v4865 = vpop.permute.xlu0 %4864
  %4866 = vrot.lane.b32.xlu0 %v4490, 1
  %v4867 = vpop.permute.xlu0 %4866
  %4868 = vrot.lane.b32.xlu0 %v4491, 1
  %v4869 = vpop.permute.xlu0 %4868
  %4870 = vrot.lane.b32.xlu0 %v4492, 1
  %v4871 = vpop.permute.xlu0 %4870
  %4872 = vrot.lane.b32.xlu0 %v4493, 1
  %v4873 = vpop.permute.xlu0 %4872
  %4874 = vrot.lane.b32.xlu0 %v4494, 1
  %v4875 = vpop.permute.xlu0 %4874
  %4876 = vrot.lane.b32.xlu0 %v4495, 1
  %v4877 = vpop.permute.xlu0 %4876
  %v4878 = vsel %vm1212, %v4829, %v4863
  %v4879 = vsel %vm1212, %v4863, %v4865
  %v4880 = vsel %vm1212, %v4829, %v4867
  %v4881 = vsel %vm1212, %v4867, %v4869
  %v4882 = vsel %vm1212, %v4829, %v4871
  %v4883 = vsel %vm1212, %v4871, %v4873
  %v4884 = vsel %vm1212, %v4829, %v4875
  %v4885 = vsel %vm1212, %v4875, %v4877
  %v4894 = vld [vmem:[%s5 + $0x8] sm:$0x7]
  %4896 = vst [vmem:[#allocation1] ss:$2 sm:$0xff] %v4894
  %v4897 = vld.sshfl [vmem:[#allocation1] sm:$0xff pattern:$0x75316420]
  %4898 = vrot.lane.b32.xlu0 %v4897, 32
  %v4899 = vpop.permute.xlu0 %4898
  %v4900 = vsel %vm1436, %v4899, 0
  %4902 = vmatpush.msra.mxu0 0.0
  %4903 = vmatpush.msra.mxu0 0.0
  %4904 = vmatpush.msra.mxu0 0.0
  %4905 = vmatpush.msra.mxu0 0.0
  %4906 = vmatpush.msra.mxu0 0.0
  %4907 = vmatpush.msra.mxu0 0.0
  %4908 = vmatpush.msra.mxu0 0.0
  %4909 = vmatpush.msra.mxu0 0.0
  %4910 = vmatpush.msra.mxu0 0.0
  %4911 = vmatpush.msra.mxu0 0.0
  %4912 = vmatpush.msra.mxu0 0.0
  %4913 = vmatpush.msra.mxu0 0.0
  %4914 = vmatpush.msra.mxu0 %v4852
  %4915 = vmatpush.msra.mxu0 %v4850
  %4916 = vmatpush.msra.mxu0 %v4848
  %4917 = vmatpush.msra.mxu0 %v4846
  %4918 = vmatmul.f32.gmra.mxu0 %v4900
  %v4919 = vpop.f32.mrf.mxu0
  %v4920 = vadd.f32 0.0, %v4919
  %4921 = vdwg.mxu0
  %4922 = vmatpush.msra.mxu0 0.0
  %4923 = vmatpush.msra.mxu0 0.0
  %4924 = vmatpush.msra.mxu0 0.0
  %4925 = vmatpush.msra.mxu0 0.0
  %4926 = vmatpush.msra.mxu0 0.0
  %4927 = vmatpush.msra.mxu0 0.0
  %4928 = vmatpush.msra.mxu0 0.0
  %4929 = vmatpush.msra.mxu0 0.0
  %4930 = vmatpush.msra.mxu0 0.0
  %4931 = vmatpush.msra.mxu0 0.0
  %4932 = vmatpush.msra.mxu0 0.0
  %4933 = vmatpush.msra.mxu0 0.0
  %4934 = vmatpush.msra.mxu0 %v4853
  %4935 = vmatpush.msra.mxu0 %v4851
  %4936 = vmatpush.msra.mxu0 %v4849
  %4937 = vmatpush.msra.mxu0 %v4847
  %4938 = vmatmul.f32.gmra.mxu0 %v4900
  %v4939 = vpop.f32.mrf.mxu0
  %v4940 = vadd.f32 0.0, %v4939
  %4941 = vdwg.mxu0
  %4942 = vmatpush.msra.mxu0 0.0
  %4943 = vmatpush.msra.mxu0 0.0
  %4944 = vmatpush.msra.mxu0 0.0
  %4945 = vmatpush.msra.mxu0 0.0
  %4946 = vmatpush.msra.mxu0 0.0
  %4947 = vmatpush.msra.mxu0 0.0
  %4948 = vmatpush.msra.mxu0 0.0
  %4949 = vmatpush.msra.mxu0 0.0
  %4950 = vmatpush.msra.mxu0 0.0
  %4951 = vmatpush.msra.mxu0 0.0
  %4952 = vmatpush.msra.mxu0 0.0
  %4953 = vmatpush.msra.mxu0 0.0
  %4954 = vmatpush.msra.mxu0 %v4884
  %4955 = vmatpush.msra.mxu0 %v4882
  %4956 = vmatpush.msra.mxu0 %v4880
  %4957 = vmatpush.msra.mxu0 %v4878
  %4958 = vmatmul.f32.gmra.mxu0 %v4900
  %v4959 = vpop.f32.mrf.mxu0
  %v4960 = vadd.f32 0.0, %v4959
  %4961 = vdwg.mxu0
  %4962 = vmatpush.msra.mxu0 0.0
  %4963 = vmatpush.msra.mxu0 0.0
  %4964 = vmatpush.msra.mxu0 0.0
  %4965 = vmatpush.msra.mxu0 0.0
  %4966 = vmatpush.msra.mxu0 0.0
  %4967 = vmatpush.msra.mxu0 0.0
  %4968 = vmatpush.msra.mxu0 0.0
  %4969 = vmatpush.msra.mxu0 0.0
  %4970 = vmatpush.msra.mxu0 0.0
  %4971 = vmatpush.msra.mxu0 0.0
  %4972 = vmatpush.msra.mxu0 0.0
  %4973 = vmatpush.msra.mxu0 0.0
  %4974 = vmatpush.msra.mxu0 %v4885
  %4975 = vmatpush.msra.mxu0 %v4883
  %4976 = vmatpush.msra.mxu0 %v4881
  %4977 = vmatpush.msra.mxu0 %v4879
  %4978 = vmatmul.f32.gmra.mxu0 %v4900
  %v4979 = vpop.f32.mrf.mxu0
  %v4980 = vadd.f32 0.0, %v4979
  %4981 = vdwg.mxu0
  %v4982 = vadd.f32 %v4824, %v4920
  %v4983 = vadd.f32 %v4825, %v4940
  %v4984 = vadd.f32 %v4826, %v4960
  %v4985 = vadd.f32 %v4827, %v4980
  %4986 = vrot.lane.b32.xlu0 %v4480, 113
  %v4987 = vpop.permute.xlu0 %4986
  %4988 = vrot.lane.b32.xlu0 %v4481, 113
  %v4989 = vpop.permute.xlu0 %4988
  %4990 = vrot.lane.b32.xlu0 0.0, 113
  %v4991 = vpop.permute.xlu0 %4990
  %4992 = vrot.lane.b32.xlu0 %v4482, 113
  %v4993 = vpop.permute.xlu0 %4992
  %4994 = vrot.lane.b32.xlu0 %v4483, 113
  %v4995 = vpop.permute.xlu0 %4994
  %4996 = vrot.lane.b32.xlu0 %v4484, 113
  %v4997 = vpop.permute.xlu0 %4996
  %4998 = vrot.lane.b32.xlu0 %v4485, 113
  %v4999 = vpop.permute.xlu0 %4998
  %5000 = vrot.lane.b32.xlu0 %v4486, 113
  %v5001 = vpop.permute.xlu0 %5000
  %5002 = vrot.lane.b32.xlu0 %v4487, 113
  %v5003 = vpop.permute.xlu0 %5002
  %v5004 = vsel %vm1242, %v4987, %v4989
  %v5005 = vsel %vm1242, %v4989, %v4991
  %v5006 = vsel %vm1242, %v4993, %v4995
  %v5007 = vsel %vm1242, %v4995, %v4991
  %v5008 = vsel %vm1242, %v4997, %v4999
  %v5009 = vsel %vm1242, %v4999, %v4991
  %v5010 = vsel %vm1242, %v5001, %v5003
  %v5011 = vsel %vm1242, %v5003, %v4991
  %5020 = vrot.lane.b32.xlu0 %v4488, 113
  %v5021 = vpop.permute.xlu0 %5020
  %5022 = vrot.lane.b32.xlu0 %v4489, 113
  %v5023 = vpop.permute.xlu0 %5022
  %5024 = vrot.lane.b32.xlu0 %v4490, 113
  %v5025 = vpop.permute.xlu0 %5024
  %5026 = vrot.lane.b32.xlu0 %v4491, 113
  %v5027 = vpop.permute.xlu0 %5026
  %5028 = vrot.lane.b32.xlu0 %v4492, 113
  %v5029 = vpop.permute.xlu0 %5028
  %5030 = vrot.lane.b32.xlu0 %v4493, 113
  %v5031 = vpop.permute.xlu0 %5030
  %5032 = vrot.lane.b32.xlu0 %v4494, 113
  %v5033 = vpop.permute.xlu0 %5032
  %5034 = vrot.lane.b32.xlu0 %v4495, 113
  %v5035 = vpop.permute.xlu0 %5034
  %v5036 = vsel %vm1242, %v5021, %v5023
  %v5037 = vsel %vm1242, %v5023, %v4991
  %v5038 = vsel %vm1242, %v5025, %v5027
  %v5039 = vsel %vm1242, %v5027, %v4991
  %v5040 = vsel %vm1242, %v5029, %v5031
  %v5041 = vsel %vm1242, %v5031, %v4991
  %v5042 = vsel %vm1242, %v5033, %v5035
  %v5043 = vsel %vm1242, %v5035, %v4991
  %v5052 = vld [vmem:[%s5 + $0x10] sm:$0x7]
  %v5054 = vsel %vm1436, %v5052, 0
  %5056 = vmatpush.msra.mxu0 0.0
  %5057 = vmatpush.msra.mxu0 0.0
  %5058 = vmatpush.msra.mxu0 0.0
  %5059 = vmatpush.msra.mxu0 0.0
  %5060 = vmatpush.msra.mxu0 0.0
  %5061 = vmatpush.msra.mxu0 0.0
  %5062 = vmatpush.msra.mxu0 0.0
  %5063 = vmatpush.msra.mxu0 0.0
  %5064 = vmatpush.msra.mxu0 0.0
  %5065 = vmatpush.msra.mxu0 0.0
  %5066 = vmatpush.msra.mxu0 0.0
  %5067 = vmatpush.msra.mxu0 0.0
  %5068 = vmatpush.msra.mxu0 %v5010
  %5069 = vmatpush.msra.mxu0 %v5008
  %5070 = vmatpush.msra.mxu0 %v5006
  %5071 = vmatpush.msra.mxu0 %v5004
  %5072 = vmatmul.f32.gmra.mxu0 %v5054
  %v5073 = vpop.f32.mrf.mxu0
  %v5074 = vadd.f32 0.0, %v5073
  %5075 = vdwg.mxu0
  %5076 = vmatpush.msra.mxu0 0.0
  %5077 = vmatpush.msra.mxu0 0.0
  %5078 = vmatpush.msra.mxu0 0.0
  %5079 = vmatpush.msra.mxu0 0.0
  %5080 = vmatpush.msra.mxu0 0.0
  %5081 = vmatpush.msra.mxu0 0.0
  %5082 = vmatpush.msra.mxu0 0.0
  %5083 = vmatpush.msra.mxu0 0.0
  %5084 = vmatpush.msra.mxu0 0.0
  %5085 = vmatpush.msra.mxu0 0.0
  %5086 = vmatpush.msra.mxu0 0.0
  %5087 = vmatpush.msra.mxu0 0.0
  %5088 = vmatpush.msra.mxu0 %v5011
  %5089 = vmatpush.msra.mxu0 %v5009
  %5090 = vmatpush.msra.mxu0 %v5007
  %5091 = vmatpush.msra.mxu0 %v5005
  %5092 = vmatmul.f32.gmra.mxu0 %v5054
  %v5093 = vpop.f32.mrf.mxu0
  %v5094 = vadd.f32 0.0, %v5093
  %5095 = vdwg.mxu0
  %5096 = vmatpush.msra.mxu0 0.0
  %5097 = vmatpush.msra.mxu0 0.0
  %5098 = vmatpush.msra.mxu0 0.0
  %5099 = vmatpush.msra.mxu0 0.0
  %5100 = vmatpush.msra.mxu0 0.0
  %5101 = vmatpush.msra.mxu0 0.0
  %5102 = vmatpush.msra.mxu0 0.0
  %5103 = vmatpush.msra.mxu0 0.0
  %5104 = vmatpush.msra.mxu0 0.0
  %5105 = vmatpush.msra.mxu0 0.0
  %5106 = vmatpush.msra.mxu0 0.0
  %5107 = vmatpush.msra.mxu0 0.0
  %5108 = vmatpush.msra.mxu0 %v5042
  %5109 = vmatpush.msra.mxu0 %v5040
  %5110 = vmatpush.msra.mxu0 %v5038
  %5111 = vmatpush.msra.mxu0 %v5036
  %5112 = vmatmul.f32.gmra.mxu0 %v5054
  %v5113 = vpop.f32.mrf.mxu0
  %v5114 = vadd.f32 0.0, %v5113
  %5115 = vdwg.mxu0
  %5116 = vmatpush.msra.mxu0 0.0
  %5117 = vmatpush.msra.mxu0 0.0
  %5118 = vmatpush.msra.mxu0 0.0
  %5119 = vmatpush.msra.mxu0 0.0
  %5120 = vmatpush.msra.mxu0 0.0
  %5121 = vmatpush.msra.mxu0 0.0
  %5122 = vmatpush.msra.mxu0 0.0
  %5123 = vmatpush.msra.mxu0 0.0
  %5124 = vmatpush.msra.mxu0 0.0
  %5125 = vmatpush.msra.mxu0 0.0
  %5126 = vmatpush.msra.mxu0 0.0
  %5127 = vmatpush.msra.mxu0 0.0
  %5128 = vmatpush.msra.mxu0 %v5043
  %5129 = vmatpush.msra.mxu0 %v5041
  %5130 = vmatpush.msra.mxu0 %v5039
  %5131 = vmatpush.msra.mxu0 %v5037
  %5132 = vmatmul.f32.gmra.mxu0 %v5054
  %v5133 = vpop.f32.mrf.mxu0
  %v5134 = vadd.f32 0.0, %v5133
  %5135 = vdwg.mxu0
  %v5136 = vadd.f32 %v4982, %v5074
  %v5137 = vadd.f32 %v4983, %v5094
  %v5138 = vadd.f32 %v4984, %v5114
  %v5139 = vadd.f32 %v4985, %v5134
  %5140 = vrot.lane.b32.xlu0 %v4480, 97
  %v5141 = vpop.permute.xlu0 %5140
  %5142 = vrot.lane.b32.xlu0 %v4481, 97
  %v5143 = vpop.permute.xlu0 %5142
  %5144 = vrot.lane.b32.xlu0 0.0, 97
  %v5145 = vpop.permute.xlu0 %5144
  %5146 = vrot.lane.b32.xlu0 %v4482, 97
  %v5147 = vpop.permute.xlu0 %5146
  %5148 = vrot.lane.b32.xlu0 %v4483, 97
  %v5149 = vpop.permute.xlu0 %5148
  %5150 = vrot.lane.b32.xlu0 %v4484, 97
  %v5151 = vpop.permute.xlu0 %5150
  %5152 = vrot.lane.b32.xlu0 %v4485, 97
  %v5153 = vpop.permute.xlu0 %5152
  %5154 = vrot.lane.b32.xlu0 %v4486, 97
  %v5155 = vpop.permute.xlu0 %5154
  %5156 = vrot.lane.b32.xlu0 %v4487, 97
  %v5157 = vpop.permute.xlu0 %5156
  %v5158 = vsel %vm1268, %v5141, %v5143
  %v5159 = vsel %vm1268, %v5143, %v5145
  %v5160 = vsel %vm1268, %v5147, %v5149
  %v5161 = vsel %vm1268, %v5149, %v5145
  %v5162 = vsel %vm1268, %v5151, %v5153
  %v5163 = vsel %vm1268, %v5153, %v5145
  %v5164 = vsel %vm1268, %v5155, %v5157
  %v5165 = vsel %vm1268, %v5157, %v5145
  %5174 = vrot.lane.b32.xlu0 %v4488, 97
  %v5175 = vpop.permute.xlu0 %5174
  %5176 = vrot.lane.b32.xlu0 %v4489, 97
  %v5177 = vpop.permute.xlu0 %5176
  %5178 = vrot.lane.b32.xlu0 %v4490, 97
  %v5179 = vpop.permute.xlu0 %5178
  %5180 = vrot.lane.b32.xlu0 %v4491, 97
  %v5181 = vpop.permute.xlu0 %5180
  %5182 = vrot.lane.b32.xlu0 %v4492, 97
  %v5183 = vpop.permute.xlu0 %5182
  %5184 = vrot.lane.b32.xlu0 %v4493, 97
  %v5185 = vpop.permute.xlu0 %5184
  %5186 = vrot.lane.b32.xlu0 %v4494, 97
  %v5187 = vpop.permute.xlu0 %5186
  %5188 = vrot.lane.b32.xlu0 %v4495, 97
  %v5189 = vpop.permute.xlu0 %5188
  %v5190 = vsel %vm1268, %v5175, %v5177
  %v5191 = vsel %vm1268, %v5177, %v5145
  %v5192 = vsel %vm1268, %v5179, %v5181
  %v5193 = vsel %vm1268, %v5181, %v5145
  %v5194 = vsel %vm1268, %v5183, %v5185
  %v5195 = vsel %vm1268, %v5185, %v5145
  %v5196 = vsel %vm1268, %v5187, %v5189
  %v5197 = vsel %vm1268, %v5189, %v5145
  %v5206 = vld [vmem:[%s5 + $0x14] sm:$0x7]
  %5208 = vst [vmem:[#allocation1] ss:$2 sm:$0xff] %v5206
  %v5209 = vld.sshfl [vmem:[#allocation1] sm:$0xff pattern:$0x75316420]
  %5210 = vrot.lane.b32.xlu0 %v5209, 96
  %v5211 = vpop.permute.xlu0 %5210
  %v5212 = vsel %vm1436, %v5211, 0
  %5214 = vmatpush.msra.mxu0 0.0
  %5215 = vmatpush.msra.mxu0 0.0
  %5216 = vmatpush.msra.mxu0 0.0
  %5217 = vmatpush.msra.mxu0 0.0
  %5218 = vmatpush.msra.mxu0 0.0
  %5219 = vmatpush.msra.mxu0 0.0
  %5220 = vmatpush.msra.mxu0 0.0
  %5221 = vmatpush.msra.mxu0 0.0
  %5222 = vmatpush.msra.mxu0 0.0
  %5223 = vmatpush.msra.mxu0 0.0
  %5224 = vmatpush.msra.mxu0 0.0
  %5225 = vmatpush.msra.mxu0 0.0
  %5226 = vmatpush.msra.mxu0 %v5164
  %5227 = vmatpush.msra.mxu0 %v5162
  %5228 = vmatpush.msra.mxu0 %v5160
  %5229 = vmatpush.msra.mxu0 %v5158
  %5230 = vmatmul.f32.gmra.mxu0 %v5212
  %v5231 = vpop.f32.mrf.mxu0
  %v5232 = vadd.f32 0.0, %v5231
  %5233 = vdwg.mxu0
  %5234 = vmatpush.msra.mxu0 0.0
  %5235 = vmatpush.msra.mxu0 0.0
  %5236 = vmatpush.msra.mxu0 0.0
  %5237 = vmatpush.msra.mxu0 0.0
  %5238 = vmatpush.msra.mxu0 0.0
  %5239 = vmatpush.msra.mxu0 0.0
  %5240 = vmatpush.msra.mxu0 0.0
  %5241 = vmatpush.msra.mxu0 0.0
  %5242 = vmatpush.msra.mxu0 0.0
  %5243 = vmatpush.msra.mxu0 0.0
  %5244 = vmatpush.msra.mxu0 0.0
  %5245 = vmatpush.msra.mxu0 0.0
  %5246 = vmatpush.msra.mxu0 %v5165
  %5247 = vmatpush.msra.mxu0 %v5163
  %5248 = vmatpush.msra.mxu0 %v5161
  %5249 = vmatpush.msra.mxu0 %v5159
  %5250 = vmatmul.f32.gmra.mxu0 %v5212
  %v5251 = vpop.f32.mrf.mxu0
  %v5252 = vadd.f32 0.0, %v5251
  %5253 = vdwg.mxu0
  %5254 = vmatpush.msra.mxu0 0.0
  %5255 = vmatpush.msra.mxu0 0.0
  %5256 = vmatpush.msra.mxu0 0.0
  %5257 = vmatpush.msra.mxu0 0.0
  %5258 = vmatpush.msra.mxu0 0.0
  %5259 = vmatpush.msra.mxu0 0.0
  %5260 = vmatpush.msra.mxu0 0.0
  %5261 = vmatpush.msra.mxu0 0.0
  %5262 = vmatpush.msra.mxu0 0.0
  %5263 = vmatpush.msra.mxu0 0.0
  %5264 = vmatpush.msra.mxu0 0.0
  %5265 = vmatpush.msra.mxu0 0.0
  %5266 = vmatpush.msra.mxu0 %v5196
  %5267 = vmatpush.msra.mxu0 %v5194
  %5268 = vmatpush.msra.mxu0 %v5192
  %5269 = vmatpush.msra.mxu0 %v5190
  %5270 = vmatmul.f32.gmra.mxu0 %v5212
  %v5271 = vpop.f32.mrf.mxu0
  %v5272 = vadd.f32 0.0, %v5271
  %5273 = vdwg.mxu0
  %5274 = vmatpush.msra.mxu0 0.0
  %5275 = vmatpush.msra.mxu0 0.0
  %5276 = vmatpush.msra.mxu0 0.0
  %5277 = vmatpush.msra.mxu0 0.0
  %5278 = vmatpush.msra.mxu0 0.0
  %5279 = vmatpush.msra.mxu0 0.0
  %5280 = vmatpush.msra.mxu0 0.0
  %5281 = vmatpush.msra.mxu0 0.0
  %5282 = vmatpush.msra.mxu0 0.0
  %5283 = vmatpush.msra.mxu0 0.0
  %5284 = vmatpush.msra.mxu0 0.0
  %5285 = vmatpush.msra.mxu0 0.0
  %5286 = vmatpush.msra.mxu0 %v5197
  %5287 = vmatpush.msra.mxu0 %v5195
  %5288 = vmatpush.msra.mxu0 %v5193
  %5289 = vmatpush.msra.mxu0 %v5191
  %5290 = vmatmul.f32.gmra.mxu0 %v5212
  %v5291 = vpop.f32.mrf.mxu0
  %v5292 = vadd.f32 0.0, %v5291
  %5293 = vdwg.mxu0
  %v5294 = vadd.f32 %v5136, %v5232
  %v5295 = vadd.f32 %v5137, %v5252
  %v5296 = vadd.f32 %v5138, %v5272
  %v5297 = vadd.f32 %v5139, %v5292
  %5306 = vrot.lane.b32.xlu0 0.0, 32
  %v5307 = vpop.permute.xlu0 %5306
  %5308 = vrot.lane.b32.xlu0 %v3657, 32
  %v5309 = vpop.permute.xlu0 %5308
  %5310 = vrot.lane.b32.xlu0 %v3658, 32
  %v5311 = vpop.permute.xlu0 %5310
  %5312 = vrot.lane.b32.xlu0 %v3661, 32
  %v5313 = vpop.permute.xlu0 %5312
  %5314 = vrot.lane.b32.xlu0 %v3662, 32
  %v5315 = vpop.permute.xlu0 %5314
  %5316 = vrot.lane.b32.xlu0 %v3665, 32
  %v5317 = vpop.permute.xlu0 %5316
  %5318 = vrot.lane.b32.xlu0 %v3666, 32
  %v5319 = vpop.permute.xlu0 %5318
  %5320 = vrot.lane.b32.xlu0 %v3669, 32
  %v5321 = vpop.permute.xlu0 %5320
  %5322 = vrot.lane.b32.xlu0 %v3670, 32
  %v5323 = vpop.permute.xlu0 %5322
  %v5324 = vsel %vm1436, %v5307, %v5309
  %v5325 = vsel %vm1436, %v5309, %v5311
  %v5326 = vsel %vm1436, %v5307, %v5313
  %v5327 = vsel %vm1436, %v5313, %v5315
  %v5328 = vsel %vm1436, %v5307, %v5317
  %v5329 = vsel %vm1436, %v5317, %v5319
  %v5330 = vsel %vm1436, %v5307, %v5321
  %v5331 = vsel %vm1436, %v5321, %v5323
  %5348 = vrot.lane.b32.xlu0 %v3659, 32
  %v5349 = vpop.permute.xlu0 %5348
  %5350 = vrot.lane.b32.xlu0 %v3660, 32
  %v5351 = vpop.permute.xlu0 %5350
  %5352 = vrot.lane.b32.xlu0 %v3663, 32
  %v5353 = vpop.permute.xlu0 %5352
  %5354 = vrot.lane.b32.xlu0 %v3664, 32
  %v5355 = vpop.permute.xlu0 %5354
  %5356 = vrot.lane.b32.xlu0 %v3667, 32
  %v5357 = vpop.permute.xlu0 %5356
  %5358 = vrot.lane.b32.xlu0 %v3668, 32
  %v5359 = vpop.permute.xlu0 %5358
  %5360 = vrot.lane.b32.xlu0 %v3671, 32
  %v5361 = vpop.permute.xlu0 %5360
  %5362 = vrot.lane.b32.xlu0 %v3672, 32
  %v5363 = vpop.permute.xlu0 %5362
  %v5364 = vsel %vm1436, %v5307, %v5349
  %v5365 = vsel %vm1436, %v5349, %v5351
  %v5366 = vsel %vm1436, %v5307, %v5353
  %v5367 = vsel %vm1436, %v5353, %v5355
  %v5368 = vsel %vm1436, %v5307, %v5357
  %v5369 = vsel %vm1436, %v5357, %v5359
  %v5370 = vsel %vm1436, %v5307, %v5361
  %v5371 = vsel %vm1436, %v5361, %v5363
  %v5380 = vld [vmem:[%s5] sm:$0x7]
  %5382 = vst [vmem:[#allocation1] ss:$2 sm:$0xff] %v5380
  %v5383 = vld.sshfl [vmem:[#allocation1] sm:$0xff pattern:$0x75316420]
  %5384 = vrot.lane.b32.xlu0 %v5383, 64
  %v5385 = vpop.permute.xlu0 %5384
  %v5386 = vsel %vm1436, %v5385, 0
  %5388 = vmatpush.msra.mxu0 0.0
  %5389 = vmatpush.msra.mxu0 0.0
  %5390 = vmatpush.msra.mxu0 0.0
  %5391 = vmatpush.msra.mxu0 0.0
  %5392 = vmatpush.msra.mxu0 0.0
  %5393 = vmatpush.msra.mxu0 0.0
  %5394 = vmatpush.msra.mxu0 0.0
  %5395 = vmatpush.msra.mxu0 0.0
  %5396 = vmatpush.msra.mxu0 0.0
  %5397 = vmatpush.msra.mxu0 0.0
  %5398 = vmatpush.msra.mxu0 0.0
  %5399 = vmatpush.msra.mxu0 0.0
  %5400 = vmatpush.msra.mxu0 %v5330
  %5401 = vmatpush.msra.mxu0 %v5328
  %5402 = vmatpush.msra.mxu0 %v5326
  %5403 = vmatpush.msra.mxu0 %v5324
  %5404 = vmatmul.f32.gmra.mxu0 %v5386
  %v5405 = vpop.f32.mrf.mxu0
  %v5406 = vadd.f32 0.0, %v5405
  %5407 = vdwg.mxu0
  %5408 = vmatpush.msra.mxu0 0.0
  %5409 = vmatpush.msra.mxu0 0.0
  %5410 = vmatpush.msra.mxu0 0.0
  %5411 = vmatpush.msra.mxu0 0.0
  %5412 = vmatpush.msra.mxu0 0.0
  %5413 = vmatpush.msra.mxu0 0.0
  %5414 = vmatpush.msra.mxu0 0.0
  %5415 = vmatpush.msra.mxu0 0.0
  %5416 = vmatpush.msra.mxu0 0.0
  %5417 = vmatpush.msra.mxu0 0.0
  %5418 = vmatpush.msra.mxu0 0.0
  %5419 = vmatpush.msra.mxu0 0.0
  %5420 = vmatpush.msra.mxu0 %v5331
  %5421 = vmatpush.msra.mxu0 %v5329
  %5422 = vmatpush.msra.mxu0 %v5327
  %5423 = vmatpush.msra.mxu0 %v5325
  %5424 = vmatmul.f32.gmra.mxu0 %v5386
  %v5425 = vpop.f32.mrf.mxu0
  %v5426 = vadd.f32 0.0, %v5425
  %5427 = vdwg.mxu0
  %5428 = vmatpush.msra.mxu0 0.0
  %5429 = vmatpush.msra.mxu0 0.0
  %5430 = vmatpush.msra.mxu0 0.0
  %5431 = vmatpush.msra.mxu0 0.0
  %5432 = vmatpush.msra.mxu0 0.0
  %5433 = vmatpush.msra.mxu0 0.0
  %5434 = vmatpush.msra.mxu0 0.0
  %5435 = vmatpush.msra.mxu0 0.0
  %5436 = vmatpush.msra.mxu0 0.0
  %5437 = vmatpush.msra.mxu0 0.0
  %5438 = vmatpush.msra.mxu0 0.0
  %5439 = vmatpush.msra.mxu0 0.0
  %5440 = vmatpush.msra.mxu0 %v5370
  %5441 = vmatpush.msra.mxu0 %v5368
  %5442 = vmatpush.msra.mxu0 %v5366
  %5443 = vmatpush.msra.mxu0 %v5364
  %5444 = vmatmul.f32.gmra.mxu0 %v5386
  %v5445 = vpop.f32.mrf.mxu0
  %v5446 = vadd.f32 0.0, %v5445
  %5447 = vdwg.mxu0
  %5448 = vmatpush.msra.mxu0 0.0
  %5449 = vmatpush.msra.mxu0 0.0
  %5450 = vmatpush.msra.mxu0 0.0
  %5451 = vmatpush.msra.mxu0 0.0
  %5452 = vmatpush.msra.mxu0 0.0
  %5453 = vmatpush.msra.mxu0 0.0
  %5454 = vmatpush.msra.mxu0 0.0
  %5455 = vmatpush.msra.mxu0 0.0
  %5456 = vmatpush.msra.mxu0 0.0
  %5457 = vmatpush.msra.mxu0 0.0
  %5458 = vmatpush.msra.mxu0 0.0
  %5459 = vmatpush.msra.mxu0 0.0
  %5460 = vmatpush.msra.mxu0 %v5371
  %5461 = vmatpush.msra.mxu0 %v5369
  %5462 = vmatpush.msra.mxu0 %v5367
  %5463 = vmatpush.msra.mxu0 %v5365
  %5464 = vmatmul.f32.gmra.mxu0 %v5386
  %v5465 = vpop.f32.mrf.mxu0
  %v5466 = vadd.f32 0.0, %v5465
  %5467 = vdwg.mxu0
  %v5468 = vadd.f32 %v5294, %v5406
  %v5469 = vadd.f32 %v5295, %v5426
  %v5470 = vadd.f32 %v5296, %v5446
  %v5471 = vadd.f32 %v5297, %v5466
  %5472 = vrot.lane.b32.xlu0 0.0, 16
  %v5473 = vpop.permute.xlu0 %5472
  %5474 = vrot.lane.b32.xlu0 %v3657, 16
  %v5475 = vpop.permute.xlu0 %5474
  %5476 = vrot.lane.b32.xlu0 %v3658, 16
  %v5477 = vpop.permute.xlu0 %5476
  %5478 = vrot.lane.b32.xlu0 %v3661, 16
  %v5479 = vpop.permute.xlu0 %5478
  %5480 = vrot.lane.b32.xlu0 %v3662, 16
  %v5481 = vpop.permute.xlu0 %5480
  %5482 = vrot.lane.b32.xlu0 %v3665, 16
  %v5483 = vpop.permute.xlu0 %5482
  %5484 = vrot.lane.b32.xlu0 %v3666, 16
  %v5485 = vpop.permute.xlu0 %5484
  %5486 = vrot.lane.b32.xlu0 %v3669, 16
  %v5487 = vpop.permute.xlu0 %5486
  %5488 = vrot.lane.b32.xlu0 %v3670, 16
  %v5489 = vpop.permute.xlu0 %5488
  %v5490 = vsel %vm1477, %v5473, %v5475
  %v5491 = vsel %vm1477, %v5475, %v5477
  %v5492 = vsel %vm1477, %v5473, %v5479
  %v5493 = vsel %vm1477, %v5479, %v5481
  %v5494 = vsel %vm1477, %v5473, %v5483
  %v5495 = vsel %vm1477, %v5483, %v5485
  %v5496 = vsel %vm1477, %v5473, %v5487
  %v5497 = vsel %vm1477, %v5487, %v5489
  %5506 = vrot.lane.b32.xlu0 %v3659, 16
  %v5507 = vpop.permute.xlu0 %5506
  %5508 = vrot.lane.b32.xlu0 %v3660, 16
  %v5509 = vpop.permute.xlu0 %5508
  %5510 = vrot.lane.b32.xlu0 %v3663, 16
  %v5511 = vpop.permute.xlu0 %5510
  %5512 = vrot.lane.b32.xlu0 %v3664, 16
  %v5513 = vpop.permute.xlu0 %5512
  %5514 = vrot.lane.b32.xlu0 %v3667, 16
  %v5515 = vpop.permute.xlu0 %5514
  %5516 = vrot.lane.b32.xlu0 %v3668, 16
  %v5517 = vpop.permute.xlu0 %5516
  %5518 = vrot.lane.b32.xlu0 %v3671, 16
  %v5519 = vpop.permute.xlu0 %5518
  %5520 = vrot.lane.b32.xlu0 %v3672, 16
  %v5521 = vpop.permute.xlu0 %5520
  %v5522 = vsel %vm1477, %v5473, %v5507
  %v5523 = vsel %vm1477, %v5507, %v5509
  %v5524 = vsel %vm1477, %v5473, %v5511
  %v5525 = vsel %vm1477, %v5511, %v5513
  %v5526 = vsel %vm1477, %v5473, %v5515
  %v5527 = vsel %vm1477, %v5515, %v5517
  %v5528 = vsel %vm1477, %v5473, %v5519
  %v5529 = vsel %vm1477, %v5519, %v5521
  %v5538 = vld [vmem:[%s5 + $0x4] sm:$0x7]
  %5540 = vst [vmem:[#allocation1] ss:$2 sm:$0xff] %v5538
  %v5541 = vld.sshfl [vmem:[#allocation1] sm:$0xff pattern:$0x75316420]
  %5542 = vrot.lane.b32.xlu0 %v5541, 32
  %v5543 = vpop.permute.xlu0 %5542
  %v5544 = vsel %vm1436, %v5543, 0
  %5546 = vmatpush.msra.mxu0 0.0
  %5547 = vmatpush.msra.mxu0 0.0
  %5548 = vmatpush.msra.mxu0 0.0
  %5549 = vmatpush.msra.mxu0 0.0
  %5550 = vmatpush.msra.mxu0 0.0
  %5551 = vmatpush.msra.mxu0 0.0
  %5552 = vmatpush.msra.mxu0 0.0
  %5553 = vmatpush.msra.mxu0 0.0
  %5554 = vmatpush.msra.mxu0 0.0
  %5555 = vmatpush.msra.mxu0 0.0
  %5556 = vmatpush.msra.mxu0 0.0
  %5557 = vmatpush.msra.mxu0 0.0
  %5558 = vmatpush.msra.mxu0 %v5496
  %5559 = vmatpush.msra.mxu0 %v5494
  %5560 = vmatpush.msra.mxu0 %v5492
  %5561 = vmatpush.msra.mxu0 %v5490
  %5562 = vmatmul.f32.gmra.mxu0 %v5544
  %v5563 = vpop.f32.mrf.mxu0
  %v5564 = vadd.f32 0.0, %v5563
  %5565 = vdwg.mxu0
  %5566 = vmatpush.msra.mxu0 0.0
  %5567 = vmatpush.msra.mxu0 0.0
  %5568 = vmatpush.msra.mxu0 0.0
  %5569 = vmatpush.msra.mxu0 0.0
  %5570 = vmatpush.msra.mxu0 0.0
  %5571 = vmatpush.msra.mxu0 0.0
  %5572 = vmatpush.msra.mxu0 0.0
  %5573 = vmatpush.msra.mxu0 0.0
  %5574 = vmatpush.msra.mxu0 0.0
  %5575 = vmatpush.msra.mxu0 0.0
  %5576 = vmatpush.msra.mxu0 0.0
  %5577 = vmatpush.msra.mxu0 0.0
  %5578 = vmatpush.msra.mxu0 %v5497
  %5579 = vmatpush.msra.mxu0 %v5495
  %5580 = vmatpush.msra.mxu0 %v5493
  %5581 = vmatpush.msra.mxu0 %v5491
  %5582 = vmatmul.f32.gmra.mxu0 %v5544
  %v5583 = vpop.f32.mrf.mxu0
  %v5584 = vadd.f32 0.0, %v5583
  %5585 = vdwg.mxu0
  %5586 = vmatpush.msra.mxu0 0.0
  %5587 = vmatpush.msra.mxu0 0.0
  %5588 = vmatpush.msra.mxu0 0.0
  %5589 = vmatpush.msra.mxu0 0.0
  %5590 = vmatpush.msra.mxu0 0.0
  %5591 = vmatpush.msra.mxu0 0.0
  %5592 = vmatpush.msra.mxu0 0.0
  %5593 = vmatpush.msra.mxu0 0.0
  %5594 = vmatpush.msra.mxu0 0.0
  %5595 = vmatpush.msra.mxu0 0.0
  %5596 = vmatpush.msra.mxu0 0.0
  %5597 = vmatpush.msra.mxu0 0.0
  %5598 = vmatpush.msra.mxu0 %v5528
  %5599 = vmatpush.msra.mxu0 %v5526
  %5600 = vmatpush.msra.mxu0 %v5524
  %5601 = vmatpush.msra.mxu0 %v5522
  %5602 = vmatmul.f32.gmra.mxu0 %v5544
  %v5603 = vpop.f32.mrf.mxu0
  %v5604 = vadd.f32 0.0, %v5603
  %5605 = vdwg.mxu0
  %5606 = vmatpush.msra.mxu0 0.0
  %5607 = vmatpush.msra.mxu0 0.0
  %5608 = vmatpush.msra.mxu0 0.0
  %5609 = vmatpush.msra.mxu0 0.0
  %5610 = vmatpush.msra.mxu0 0.0
  %5611 = vmatpush.msra.mxu0 0.0
  %5612 = vmatpush.msra.mxu0 0.0
  %5613 = vmatpush.msra.mxu0 0.0
  %5614 = vmatpush.msra.mxu0 0.0
  %5615 = vmatpush.msra.mxu0 0.0
  %5616 = vmatpush.msra.mxu0 0.0
  %5617 = vmatpush.msra.mxu0 0.0
  %5618 = vmatpush.msra.mxu0 %v5529
  %5619 = vmatpush.msra.mxu0 %v5527
  %5620 = vmatpush.msra.mxu0 %v5525
  %5621 = vmatpush.msra.mxu0 %v5523
  %5622 = vmatmul.f32.gmra.mxu0 %v5544
  %v5623 = vpop.f32.mrf.mxu0
  %v5624 = vadd.f32 0.0, %v5623
  %5625 = vdwg.mxu0
  %v5626 = vadd.f32 %v5468, %v5564
  %v5627 = vadd.f32 %v5469, %v5584
  %v5628 = vadd.f32 %v5470, %v5604
  %v5629 = vadd.f32 %v5471, %v5624
  %v5630 = vld [vmem:[%s5 + $0xc] sm:$0x7]
  %v5632 = vsel %vm1436, %v5630, 0
  %5634 = vmatpush.msra.mxu0 0.0
  %5635 = vmatpush.msra.mxu0 0.0
  %5636 = vmatpush.msra.mxu0 0.0
  %5637 = vmatpush.msra.mxu0 0.0
  %5638 = vmatpush.msra.mxu0 0.0
  %5639 = vmatpush.msra.mxu0 0.0
  %5640 = vmatpush.msra.mxu0 0.0
  %5641 = vmatpush.msra.mxu0 0.0
  %5642 = vmatpush.msra.mxu0 0.0
  %5643 = vmatpush.msra.mxu0 0.0
  %5644 = vmatpush.msra.mxu0 0.0
  %5645 = vmatpush.msra.mxu0 0.0
  %5646 = vmatpush.msra.mxu0 %v3669
  %5647 = vmatpush.msra.mxu0 %v3665
  %5648 = vmatpush.msra.mxu0 %v3661
  %5649 = vmatpush.msra.mxu0 %v3657
  %5650 = vmatmul.f32.gmra.mxu0 %v5632
  %v5651 = vpop.f32.mrf.mxu0
  %v5652 = vadd.f32 0.0, %v5651
  %5653 = vdwg.mxu0
  %5654 = vmatpush.msra.mxu0 0.0
  %5655 = vmatpush.msra.mxu0 0.0
  %5656 = vmatpush.msra.mxu0 0.0
  %5657 = vmatpush.msra.mxu0 0.0
  %5658 = vmatpush.msra.mxu0 0.0
  %5659 = vmatpush.msra.mxu0 0.0
  %5660 = vmatpush.msra.mxu0 0.0
  %5661 = vmatpush.msra.mxu0 0.0
  %5662 = vmatpush.msra.mxu0 0.0
  %5663 = vmatpush.msra.mxu0 0.0
  %5664 = vmatpush.msra.mxu0 0.0
  %5665 = vmatpush.msra.mxu0 0.0
  %5666 = vmatpush.msra.mxu0 %v3670
  %5667 = vmatpush.msra.mxu0 %v3666
  %5668 = vmatpush.msra.mxu0 %v3662
  %5669 = vmatpush.msra.mxu0 %v3658
  %5670 = vmatmul.f32.gmra.mxu0 %v5632
  %v5671 = vpop.f32.mrf.mxu0
  %v5672 = vadd.f32 0.0, %v5671
  %5673 = vdwg.mxu0
  %5674 = vmatpush.msra.mxu0 0.0
  %5675 = vmatpush.msra.mxu0 0.0
  %5676 = vmatpush.msra.mxu0 0.0
  %5677 = vmatpush.msra.mxu0 0.0
  %5678 = vmatpush.msra.mxu0 0.0
  %5679 = vmatpush.msra.mxu0 0.0
  %5680 = vmatpush.msra.mxu0 0.0
  %5681 = vmatpush.msra.mxu0 0.0
  %5682 = vmatpush.msra.mxu0 0.0
  %5683 = vmatpush.msra.mxu0 0.0
  %5684 = vmatpush.msra.mxu0 0.0
  %5685 = vmatpush.msra.mxu0 0.0
  %5686 = vmatpush.msra.mxu0 %v3671
  %5687 = vmatpush.msra.mxu0 %v3667
  %5688 = vmatpush.msra.mxu0 %v3663
  %5689 = vmatpush.msra.mxu0 %v3659
  %5690 = vmatmul.f32.gmra.mxu0 %v5632
  %v5691 = vpop.f32.mrf.mxu0
  %v5692 = vadd.f32 0.0, %v5691
  %5693 = vdwg.mxu0
  %5694 = vmatpush.msra.mxu0 0.0
  %5695 = vmatpush.msra.mxu0 0.0
  %5696 = vmatpush.msra.mxu0 0.0
  %5697 = vmatpush.msra.mxu0 0.0
  %5698 = vmatpush.msra.mxu0 0.0
  %5699 = vmatpush.msra.mxu0 0.0
  %5700 = vmatpush.msra.mxu0 0.0
  %5701 = vmatpush.msra.mxu0 0.0
  %5702 = vmatpush.msra.mxu0 0.0
  %5703 = vmatpush.msra.mxu0 0.0
  %5704 = vmatpush.msra.mxu0 0.0
  %5705 = vmatpush.msra.mxu0 0.0
  %5706 = vmatpush.msra.mxu0 %v3672
  %5707 = vmatpush.msra.mxu0 %v3668
  %5708 = vmatpush.msra.mxu0 %v3664
  %5709 = vmatpush.msra.mxu0 %v3660
  %5710 = vmatmul.f32.gmra.mxu0 %v5632
  %v5711 = vpop.f32.mrf.mxu0
  %v5712 = vadd.f32 0.0, %v5711
  %5713 = vdwg.mxu0
  %v5714 = vadd.f32 %v5626, %v5652
  %v5715 = vadd.f32 %v5627, %v5672
  %v5716 = vadd.f32 %v5628, %v5692
  %v5717 = vadd.f32 %v5629, %v5712
  %5718 = vrot.lane.b32.xlu0 %v3657, 112
  %v5719 = vpop.permute.xlu0 %5718
  %5720 = vrot.lane.b32.xlu0 %v3658, 112
  %v5721 = vpop.permute.xlu0 %5720
  %5722 = vrot.lane.b32.xlu0 0.0, 112
  %v5723 = vpop.permute.xlu0 %5722
  %5724 = vrot.lane.b32.xlu0 %v3661, 112
  %v5725 = vpop.permute.xlu0 %5724
  %5726 = vrot.lane.b32.xlu0 %v3662, 112
  %v5727 = vpop.permute.xlu0 %5726
  %5728 = vrot.lane.b32.xlu0 %v3665, 112
  %v5729 = vpop.permute.xlu0 %5728
  %5730 = vrot.lane.b32.xlu0 %v3666, 112
  %v5731 = vpop.permute.xlu0 %5730
  %5732 = vrot.lane.b32.xlu0 %v3669, 112
  %v5733 = vpop.permute.xlu0 %5732
  %5734 = vrot.lane.b32.xlu0 %v3670, 112
  %v5735 = vpop.permute.xlu0 %5734
  %v5736 = vsel %vm1536, %v5719, %v5721
  %v5737 = vsel %vm1536, %v5721, %v5723
  %v5738 = vsel %vm1536, %v5725, %v5727
  %v5739 = vsel %vm1536, %v5727, %v5723
  %v5740 = vsel %vm1536, %v5729, %v5731
  %v5741 = vsel %vm1536, %v5731, %v5723
  %v5742 = vsel %vm1536, %v5733, %v5735
  %v5743 = vsel %vm1536, %v5735, %v5723
  %5752 = vrot.lane.b32.xlu0 %v3659, 112
  %v5753 = vpop.permute.xlu0 %5752
  %5754 = vrot.lane.b32.xlu0 %v3660, 112
  %v5755 = vpop.permute.xlu0 %5754
  %5756 = vrot.lane.b32.xlu0 %v3663, 112
  %v5757 = vpop.permute.xlu0 %5756
  %5758 = vrot.lane.b32.xlu0 %v3664, 112
  %v5759 = vpop.permute.xlu0 %5758
  %5760 = vrot.lane.b32.xlu0 %v3667, 112
  %v5761 = vpop.permute.xlu0 %5760
  %5762 = vrot.lane.b32.xlu0 %v3668, 112
  %v5763 = vpop.permute.xlu0 %5762
  %5764 = vrot.lane.b32.xlu0 %v3671, 112
  %v5765 = vpop.permute.xlu0 %5764
  %5766 = vrot.lane.b32.xlu0 %v3672, 112
  %v5767 = vpop.permute.xlu0 %5766
  %v5768 = vsel %vm1536, %v5753, %v5755
  %v5769 = vsel %vm1536, %v5755, %v5723
  %v5770 = vsel %vm1536, %v5757, %v5759
  %v5771 = vsel %vm1536, %v5759, %v5723
  %v5772 = vsel %vm1536, %v5761, %v5763
  %v5773 = vsel %vm1536, %v5763, %v5723
  %v5774 = vsel %vm1536, %v5765, %v5767
  %v5775 = vsel %vm1536, %v5767, %v5723
  %v5784 = vld [vmem:[%s5 + $0x10] sm:$0x7]
  %5786 = vst [vmem:[#allocation1] ss:$2 sm:$0xff] %v5784
  %v5787 = vld.sshfl [vmem:[#allocation1] sm:$0xff pattern:$0x75316420]
  %5788 = vrot.lane.b32.xlu0 %v5787, 96
  %v5789 = vpop.permute.xlu0 %5788
  %v5790 = vsel %vm1436, %v5789, 0
  %5792 = vmatpush.msra.mxu0 0.0
  %5793 = vmatpush.msra.mxu0 0.0
  %5794 = vmatpush.msra.mxu0 0.0
  %5795 = vmatpush.msra.mxu0 0.0
  %5796 = vmatpush.msra.mxu0 0.0
  %5797 = vmatpush.msra.mxu0 0.0
  %5798 = vmatpush.msra.mxu0 0.0
  %5799 = vmatpush.msra.mxu0 0.0
  %5800 = vmatpush.msra.mxu0 0.0
  %5801 = vmatpush.msra.mxu0 0.0
  %5802 = vmatpush.msra.mxu0 0.0
  %5803 = vmatpush.msra.mxu0 0.0
  %5804 = vmatpush.msra.mxu0 %v5742
  %5805 = vmatpush.msra.mxu0 %v5740
  %5806 = vmatpush.msra.mxu0 %v5738
  %5807 = vmatpush.msra.mxu0 %v5736
  %5808 = vmatmul.f32.gmra.mxu0 %v5790
  %v5809 = vpop.f32.mrf.mxu0
  %v5810 = vadd.f32 0.0, %v5809
  %5811 = vdwg.mxu0
  %5812 = vmatpush.msra.mxu0 0.0
  %5813 = vmatpush.msra.mxu0 0.0
  %5814 = vmatpush.msra.mxu0 0.0
  %5815 = vmatpush.msra.mxu0 0.0
  %5816 = vmatpush.msra.mxu0 0.0
  %5817 = vmatpush.msra.mxu0 0.0
  %5818 = vmatpush.msra.mxu0 0.0
  %5819 = vmatpush.msra.mxu0 0.0
  %5820 = vmatpush.msra.mxu0 0.0
  %5821 = vmatpush.msra.mxu0 0.0
  %5822 = vmatpush.msra.mxu0 0.0
  %5823 = vmatpush.msra.mxu0 0.0
  %5824 = vmatpush.msra.mxu0 %v5743
  %5825 = vmatpush.msra.mxu0 %v5741
  %5826 = vmatpush.msra.mxu0 %v5739
  %5827 = vmatpush.msra.mxu0 %v5737
  %5828 = vmatmul.f32.gmra.mxu0 %v5790
  %v5829 = vpop.f32.mrf.mxu0
  %v5830 = vadd.f32 0.0, %v5829
  %5831 = vdwg.mxu0
  %5832 = vmatpush.msra.mxu0 0.0
  %5833 = vmatpush.msra.mxu0 0.0
  %5834 = vmatpush.msra.mxu0 0.0
  %5835 = vmatpush.msra.mxu0 0.0
  %5836 = vmatpush.msra.mxu0 0.0
  %5837 = vmatpush.msra.mxu0 0.0
  %5838 = vmatpush.msra.mxu0 0.0
  %5839 = vmatpush.msra.mxu0 0.0
  %5840 = vmatpush.msra.mxu0 0.0
  %5841 = vmatpush.msra.mxu0 0.0
  %5842 = vmatpush.msra.mxu0 0.0
  %5843 = vmatpush.msra.mxu0 0.0
  %5844 = vmatpush.msra.mxu0 %v5774
  %5845 = vmatpush.msra.mxu0 %v5772
  %5846 = vmatpush.msra.mxu0 %v5770
  %5847 = vmatpush.msra.mxu0 %v5768
  %5848 = vmatmul.f32.gmra.mxu0 %v5790
  %v5849 = vpop.f32.mrf.mxu0
  %v5850 = vadd.f32 0.0, %v5849
  %5851 = vdwg.mxu0
  %5852 = vmatpush.msra.mxu0 0.0
  %5853 = vmatpush.msra.mxu0 0.0
  %5854 = vmatpush.msra.mxu0 0.0
  %5855 = vmatpush.msra.mxu0 0.0
  %5856 = vmatpush.msra.mxu0 0.0
  %5857 = vmatpush.msra.mxu0 0.0
  %5858 = vmatpush.msra.mxu0 0.0
  %5859 = vmatpush.msra.mxu0 0.0
  %5860 = vmatpush.msra.mxu0 0.0
  %5861 = vmatpush.msra.mxu0 0.0
  %5862 = vmatpush.msra.mxu0 0.0
  %5863 = vmatpush.msra.mxu0 0.0
  %5864 = vmatpush.msra.mxu0 %v5775
  %5865 = vmatpush.msra.mxu0 %v5773
  %5866 = vmatpush.msra.mxu0 %v5771
  %5867 = vmatpush.msra.mxu0 %v5769
  %5868 = vmatmul.f32.gmra.mxu0 %v5790
  %v5869 = vpop.f32.mrf.mxu0
  %v5870 = vadd.f32 0.0, %v5869
  %5871 = vdwg.mxu0
  %v5872 = vadd.f32 %v5714, %v5810
  %v5873 = vadd.f32 %v5715, %v5830
  %v5874 = vadd.f32 %v5716, %v5850
  %v5875 = vadd.f32 %v5717, %v5870
  %5876 = vrot.lane.b32.xlu0 %v3657, 96
  %v5877 = vpop.permute.xlu0 %5876
  %5878 = vrot.lane.b32.xlu0 %v3658, 96
  %v5879 = vpop.permute.xlu0 %5878
  %5880 = vrot.lane.b32.xlu0 0.0, 96
  %v5881 = vpop.permute.xlu0 %5880
  %5882 = vrot.lane.b32.xlu0 %v3661, 96
  %v5883 = vpop.permute.xlu0 %5882
  %5884 = vrot.lane.b32.xlu0 %v3662, 96
  %v5885 = vpop.permute.xlu0 %5884
  %5886 = vrot.lane.b32.xlu0 %v3665, 96
  %v5887 = vpop.permute.xlu0 %5886
  %5888 = vrot.lane.b32.xlu0 %v3666, 96
  %v5889 = vpop.permute.xlu0 %5888
  %5890 = vrot.lane.b32.xlu0 %v3669, 96
  %v5891 = vpop.permute.xlu0 %5890
  %5892 = vrot.lane.b32.xlu0 %v3670, 96
  %v5893 = vpop.permute.xlu0 %5892
  %v5894 = vsel %vm1577, %v5877, %v5879
  %v5895 = vsel %vm1577, %v5879, %v5881
  %v5896 = vsel %vm1577, %v5883, %v5885
  %v5897 = vsel %vm1577, %v5885, %v5881
  %v5898 = vsel %vm1577, %v5887, %v5889
  %v5899 = vsel %vm1577, %v5889, %v5881
  %v5900 = vsel %vm1577, %v5891, %v5893
  %v5901 = vsel %vm1577, %v5893, %v5881
  %5910 = vrot.lane.b32.xlu0 %v3659, 96
  %v5911 = vpop.permute.xlu0 %5910
  %5912 = vrot.lane.b32.xlu0 %v3660, 96
  %v5913 = vpop.permute.xlu0 %5912
  %5914 = vrot.lane.b32.xlu0 %v3663, 96
  %v5915 = vpop.permute.xlu0 %5914
  %5916 = vrot.lane.b32.xlu0 %v3664, 96
  %v5917 = vpop.permute.xlu0 %5916
  %5918 = vrot.lane.b32.xlu0 %v3667, 96
  %v5919 = vpop.permute.xlu0 %5918
  %5920 = vrot.lane.b32.xlu0 %v3668, 96
  %v5921 = vpop.permute.xlu0 %5920
  %5922 = vrot.lane.b32.xlu0 %v3671, 96
  %v5923 = vpop.permute.xlu0 %5922
  %5924 = vrot.lane.b32.xlu0 %v3672, 96
  %v5925 = vpop.permute.xlu0 %5924
  %v5926 = vsel %vm1577, %v5911, %v5913
  %v5927 = vsel %vm1577, %v5913, %v5881
  %v5928 = vsel %vm1577, %v5915, %v5917
  %v5929 = vsel %vm1577, %v5917, %v5881
  %v5930 = vsel %vm1577, %v5919, %v5921
  %v5931 = vsel %vm1577, %v5921, %v5881
  %v5932 = vsel %vm1577, %v5923, %v5925
  %v5933 = vsel %vm1577, %v5925, %v5881
  %v5942 = vld [vmem:[%s5 + $0x14] sm:$0x7]
  %5944 = vst [vmem:[#allocation1] ss:$2 sm:$0xff] %v5942
  %v5945 = vld.sshfl [vmem:[#allocation1] sm:$0xff pattern:$0x75316420]
  %5946 = vrot.lane.b32.xlu0 %v5945, 64
  %v5947 = vpop.permute.xlu0 %5946
  %v5948 = vsel %vm1436, %v5947, 0
  %5950 = vmatpush.msra.mxu0 0.0
  %5951 = vmatpush.msra.mxu0 0.0
  %5952 = vmatpush.msra.mxu0 0.0
  %5953 = vmatpush.msra.mxu0 0.0
  %5954 = vmatpush.msra.mxu0 0.0
  %5955 = vmatpush.msra.mxu0 0.0
  %5956 = vmatpush.msra.mxu0 0.0
  %5957 = vmatpush.msra.mxu0 0.0
  %5958 = vmatpush.msra.mxu0 0.0
  %5959 = vmatpush.msra.mxu0 0.0
  %5960 = vmatpush.msra.mxu0 0.0
  %5961 = vmatpush.msra.mxu0 0.0
  %5962 = vmatpush.msra.mxu0 %v5900
  %5963 = vmatpush.msra.mxu0 %v5898
  %5964 = vmatpush.msra.mxu0 %v5896
  %5965 = vmatpush.msra.mxu0 %v5894
  %5966 = vmatmul.f32.gmra.mxu0 %v5948
  %v5967 = vpop.f32.mrf.mxu0
  %v5968 = vadd.f32 0.0, %v5967
  %5969 = vdwg.mxu0
  %5970 = vmatpush.msra.mxu0 0.0
  %5971 = vmatpush.msra.mxu0 0.0
  %5972 = vmatpush.msra.mxu0 0.0
  %5973 = vmatpush.msra.mxu0 0.0
  %5974 = vmatpush.msra.mxu0 0.0
  %5975 = vmatpush.msra.mxu0 0.0
  %5976 = vmatpush.msra.mxu0 0.0
  %5977 = vmatpush.msra.mxu0 0.0
  %5978 = vmatpush.msra.mxu0 0.0
  %5979 = vmatpush.msra.mxu0 0.0
  %5980 = vmatpush.msra.mxu0 0.0
  %5981 = vmatpush.msra.mxu0 0.0
  %5982 = vmatpush.msra.mxu0 %v5901
  %5983 = vmatpush.msra.mxu0 %v5899
  %5984 = vmatpush.msra.mxu0 %v5897
  %5985 = vmatpush.msra.mxu0 %v5895
  %5986 = vmatmul.f32.gmra.mxu0 %v5948
  %v5987 = vpop.f32.mrf.mxu0
  %v5988 = vadd.f32 0.0, %v5987
  %5989 = vdwg.mxu0
  %5990 = vmatpush.msra.mxu0 0.0
  %5991 = vmatpush.msra.mxu0 0.0
  %5992 = vmatpush.msra.mxu0 0.0
  %5993 = vmatpush.msra.mxu0 0.0
  %5994 = vmatpush.msra.mxu0 0.0
  %5995 = vmatpush.msra.mxu0 0.0
  %5996 = vmatpush.msra.mxu0 0.0
  %5997 = vmatpush.msra.mxu0 0.0
  %5998 = vmatpush.msra.mxu0 0.0
  %5999 = vmatpush.msra.mxu0 0.0
  %6000 = vmatpush.msra.mxu0 0.0
  %6001 = vmatpush.msra.mxu0 0.0
  %6002 = vmatpush.msra.mxu0 %v5932
  %6003 = vmatpush.msra.mxu0 %v5930
  %6004 = vmatpush.msra.mxu0 %v5928
  %6005 = vmatpush.msra.mxu0 %v5926
  %6006 = vmatmul.f32.gmra.mxu0 %v5948
  %v6007 = vpop.f32.mrf.mxu0
  %v6008 = vadd.f32 0.0, %v6007
  %6009 = vdwg.mxu0
  %6010 = vmatpush.msra.mxu0 0.0
  %6011 = vmatpush.msra.mxu0 0.0
  %6012 = vmatpush.msra.mxu0 0.0
  %6013 = vmatpush.msra.mxu0 0.0
  %6014 = vmatpush.msra.mxu0 0.0
  %6015 = vmatpush.msra.mxu0 0.0
  %6016 = vmatpush.msra.mxu0 0.0
  %6017 = vmatpush.msra.mxu0 0.0
  %6018 = vmatpush.msra.mxu0 0.0
  %6019 = vmatpush.msra.mxu0 0.0
  %6020 = vmatpush.msra.mxu0 0.0
  %6021 = vmatpush.msra.mxu0 0.0
  %6022 = vmatpush.msra.mxu0 %v5933
  %6023 = vmatpush.msra.mxu0 %v5931
  %6024 = vmatpush.msra.mxu0 %v5929
  %6025 = vmatpush.msra.mxu0 %v5927
  %6026 = vmatmul.f32.gmra.mxu0 %v5948
  %v6027 = vpop.f32.mrf.mxu0
  %v6028 = vadd.f32 0.0, %v6027
  %6029 = vdwg.mxu0
  %v6030 = vadd.f32 %v5872, %v5968
  %v6031 = vadd.f32 %v5873, %v5988
  %v6032 = vadd.f32 %v5874, %v6008
  %v6033 = vadd.f32 %v5875, %v6028
  %v6034 = vsel %vm1712, %v3657, 0.0
  %v6035 = vsel %vm1713, %v3658, 0.0
  %v6036 = vsel %vm1712, %v3661, 0.0
  %v6037 = vsel %vm1713, %v3662, 0.0
  %v6038 = vsel %vm1712, %v3665, 0.0
  %v6039 = vsel %vm1713, %v3666, 0.0
  %v6040 = vsel %vm1712, %v3669, 0.0
  %v6041 = vsel %vm1713, %v3670, 0.0
  %v6042 = vsel %vm1712, %v3659, 0.0
  %v6043 = vsel %vm1713, %v3660, 0.0
  %v6044 = vsel %vm1712, %v3663, 0.0
  %v6045 = vsel %vm1713, %v3664, 0.0
  %v6046 = vsel %vm1712, %v3667, 0.0
  %v6047 = vsel %vm1713, %v3668, 0.0
  %v6048 = vsel %vm1712, %v3671, 0.0
  %v6049 = vsel %vm1713, %v3672, 0.0
  %6058 = vrot.lane.b32.xlu0 0.0, 31
  %v6059 = vpop.permute.xlu0 %6058
  %6060 = vrot.lane.b32.xlu0 %v6034, 31
  %v6061 = vpop.permute.xlu0 %6060
  %6062 = vrot.lane.b32.xlu0 %v6035, 31
  %v6063 = vpop.permute.xlu0 %6062
  %6064 = vrot.lane.b32.xlu0 %v6036, 31
  %v6065 = vpop.permute.xlu0 %6064
  %6066 = vrot.lane.b32.xlu0 %v6037, 31
  %v6067 = vpop.permute.xlu0 %6066
  %6068 = vrot.lane.b32.xlu0 %v6038, 31
  %v6069 = vpop.permute.xlu0 %6068
  %6070 = vrot.lane.b32.xlu0 %v6039, 31
  %v6071 = vpop.permute.xlu0 %6070
  %6072 = vrot.lane.b32.xlu0 %v6040, 31
  %v6073 = vpop.permute.xlu0 %6072
  %6074 = vrot.lane.b32.xlu0 %v6041, 31
  %v6075 = vpop.permute.xlu0 %6074
  %v6076 = vsel %vm1819, %v6059, %v6061
  %v6077 = vsel %vm1819, %v6061, %v6063
  %v6078 = vsel %vm1819, %v6059, %v6065
  %v6079 = vsel %vm1819, %v6065, %v6067
  %v6080 = vsel %vm1819, %v6059, %v6069
  %v6081 = vsel %vm1819, %v6069, %v6071
  %v6082 = vsel %vm1819, %v6059, %v6073
  %v6083 = vsel %vm1819, %v6073, %v6075
  %6100 = vrot.lane.b32.xlu0 %v6042, 31
  %v6101 = vpop.permute.xlu0 %6100
  %6102 = vrot.lane.b32.xlu0 %v6043, 31
  %v6103 = vpop.permute.xlu0 %6102
  %6104 = vrot.lane.b32.xlu0 %v6044, 31
  %v6105 = vpop.permute.xlu0 %6104
  %6106 = vrot.lane.b32.xlu0 %v6045, 31
  %v6107 = vpop.permute.xlu0 %6106
  %6108 = vrot.lane.b32.xlu0 %v6046, 31
  %v6109 = vpop.permute.xlu0 %6108
  %6110 = vrot.lane.b32.xlu0 %v6047, 31
  %v6111 = vpop.permute.xlu0 %6110
  %6112 = vrot.lane.b32.xlu0 %v6048, 31
  %v6113 = vpop.permute.xlu0 %6112
  %6114 = vrot.lane.b32.xlu0 %v6049, 31
  %v6115 = vpop.permute.xlu0 %6114
  %v6116 = vsel %vm1819, %v6059, %v6101
  %v6117 = vsel %vm1819, %v6101, %v6103
  %v6118 = vsel %vm1819, %v6059, %v6105
  %v6119 = vsel %vm1819, %v6105, %v6107
  %v6120 = vsel %vm1819, %v6059, %v6109
  %v6121 = vsel %vm1819, %v6109, %v6111
  %v6122 = vsel %vm1819, %v6059, %v6113
  %v6123 = vsel %vm1819, %v6113, %v6115
  %v6132 = vld [vmem:[%s5] sm:$0x7]
  %6134 = vst [vmem:[#allocation1] ss:$2 sm:$0xff] %v6132
  %v6135 = vld.sshfl [vmem:[#allocation1] sm:$0xff pattern:$0x75316420]
  %6136 = vrot.lane.b32.xlu0 %v6135, 32
  %v6137 = vpop.permute.xlu0 %6136
  %v6138 = vsel %vm1436, %v6137, 0
  %6140 = vmatpush.msra.mxu0 0.0
  %6141 = vmatpush.msra.mxu0 0.0
  %6142 = vmatpush.msra.mxu0 0.0
  %6143 = vmatpush.msra.mxu0 0.0
  %6144 = vmatpush.msra.mxu0 0.0
  %6145 = vmatpush.msra.mxu0 0.0
  %6146 = vmatpush.msra.mxu0 0.0
  %6147 = vmatpush.msra.mxu0 0.0
  %6148 = vmatpush.msra.mxu0 0.0
  %6149 = vmatpush.msra.mxu0 0.0
  %6150 = vmatpush.msra.mxu0 0.0
  %6151 = vmatpush.msra.mxu0 0.0
  %6152 = vmatpush.msra.mxu0 %v6082
  %6153 = vmatpush.msra.mxu0 %v6080
  %6154 = vmatpush.msra.mxu0 %v6078
  %6155 = vmatpush.msra.mxu0 %v6076
  %6156 = vmatmul.f32.gmra.mxu0 %v6138
  %v6157 = vpop.f32.mrf.mxu0
  %v6158 = vadd.f32 0.0, %v6157
  %6159 = vdwg.mxu0
  %6160 = vmatpush.msra.mxu0 0.0
  %6161 = vmatpush.msra.mxu0 0.0
  %6162 = vmatpush.msra.mxu0 0.0
  %6163 = vmatpush.msra.mxu0 0.0
  %6164 = vmatpush.msra.mxu0 0.0
  %6165 = vmatpush.msra.mxu0 0.0
  %6166 = vmatpush.msra.mxu0 0.0
  %6167 = vmatpush.msra.mxu0 0.0
  %6168 = vmatpush.msra.mxu0 0.0
  %6169 = vmatpush.msra.mxu0 0.0
  %6170 = vmatpush.msra.mxu0 0.0
  %6171 = vmatpush.msra.mxu0 0.0
  %6172 = vmatpush.msra.mxu0 %v6083
  %6173 = vmatpush.msra.mxu0 %v6081
  %6174 = vmatpush.msra.mxu0 %v6079
  %6175 = vmatpush.msra.mxu0 %v6077
  %6176 = vmatmul.f32.gmra.mxu0 %v6138
  %v6177 = vpop.f32.mrf.mxu0
  %v6178 = vadd.f32 0.0, %v6177
  %6179 = vdwg.mxu0
  %6180 = vmatpush.msra.mxu0 0.0
  %6181 = vmatpush.msra.mxu0 0.0
  %6182 = vmatpush.msra.mxu0 0.0
  %6183 = vmatpush.msra.mxu0 0.0
  %6184 = vmatpush.msra.mxu0 0.0
  %6185 = vmatpush.msra.mxu0 0.0
  %6186 = vmatpush.msra.mxu0 0.0
  %6187 = vmatpush.msra.mxu0 0.0
  %6188 = vmatpush.msra.mxu0 0.0
  %6189 = vmatpush.msra.mxu0 0.0
  %6190 = vmatpush.msra.mxu0 0.0
  %6191 = vmatpush.msra.mxu0 0.0
  %6192 = vmatpush.msra.mxu0 %v6122
  %6193 = vmatpush.msra.mxu0 %v6120
  %6194 = vmatpush.msra.mxu0 %v6118
  %6195 = vmatpush.msra.mxu0 %v6116
  %6196 = vmatmul.f32.gmra.mxu0 %v6138
  %v6197 = vpop.f32.mrf.mxu0
  %v6198 = vadd.f32 0.0, %v6197
  %6199 = vdwg.mxu0
  %6200 = vmatpush.msra.mxu0 0.0
  %6201 = vmatpush.msra.mxu0 0.0
  %6202 = vmatpush.msra.mxu0 0.0
  %6203 = vmatpush.msra.mxu0 0.0
  %6204 = vmatpush.msra.mxu0 0.0
  %6205 = vmatpush.msra.mxu0 0.0
  %6206 = vmatpush.msra.mxu0 0.0
  %6207 = vmatpush.msra.mxu0 0.0
  %6208 = vmatpush.msra.mxu0 0.0
  %6209 = vmatpush.msra.mxu0 0.0
  %6210 = vmatpush.msra.mxu0 0.0
  %6211 = vmatpush.msra.mxu0 0.0
  %6212 = vmatpush.msra.mxu0 %v6123
  %6213 = vmatpush.msra.mxu0 %v6121
  %6214 = vmatpush.msra.mxu0 %v6119
  %6215 = vmatpush.msra.mxu0 %v6117
  %6216 = vmatmul.f32.gmra.mxu0 %v6138
  %v6217 = vpop.f32.mrf.mxu0
  %v6218 = vadd.f32 0.0, %v6217
  %6219 = vdwg.mxu0
  %v6220 = vadd.f32 %v6030, %v6158
  %v6221 = vadd.f32 %v6031, %v6178
  %v6222 = vadd.f32 %v6032, %v6198
  %v6223 = vadd.f32 %v6033, %v6218
  %6224 = vrot.lane.b32.xlu0 0.0, 15
  %v6225 = vpop.permute.xlu0 %6224
  %6226 = vrot.lane.b32.xlu0 %v6034, 15
  %v6227 = vpop.permute.xlu0 %6226
  %6228 = vrot.lane.b32.xlu0 %v6035, 15
  %v6229 = vpop.permute.xlu0 %6228
  %6230 = vrot.lane.b32.xlu0 %v6036, 15
  %v6231 = vpop.permute.xlu0 %6230
  %6232 = vrot.lane.b32.xlu0 %v6037, 15
  %v6233 = vpop.permute.xlu0 %6232
  %6234 = vrot.lane.b32.xlu0 %v6038, 15
  %v6235 = vpop.permute.xlu0 %6234
  %6236 = vrot.lane.b32.xlu0 %v6039, 15
  %v6237 = vpop.permute.xlu0 %6236
  %6238 = vrot.lane.b32.xlu0 %v6040, 15
  %v6239 = vpop.permute.xlu0 %6238
  %6240 = vrot.lane.b32.xlu0 %v6041, 15
  %v6241 = vpop.permute.xlu0 %6240
  %v6242 = vsel %vm1848, %v6225, %v6227
  %v6243 = vsel %vm1848, %v6227, %v6229
  %v6244 = vsel %vm1848, %v6225, %v6231
  %v6245 = vsel %vm1848, %v6231, %v6233
  %v6246 = vsel %vm1848, %v6225, %v6235
  %v6247 = vsel %vm1848, %v6235, %v6237
  %v6248 = vsel %vm1848, %v6225, %v6239
  %v6249 = vsel %vm1848, %v6239, %v6241
  %6258 = vrot.lane.b32.xlu0 %v6042, 15
  %v6259 = vpop.permute.xlu0 %6258
  %6260 = vrot.lane.b32.xlu0 %v6043, 15
  %v6261 = vpop.permute.xlu0 %6260
  %6262 = vrot.lane.b32.xlu0 %v6044, 15
  %v6263 = vpop.permute.xlu0 %6262
  %6264 = vrot.lane.b32.xlu0 %v6045, 15
  %v6265 = vpop.permute.xlu0 %6264
  %6266 = vrot.lane.b32.xlu0 %v6046, 15
  %v6267 = vpop.permute.xlu0 %6266
  %6268 = vrot.lane.b32.xlu0 %v6047, 15
  %v6269 = vpop.permute.xlu0 %6268
  %6270 = vrot.lane.b32.xlu0 %v6048, 15
  %v6271 = vpop.permute.xlu0 %6270
  %6272 = vrot.lane.b32.xlu0 %v6049, 15
  %v6273 = vpop.permute.xlu0 %6272
  %v6274 = vsel %vm1848, %v6225, %v6259
  %v6275 = vsel %vm1848, %v6259, %v6261
  %v6276 = vsel %vm1848, %v6225, %v6263
  %v6277 = vsel %vm1848, %v6263, %v6265
  %v6278 = vsel %vm1848, %v6225, %v6267
  %v6279 = vsel %vm1848, %v6267, %v6269
  %v6280 = vsel %vm1848, %v6225, %v6271
  %v6281 = vsel %vm1848, %v6271, %v6273
  %v6290 = vld [vmem:[%s5 + $0x8] sm:$0x7]
  %v6292 = vsel %vm1436, %v6290, 0
  %6294 = vmatpush.msra.mxu0 0.0
  %6295 = vmatpush.msra.mxu0 0.0
  %6296 = vmatpush.msra.mxu0 0.0
  %6297 = vmatpush.msra.mxu0 0.0
  %6298 = vmatpush.msra.mxu0 0.0
  %6299 = vmatpush.msra.mxu0 0.0
  %6300 = vmatpush.msra.mxu0 0.0
  %6301 = vmatpush.msra.mxu0 0.0
  %6302 = vmatpush.msra.mxu0 0.0
  %6303 = vmatpush.msra.mxu0 0.0
  %6304 = vmatpush.msra.mxu0 0.0
  %6305 = vmatpush.msra.mxu0 0.0
  %6306 = vmatpush.msra.mxu0 %v6248
  %6307 = vmatpush.msra.mxu0 %v6246
  %6308 = vmatpush.msra.mxu0 %v6244
  %6309 = vmatpush.msra.mxu0 %v6242
  %6310 = vmatmul.f32.gmra.mxu0 %v6292
  %v6311 = vpop.f32.mrf.mxu0
  %v6312 = vadd.f32 0.0, %v6311
  %6313 = vdwg.mxu0
  %6314 = vmatpush.msra.mxu0 0.0
  %6315 = vmatpush.msra.mxu0 0.0
  %6316 = vmatpush.msra.mxu0 0.0
  %6317 = vmatpush.msra.mxu0 0.0
  %6318 = vmatpush.msra.mxu0 0.0
  %6319 = vmatpush.msra.mxu0 0.0
  %6320 = vmatpush.msra.mxu0 0.0
  %6321 = vmatpush.msra.mxu0 0.0
  %6322 = vmatpush.msra.mxu0 0.0
  %6323 = vmatpush.msra.mxu0 0.0
  %6324 = vmatpush.msra.mxu0 0.0
  %6325 = vmatpush.msra.mxu0 0.0
  %6326 = vmatpush.msra.mxu0 %v6249
  %6327 = vmatpush.msra.mxu0 %v6247
  %6328 = vmatpush.msra.mxu0 %v6245
  %6329 = vmatpush.msra.mxu0 %v6243
  %6330 = vmatmul.f32.gmra.mxu0 %v6292
  %v6331 = vpop.f32.mrf.mxu0
  %v6332 = vadd.f32 0.0, %v6331
  %6333 = vdwg.mxu0
  %6334 = vmatpush.msra.mxu0 0.0
  %6335 = vmatpush.msra.mxu0 0.0
  %6336 = vmatpush.msra.mxu0 0.0
  %6337 = vmatpush.msra.mxu0 0.0
  %6338 = vmatpush.msra.mxu0 0.0
  %6339 = vmatpush.msra.mxu0 0.0
  %6340 = vmatpush.msra.mxu0 0.0
  %6341 = vmatpush.msra.mxu0 0.0
  %6342 = vmatpush.msra.mxu0 0.0
  %6343 = vmatpush.msra.mxu0 0.0
  %6344 = vmatpush.msra.mxu0 0.0
  %6345 = vmatpush.msra.mxu0 0.0
  %6346 = vmatpush.msra.mxu0 %v6280
  %6347 = vmatpush.msra.mxu0 %v6278
  %6348 = vmatpush.msra.mxu0 %v6276
  %6349 = vmatpush.msra.mxu0 %v6274
  %6350 = vmatmul.f32.gmra.mxu0 %v6292
  %v6351 = vpop.f32.mrf.mxu0
  %v6352 = vadd.f32 0.0, %v6351
  %6353 = vdwg.mxu0
  %6354 = vmatpush.msra.mxu0 0.0
  %6355 = vmatpush.msra.mxu0 0.0
  %6356 = vmatpush.msra.mxu0 0.0
  %6357 = vmatpush.msra.mxu0 0.0
  %6358 = vmatpush.msra.mxu0 0.0
  %6359 = vmatpush.msra.mxu0 0.0
  %6360 = vmatpush.msra.mxu0 0.0
  %6361 = vmatpush.msra.mxu0 0.0
  %6362 = vmatpush.msra.mxu0 0.0
  %6363 = vmatpush.msra.mxu0 0.0
  %6364 = vmatpush.msra.mxu0 0.0
  %6365 = vmatpush.msra.mxu0 0.0
  %6366 = vmatpush.msra.mxu0 %v6281
  %6367 = vmatpush.msra.mxu0 %v6279
  %6368 = vmatpush.msra.mxu0 %v6277
  %6369 = vmatpush.msra.mxu0 %v6275
  %6370 = vmatmul.f32.gmra.mxu0 %v6292
  %v6371 = vpop.f32.mrf.mxu0
  %v6372 = vadd.f32 0.0, %v6371
  %6373 = vdwg.mxu0
  %v6374 = vadd.f32 %v6220, %v6312
  %v6375 = vadd.f32 %v6221, %v6332
  %v6376 = vadd.f32 %v6222, %v6352
  %v6377 = vadd.f32 %v6223, %v6372
  %6378 = vrot.lane.b32.xlu0 %v6034, 127
  %v6379 = vpop.permute.xlu0 %6378
  %6380 = vrot.lane.b32.xlu0 %v6035, 127
  %v6381 = vpop.permute.xlu0 %6380
  %6382 = vrot.lane.b32.xlu0 0.0, 127
  %v6383 = vpop.permute.xlu0 %6382
  %6384 = vrot.lane.b32.xlu0 %v6036, 127
  %v6385 = vpop.permute.xlu0 %6384
  %6386 = vrot.lane.b32.xlu0 %v6037, 127
  %v6387 = vpop.permute.xlu0 %6386
  %6388 = vrot.lane.b32.xlu0 %v6038, 127
  %v6389 = vpop.permute.xlu0 %6388
  %6390 = vrot.lane.b32.xlu0 %v6039, 127
  %v6391 = vpop.permute.xlu0 %6390
  %6392 = vrot.lane.b32.xlu0 %v6040, 127
  %v6393 = vpop.permute.xlu0 %6392
  %6394 = vrot.lane.b32.xlu0 %v6041, 127
  %v6395 = vpop.permute.xlu0 %6394
  %v6396 = vsel %vm1874, %v6379, %v6381
  %v6397 = vsel %vm1874, %v6381, %v6383
  %v6398 = vsel %vm1874, %v6385, %v6387
  %v6399 = vsel %vm1874, %v6387, %v6383
  %v6400 = vsel %vm1874, %v6389, %v6391
  %v6401 = vsel %vm1874, %v6391, %v6383
  %v6402 = vsel %vm1874, %v6393, %v6395
  %v6403 = vsel %vm1874, %v6395, %v6383
  %6412 = vrot.lane.b32.xlu0 %v6042, 127
  %v6413 = vpop.permute.xlu0 %6412
  %6414 = vrot.lane.b32.xlu0 %v6043, 127
  %v6415 = vpop.permute.xlu0 %6414
  %6416 = vrot.lane.b32.xlu0 %v6044, 127
  %v6417 = vpop.permute.xlu0 %6416
  %6418 = vrot.lane.b32.xlu0 %v6045, 127
  %v6419 = vpop.permute.xlu0 %6418
  %6420 = vrot.lane.b32.xlu0 %v6046, 127
  %v6421 = vpop.permute.xlu0 %6420
  %6422 = vrot.lane.b32.xlu0 %v6047, 127
  %v6423 = vpop.permute.xlu0 %6422
  %6424 = vrot.lane.b32.xlu0 %v6048, 127
  %v6425 = vpop.permute.xlu0 %6424
  %6426 = vrot.lane.b32.xlu0 %v6049, 127
  %v6427 = vpop.permute.xlu0 %6426
  %v6428 = vsel %vm1874, %v6413, %v6415
  %v6429 = vsel %vm1874, %v6415, %v6383
  %v6430 = vsel %vm1874, %v6417, %v6419
  %v6431 = vsel %vm1874, %v6419, %v6383
  %v6432 = vsel %vm1874, %v6421, %v6423
  %v6433 = vsel %vm1874, %v6423, %v6383
  %v6434 = vsel %vm1874, %v6425, %v6427
  %v6435 = vsel %vm1874, %v6427, %v6383
  %v6444 = vld [vmem:[%s5 + $0xc] sm:$0x7]
  %6446 = vst [vmem:[#allocation1] ss:$2 sm:$0xff] %v6444
  %v6447 = vld.sshfl [vmem:[#allocation1] sm:$0xff pattern:$0x75316420]
  %6448 = vrot.lane.b32.xlu0 %v6447, 96
  %v6449 = vpop.permute.xlu0 %6448
  %v6450 = vsel %vm1436, %v6449, 0
  %6452 = vmatpush.msra.mxu0 0.0
  %6453 = vmatpush.msra.mxu0 0.0
  %6454 = vmatpush.msra.mxu0 0.0
  %6455 = vmatpush.msra.mxu0 0.0
  %6456 = vmatpush.msra.mxu0 0.0
  %6457 = vmatpush.msra.mxu0 0.0
  %6458 = vmatpush.msra.mxu0 0.0
  %6459 = vmatpush.msra.mxu0 0.0
  %6460 = vmatpush.msra.mxu0 0.0
  %6461 = vmatpush.msra.mxu0 0.0
  %6462 = vmatpush.msra.mxu0 0.0
  %6463 = vmatpush.msra.mxu0 0.0
  %6464 = vmatpush.msra.mxu0 %v6402
  %6465 = vmatpush.msra.mxu0 %v6400
  %6466 = vmatpush.msra.mxu0 %v6398
  %6467 = vmatpush.msra.mxu0 %v6396
  %6468 = vmatmul.f32.gmra.mxu0 %v6450
  %v6469 = vpop.f32.mrf.mxu0
  %v6470 = vadd.f32 0.0, %v6469
  %6471 = vdwg.mxu0
  %6472 = vmatpush.msra.mxu0 0.0
  %6473 = vmatpush.msra.mxu0 0.0
  %6474 = vmatpush.msra.mxu0 0.0
  %6475 = vmatpush.msra.mxu0 0.0
  %6476 = vmatpush.msra.mxu0 0.0
  %6477 = vmatpush.msra.mxu0 0.0
  %6478 = vmatpush.msra.mxu0 0.0
  %6479 = vmatpush.msra.mxu0 0.0
  %6480 = vmatpush.msra.mxu0 0.0
  %6481 = vmatpush.msra.mxu0 0.0
  %6482 = vmatpush.msra.mxu0 0.0
  %6483 = vmatpush.msra.mxu0 0.0
  %6484 = vmatpush.msra.mxu0 %v6403
  %6485 = vmatpush.msra.mxu0 %v6401
  %6486 = vmatpush.msra.mxu0 %v6399
  %6487 = vmatpush.msra.mxu0 %v6397
  %6488 = vmatmul.f32.gmra.mxu0 %v6450
  %v6489 = vpop.f32.mrf.mxu0
  %v6490 = vadd.f32 0.0, %v6489
  %6491 = vdwg.mxu0
  %6492 = vmatpush.msra.mxu0 0.0
  %6493 = vmatpush.msra.mxu0 0.0
  %6494 = vmatpush.msra.mxu0 0.0
  %6495 = vmatpush.msra.mxu0 0.0
  %6496 = vmatpush.msra.mxu0 0.0
  %6497 = vmatpush.msra.mxu0 0.0
  %6498 = vmatpush.msra.mxu0 0.0
  %6499 = vmatpush.msra.mxu0 0.0
  %6500 = vmatpush.msra.mxu0 0.0
  %6501 = vmatpush.msra.mxu0 0.0
  %6502 = vmatpush.msra.mxu0 0.0
  %6503 = vmatpush.msra.mxu0 0.0
  %6504 = vmatpush.msra.mxu0 %v6434
  %6505 = vmatpush.msra.mxu0 %v6432
  %6506 = vmatpush.msra.mxu0 %v6430
  %6507 = vmatpush.msra.mxu0 %v6428
  %6508 = vmatmul.f32.gmra.mxu0 %v6450
  %v6509 = vpop.f32.mrf.mxu0
  %v6510 = vadd.f32 0.0, %v6509
  %6511 = vdwg.mxu0
  %6512 = vmatpush.msra.mxu0 0.0
  %6513 = vmatpush.msra.mxu0 0.0
  %6514 = vmatpush.msra.mxu0 0.0
  %6515 = vmatpush.msra.mxu0 0.0
  %6516 = vmatpush.msra.mxu0 0.0
  %6517 = vmatpush.msra.mxu0 0.0
  %6518 = vmatpush.msra.mxu0 0.0
  %6519 = vmatpush.msra.mxu0 0.0
  %6520 = vmatpush.msra.mxu0 0.0
  %6521 = vmatpush.msra.mxu0 0.0
  %6522 = vmatpush.msra.mxu0 0.0
  %6523 = vmatpush.msra.mxu0 0.0
  %6524 = vmatpush.msra.mxu0 %v6435
  %6525 = vmatpush.msra.mxu0 %v6433
  %6526 = vmatpush.msra.mxu0 %v6431
  %6527 = vmatpush.msra.mxu0 %v6429
  %6528 = vmatmul.f32.gmra.mxu0 %v6450
  %v6529 = vpop.f32.mrf.mxu0
  %v6530 = vadd.f32 0.0, %v6529
  %6531 = vdwg.mxu0
  %v6532 = vadd.f32 %v6374, %v6470
  %v6533 = vadd.f32 %v6375, %v6490
  %v6534 = vadd.f32 %v6376, %v6510
  %v6535 = vadd.f32 %v6377, %v6530
  %6536 = vrot.lane.b32.xlu0 %v6034, 111
  %v6537 = vpop.permute.xlu0 %6536
  %6538 = vrot.lane.b32.xlu0 %v6035, 111
  %v6539 = vpop.permute.xlu0 %6538
  %6540 = vrot.lane.b32.xlu0 0.0, 111
  %v6541 = vpop.permute.xlu0 %6540
  %6542 = vrot.lane.b32.xlu0 %v6036, 111
  %v6543 = vpop.permute.xlu0 %6542
  %6544 = vrot.lane.b32.xlu0 %v6037, 111
  %v6545 = vpop.permute.xlu0 %6544
  %6546 = vrot.lane.b32.xlu0 %v6038, 111
  %v6547 = vpop.permute.xlu0 %6546
  %6548 = vrot.lane.b32.xlu0 %v6039, 111
  %v6549 = vpop.permute.xlu0 %6548
  %6550 = vrot.lane.b32.xlu0 %v6040, 111
  %v6551 = vpop.permute.xlu0 %6550
  %6552 = vrot.lane.b32.xlu0 %v6041, 111
  %v6553 = vpop.permute.xlu0 %6552
  %v6554 = vsel %vm1904, %v6537, %v6539
  %v6555 = vsel %vm1904, %v6539, %v6541
  %v6556 = vsel %vm1904, %v6543, %v6545
  %v6557 = vsel %vm1904, %v6545, %v6541
  %v6558 = vsel %vm1904, %v6547, %v6549
  %v6559 = vsel %vm1904, %v6549, %v6541
  %v6560 = vsel %vm1904, %v6551, %v6553
  %v6561 = vsel %vm1904, %v6553, %v6541
  %6570 = vrot.lane.b32.xlu0 %v6042, 111
  %v6571 = vpop.permute.xlu0 %6570
  %6572 = vrot.lane.b32.xlu0 %v6043, 111
  %v6573 = vpop.permute.xlu0 %6572
  %6574 = vrot.lane.b32.xlu0 %v6044, 111
  %v6575 = vpop.permute.xlu0 %6574
  %6576 = vrot.lane.b32.xlu0 %v6045, 111
  %v6577 = vpop.permute.xlu0 %6576
  %6578 = vrot.lane.b32.xlu0 %v6046, 111
  %v6579 = vpop.permute.xlu0 %6578
  %6580 = vrot.lane.b32.xlu0 %v6047, 111
  %v6581 = vpop.permute.xlu0 %6580
  %6582 = vrot.lane.b32.xlu0 %v6048, 111
  %v6583 = vpop.permute.xlu0 %6582
  %6584 = vrot.lane.b32.xlu0 %v6049, 111
  %v6585 = vpop.permute.xlu0 %6584
  %v6586 = vsel %vm1904, %v6571, %v6573
  %v6587 = vsel %vm1904, %v6573, %v6541
  %v6588 = vsel %vm1904, %v6575, %v6577
  %v6589 = vsel %vm1904, %v6577, %v6541
  %v6590 = vsel %vm1904, %v6579, %v6581
  %v6591 = vsel %vm1904, %v6581, %v6541
  %v6592 = vsel %vm1904, %v6583, %v6585
  %v6593 = vsel %vm1904, %v6585, %v6541
  %v6602 = vld [vmem:[%s5 + $0x10] sm:$0x7]
  %6604 = vst [vmem:[#allocation1] ss:$2 sm:$0xff] %v6602
  %v6605 = vld.sshfl [vmem:[#allocation1] sm:$0xff pattern:$0x75316420]
  %6606 = vrot.lane.b32.xlu0 %v6605, 64
  %v6607 = vpop.permute.xlu0 %6606
  %v6608 = vsel %vm1436, %v6607, 0
  %6610 = vmatpush.msra.mxu0 0.0
  %6611 = vmatpush.msra.mxu0 0.0
  %6612 = vmatpush.msra.mxu0 0.0
  %6613 = vmatpush.msra.mxu0 0.0
  %6614 = vmatpush.msra.mxu0 0.0
  %6615 = vmatpush.msra.mxu0 0.0
  %6616 = vmatpush.msra.mxu0 0.0
  %6617 = vmatpush.msra.mxu0 0.0
  %6618 = vmatpush.msra.mxu0 0.0
  %6619 = vmatpush.msra.mxu0 0.0
  %6620 = vmatpush.msra.mxu0 0.0
  %6621 = vmatpush.msra.mxu0 0.0
  %6622 = vmatpush.msra.mxu0 %v6560
  %6623 = vmatpush.msra.mxu0 %v6558
  %6624 = vmatpush.msra.mxu0 %v6556
  %6625 = vmatpush.msra.mxu0 %v6554
  %6626 = vmatmul.f32.gmra.mxu0 %v6608
  %v6627 = vpop.f32.mrf.mxu0
  %v6628 = vadd.f32 0.0, %v6627
  %6629 = vdwg.mxu0
  %6630 = vmatpush.msra.mxu0 0.0
  %6631 = vmatpush.msra.mxu0 0.0
  %6632 = vmatpush.msra.mxu0 0.0
  %6633 = vmatpush.msra.mxu0 0.0
  %6634 = vmatpush.msra.mxu0 0.0
  %6635 = vmatpush.msra.mxu0 0.0
  %6636 = vmatpush.msra.mxu0 0.0
  %6637 = vmatpush.msra.mxu0 0.0
  %6638 = vmatpush.msra.mxu0 0.0
  %6639 = vmatpush.msra.mxu0 0.0
  %6640 = vmatpush.msra.mxu0 0.0
  %6641 = vmatpush.msra.mxu0 0.0
  %6642 = vmatpush.msra.mxu0 %v6561
  %6643 = vmatpush.msra.mxu0 %v6559
  %6644 = vmatpush.msra.mxu0 %v6557
  %6645 = vmatpush.msra.mxu0 %v6555
  %6646 = vmatmul.f32.gmra.mxu0 %v6608
  %v6647 = vpop.f32.mrf.mxu0
  %v6648 = vadd.f32 0.0, %v6647
  %6649 = vdwg.mxu0
  %6650 = vmatpush.msra.mxu0 0.0
  %6651 = vmatpush.msra.mxu0 0.0
  %6652 = vmatpush.msra.mxu0 0.0
  %6653 = vmatpush.msra.mxu0 0.0
  %6654 = vmatpush.msra.mxu0 0.0
  %6655 = vmatpush.msra.mxu0 0.0
  %6656 = vmatpush.msra.mxu0 0.0
  %6657 = vmatpush.msra.mxu0 0.0
  %6658 = vmatpush.msra.mxu0 0.0
  %6659 = vmatpush.msra.mxu0 0.0
  %6660 = vmatpush.msra.mxu0 0.0
  %6661 = vmatpush.msra.mxu0 0.0
  %6662 = vmatpush.msra.mxu0 %v6592
  %6663 = vmatpush.msra.mxu0 %v6590
  %6664 = vmatpush.msra.mxu0 %v6588
  %6665 = vmatpush.msra.mxu0 %v6586
  %6666 = vmatmul.f32.gmra.mxu0 %v6608
  %v6667 = vpop.f32.mrf.mxu0
  %v6668 = vadd.f32 0.0, %v6667
  %6669 = vdwg.mxu0
  %6670 = vmatpush.msra.mxu0 0.0
  %6671 = vmatpush.msra.mxu0 0.0
  %6672 = vmatpush.msra.mxu0 0.0
  %6673 = vmatpush.msra.mxu0 0.0
  %6674 = vmatpush.msra.mxu0 0.0
  %6675 = vmatpush.msra.mxu0 0.0
  %6676 = vmatpush.msra.mxu0 0.0
  %6677 = vmatpush.msra.mxu0 0.0
  %6678 = vmatpush.msra.mxu0 0.0
  %6679 = vmatpush.msra.mxu0 0.0
  %6680 = vmatpush.msra.mxu0 0.0
  %6681 = vmatpush.msra.mxu0 0.0
  %6682 = vmatpush.msra.mxu0 %v6593
  %6683 = vmatpush.msra.mxu0 %v6591
  %6684 = vmatpush.msra.mxu0 %v6589
  %6685 = vmatpush.msra.mxu0 %v6587
  %6686 = vmatmul.f32.gmra.mxu0 %v6608
  %v6687 = vpop.f32.mrf.mxu0
  %v6688 = vadd.f32 0.0, %v6687
  %6689 = vdwg.mxu0
  %v6690 = vadd.f32 %v6532, %v6628
  %v6691 = vadd.f32 %v6533, %v6648
  %v6692 = vadd.f32 %v6534, %v6668
  %v6693 = vadd.f32 %v6535, %v6688
  %6694 = vrot.lane.b32.xlu0 %v6034, 95
  %v6695 = vpop.permute.xlu0 %6694
  %6696 = vrot.lane.b32.xlu0 %v6035, 95
  %v6697 = vpop.permute.xlu0 %6696
  %6698 = vrot.lane.b32.xlu0 0.0, 95
  %v6699 = vpop.permute.xlu0 %6698
  %6700 = vrot.lane.b32.xlu0 %v6036, 95
  %v6701 = vpop.permute.xlu0 %6700
  %6702 = vrot.lane.b32.xlu0 %v6037, 95
  %v6703 = vpop.permute.xlu0 %6702
  %6704 = vrot.lane.b32.xlu0 %v6038, 95
  %v6705 = vpop.permute.xlu0 %6704
  %6706 = vrot.lane.b32.xlu0 %v6039, 95
  %v6707 = vpop.permute.xlu0 %6706
  %6708 = vrot.lane.b32.xlu0 %v6040, 95
  %v6709 = vpop.permute.xlu0 %6708
  %6710 = vrot.lane.b32.xlu0 %v6041, 95
  %v6711 = vpop.permute.xlu0 %6710
  %v6712 = vsel %vm1937, %v6695, %v6697
  %v6713 = vsel %vm1937, %v6697, %v6699
  %v6714 = vsel %vm1937, %v6701, %v6703
  %v6715 = vsel %vm1937, %v6703, %v6699
  %v6716 = vsel %vm1937, %v6705, %v6707
  %v6717 = vsel %vm1937, %v6707, %v6699
  %v6718 = vsel %vm1937, %v6709, %v6711
  %v6719 = vsel %vm1937, %v6711, %v6699
  %6728 = vrot.lane.b32.xlu0 %v6042, 95
  %v6729 = vpop.permute.xlu0 %6728
  %6730 = vrot.lane.b32.xlu0 %v6043, 95
  %v6731 = vpop.permute.xlu0 %6730
  %6732 = vrot.lane.b32.xlu0 %v6044, 95
  %v6733 = vpop.permute.xlu0 %6732
  %6734 = vrot.lane.b32.xlu0 %v6045, 95
  %v6735 = vpop.permute.xlu0 %6734
  %6736 = vrot.lane.b32.xlu0 %v6046, 95
  %v6737 = vpop.permute.xlu0 %6736
  %6738 = vrot.lane.b32.xlu0 %v6047, 95
  %v6739 = vpop.permute.xlu0 %6738
  %6740 = vrot.lane.b32.xlu0 %v6048, 95
  %v6741 = vpop.permute.xlu0 %6740
  %6742 = vrot.lane.b32.xlu0 %v6049, 95
  %v6743 = vpop.permute.xlu0 %6742
  %v6744 = vsel %vm1937, %v6729, %v6731
  %v6745 = vsel %vm1937, %v6731, %v6699
  %v6746 = vsel %vm1937, %v6733, %v6735
  %v6747 = vsel %vm1937, %v6735, %v6699
  %v6748 = vsel %vm1937, %v6737, %v6739
  %v6749 = vsel %vm1937, %v6739, %v6699
  %v6750 = vsel %vm1937, %v6741, %v6743
  %v6751 = vsel %vm1937, %v6743, %v6699
  %v6760 = vld [vmem:[%s5 + $0x14] sm:$0x7]
  %6762 = vst [vmem:[#allocation1] ss:$2 sm:$0xff] %v6760
  %v6763 = vld.sshfl [vmem:[#allocation1] sm:$0xff pattern:$0x75316420]
  %6764 = vrot.lane.b32.xlu0 %v6763, 32
  %v6765 = vpop.permute.xlu0 %6764
  %v6766 = vsel %vm1436, %v6765, 0
  %6768 = vmatpush.msra.mxu0 0.0
  %6769 = vmatpush.msra.mxu0 0.0
  %6770 = vmatpush.msra.mxu0 0.0
  %6771 = vmatpush.msra.mxu0 0.0
  %6772 = vmatpush.msra.mxu0 0.0
  %6773 = vmatpush.msra.mxu0 0.0
  %6774 = vmatpush.msra.mxu0 0.0
  %6775 = vmatpush.msra.mxu0 0.0
  %6776 = vmatpush.msra.mxu0 0.0
  %6777 = vmatpush.msra.mxu0 0.0
  %6778 = vmatpush.msra.mxu0 0.0
  %6779 = vmatpush.msra.mxu0 0.0
  %6780 = vmatpush.msra.mxu0 %v6718
  %6781 = vmatpush.msra.mxu0 %v6716
  %6782 = vmatpush.msra.mxu0 %v6714
  %6783 = vmatpush.msra.mxu0 %v6712
  %6784 = vmatmul.f32.gmra.mxu0 %v6766
  %v6785 = vpop.f32.mrf.mxu0
  %v6786 = vadd.f32 0.0, %v6785
  %6787 = vdwg.mxu0
  %6788 = vmatpush.msra.mxu0 0.0
  %6789 = vmatpush.msra.mxu0 0.0
  %6790 = vmatpush.msra.mxu0 0.0
  %6791 = vmatpush.msra.mxu0 0.0
  %6792 = vmatpush.msra.mxu0 0.0
  %6793 = vmatpush.msra.mxu0 0.0
  %6794 = vmatpush.msra.mxu0 0.0
  %6795 = vmatpush.msra.mxu0 0.0
  %6796 = vmatpush.msra.mxu0 0.0
  %6797 = vmatpush.msra.mxu0 0.0
  %6798 = vmatpush.msra.mxu0 0.0
  %6799 = vmatpush.msra.mxu0 0.0
  %6800 = vmatpush.msra.mxu0 %v6719
  %6801 = vmatpush.msra.mxu0 %v6717
  %6802 = vmatpush.msra.mxu0 %v6715
  %6803 = vmatpush.msra.mxu0 %v6713
  %6804 = vmatmul.f32.gmra.mxu0 %v6766
  %v6805 = vpop.f32.mrf.mxu0
  %v6806 = vadd.f32 0.0, %v6805
  %6807 = vdwg.mxu0
  %6808 = vmatpush.msra.mxu0 0.0
  %6809 = vmatpush.msra.mxu0 0.0
  %6810 = vmatpush.msra.mxu0 0.0
  %6811 = vmatpush.msra.mxu0 0.0
  %6812 = vmatpush.msra.mxu0 0.0
  %6813 = vmatpush.msra.mxu0 0.0
  %6814 = vmatpush.msra.mxu0 0.0
  %6815 = vmatpush.msra.mxu0 0.0
  %6816 = vmatpush.msra.mxu0 0.0
  %6817 = vmatpush.msra.mxu0 0.0
  %6818 = vmatpush.msra.mxu0 0.0
  %6819 = vmatpush.msra.mxu0 0.0
  %6820 = vmatpush.msra.mxu0 %v6750
  %6821 = vmatpush.msra.mxu0 %v6748
  %6822 = vmatpush.msra.mxu0 %v6746
  %6823 = vmatpush.msra.mxu0 %v6744
  %6824 = vmatmul.f32.gmra.mxu0 %v6766
  %v6825 = vpop.f32.mrf.mxu0
  %v6826 = vadd.f32 0.0, %v6825
  %6827 = vdwg.mxu0
  %6828 = vmatpush.msra.mxu0 0.0
  %6829 = vmatpush.msra.mxu0 0.0
  %6830 = vmatpush.msra.mxu0 0.0
  %6831 = vmatpush.msra.mxu0 0.0
  %6832 = vmatpush.msra.mxu0 0.0
  %6833 = vmatpush.msra.mxu0 0.0
  %6834 = vmatpush.msra.mxu0 0.0
  %6835 = vmatpush.msra.mxu0 0.0
  %6836 = vmatpush.msra.mxu0 0.0
  %6837 = vmatpush.msra.mxu0 0.0
  %6838 = vmatpush.msra.mxu0 0.0
  %6839 = vmatpush.msra.mxu0 0.0
  %6840 = vmatpush.msra.mxu0 %v6751
  %6841 = vmatpush.msra.mxu0 %v6749
  %6842 = vmatpush.msra.mxu0 %v6747
  %6843 = vmatpush.msra.mxu0 %v6745
  %6844 = vmatmul.f32.gmra.mxu0 %v6766
  %v6845 = vpop.f32.mrf.mxu0
  %v6846 = vadd.f32 0.0, %v6845
  %6847 = vdwg.mxu0
  %v6848 = vadd.f32 %v6690, %v6786
  %v6849 = vadd.f32 %v6691, %v6806
  %v6850 = vadd.f32 %v6692, %v6826
  %v6851 = vadd.f32 %v6693, %v6846
  %v6852 = vsel %vm2028, %v3657, 0.0
  %v6853 = vsel %vm2029, %v3658, 0.0
  %v6854 = vsel %vm2028, %v3661, 0.0
  %v6855 = vsel %vm2029, %v3662, 0.0
  %v6856 = vsel %vm2028, %v3665, 0.0
  %v6857 = vsel %vm2029, %v3666, 0.0
  %v6858 = vsel %vm2028, %v3669, 0.0
  %v6859 = vsel %vm2029, %v3670, 0.0
  %v6860 = vsel %vm2028, %v3659, 0.0
  %v6861 = vsel %vm2029, %v3660, 0.0
  %v6862 = vsel %vm2028, %v3663, 0.0
  %v6863 = vsel %vm2029, %v3664, 0.0
  %v6864 = vsel %vm2028, %v3667, 0.0
  %v6865 = vsel %vm2029, %v3668, 0.0
  %v6866 = vsel %vm2028, %v3671, 0.0
  %v6867 = vsel %vm2029, %v3672, 0.0
  %6876 = vrot.lane.b32.xlu0 0.0, 30
  %v6877 = vpop.permute.xlu0 %6876
  %6878 = vrot.lane.b32.xlu0 %v6852, 30
  %v6879 = vpop.permute.xlu0 %6878
  %6880 = vrot.lane.b32.xlu0 %v6853, 30
  %v6881 = vpop.permute.xlu0 %6880
  %6882 = vrot.lane.b32.xlu0 %v6854, 30
  %v6883 = vpop.permute.xlu0 %6882
  %6884 = vrot.lane.b32.xlu0 %v6855, 30
  %v6885 = vpop.permute.xlu0 %6884
  %6886 = vrot.lane.b32.xlu0 %v6856, 30
  %v6887 = vpop.permute.xlu0 %6886
  %6888 = vrot.lane.b32.xlu0 %v6857, 30
  %v6889 = vpop.permute.xlu0 %6888
  %6890 = vrot.lane.b32.xlu0 %v6858, 30
  %v6891 = vpop.permute.xlu0 %6890
  %6892 = vrot.lane.b32.xlu0 %v6859, 30
  %v6893 = vpop.permute.xlu0 %6892
  %v6894 = vsel %vm2131, %v6877, %v6879
  %v6895 = vsel %vm2131, %v6879, %v6881
  %v6896 = vsel %vm2131, %v6877, %v6883
  %v6897 = vsel %vm2131, %v6883, %v6885
  %v6898 = vsel %vm2131, %v6877, %v6887
  %v6899 = vsel %vm2131, %v6887, %v6889
  %v6900 = vsel %vm2131, %v6877, %v6891
  %v6901 = vsel %vm2131, %v6891, %v6893
  %6918 = vrot.lane.b32.xlu0 %v6860, 30
  %v6919 = vpop.permute.xlu0 %6918
  %6920 = vrot.lane.b32.xlu0 %v6861, 30
  %v6921 = vpop.permute.xlu0 %6920
  %6922 = vrot.lane.b32.xlu0 %v6862, 30
  %v6923 = vpop.permute.xlu0 %6922
  %6924 = vrot.lane.b32.xlu0 %v6863, 30
  %v6925 = vpop.permute.xlu0 %6924
  %6926 = vrot.lane.b32.xlu0 %v6864, 30
  %v6927 = vpop.permute.xlu0 %6926
  %6928 = vrot.lane.b32.xlu0 %v6865, 30
  %v6929 = vpop.permute.xlu0 %6928
  %6930 = vrot.lane.b32.xlu0 %v6866, 30
  %v6931 = vpop.permute.xlu0 %6930
  %6932 = vrot.lane.b32.xlu0 %v6867, 30
  %v6933 = vpop.permute.xlu0 %6932
  %v6934 = vsel %vm2131, %v6877, %v6919
  %v6935 = vsel %vm2131, %v6919, %v6921
  %v6936 = vsel %vm2131, %v6877, %v6923
  %v6937 = vsel %vm2131, %v6923, %v6925
  %v6938 = vsel %vm2131, %v6877, %v6927
  %v6939 = vsel %vm2131, %v6927, %v6929
  %v6940 = vsel %vm2131, %v6877, %v6931
  %v6941 = vsel %vm2131, %v6931, %v6933
  %v6950 = vld [vmem:[%s5 + $0x4] sm:$0x7]
  %v6952 = vsel %vm1436, %v6950, 0
  %6954 = vmatpush.msra.mxu0 0.0
  %6955 = vmatpush.msra.mxu0 0.0
  %6956 = vmatpush.msra.mxu0 0.0
  %6957 = vmatpush.msra.mxu0 0.0
  %6958 = vmatpush.msra.mxu0 0.0
  %6959 = vmatpush.msra.mxu0 0.0
  %6960 = vmatpush.msra.mxu0 0.0
  %6961 = vmatpush.msra.mxu0 0.0
  %6962 = vmatpush.msra.mxu0 0.0
  %6963 = vmatpush.msra.mxu0 0.0
  %6964 = vmatpush.msra.mxu0 0.0
  %6965 = vmatpush.msra.mxu0 0.0
  %6966 = vmatpush.msra.mxu0 %v6900
  %6967 = vmatpush.msra.mxu0 %v6898
  %6968 = vmatpush.msra.mxu0 %v6896
  %6969 = vmatpush.msra.mxu0 %v6894
  %6970 = vmatmul.f32.gmra.mxu0 %v6952
  %v6971 = vpop.f32.mrf.mxu0
  %v6972 = vadd.f32 0.0, %v6971
  %6973 = vdwg.mxu0
  %6974 = vmatpush.msra.mxu0 0.0
  %6975 = vmatpush.msra.mxu0 0.0
  %6976 = vmatpush.msra.mxu0 0.0
  %6977 = vmatpush.msra.mxu0 0.0
  %6978 = vmatpush.msra.mxu0 0.0
  %6979 = vmatpush.msra.mxu0 0.0
  %6980 = vmatpush.msra.mxu0 0.0
  %6981 = vmatpush.msra.mxu0 0.0
  %6982 = vmatpush.msra.mxu0 0.0
  %6983 = vmatpush.msra.mxu0 0.0
  %6984 = vmatpush.msra.mxu0 0.0
  %6985 = vmatpush.msra.mxu0 0.0
  %6986 = vmatpush.msra.mxu0 %v6901
  %6987 = vmatpush.msra.mxu0 %v6899
  %6988 = vmatpush.msra.mxu0 %v6897
  %6989 = vmatpush.msra.mxu0 %v6895
  %6990 = vmatmul.f32.gmra.mxu0 %v6952
  %v6991 = vpop.f32.mrf.mxu0
  %v6992 = vadd.f32 0.0, %v6991
  %6993 = vdwg.mxu0
  %6994 = vmatpush.msra.mxu0 0.0
  %6995 = vmatpush.msra.mxu0 0.0
  %6996 = vmatpush.msra.mxu0 0.0
  %6997 = vmatpush.msra.mxu0 0.0
  %6998 = vmatpush.msra.mxu0 0.0
  %6999 = vmatpush.msra.mxu0 0.0
  %7000 = vmatpush.msra.mxu0 0.0
  %7001 = vmatpush.msra.mxu0 0.0
  %7002 = vmatpush.msra.mxu0 0.0
  %7003 = vmatpush.msra.mxu0 0.0
  %7004 = vmatpush.msra.mxu0 0.0
  %7005 = vmatpush.msra.mxu0 0.0
  %7006 = vmatpush.msra.mxu0 %v6940
  %7007 = vmatpush.msra.mxu0 %v6938
  %7008 = vmatpush.msra.mxu0 %v6936
  %7009 = vmatpush.msra.mxu0 %v6934
  %7010 = vmatmul.f32.gmra.mxu0 %v6952
  %v7011 = vpop.f32.mrf.mxu0
  %v7012 = vadd.f32 0.0, %v7011
  %7013 = vdwg.mxu0
  %7014 = vmatpush.msra.mxu0 0.0
  %7015 = vmatpush.msra.mxu0 0.0
  %7016 = vmatpush.msra.mxu0 0.0
  %7017 = vmatpush.msra.mxu0 0.0
  %7018 = vmatpush.msra.mxu0 0.0
  %7019 = vmatpush.msra.mxu0 0.0
  %7020 = vmatpush.msra.mxu0 0.0
  %7021 = vmatpush.msra.mxu0 0.0
  %7022 = vmatpush.msra.mxu0 0.0
  %7023 = vmatpush.msra.mxu0 0.0
  %7024 = vmatpush.msra.mxu0 0.0
  %7025 = vmatpush.msra.mxu0 0.0
  %7026 = vmatpush.msra.mxu0 %v6941
  %7027 = vmatpush.msra.mxu0 %v6939
  %7028 = vmatpush.msra.mxu0 %v6937
  %7029 = vmatpush.msra.mxu0 %v6935
  %7030 = vmatmul.f32.gmra.mxu0 %v6952
  %v7031 = vpop.f32.mrf.mxu0
  %v7032 = vadd.f32 0.0, %v7031
  %7033 = vdwg.mxu0
  %v7034 = vadd.f32 %v6848, %v6972
  %v7035 = vadd.f32 %v6849, %v6992
  %v7036 = vadd.f32 %v6850, %v7012
  %v7037 = vadd.f32 %v6851, %v7032
  %7038 = vrot.lane.b32.xlu0 0.0, 14
  %v7039 = vpop.permute.xlu0 %7038
  %7040 = vrot.lane.b32.xlu0 %v6852, 14
  %v7041 = vpop.permute.xlu0 %7040
  %7042 = vrot.lane.b32.xlu0 %v6853, 14
  %v7043 = vpop.permute.xlu0 %7042
  %7044 = vrot.lane.b32.xlu0 %v6854, 14
  %v7045 = vpop.permute.xlu0 %7044
  %7046 = vrot.lane.b32.xlu0 %v6855, 14
  %v7047 = vpop.permute.xlu0 %7046
  %7048 = vrot.lane.b32.xlu0 %v6856, 14
  %v7049 = vpop.permute.xlu0 %7048
  %7050 = vrot.lane.b32.xlu0 %v6857, 14
  %v7051 = vpop.permute.xlu0 %7050
  %7052 = vrot.lane.b32.xlu0 %v6858, 14
  %v7053 = vpop.permute.xlu0 %7052
  %7054 = vrot.lane.b32.xlu0 %v6859, 14
  %v7055 = vpop.permute.xlu0 %7054
  %v7056 = vsel %vm2156, %v7039, %v7041
  %v7057 = vsel %vm2156, %v7041, %v7043
  %v7058 = vsel %vm2156, %v7039, %v7045
  %v7059 = vsel %vm2156, %v7045, %v7047
  %v7060 = vsel %vm2156, %v7039, %v7049
  %v7061 = vsel %vm2156, %v7049, %v7051
  %v7062 = vsel %vm2156, %v7039, %v7053
  %v7063 = vsel %vm2156, %v7053, %v7055
  %7072 = vrot.lane.b32.xlu0 %v6860, 14
  %v7073 = vpop.permute.xlu0 %7072
  %7074 = vrot.lane.b32.xlu0 %v6861, 14
  %v7075 = vpop.permute.xlu0 %7074
  %7076 = vrot.lane.b32.xlu0 %v6862, 14
  %v7077 = vpop.permute.xlu0 %7076
  %7078 = vrot.lane.b32.xlu0 %v6863, 14
  %v7079 = vpop.permute.xlu0 %7078
  %7080 = vrot.lane.b32.xlu0 %v6864, 14
  %v7081 = vpop.permute.xlu0 %7080
  %7082 = vrot.lane.b32.xlu0 %v6865, 14
  %v7083 = vpop.permute.xlu0 %7082
  %7084 = vrot.lane.b32.xlu0 %v6866, 14
  %v7085 = vpop.permute.xlu0 %7084
  %7086 = vrot.lane.b32.xlu0 %v6867, 14
  %v7087 = vpop.permute.xlu0 %7086
  %v7088 = vsel %vm2156, %v7039, %v7073
  %v7089 = vsel %vm2156, %v7073, %v7075
  %v7090 = vsel %vm2156, %v7039, %v7077
  %v7091 = vsel %vm2156, %v7077, %v7079
  %v7092 = vsel %vm2156, %v7039, %v7081
  %v7093 = vsel %vm2156, %v7081, %v7083
  %v7094 = vsel %vm2156, %v7039, %v7085
  %v7095 = vsel %vm2156, %v7085, %v7087
  %v7104 = vld [vmem:[%s5 + $0x8] sm:$0x7]
  %7106 = vst [vmem:[#allocation1] ss:$2 sm:$0xff] %v7104
  %v7107 = vld.sshfl [vmem:[#allocation1] sm:$0xff pattern:$0x75316420]
  %7108 = vrot.lane.b32.xlu0 %v7107, 96
  %v7109 = vpop.permute.xlu0 %7108
  %v7110 = vsel %vm1436, %v7109, 0
  %7112 = vmatpush.msra.mxu0 0.0
  %7113 = vmatpush.msra.mxu0 0.0
  %7114 = vmatpush.msra.mxu0 0.0
  %7115 = vmatpush.msra.mxu0 0.0
  %7116 = vmatpush.msra.mxu0 0.0
  %7117 = vmatpush.msra.mxu0 0.0
  %7118 = vmatpush.msra.mxu0 0.0
  %7119 = vmatpush.msra.mxu0 0.0
  %7120 = vmatpush.msra.mxu0 0.0
  %7121 = vmatpush.msra.mxu0 0.0
  %7122 = vmatpush.msra.mxu0 0.0
  %7123 = vmatpush.msra.mxu0 0.0
  %7124 = vmatpush.msra.mxu0 %v7062
  %7125 = vmatpush.msra.mxu0 %v7060
  %7126 = vmatpush.msra.mxu0 %v7058
  %7127 = vmatpush.msra.mxu0 %v7056
  %7128 = vmatmul.f32.gmra.mxu0 %v7110
  %v7129 = vpop.f32.mrf.mxu0
  %v7130 = vadd.f32 0.0, %v7129
  %7131 = vdwg.mxu0
  %7132 = vmatpush.msra.mxu0 0.0
  %7133 = vmatpush.msra.mxu0 0.0
  %7134 = vmatpush.msra.mxu0 0.0
  %7135 = vmatpush.msra.mxu0 0.0
  %7136 = vmatpush.msra.mxu0 0.0
  %7137 = vmatpush.msra.mxu0 0.0
  %7138 = vmatpush.msra.mxu0 0.0
  %7139 = vmatpush.msra.mxu0 0.0
  %7140 = vmatpush.msra.mxu0 0.0
  %7141 = vmatpush.msra.mxu0 0.0
  %7142 = vmatpush.msra.mxu0 0.0
  %7143 = vmatpush.msra.mxu0 0.0
  %7144 = vmatpush.msra.mxu0 %v7063
  %7145 = vmatpush.msra.mxu0 %v7061
  %7146 = vmatpush.msra.mxu0 %v7059
  %7147 = vmatpush.msra.mxu0 %v7057
  %7148 = vmatmul.f32.gmra.mxu0 %v7110
  %v7149 = vpop.f32.mrf.mxu0
  %v7150 = vadd.f32 0.0, %v7149
  %7151 = vdwg.mxu0
  %7152 = vmatpush.msra.mxu0 0.0
  %7153 = vmatpush.msra.mxu0 0.0
  %7154 = vmatpush.msra.mxu0 0.0
  %7155 = vmatpush.msra.mxu0 0.0
  %7156 = vmatpush.msra.mxu0 0.0
  %7157 = vmatpush.msra.mxu0 0.0
  %7158 = vmatpush.msra.mxu0 0.0
  %7159 = vmatpush.msra.mxu0 0.0
  %7160 = vmatpush.msra.mxu0 0.0
  %7161 = vmatpush.msra.mxu0 0.0
  %7162 = vmatpush.msra.mxu0 0.0
  %7163 = vmatpush.msra.mxu0 0.0
  %7164 = vmatpush.msra.mxu0 %v7094
  %7165 = vmatpush.msra.mxu0 %v7092
  %7166 = vmatpush.msra.mxu0 %v7090
  %7167 = vmatpush.msra.mxu0 %v7088
  %7168 = vmatmul.f32.gmra.mxu0 %v7110
  %v7169 = vpop.f32.mrf.mxu0
  %v7170 = vadd.f32 0.0, %v7169
  %7171 = vdwg.mxu0
  %7172 = vmatpush.msra.mxu0 0.0
  %7173 = vmatpush.msra.mxu0 0.0
  %7174 = vmatpush.msra.mxu0 0.0
  %7175 = vmatpush.msra.mxu0 0.0
  %7176 = vmatpush.msra.mxu0 0.0
  %7177 = vmatpush.msra.mxu0 0.0
  %7178 = vmatpush.msra.mxu0 0.0
  %7179 = vmatpush.msra.mxu0 0.0
  %7180 = vmatpush.msra.mxu0 0.0
  %7181 = vmatpush.msra.mxu0 0.0
  %7182 = vmatpush.msra.mxu0 0.0
  %7183 = vmatpush.msra.mxu0 0.0
  %7184 = vmatpush.msra.mxu0 %v7095
  %7185 = vmatpush.msra.mxu0 %v7093
  %7186 = vmatpush.msra.mxu0 %v7091
  %7187 = vmatpush.msra.mxu0 %v7089
  %7188 = vmatmul.f32.gmra.mxu0 %v7110
  %v7189 = vpop.f32.mrf.mxu0
  %v7190 = vadd.f32 0.0, %v7189
  %7191 = vdwg.mxu0
  %v7192 = vadd.f32 %v7034, %v7130
  %v7193 = vadd.f32 %v7035, %v7150
  %v7194 = vadd.f32 %v7036, %v7170
  %v7195 = vadd.f32 %v7037, %v7190
  %7196 = vrot.lane.b32.xlu0 %v6852, 126
  %v7197 = vpop.permute.xlu0 %7196
  %7198 = vrot.lane.b32.xlu0 %v6853, 126
  %v7199 = vpop.permute.xlu0 %7198
  %7200 = vrot.lane.b32.xlu0 0.0, 126
  %v7201 = vpop.permute.xlu0 %7200
  %7202 = vrot.lane.b32.xlu0 %v6854, 126
  %v7203 = vpop.permute.xlu0 %7202
  %7204 = vrot.lane.b32.xlu0 %v6855, 126
  %v7205 = vpop.permute.xlu0 %7204
  %7206 = vrot.lane.b32.xlu0 %v6856, 126
  %v7207 = vpop.permute.xlu0 %7206
  %7208 = vrot.lane.b32.xlu0 %v6857, 126
  %v7209 = vpop.permute.xlu0 %7208
  %7210 = vrot.lane.b32.xlu0 %v6858, 126
  %v7211 = vpop.permute.xlu0 %7210
  %7212 = vrot.lane.b32.xlu0 %v6859, 126
  %v7213 = vpop.permute.xlu0 %7212
  %v7214 = vsel %vm2186, %v7197, %v7199
  %v7215 = vsel %vm2186, %v7199, %v7201
  %v7216 = vsel %vm2186, %v7203, %v7205
  %v7217 = vsel %vm2186, %v7205, %v7201
  %v7218 = vsel %vm2186, %v7207, %v7209
  %v7219 = vsel %vm2186, %v7209, %v7201
  %v7220 = vsel %vm2186, %v7211, %v7213
  %v7221 = vsel %vm2186, %v7213, %v7201
  %7230 = vrot.lane.b32.xlu0 %v6860, 126
  %v7231 = vpop.permute.xlu0 %7230
  %7232 = vrot.lane.b32.xlu0 %v6861, 126
  %v7233 = vpop.permute.xlu0 %7232
  %7234 = vrot.lane.b32.xlu0 %v6862, 126
  %v7235 = vpop.permute.xlu0 %7234
  %7236 = vrot.lane.b32.xlu0 %v6863, 126
  %v7237 = vpop.permute.xlu0 %7236
  %7238 = vrot.lane.b32.xlu0 %v6864, 126
  %v7239 = vpop.permute.xlu0 %7238
  %7240 = vrot.lane.b32.xlu0 %v6865, 126
  %v7241 = vpop.permute.xlu0 %7240
  %7242 = vrot.lane.b32.xlu0 %v6866, 126
  %v7243 = vpop.permute.xlu0 %7242
  %7244 = vrot.lane.b32.xlu0 %v6867, 126
  %v7245 = vpop.permute.xlu0 %7244
  %v7246 = vsel %vm2186, %v7231, %v7233
  %v7247 = vsel %vm2186, %v7233, %v7201
  %v7248 = vsel %vm2186, %v7235, %v7237
  %v7249 = vsel %vm2186, %v7237, %v7201
  %v7250 = vsel %vm2186, %v7239, %v7241
  %v7251 = vsel %vm2186, %v7241, %v7201
  %v7252 = vsel %vm2186, %v7243, %v7245
  %v7253 = vsel %vm2186, %v7245, %v7201
  %v7262 = vld [vmem:[%s5 + $0xc] sm:$0x7]
  %7264 = vst [vmem:[#allocation1] ss:$2 sm:$0xff] %v7262
  %v7265 = vld.sshfl [vmem:[#allocation1] sm:$0xff pattern:$0x75316420]
  %7266 = vrot.lane.b32.xlu0 %v7265, 64
  %v7267 = vpop.permute.xlu0 %7266
  %v7268 = vsel %vm1436, %v7267, 0
  %7270 = vmatpush.msra.mxu0 0.0
  %7271 = vmatpush.msra.mxu0 0.0
  %7272 = vmatpush.msra.mxu0 0.0
  %7273 = vmatpush.msra.mxu0 0.0
  %7274 = vmatpush.msra.mxu0 0.0
  %7275 = vmatpush.msra.mxu0 0.0
  %7276 = vmatpush.msra.mxu0 0.0
  %7277 = vmatpush.msra.mxu0 0.0
  %7278 = vmatpush.msra.mxu0 0.0
  %7279 = vmatpush.msra.mxu0 0.0
  %7280 = vmatpush.msra.mxu0 0.0
  %7281 = vmatpush.msra.mxu0 0.0
  %7282 = vmatpush.msra.mxu0 %v7220
  %7283 = vmatpush.msra.mxu0 %v7218
  %7284 = vmatpush.msra.mxu0 %v7216
  %7285 = vmatpush.msra.mxu0 %v7214
  %7286 = vmatmul.f32.gmra.mxu0 %v7268
  %v7287 = vpop.f32.mrf.mxu0
  %v7288 = vadd.f32 0.0, %v7287
  %7289 = vdwg.mxu0
  %7290 = vmatpush.msra.mxu0 0.0
  %7291 = vmatpush.msra.mxu0 0.0
  %7292 = vmatpush.msra.mxu0 0.0
  %7293 = vmatpush.msra.mxu0 0.0
  %7294 = vmatpush.msra.mxu0 0.0
  %7295 = vmatpush.msra.mxu0 0.0
  %7296 = vmatpush.msra.mxu0 0.0
  %7297 = vmatpush.msra.mxu0 0.0
  %7298 = vmatpush.msra.mxu0 0.0
  %7299 = vmatpush.msra.mxu0 0.0
  %7300 = vmatpush.msra.mxu0 0.0
  %7301 = vmatpush.msra.mxu0 0.0
  %7302 = vmatpush.msra.mxu0 %v7221
  %7303 = vmatpush.msra.mxu0 %v7219
  %7304 = vmatpush.msra.mxu0 %v7217
  %7305 = vmatpush.msra.mxu0 %v7215
  %7306 = vmatmul.f32.gmra.mxu0 %v7268
  %v7307 = vpop.f32.mrf.mxu0
  %v7308 = vadd.f32 0.0, %v7307
  %7309 = vdwg.mxu0
  %7310 = vmatpush.msra.mxu0 0.0
  %7311 = vmatpush.msra.mxu0 0.0
  %7312 = vmatpush.msra.mxu0 0.0
  %7313 = vmatpush.msra.mxu0 0.0
  %7314 = vmatpush.msra.mxu0 0.0
  %7315 = vmatpush.msra.mxu0 0.0
  %7316 = vmatpush.msra.mxu0 0.0
  %7317 = vmatpush.msra.mxu0 0.0
  %7318 = vmatpush.msra.mxu0 0.0
  %7319 = vmatpush.msra.mxu0 0.0
  %7320 = vmatpush.msra.mxu0 0.0
  %7321 = vmatpush.msra.mxu0 0.0
  %7322 = vmatpush.msra.mxu0 %v7252
  %7323 = vmatpush.msra.mxu0 %v7250
  %7324 = vmatpush.msra.mxu0 %v7248
  %7325 = vmatpush.msra.mxu0 %v7246
  %7326 = vmatmul.f32.gmra.mxu0 %v7268
  %v7327 = vpop.f32.mrf.mxu0
  %v7328 = vadd.f32 0.0, %v7327
  %7329 = vdwg.mxu0
  %7330 = vmatpush.msra.mxu0 0.0
  %7331 = vmatpush.msra.mxu0 0.0
  %7332 = vmatpush.msra.mxu0 0.0
  %7333 = vmatpush.msra.mxu0 0.0
  %7334 = vmatpush.msra.mxu0 0.0
  %7335 = vmatpush.msra.mxu0 0.0
  %7336 = vmatpush.msra.mxu0 0.0
  %7337 = vmatpush.msra.mxu0 0.0
  %7338 = vmatpush.msra.mxu0 0.0
  %7339 = vmatpush.msra.mxu0 0.0
  %7340 = vmatpush.msra.mxu0 0.0
  %7341 = vmatpush.msra.mxu0 0.0
  %7342 = vmatpush.msra.mxu0 %v7253
  %7343 = vmatpush.msra.mxu0 %v7251
  %7344 = vmatpush.msra.mxu0 %v7249
  %7345 = vmatpush.msra.mxu0 %v7247
  %7346 = vmatmul.f32.gmra.mxu0 %v7268
  %v7347 = vpop.f32.mrf.mxu0
  %v7348 = vadd.f32 0.0, %v7347
  %7349 = vdwg.mxu0
  %v7350 = vadd.f32 %v7192, %v7288
  %v7351 = vadd.f32 %v7193, %v7308
  %v7352 = vadd.f32 %v7194, %v7328
  %v7353 = vadd.f32 %v7195, %v7348
  %7354 = vrot.lane.b32.xlu0 %v6852, 110
  %v7355 = vpop.permute.xlu0 %7354
  %7356 = vrot.lane.b32.xlu0 %v6853, 110
  %v7357 = vpop.permute.xlu0 %7356
  %7358 = vrot.lane.b32.xlu0 0.0, 110
  %v7359 = vpop.permute.xlu0 %7358
  %7360 = vrot.lane.b32.xlu0 %v6854, 110
  %v7361 = vpop.permute.xlu0 %7360
  %7362 = vrot.lane.b32.xlu0 %v6855, 110
  %v7363 = vpop.permute.xlu0 %7362
  %7364 = vrot.lane.b32.xlu0 %v6856, 110
  %v7365 = vpop.permute.xlu0 %7364
  %7366 = vrot.lane.b32.xlu0 %v6857, 110
  %v7367 = vpop.permute.xlu0 %7366
  %7368 = vrot.lane.b32.xlu0 %v6858, 110
  %v7369 = vpop.permute.xlu0 %7368
  %7370 = vrot.lane.b32.xlu0 %v6859, 110
  %v7371 = vpop.permute.xlu0 %7370
  %v7372 = vsel %vm2220, %v7355, %v7357
  %v7373 = vsel %vm2220, %v7357, %v7359
  %v7374 = vsel %vm2220, %v7361, %v7363
  %v7375 = vsel %vm2220, %v7363, %v7359
  %v7376 = vsel %vm2220, %v7365, %v7367
  %v7377 = vsel %vm2220, %v7367, %v7359
  %v7378 = vsel %vm2220, %v7369, %v7371
  %v7379 = vsel %vm2220, %v7371, %v7359
  %7388 = vrot.lane.b32.xlu0 %v6860, 110
  %v7389 = vpop.permute.xlu0 %7388
  %7390 = vrot.lane.b32.xlu0 %v6861, 110
  %v7391 = vpop.permute.xlu0 %7390
  %7392 = vrot.lane.b32.xlu0 %v6862, 110
  %v7393 = vpop.permute.xlu0 %7392
  %7394 = vrot.lane.b32.xlu0 %v6863, 110
  %v7395 = vpop.permute.xlu0 %7394
  %7396 = vrot.lane.b32.xlu0 %v6864, 110
  %v7397 = vpop.permute.xlu0 %7396
  %7398 = vrot.lane.b32.xlu0 %v6865, 110
  %v7399 = vpop.permute.xlu0 %7398
  %7400 = vrot.lane.b32.xlu0 %v6866, 110
  %v7401 = vpop.permute.xlu0 %7400
  %7402 = vrot.lane.b32.xlu0 %v6867, 110
  %v7403 = vpop.permute.xlu0 %7402
  %v7404 = vsel %vm2220, %v7389, %v7391
  %v7405 = vsel %vm2220, %v7391, %v7359
  %v7406 = vsel %vm2220, %v7393, %v7395
  %v7407 = vsel %vm2220, %v7395, %v7359
  %v7408 = vsel %vm2220, %v7397, %v7399
  %v7409 = vsel %vm2220, %v7399, %v7359
  %v7410 = vsel %vm2220, %v7401, %v7403
  %v7411 = vsel %vm2220, %v7403, %v7359
  %v7420 = vld [vmem:[%s5 + $0x10] sm:$0x7]
  %7422 = vst [vmem:[#allocation1] ss:$2 sm:$0xff] %v7420
  %v7423 = vld.sshfl [vmem:[#allocation1] sm:$0xff pattern:$0x75316420]
  %7424 = vrot.lane.b32.xlu0 %v7423, 32
  %v7425 = vpop.permute.xlu0 %7424
  %v7426 = vsel %vm1436, %v7425, 0
  %7428 = vmatpush.msra.mxu0 0.0
  %7429 = vmatpush.msra.mxu0 0.0
  %7430 = vmatpush.msra.mxu0 0.0
  %7431 = vmatpush.msra.mxu0 0.0
  %7432 = vmatpush.msra.mxu0 0.0
  %7433 = vmatpush.msra.mxu0 0.0
  %7434 = vmatpush.msra.mxu0 0.0
  %7435 = vmatpush.msra.mxu0 0.0
  %7436 = vmatpush.msra.mxu0 0.0
  %7437 = vmatpush.msra.mxu0 0.0
  %7438 = vmatpush.msra.mxu0 0.0
  %7439 = vmatpush.msra.mxu0 0.0
  %7440 = vmatpush.msra.mxu0 %v7378
  %7441 = vmatpush.msra.mxu0 %v7376
  %7442 = vmatpush.msra.mxu0 %v7374
  %7443 = vmatpush.msra.mxu0 %v7372
  %7444 = vmatmul.f32.gmra.mxu0 %v7426
  %v7445 = vpop.f32.mrf.mxu0
  %v7446 = vadd.f32 0.0, %v7445
  %7447 = vdwg.mxu0
  %7448 = vmatpush.msra.mxu0 0.0
  %7449 = vmatpush.msra.mxu0 0.0
  %7450 = vmatpush.msra.mxu0 0.0
  %7451 = vmatpush.msra.mxu0 0.0
  %7452 = vmatpush.msra.mxu0 0.0
  %7453 = vmatpush.msra.mxu0 0.0
  %7454 = vmatpush.msra.mxu0 0.0
  %7455 = vmatpush.msra.mxu0 0.0
  %7456 = vmatpush.msra.mxu0 0.0
  %7457 = vmatpush.msra.mxu0 0.0
  %7458 = vmatpush.msra.mxu0 0.0
  %7459 = vmatpush.msra.mxu0 0.0
  %7460 = vmatpush.msra.mxu0 %v7379
  %7461 = vmatpush.msra.mxu0 %v7377
  %7462 = vmatpush.msra.mxu0 %v7375
  %7463 = vmatpush.msra.mxu0 %v7373
  %7464 = vmatmul.f32.gmra.mxu0 %v7426
  %v7465 = vpop.f32.mrf.mxu0
  %v7466 = vadd.f32 0.0, %v7465
  %7467 = vdwg.mxu0
  %7468 = vmatpush.msra.mxu0 0.0
  %7469 = vmatpush.msra.mxu0 0.0
  %7470 = vmatpush.msra.mxu0 0.0
  %7471 = vmatpush.msra.mxu0 0.0
  %7472 = vmatpush.msra.mxu0 0.0
  %7473 = vmatpush.msra.mxu0 0.0
  %7474 = vmatpush.msra.mxu0 0.0
  %7475 = vmatpush.msra.mxu0 0.0
  %7476 = vmatpush.msra.mxu0 0.0
  %7477 = vmatpush.msra.mxu0 0.0
  %7478 = vmatpush.msra.mxu0 0.0
  %7479 = vmatpush.msra.mxu0 0.0
  %7480 = vmatpush.msra.mxu0 %v7410
  %7481 = vmatpush.msra.mxu0 %v7408
  %7482 = vmatpush.msra.mxu0 %v7406
  %7483 = vmatpush.msra.mxu0 %v7404
  %7484 = vmatmul.f32.gmra.mxu0 %v7426
  %v7485 = vpop.f32.mrf.mxu0
  %v7486 = vadd.f32 0.0, %v7485
  %7487 = vdwg.mxu0
  %7488 = vmatpush.msra.mxu0 0.0
  %7489 = vmatpush.msra.mxu0 0.0
  %7490 = vmatpush.msra.mxu0 0.0
  %7491 = vmatpush.msra.mxu0 0.0
  %7492 = vmatpush.msra.mxu0 0.0
  %7493 = vmatpush.msra.mxu0 0.0
  %7494 = vmatpush.msra.mxu0 0.0
  %7495 = vmatpush.msra.mxu0 0.0
  %7496 = vmatpush.msra.mxu0 0.0
  %7497 = vmatpush.msra.mxu0 0.0
  %7498 = vmatpush.msra.mxu0 0.0
  %7499 = vmatpush.msra.mxu0 0.0
  %7500 = vmatpush.msra.mxu0 %v7411
  %7501 = vmatpush.msra.mxu0 %v7409
  %7502 = vmatpush.msra.mxu0 %v7407
  %7503 = vmatpush.msra.mxu0 %v7405
  %7504 = vmatmul.f32.gmra.mxu0 %v7426
  %v7505 = vpop.f32.mrf.mxu0
  %v7506 = vadd.f32 0.0, %v7505
  %7507 = vdwg.mxu0
  %v7508 = vadd.f32 %v7350, %v7446
  %v7509 = vadd.f32 %v7351, %v7466
  %v7510 = vadd.f32 %v7352, %v7486
  %v7511 = vadd.f32 %v7353, %v7506
  %7512 = vrot.lane.b32.xlu0 %v6852, 94
  %v7513 = vpop.permute.xlu0 %7512
  %7514 = vrot.lane.b32.xlu0 %v6853, 94
  %v7515 = vpop.permute.xlu0 %7514
  %7516 = vrot.lane.b32.xlu0 0.0, 94
  %v7517 = vpop.permute.xlu0 %7516
  %7518 = vrot.lane.b32.xlu0 %v6854, 94
  %v7519 = vpop.permute.xlu0 %7518
  %7520 = vrot.lane.b32.xlu0 %v6855, 94
  %v7521 = vpop.permute.xlu0 %7520
  %7522 = vrot.lane.b32.xlu0 %v6856, 94
  %v7523 = vpop.permute.xlu0 %7522
  %7524 = vrot.lane.b32.xlu0 %v6857, 94
  %v7525 = vpop.permute.xlu0 %7524
  %7526 = vrot.lane.b32.xlu0 %v6858, 94
  %v7527 = vpop.permute.xlu0 %7526
  %7528 = vrot.lane.b32.xlu0 %v6859, 94
  %v7529 = vpop.permute.xlu0 %7528
  %v7530 = vsel %vm2249, %v7513, %v7515
  %v7531 = vsel %vm2249, %v7515, %v7517
  %v7532 = vsel %vm2249, %v7519, %v7521
  %v7533 = vsel %vm2249, %v7521, %v7517
  %v7534 = vsel %vm2249, %v7523, %v7525
  %v7535 = vsel %vm2249, %v7525, %v7517
  %v7536 = vsel %vm2249, %v7527, %v7529
  %v7537 = vsel %vm2249, %v7529, %v7517
  %7546 = vrot.lane.b32.xlu0 %v6860, 94
  %v7547 = vpop.permute.xlu0 %7546
  %7548 = vrot.lane.b32.xlu0 %v6861, 94
  %v7549 = vpop.permute.xlu0 %7548
  %7550 = vrot.lane.b32.xlu0 %v6862, 94
  %v7551 = vpop.permute.xlu0 %7550
  %7552 = vrot.lane.b32.xlu0 %v6863, 94
  %v7553 = vpop.permute.xlu0 %7552
  %7554 = vrot.lane.b32.xlu0 %v6864, 94
  %v7555 = vpop.permute.xlu0 %7554
  %7556 = vrot.lane.b32.xlu0 %v6865, 94
  %v7557 = vpop.permute.xlu0 %7556
  %7558 = vrot.lane.b32.xlu0 %v6866, 94
  %v7559 = vpop.permute.xlu0 %7558
  %7560 = vrot.lane.b32.xlu0 %v6867, 94
  %v7561 = vpop.permute.xlu0 %7560
  %v7562 = vsel %vm2249, %v7547, %v7549
  %v7563 = vsel %vm2249, %v7549, %v7517
  %v7564 = vsel %vm2249, %v7551, %v7553
  %v7565 = vsel %vm2249, %v7553, %v7517
  %v7566 = vsel %vm2249, %v7555, %v7557
  %v7567 = vsel %vm2249, %v7557, %v7517
  %v7568 = vsel %vm2249, %v7559, %v7561
  %v7569 = vsel %vm2249, %v7561, %v7517
  %v7578 = vld [vmem:[%s5 + $0x18] sm:$0x7]
  %v7580 = vsel %vm1436, %v7578, 0
  %7582 = vmatpush.msra.mxu0 0.0
  %7583 = vmatpush.msra.mxu0 0.0
  %7584 = vmatpush.msra.mxu0 0.0
  %7585 = vmatpush.msra.mxu0 0.0
  %7586 = vmatpush.msra.mxu0 0.0
  %7587 = vmatpush.msra.mxu0 0.0
  %7588 = vmatpush.msra.mxu0 0.0
  %7589 = vmatpush.msra.mxu0 0.0
  %7590 = vmatpush.msra.mxu0 0.0
  %7591 = vmatpush.msra.mxu0 0.0
  %7592 = vmatpush.msra.mxu0 0.0
  %7593 = vmatpush.msra.mxu0 0.0
  %7594 = vmatpush.msra.mxu0 %v7536
  %7595 = vmatpush.msra.mxu0 %v7534
  %7596 = vmatpush.msra.mxu0 %v7532
  %7597 = vmatpush.msra.mxu0 %v7530
  %7598 = vmatmul.f32.gmra.mxu0 %v7580
  %v7599 = vpop.f32.mrf.mxu0
  %v7600 = vadd.f32 0.0, %v7599
  %7601 = vdwg.mxu0
  %7602 = vmatpush.msra.mxu0 0.0
  %7603 = vmatpush.msra.mxu0 0.0
  %7604 = vmatpush.msra.mxu0 0.0
  %7605 = vmatpush.msra.mxu0 0.0
  %7606 = vmatpush.msra.mxu0 0.0
  %7607 = vmatpush.msra.mxu0 0.0
  %7608 = vmatpush.msra.mxu0 0.0
  %7609 = vmatpush.msra.mxu0 0.0
  %7610 = vmatpush.msra.mxu0 0.0
  %7611 = vmatpush.msra.mxu0 0.0
  %7612 = vmatpush.msra.mxu0 0.0
  %7613 = vmatpush.msra.mxu0 0.0
  %7614 = vmatpush.msra.mxu0 %v7537
  %7615 = vmatpush.msra.mxu0 %v7535
  %7616 = vmatpush.msra.mxu0 %v7533
  %7617 = vmatpush.msra.mxu0 %v7531
  %7618 = vmatmul.f32.gmra.mxu0 %v7580
  %v7619 = vpop.f32.mrf.mxu0
  %v7620 = vadd.f32 0.0, %v7619
  %7621 = vdwg.mxu0
  %7622 = vmatpush.msra.mxu0 0.0
  %7623 = vmatpush.msra.mxu0 0.0
  %7624 = vmatpush.msra.mxu0 0.0
  %7625 = vmatpush.msra.mxu0 0.0
  %7626 = vmatpush.msra.mxu0 0.0
  %7627 = vmatpush.msra.mxu0 0.0
  %7628 = vmatpush.msra.mxu0 0.0
  %7629 = vmatpush.msra.mxu0 0.0
  %7630 = vmatpush.msra.mxu0 0.0
  %7631 = vmatpush.msra.mxu0 0.0
  %7632 = vmatpush.msra.mxu0 0.0
  %7633 = vmatpush.msra.mxu0 0.0
  %7634 = vmatpush.msra.mxu0 %v7568
  %7635 = vmatpush.msra.mxu0 %v7566
  %7636 = vmatpush.msra.mxu0 %v7564
  %7637 = vmatpush.msra.mxu0 %v7562
  %7638 = vmatmul.f32.gmra.mxu0 %v7580
  %v7639 = vpop.f32.mrf.mxu0
  %v7640 = vadd.f32 0.0, %v7639
  %7641 = vdwg.mxu0
  %7642 = vmatpush.msra.mxu0 0.0
  %7643 = vmatpush.msra.mxu0 0.0
  %7644 = vmatpush.msra.mxu0 0.0
  %7645 = vmatpush.msra.mxu0 0.0
  %7646 = vmatpush.msra.mxu0 0.0
  %7647 = vmatpush.msra.mxu0 0.0
  %7648 = vmatpush.msra.mxu0 0.0
  %7649 = vmatpush.msra.mxu0 0.0
  %7650 = vmatpush.msra.mxu0 0.0
  %7651 = vmatpush.msra.mxu0 0.0
  %7652 = vmatpush.msra.mxu0 0.0
  %7653 = vmatpush.msra.mxu0 0.0
  %7654 = vmatpush.msra.mxu0 %v7569
  %7655 = vmatpush.msra.mxu0 %v7567
  %7656 = vmatpush.msra.mxu0 %v7565
  %7657 = vmatpush.msra.mxu0 %v7563
  %7658 = vmatmul.f32.gmra.mxu0 %v7580
  %v7659 = vpop.f32.mrf.mxu0
  %v7660 = vadd.f32 0.0, %v7659
  %7661 = vdwg.mxu0
  %v7662 = vadd.f32 %v7508, %v7600
  %v7663 = vadd.f32 %v7509, %v7620
  %v7664 = vadd.f32 %v7510, %v7640
  %v7665 = vadd.f32 %v7511, %v7660
  %v7666 = vld [vmem:[%s6] sm:$0x7]
  %7668 = vset.pattern.permute.xlu0 0
  %7669 = vperm.xlu0 %7668, %v7666
  %v7670 = vpop.permute.xlu0 %7669
  %v7672 = vadd.f32 %v7662, %v7670
  %v7673 = vadd.f32 %v7663, %v7670
  %v7674 = vadd.f32 %v7664, %v7670
  %v7675 = vadd.f32 %v7665, %v7670
  %v7676 = vmax.f32 %v7672, 0.0
  %v7677 = vmax.f32 %v7673, 0.0
  %v7678 = vmax.f32 %v7674, 0.0
  %v7679 = vmax.f32 %v7675, 0.0
  %v7682 = vrot.slane %v7677, 4
  %vm7683 = vcmask 1043456
  %v7684 = vsel %vm7683, %v7676, %v7682
  %7686 = vst [vmem:[%s7] sm:$0x77] %v7684
  %v7689 = vrot.slane %v7679, 4
  %v7690 = vsel %vm7683, %v7678, %v7689
  %s7692 = scalar_lea.vmem %s7, 8
  %7693 = vst [vmem:[%s7692] sm:$0x77] %v7690
  // Predicated region
  $region30: #{srcnn_forward.1} parent=0 // pred_check
    _
  $region31: #{srcnn_forward.1} parent=0 // pred_check_branch
    %7695 = sbr.rel (0) target = $region33
  $region32: #{srcnn_forward.1} parent=0 // pred_region
    _
  $region33: #{srcnn_forward.1} parent=0 // pred_fallthru
    _
  // Predicated region
  $region34: #{srcnn_forward.1} parent=0 // pred_check
    _
  $region35: #{srcnn_forward.1} parent=0 // pred_check_branch
    %7697 = sbr.rel (0) target = $region37
  $region36: #{srcnn_forward.1} parent=0 // pred_region
    _
  $region37: #{srcnn_forward.1} parent=0 // pred_fallthru
    _

</llo_original>
